<compile_context>
chip_gen: v5e
topology: v5e:2x2
jax: 0.10.0
libtpu: 0.0.40
codegen_flags: <defaults>
</compile_context>

<pallas_src>
import math

import jax
import jax.numpy as jnp
from jax.experimental import pallas as pl
from jax.experimental.pallas import tpu as pltpu


# ----------------------------------------------------------------------------
# Fused Pallas kernel: the whole ResLSTM stack, time loop inside the kernel.
# ----------------------------------------------------------------------------
def _res_lstm_kernel(x_ref, wih0_ref, wihR_ref, whh_ref, b_ref,
                     out_ref, seq0, seq1, gates_scr):
    # Shapes (all static):
    #   x_ref     : (T*Bp, D_in)   flattened sequence-major input (f32)
    #   wih0_ref  : (D_in, 4H)     input weights of layer 0 ("temp"), bf16
    #   wihR_ref  : (7, H, 4H)     input weights of layers 1..7, bf16
    #   whh_ref   : (8, H, 4H)     recurrent weights of all 8 layers, bf16
    #   b_ref     : (8, 1, 4H)     combined bias (b_ih + b_hh), f32
    #   out_ref   : (Bp, H)        final hidden state of the last layer
    #   seq0/seq1 : (T*Bp, H)      VMEM sequence buffers (f32)
    #   gates_scr : (T*Bp, 4H)     hoisted input-projection buffer (f32)
    # Gate column order everywhere in the kernel is [i, f, o, g].
    Bp, H = out_ref.shape
    T = seq0.shape[0] // Bp

    def run_layer(in_seq_ref, w_ih, w_hh, bias, h0, c0, out_seq_ref,
                  accumulate):
        """One LSTM layer over the full sequence; returns final (h, c)."""
        # Hoisted input projection for ALL timesteps: one (T*Bp, D) @ (D, 4H)
        # MXU pass (bf16 operands, f32 accumulation) + bias, staged in VMEM.
        gates_scr[...] = (
            jnp.dot(in_seq_ref[...].astype(jnp.bfloat16), w_ih,
                    preferred_element_type=jnp.float32)
            + bias)

        def step(t, carry):
            h, c = carry
            row = pl.multiple_of(t * Bp, Bp)          # sublane-aligned offset
            g = gates_scr[pl.ds(row, Bp), :] + jnp.dot(
                h.astype(jnp.bfloat16), w_hh,
                preferred_element_type=jnp.float32)
            # Gates are [i, f, o, g]: one contiguous sigmoid over 3H lanes,
            # one tanh over the trailing H lanes (half the per-step
            # transcendental work vs. activating the full 4H twice).
            sg = jax.nn.sigmoid(g[:, :3 * H])
            g_g = jnp.tanh(g[:, 3 * H:])
            i_g = sg[:, 0 * H:1 * H]
            f_g = sg[:, 1 * H:2 * H]
            o_g = sg[:, 2 * H:3 * H]
            c_new = f_g * c + i_g * g_g
            h_new = o_g * jnp.tanh(c_new)
            if out_seq_ref is not None:
                if accumulate:
                    # Fused residual shortcut: block_out[t] = block_in[t] + h_t
                    out_seq_ref[pl.ds(row, Bp), :] = (
                        out_seq_ref[pl.ds(row, Bp), :] + h_new)
                else:
                    out_seq_ref[pl.ds(row, Bp), :] = h_new
            return h_new, c_new

        # T is small & static -> fully unroll for cross-step scheduling.
        return jax.lax.fori_loop(0, T, step, (h0, c0), unroll=True)

    zeros = jnp.zeros((Bp, H), jnp.float32)

    # Layer 0 ("temp"): zero initial state, writes its sequence into seq0.
    h, c = run_layer(x_ref, wih0_ref[...], whh_ref[0], b_ref[0],
                     zeros, zeros, seq0, False)

    # Three residual blocks (2 LSTM layers each).  Each layer's final (h, c)
    # seeds the next layer's initial state, exactly as the PyTorch module
    # threads them -> layers are serially dependent (no wavefront possible).
    for blk in range(3):
        l1 = 1 + 2 * blk
        l2 = 2 + 2 * blk
        # Block input stays in seq0 (needed for the residual shortcut).
        h, c = run_layer(seq0, wihR_ref[l1 - 1], whh_ref[l1], b_ref[l1],
                         h, c, seq1, False)
        # Second layer: its input (seq1) is fully consumed by the hoisted
        # projection before its time loop, and seq0[t] is otherwise dead, so
        # accumulating the residual in place (seq0[t] += h_t) is safe.
        h, c = run_layer(seq1, wihR_ref[l2 - 1], whh_ref[l2], b_ref[l2],
                         h, c, seq0, True)

    # Final LSTM: only its terminal hidden state is needed -> no seq writes.
    h, c = run_layer(seq0, wihR_ref[6], whh_ref[7], b_ref[7], h, c, None,
                     False)
    out_ref[...] = h.astype(out_ref.dtype)


# ----------------------------------------------------------------------------
# Parameter construction (PyTorch nn.LSTM layout) + kernel packing
# ----------------------------------------------------------------------------
def init_res_lstm_params(key, in_channel, hidden_dim):
    """Per-layer params in PyTorch nn.LSTM layout (gate order [i, f, g, o])."""
    layers = []
    for idx, k in enumerate(jax.random.split(key, 8)):
        d_in = in_channel if idx == 0 else hidden_dim
        s = 1.0 / math.sqrt(hidden_dim)
        k1, k2, k3, k4 = jax.random.split(k, 4)
        layers.append({
            "w_ih": jax.random.uniform(k1, (4 * hidden_dim, d_in),
                                       jnp.float32, -s, s),
            "w_hh": jax.random.uniform(k2, (4 * hidden_dim, hidden_dim),
                                       jnp.float32, -s, s),
            "b_ih": jax.random.uniform(k3, (4 * hidden_dim,), jnp.float32,
                                       -s, s),
            "b_hh": jax.random.uniform(k4, (4 * hidden_dim,), jnp.float32,
                                       -s, s),
        })
    return layers


def _reorder_ifog(w):
    """Reorder gate chunks along axis 0 from PyTorch [i,f,g,o] to [i,f,o,g]."""
    i, f, g, o = jnp.split(w, 4, axis=0)
    return jnp.concatenate([i, f, o, g], axis=0)


def pack_kernel_params(layers):
    """Transpose, gate-reorder to [i,f,o,g], cast weights to bf16, stack."""
    def prep_w(w):                               # (4H, X) -> (X, 4H) bf16
        return jnp.transpose(_reorder_ifog(w)).astype(jnp.bfloat16)

    def prep_b(layer):                           # (1, 4H) f32
        return _reorder_ifog(layer["b_ih"] + layer["b_hh"])[None, :]

    return {
        "wih0": prep_w(layers[0]["w_ih"]),                          # (D,4H)
        "wihR": jnp.stack([prep_w(l["w_ih"]) for l in layers[1:]]),  # (7,H,4H)
        "whh": jnp.stack([prep_w(l["w_hh"]) for l in layers]),       # (8,H,4H)
        "b": jnp.stack([prep_b(l) for l in layers]),                 # (8,1,4H)
    }


# ----------------------------------------------------------------------------
# Forward wrapper
# ----------------------------------------------------------------------------
@jax.jit
def res_lstm_forward(kparams, input_seq):
    """input_seq: (B, T, in_channel) batch-first. Returns hidden.squeeze()."""
    B, T, D = input_seq.shape
    H = kparams["whh"].shape[1]
    Bp = ((B + 7) // 8) * 8                      # pad batch to sublane width

    x = jnp.transpose(input_seq, (1, 0, 2))      # (T, B, D) sequence-major
    if Bp != B:
        x = jnp.pad(x, ((0, 0), (0, Bp - B), (0, 0)))
    x = x.reshape(T * Bp, D)                     # lane-friendly 2-D layout

    out = pl.pallas_call(
        _res_lstm_kernel,
        out_shape=jax.ShapeDtypeStruct((Bp, H), jnp.float32),
        in_specs=[pl.BlockSpec(memory_space=pltpu.MemorySpace.VMEM)] * 5,
        out_specs=pl.BlockSpec(memory_space=pltpu.MemorySpace.VMEM),
        scratch_shapes=[
            pltpu.VMEM((T * Bp, H), jnp.float32),       # seq0
            pltpu.VMEM((T * Bp, H), jnp.float32),       # seq1
            pltpu.VMEM((T * Bp, 4 * H), jnp.float32),   # hoisted gates
        ],
    )(x, kparams["wih0"], kparams["wihR"], kparams["whh"], kparams["b"])
    return out[:B]


# ----------------------------------------------------------------------------
# Pure-JAX reference (PyTorch layout, gate order [i, f, g, o])
# ----------------------------------------------------------------------------
def _lstm_ref(x_btd, w_ih, w_hh, b, h0, c0):
    H = h0.shape[-1]

    def step(carry, x_t):
        h, c = carry
        g = x_t @ w_ih.T + h @ w_hh.T + b
        i = jax.nn.sigmoid(g[:, 0 * H:1 * H])
        f = jax.nn.sigmoid(g[:, 1 * H:2 * H])
        gg = jnp.tanh(g[:, 2 * H:3 * H])
        o = jax.nn.sigmoid(g[:, 3 * H:4 * H])
        c = f * c + i * gg
        h = o * jnp.tanh(c)
        return (h, c), h

    (hN, cN), ys = jax.lax.scan(step, (h0, c0), jnp.transpose(x_btd, (1, 0, 2)))
    return jnp.transpose(ys, (1, 0, 2)), hN, cN


def res_lstm_reference(layers, x):
    B = x.shape[0]
    H = layers[0]["w_hh"].shape[1]
    h = jnp.zeros((B, H), jnp.float32)
    c = jnp.zeros((B, H), jnp.float32)

    def layer(l, inp, h, c):
        p = layers[l]
        return _lstm_ref(inp, p["w_ih"], p["w_hh"], p["b_ih"] + p["b_hh"], h, c)

    y, h, c = layer(0, x, h, c)
    for blk in range(3):
        y1, h, c = layer(1 + 2 * blk, y, h, c)
        y2, h, c = layer(2 + 2 * blk, y1, h, c)
        y = y + y2
    y, h, c = layer(7, y, h, c)
    return h


# ----------------------------------------------------------------------------
if __name__ == "__main__":
    B, T = 2, 8
    in_channel = 4
    hidden_dim = 32
    model_params = {"in_size": 16, "in_channel": in_channel, "begin_channel": 4}

    key = jax.random.PRNGKey(0)
    k_param, k_input = jax.random.split(key)
    torch_layout_params = init_res_lstm_params(
        k_param, model_params["in_channel"], hidden_dim)
    kparams = pack_kernel_params(torch_layout_params)

    # input_seq: (B, T, in_channel), batch-first like nn.LSTM(batch_first=True)
    input_seq = jax.random.normal(k_input, (B, T, in_channel), jnp.float32)

    out = res_lstm_forward(kparams, input_seq)
    out = jax.block_until_ready(out)

    assert out.shape == (B, hidden_dim), out.shape
    assert bool(jnp.all(jnp.isfinite(out)))

    # Loose numerical sanity check vs pure-JAX f32 reference (bf16 MXU
    # operands over 64 recurrent steps, hence the tolerance; tighter parity
    # would need precision=jax.lax.Precision.HIGHEST at extra MXU cost).
    ref = res_lstm_reference(torch_layout_params, input_seq)
    max_err = float(jnp.max(jnp.abs(out - ref)))
    assert max_err < 5e-2, f"mismatch vs reference: {max_err}"

    print("KERNEL_OK")
</pallas_src>

<mosaic_0001>
module attributes {stable_mosaic.version = 11 : i64} {
  func.func @_res_lstm_kernel(%arg0: memref<64x4xf32, #tpu.memory_space<vmem>>, %arg1: memref<4x128xbf16, #tpu.memory_space<vmem>>, %arg2: memref<7x32x128xbf16, #tpu.memory_space<vmem>>, %arg3: memref<8x32x128xbf16, #tpu.memory_space<vmem>>, %arg4: memref<8x1x128xf32, #tpu.memory_space<vmem>>, %arg5: memref<8x32xf32, #tpu.memory_space<vmem>>, %arg6: memref<64x32xf32, #tpu.memory_space<vmem>>, %arg7: memref<64x32xf32, #tpu.memory_space<vmem>>, %arg8: memref<64x128xf32, #tpu.memory_space<vmem>>) attributes {dimension_semantics = [], scalar_prefetch = 0 : i64, scratch_operands = 3 : i64, tpu.core_type = #tpu.core_type<tc>} {
    %cst = arith.constant 0.000000e+00 : f32
    %0 = vector.broadcast %cst : f32 to vector<8x32xf32>
    %c0 = arith.constant 0 : index
    %c0_0 = arith.constant 0 : index
    %1 = vector.load %arg1[%c0, %c0_0] : memref<4x128xbf16, #tpu.memory_space<vmem>>, vector<4x128xbf16>
    %c0_1 = arith.constant 0 : index
    %c0_2 = arith.constant 0 : index
    %c0_3 = arith.constant 0 : index
    %2 = vector.load %arg3[%c0_1, %c0_2, %c0_3] : memref<8x32x128xbf16, #tpu.memory_space<vmem>>, vector<1x32x128xbf16>
    %3 = vector.shape_cast %2 : vector<1x32x128xbf16> to vector<32x128xbf16>
    %c0_4 = arith.constant 0 : index
    %c0_5 = arith.constant 0 : index
    %c0_6 = arith.constant 0 : index
    %4 = vector.load %arg4[%c0_4, %c0_5, %c0_6] : memref<8x1x128xf32, #tpu.memory_space<vmem>>, vector<1x1x128xf32>
    %5 = vector.shape_cast %4 : vector<1x1x128xf32> to vector<1x128xf32>
    %c0_7 = arith.constant 0 : index
    %c0_8 = arith.constant 0 : index
    %6 = vector.load %arg0[%c0_7, %c0_8] : memref<64x4xf32, #tpu.memory_space<vmem>>, vector<64x4xf32>
    %7 = arith.truncf %6 : vector<64x4xf32> to vector<64x4xbf16>
    %cst_9 = arith.constant dense<0.000000e+00> : vector<64x128xf32>
    %8 = tpu.matmul %7, %1, %cst_9 {dimension_numbers = #tpu.dot_dimension_numbers<[1], [0], [0], [1], [0, 0, 1, 1], [], []>} : vector<64x4xbf16>, vector<4x128xbf16>, vector<64x128xf32> -> vector<64x128xf32>
    %9 = vector.broadcast %5 : vector<1x128xf32> to vector<64x128xf32>
    %10 = arith.addf %8, %9 : vector<64x128xf32>
    %c0_10 = arith.constant 0 : index
    %c0_11 = arith.constant 0 : index
    %11 = vector.load %arg8[%c0_10, %c0_11] : memref<64x128xf32, #tpu.memory_space<vmem>>, vector<64x128xf32>
    tpu.vector_store %arg8[%c0_10, %c0_11], %10 {strides = array<i32>} : memref<64x128xf32, #tpu.memory_space<vmem>>, vector<64x128xf32>,
    %c0_i32 = arith.constant 0 : i32
    %c8_i32 = arith.constant 8 : i32
    %12 = arith.muli %c0_i32, %c8_i32 : i32
    %13 = tpu.assume_multiple %12, 8 : i32
    %14 = arith.index_cast %13 : i32 to index
    %c0_12 = arith.constant 0 : index
    %15 = vector.load %arg8[%14, %c0_12] : memref<64x128xf32, #tpu.memory_space<vmem>>, vector<8x128xf32>
    %16 = arith.truncf %0 : vector<8x32xf32> to vector<8x32xbf16>
    %cst_13 = arith.constant dense<0.000000e+00> : vector<8x128xf32>
    %17 = tpu.matmul %16, %3, %cst_13 {dimension_numbers = #tpu.dot_dimension_numbers<[1], [0], [0], [1], [0, 0, 1, 1], [], []>} : vector<8x32xbf16>, vector<32x128xbf16>, vector<8x128xf32> -> vector<8x128xf32>
    %18 = arith.addf %15, %17 : vector<8x128xf32>
    %19 = vector.extract_strided_slice %18 {offsets = [0, 0], sizes = [8, 96], strides = [1, 1]} : vector<8x128xf32> to vector<8x96xf32>
    %20 = arith.negf %19 : vector<8x96xf32>
    %21 = math.exp %20 : vector<8x96xf32>
    %cst_14 = arith.constant 1.000000e+00 : f32
    %22 = vector.broadcast %cst_14 : f32 to vector<8x96xf32>
    %23 = arith.addf %22, %21 : vector<8x96xf32>
    %24 = arith.divf %22, %23 : vector<8x96xf32>
    %25 = vector.extract_strided_slice %18 {offsets = [0, 96], sizes = [8, 32], strides = [1, 1]} : vector<8x128xf32> to vector<8x32xf32>
    %26 = math.tanh %25 : vector<8x32xf32>
    %27 = vector.extract_strided_slice %24 {offsets = [0, 0], sizes = [8, 32], strides = [1, 1]} : vector<8x96xf32> to vector<8x32xf32>
    %28 = vector.extract_strided_slice %24 {offsets = [0, 32], sizes = [8, 32], strides = [1, 1]} : vector<8x96xf32> to vector<8x32xf32>
    %29 = vector.extract_strided_slice %24 {offsets = [0, 64], sizes = [8, 32], strides = [1, 1]} : vector<8x96xf32> to vector<8x32xf32>
    %30 = arith.mulf %28, %0 : vector<8x32xf32>
    %31 = arith.mulf %27, %26 : vector<8x32xf32>
    %32 = arith.addf %30, %31 : vector<8x32xf32>
    %33 = math.tanh %32 : vector<8x32xf32>
    %34 = arith.mulf %29, %33 : vector<8x32xf32>
    %35 = arith.index_cast %13 : i32 to index
    %c0_15 = arith.constant 0 : index
    %36 = vector.load %arg6[%35, %c0_15] : memref<64x32xf32, #tpu.memory_space<vmem>>, vector<8x32xf32>
    tpu.vector_store %arg6[%35, %c0_15], %34 {strides = array<i32>} : memref<64x32xf32, #tpu.memory_space<vmem>>, vector<8x32xf32>,
    %c1_i32 = arith.constant 1 : i32
    %c8_i32_16 = arith.constant 8 : i32
    %37 = arith.muli %c1_i32, %c8_i32_16 : i32
    %38 = tpu.assume_multiple %37, 8 : i32
    %39 = arith.index_cast %38 : i32 to index
    %c0_17 = arith.constant 0 : index
    %40 = vector.load %arg8[%39, %c0_17] : memref<64x128xf32, #tpu.memory_space<vmem>>, vector<8x128xf32>
    %41 = arith.truncf %34 : vector<8x32xf32> to vector<8x32xbf16>
    %cst_18 = arith.constant dense<0.000000e+00> : vector<8x128xf32>
    %42 = tpu.matmul %41, %3, %cst_18 {dimension_numbers = #tpu.dot_dimension_numbers<[1], [0], [0], [1], [0, 0, 1, 1], [], []>} : vector<8x32xbf16>, vector<32x128xbf16>, vector<8x128xf32> -> vector<8x128xf32>
    %43 = arith.addf %40, %42 : vector<8x128xf32>
    %44 = vector.extract_strided_slice %43 {offsets = [0, 0], sizes = [8, 96], strides = [1, 1]} : vector<8x128xf32> to vector<8x96xf32>
    %45 = arith.negf %44 : vector<8x96xf32>
    %46 = math.exp %45 : vector<8x96xf32>
    %cst_19 = arith.constant 1.000000e+00 : f32
    %47 = vector.broadcast %cst_19 : f32 to vector<8x96xf32>
    %48 = arith.addf %47, %46 : vector<8x96xf32>
    %49 = arith.divf %47, %48 : vector<8x96xf32>
    %50 = vector.extract_strided_slice %43 {offsets = [0, 96], sizes = [8, 32], strides = [1, 1]} : vector<8x128xf32> to vector<8x32xf32>
    %51 = math.tanh %50 : vector<8x32xf32>
    %52 = vector.extract_strided_slice %49 {offsets = [0, 0], sizes = [8, 32], strides = [1, 1]} : vector<8x96xf32> to vector<8x32xf32>
    %53 = vector.extract_strided_slice %49 {offsets = [0, 32], sizes = [8, 32], strides = [1, 1]} : vector<8x96xf32> to vector<8x32xf32>
    %54 = vector.extract_strided_slice %49 {offsets = [0, 64], sizes = [8, 32], strides = [1, 1]} : vector<8x96xf32> to vector<8x32xf32>
    %55 = arith.mulf %53, %32 : vector<8x32xf32>
    %56 = arith.mulf %52, %51 : vector<8x32xf32>
    %57 = arith.addf %55, %56 : vector<8x32xf32>
    %58 = math.tanh %57 : vector<8x32xf32>
    %59 = arith.mulf %54, %58 : vector<8x32xf32>
    %60 = arith.index_cast %38 : i32 to index
    %c0_20 = arith.constant 0 : index
    %61 = vector.load %arg6[%60, %c0_20] : memref<64x32xf32, #tpu.memory_space<vmem>>, vector<8x32xf32>
    tpu.vector_store %arg6[%60, %c0_20], %59 {strides = array<i32>} : memref<64x32xf32, #tpu.memory_space<vmem>>, vector<8x32xf32>,
    %c2_i32 = arith.constant 2 : i32
    %c8_i32_21 = arith.constant 8 : i32
    %62 = arith.muli %c2_i32, %c8_i32_21 : i32
    %63 = tpu.assume_multiple %62, 8 : i32
    %64 = arith.index_cast %63 : i32 to index
    %c0_22 = arith.constant 0 : index
    %65 = vector.load %arg8[%64, %c0_22] : memref<64x128xf32, #tpu.memory_space<vmem>>, vector<8x128xf32>
    %66 = arith.truncf %59 : vector<8x32xf32> to vector<8x32xbf16>
    %cst_23 = arith.constant dense<0.000000e+00> : vector<8x128xf32>
    %67 = tpu.matmul %66, %3, %cst_23 {dimension_numbers = #tpu.dot_dimension_numbers<[1], [0], [0], [1], [0, 0, 1, 1], [], []>} : vector<8x32xbf16>, vector<32x128xbf16>, vector<8x128xf32> -> vector<8x128xf32>
    %68 = arith.addf %65, %67 : vector<8x128xf32>
    %69 = vector.extract_strided_slice %68 {offsets = [0, 0], sizes = [8, 96], strides = [1, 1]} : vector<8x128xf32> to vector<8x96xf32>
    %70 = arith.negf %69 : vector<8x96xf32>
    %71 = math.exp %70 : vector<8x96xf32>
    %cst_24 = arith.constant 1.000000e+00 : f32
    %72 = vector.broadcast %cst_24 : f32 to vector<8x96xf32>
    %73 = arith.addf %72, %71 : vector<8x96xf32>
    %74 = arith.divf %72, %73 : vector<8x96xf32>
    %75 = vector.extract_strided_slice %68 {offsets = [0, 96], sizes = [8, 32], strides = [1, 1]} : vector<8x128xf32> to vector<8x32xf32>
    %76 = math.tanh %75 : vector<8x32xf32>
    %77 = vector.extract_strided_slice %74 {offsets = [0, 0], sizes = [8, 32], strides = [1, 1]} : vector<8x96xf32> to vector<8x32xf32>
    %78 = vector.extract_strided_slice %74 {offsets = [0, 32], sizes = [8, 32], strides = [1, 1]} : vector<8x96xf32> to vector<8x32xf32>
    %79 = vector.extract_strided_slice %74 {offsets = [0, 64], sizes = [8, 32], strides = [1, 1]} : vector<8x96xf32> to vector<8x32xf32>
    %80 = arith.mulf %78, %57 : vector<8x32xf32>
    %81 = arith.mulf %77, %76 : vector<8x32xf32>
    %82 = arith.addf %80, %81 : vector<8x32xf32>
    %83 = math.tanh %82 : vector<8x32xf32>
    %84 = arith.mulf %79, %83 : vector<8x32xf32>
    %85 = arith.index_cast %63 : i32 to index
    %c0_25 = arith.constant 0 : index
    %86 = vector.load %arg6[%85, %c0_25] : memref<64x32xf32, #tpu.memory_space<vmem>>, vector<8x32xf32>
    tpu.vector_store %arg6[%85, %c0_25], %84 {strides = array<i32>} : memref<64x32xf32, #tpu.memory_space<vmem>>, vector<8x32xf32>,
    %c3_i32 = arith.constant 3 : i32
    %c8_i32_26 = arith.constant 8 : i32
    %87 = arith.muli %c3_i32, %c8_i32_26 : i32
    %88 = tpu.assume_multiple %87, 8 : i32
    %89 = arith.index_cast %88 : i32 to index
    %c0_27 = arith.constant 0 : index
    %90 = vector.load %arg8[%89, %c0_27] : memref<64x128xf32, #tpu.memory_space<vmem>>, vector<8x128xf32>
    %91 = arith.truncf %84 : vector<8x32xf32> to vector<8x32xbf16>
    %cst_28 = arith.constant dense<0.000000e+00> : vector<8x128xf32>
    %92 = tpu.matmul %91, %3, %cst_28 {dimension_numbers = #tpu.dot_dimension_numbers<[1], [0], [0], [1], [0, 0, 1, 1], [], []>} : vector<8x32xbf16>, vector<32x128xbf16>, vector<8x128xf32> -> vector<8x128xf32>
    %93 = arith.addf %90, %92 : vector<8x128xf32>
    %94 = vector.extract_strided_slice %93 {offsets = [0, 0], sizes = [8, 96], strides = [1, 1]} : vector<8x128xf32> to vector<8x96xf32>
    %95 = arith.negf %94 : vector<8x96xf32>
    %96 = math.exp %95 : vector<8x96xf32>
    %cst_29 = arith.constant 1.000000e+00 : f32
    %97 = vector.broadcast %cst_29 : f32 to vector<8x96xf32>
    %98 = arith.addf %97, %96 : vector<8x96xf32>
    %99 = arith.divf %97, %98 : vector<8x96xf32>
    %100 = vector.extract_strided_slice %93 {offsets = [0, 96], sizes = [8, 32], strides = [1, 1]} : vector<8x128xf32> to vector<8x32xf32>
    %101 = math.tanh %100 : vector<8x32xf32>
    %102 = vector.extract_strided_slice %99 {offsets = [0, 0], sizes = [8, 32], strides = [1, 1]} : vector<8x96xf32> to vector<8x32xf32>
    %103 = vector.extract_strided_slice %99 {offsets = [0, 32], sizes = [8, 32], strides = [1, 1]} : vector<8x96xf32> to vector<8x32xf32>
    %104 = vector.extract_strided_slice %99 {offsets = [0, 64], sizes = [8, 32], strides = [1, 1]} : vector<8x96xf32> to vector<8x32xf32>
    %105 = arith.mulf %103, %82 : vector<8x32xf32>
    %106 = arith.mulf %102, %101 : vector<8x32xf32>
    %107 = arith.addf %105, %106 : vector<8x32xf32>
    %108 = math.tanh %107 : vector<8x32xf32>
    %109 = arith.mulf %104, %108 : vector<8x32xf32>
    %110 = arith.index_cast %88 : i32 to index
    %c0_30 = arith.constant 0 : index
    %111 = vector.load %arg6[%110, %c0_30] : memref<64x32xf32, #tpu.memory_space<vmem>>, vector<8x32xf32>
    tpu.vector_store %arg6[%110, %c0_30], %109 {strides = array<i32>} : memref<64x32xf32, #tpu.memory_space<vmem>>, vector<8x32xf32>,
    %c4_i32 = arith.constant 4 : i32
    %c8_i32_31 = arith.constant 8 : i32
    %112 = arith.muli %c4_i32, %c8_i32_31 : i32
    %113 = tpu.assume_multiple %112, 8 : i32
    %114 = arith.index_cast %113 : i32 to index
    %c0_32 = arith.constant 0 : index
    %115 = vector.load %arg8[%114, %c0_32] : memref<64x128xf32, #tpu.memory_space<vmem>>, vector<8x128xf32>
    %116 = arith.truncf %109 : vector<8x32xf32> to vector<8x32xbf16>
    %cst_33 = arith.constant dense<0.000000e+00> : vector<8x128xf32>
    %117 = tpu.matmul %116, %3, %cst_33 {dimension_numbers = #tpu.dot_dimension_numbers<[1], [0], [0], [1], [0, 0, 1, 1], [], []>} : vector<8x32xbf16>, vector<32x128xbf16>, vector<8x128xf32> -> vector<8x128xf32>
    %118 = arith.addf %115, %117 : vector<8x128xf32>
    %119 = vector.extract_strided_slice %118 {offsets = [0, 0], sizes = [8, 96], strides = [1, 1]} : vector<8x128xf32> to vector<8x96xf32>
    %120 = arith.negf %119 : vector<8x96xf32>
    %121 = math.exp %120 : vector<8x96xf32>
    %cst_34 = arith.constant 1.000000e+00 : f32
    %122 = vector.broadcast %cst_34 : f32 to vector<8x96xf32>
    %123 = arith.addf %122, %121 : vector<8x96xf32>
    %124 = arith.divf %122, %123 : vector<8x96xf32>
    %125 = vector.extract_strided_slice %118 {offsets = [0, 96], sizes = [8, 32], strides = [1, 1]} : vector<8x128xf32> to vector<8x32xf32>
    %126 = math.tanh %125 : vector<8x32xf32>
    %127 = vector.extract_strided_slice %124 {offsets = [0, 0], sizes = [8, 32], strides = [1, 1]} : vector<8x96xf32> to vector<8x32xf32>
    %128 = vector.extract_strided_slice %124 {offsets = [0, 32], sizes = [8, 32], strides = [1, 1]} : vector<8x96xf32> to vector<8x32xf32>
    %129 = vector.extract_strided_slice %124 {offsets = [0, 64], sizes = [8, 32], strides = [1, 1]} : vector<8x96xf32> to vector<8x32xf32>
    %130 = arith.mulf %128, %107 : vector<8x32xf32>
    %131 = arith.mulf %127, %126 : vector<8x32xf32>
    %132 = arith.addf %130, %131 : vector<8x32xf32>
    %133 = math.tanh %132 : vector<8x32xf32>
    %134 = arith.mulf %129, %133 : vector<8x32xf32>
    %135 = arith.index_cast %113 : i32 to index
    %c0_35 = arith.constant 0 : index
    %136 = vector.load %arg6[%135, %c0_35] : memref<64x32xf32, #tpu.memory_space<vmem>>, vector<8x32xf32>
    tpu.vector_store %arg6[%135, %c0_35], %134 {strides = array<i32>} : memref<64x32xf32, #tpu.memory_space<vmem>>, vector<8x32xf32>,
    %c5_i32 = arith.constant 5 : i32
    %c8_i32_36 = arith.constant 8 : i32
    %137 = arith.muli %c5_i32, %c8_i32_36 : i32
    %138 = tpu.assume_multiple %137, 8 : i32
    %139 = arith.index_cast %138 : i32 to index
    %c0_37 = arith.constant 0 : index
    %140 = vector.load %arg8[%139, %c0_37] : memref<64x128xf32, #tpu.memory_space<vmem>>, vector<8x128xf32>
    %141 = arith.truncf %134 : vector<8x32xf32> to vector<8x32xbf16>
    %cst_38 = arith.constant dense<0.000000e+00> : vector<8x128xf32>
    %142 = tpu.matmul %141, %3, %cst_38 {dimension_numbers = #tpu.dot_dimension_numbers<[1], [0], [0], [1], [0, 0, 1, 1], [], []>} : vector<8x32xbf16>, vector<32x128xbf16>, vector<8x128xf32> -> vector<8x128xf32>
    %143 = arith.addf %140, %142 : vector<8x128xf32>
    %144 = vector.extract_strided_slice %143 {offsets = [0, 0], sizes = [8, 96], strides = [1, 1]} : vector<8x128xf32> to vector<8x96xf32>
    %145 = arith.negf %144 : vector<8x96xf32>
    %146 = math.exp %145 : vector<8x96xf32>
    %cst_39 = arith.constant 1.000000e+00 : f32
    %147 = vector.broadcast %cst_39 : f32 to vector<8x96xf32>
    %148 = arith.addf %147, %146 : vector<8x96xf32>
    %149 = arith.divf %147, %148 : vector<8x96xf32>
    %150 = vector.extract_strided_slice %143 {offsets = [0, 96], sizes = [8, 32], strides = [1, 1]} : vector<8x128xf32> to vector<8x32xf32>
    %151 = math.tanh %150 : vector<8x32xf32>
    %152 = vector.extract_strided_slice %149 {offsets = [0, 0], sizes = [8, 32], strides = [1, 1]} : vector<8x96xf32> to vector<8x32xf32>
    %153 = vector.extract_strided_slice %149 {offsets = [0, 32], sizes = [8, 32], strides = [1, 1]} : vector<8x96xf32> to vector<8x32xf32>
    %154 = vector.extract_strided_slice %149 {offsets = [0, 64], sizes = [8, 32], strides = [1, 1]} : vector<8x96xf32> to vector<8x32xf32>
    %155 = arith.mulf %153, %132 : vector<8x32xf32>
    %156 = arith.mulf %152, %151 : vector<8x32xf32>
    %157 = arith.addf %155, %156 : vector<8x32xf32>
    %158 = math.tanh %157 : vector<8x32xf32>
    %159 = arith.mulf %154, %158 : vector<8x32xf32>
    %160 = arith.index_cast %138 : i32 to index
    %c0_40 = arith.constant 0 : index
    %161 = vector.load %arg6[%160, %c0_40] : memref<64x32xf32, #tpu.memory_space<vmem>>, vector<8x32xf32>
    tpu.vector_store %arg6[%160, %c0_40], %159 {strides = array<i32>} : memref<64x32xf32, #tpu.memory_space<vmem>>, vector<8x32xf32>,
    %c6_i32 = arith.constant 6 : i32
    %c8_i32_41 = arith.constant 8 : i32
    %162 = arith.muli %c6_i32, %c8_i32_41 : i32
    %163 = tpu.assume_multiple %162, 8 : i32
    %164 = arith.index_cast %163 : i32 to index
    %c0_42 = arith.constant 0 : index
    %165 = vector.load %arg8[%164, %c0_42] : memref<64x128xf32, #tpu.memory_space<vmem>>, vector<8x128xf32>
    %166 = arith.truncf %159 : vector<8x32xf32> to vector<8x32xbf16>
    %cst_43 = arith.constant dense<0.000000e+00> : vector<8x128xf32>
    %167 = tpu.matmul %166, %3, %cst_43 {dimension_numbers = #tpu.dot_dimension_numbers<[1], [0], [0], [1], [0, 0, 1, 1], [], []>} : vector<8x32xbf16>, vector<32x128xbf16>, vector<8x128xf32> -> vector<8x128xf32>
    %168 = arith.addf %165, %167 : vector<8x128xf32>
    %169 = vector.extract_strided_slice %168 {offsets = [0, 0], sizes = [8, 96], strides = [1, 1]} : vector<8x128xf32> to vector<8x96xf32>
    %170 = arith.negf %169 : vector<8x96xf32>
    %171 = math.exp %170 : vector<8x96xf32>
    %cst_44 = arith.constant 1.000000e+00 : f32
    %172 = vector.broadcast %cst_44 : f32 to vector<8x96xf32>
    %173 = arith.addf %172, %171 : vector<8x96xf32>
    %174 = arith.divf %172, %173 : vector<8x96xf32>
    %175 = vector.extract_strided_slice %168 {offsets = [0, 96], sizes = [8, 32], strides = [1, 1]} : vector<8x128xf32> to vector<8x32xf32>
    %176 = math.tanh %175 : vector<8x32xf32>
    %177 = vector.extract_strided_slice %174 {offsets = [0, 0], sizes = [8, 32], strides = [1, 1]} : vector<8x96xf32> to vector<8x32xf32>
    %178 = vector.extract_strided_slice %174 {offsets = [0, 32], sizes = [8, 32], strides = [1, 1]} : vector<8x96xf32> to vector<8x32xf32>
    %179 = vector.extract_strided_slice %174 {offsets = [0, 64], sizes = [8, 32], strides = [1, 1]} : vector<8x96xf32> to vector<8x32xf32>
    %180 = arith.mulf %178, %157 : vector<8x32xf32>
    %181 = arith.mulf %177, %176 : vector<8x32xf32>
    %182 = arith.addf %180, %181 : vector<8x32xf32>
    %183 = math.tanh %182 : vector<8x32xf32>
    %184 = arith.mulf %179, %183 : vector<8x32xf32>
    %185 = arith.index_cast %163 : i32 to index
    %c0_45 = arith.constant 0 : index
    %186 = vector.load %arg6[%185, %c0_45] : memref<64x32xf32, #tpu.memory_space<vmem>>, vector<8x32xf32>
    tpu.vector_store %arg6[%185, %c0_45], %184 {strides = array<i32>} : memref<64x32xf32, #tpu.memory_space<vmem>>, vector<8x32xf32>,
    %c7_i32 = arith.constant 7 : i32
    %c8_i32_46 = arith.constant 8 : i32
    %187 = arith.muli %c7_i32, %c8_i32_46 : i32
    %188 = tpu.assume_multiple %187, 8 : i32
    %189 = arith.index_cast %188 : i32 to index
    %c0_47 = arith.constant 0 : index
    %190 = vector.load %arg8[%189, %c0_47] : memref<64x128xf32, #tpu.memory_space<vmem>>, vector<8x128xf32>
    %191 = arith.truncf %184 : vector<8x32xf32> to vector<8x32xbf16>
    %cst_48 = arith.constant dense<0.000000e+00> : vector<8x128xf32>
    %192 = tpu.matmul %191, %3, %cst_48 {dimension_numbers = #tpu.dot_dimension_numbers<[1], [0], [0], [1], [0, 0, 1, 1], [], []>} : vector<8x32xbf16>, vector<32x128xbf16>, vector<8x128xf32> -> vector<8x128xf32>
    %193 = arith.addf %190, %192 : vector<8x128xf32>
    %194 = vector.extract_strided_slice %193 {offsets = [0, 0], sizes = [8, 96], strides = [1, 1]} : vector<8x128xf32> to vector<8x96xf32>
    %195 = arith.negf %194 : vector<8x96xf32>
    %196 = math.exp %195 : vector<8x96xf32>
    %cst_49 = arith.constant 1.000000e+00 : f32
    %197 = vector.broadcast %cst_49 : f32 to vector<8x96xf32>
    %198 = arith.addf %197, %196 : vector<8x96xf32>
    %199 = arith.divf %197, %198 : vector<8x96xf32>
    %200 = vector.extract_strided_slice %193 {offsets = [0, 96], sizes = [8, 32], strides = [1, 1]} : vector<8x128xf32> to vector<8x32xf32>
    %201 = math.tanh %200 : vector<8x32xf32>
    %202 = vector.extract_strided_slice %199 {offsets = [0, 0], sizes = [8, 32], strides = [1, 1]} : vector<8x96xf32> to vector<8x32xf32>
    %203 = vector.extract_strided_slice %199 {offsets = [0, 32], sizes = [8, 32], strides = [1, 1]} : vector<8x96xf32> to vector<8x32xf32>
    %204 = vector.extract_strided_slice %199 {offsets = [0, 64], sizes = [8, 32], strides = [1, 1]} : vector<8x96xf32> to vector<8x32xf32>
    %205 = arith.mulf %203, %182 : vector<8x32xf32>
    %206 = arith.mulf %202, %201 : vector<8x32xf32>
    %207 = arith.addf %205, %206 : vector<8x32xf32>
    %208 = math.tanh %207 : vector<8x32xf32>
    %209 = arith.mulf %204, %208 : vector<8x32xf32>
    %210 = arith.index_cast %188 : i32 to index
    %c0_50 = arith.constant 0 : index
    %211 = vector.load %arg6[%210, %c0_50] : memref<64x32xf32, #tpu.memory_space<vmem>>, vector<8x32xf32>
    tpu.vector_store %arg6[%210, %c0_50], %209 {strides = array<i32>} : memref<64x32xf32, #tpu.memory_space<vmem>>, vector<8x32xf32>,
    %c8_i32_51 = arith.constant 8 : i32
    %c0_52 = arith.constant 0 : index
    %c0_53 = arith.constant 0 : index
    %c0_54 = arith.constant 0 : index
    %212 = vector.load %arg2[%c0_52, %c0_53, %c0_54] : memref<7x32x128xbf16, #tpu.memory_space<vmem>>, vector<1x32x128xbf16>
    %213 = vector.shape_cast %212 : vector<1x32x128xbf16> to vector<32x128xbf16>
    %c1 = arith.constant 1 : index
    %c0_55 = arith.constant 0 : index
    %c0_56 = arith.constant 0 : index
    %214 = vector.load %arg3[%c1, %c0_55, %c0_56] : memref<8x32x128xbf16, #tpu.memory_space<vmem>>, vector<1x32x128xbf16>
    %215 = vector.shape_cast %214 : vector<1x32x128xbf16> to vector<32x128xbf16>
    %c1_57 = arith.constant 1 : index
    %c0_58 = arith.constant 0 : index
    %c0_59 = arith.constant 0 : index
    %216 = vector.load %arg4[%c1_57, %c0_58, %c0_59] : memref<8x1x128xf32, #tpu.memory_space<vmem>>, vector<1x1x128xf32>
    %217 = vector.shape_cast %216 : vector<1x1x128xf32> to vector<1x128xf32>
    %c0_60 = arith.constant 0 : index
    %c0_61 = arith.constant 0 : index
    %218 = vector.load %arg6[%c0_60, %c0_61] : memref<64x32xf32, #tpu.memory_space<vmem>>, vector<64x32xf32>
    %219 = arith.truncf %218 : vector<64x32xf32> to vector<64x32xbf16>
    %cst_62 = arith.constant dense<0.000000e+00> : vector<64x128xf32>
    %220 = tpu.matmul %219, %213, %cst_62 {dimension_numbers = #tpu.dot_dimension_numbers<[1], [0], [0], [1], [0, 0, 1, 1], [], []>} : vector<64x32xbf16>, vector<32x128xbf16>, vector<64x128xf32> -> vector<64x128xf32>
    %221 = vector.broadcast %217 : vector<1x128xf32> to vector<64x128xf32>
    %222 = arith.addf %220, %221 : vector<64x128xf32>
    %c0_63 = arith.constant 0 : index
    %c0_64 = arith.constant 0 : index
    %223 = vector.load %arg8[%c0_63, %c0_64] : memref<64x128xf32, #tpu.memory_space<vmem>>, vector<64x128xf32>
    tpu.vector_store %arg8[%c0_63, %c0_64], %222 {strides = array<i32>} : memref<64x128xf32, #tpu.memory_space<vmem>>, vector<64x128xf32>,
    %c0_i32_65 = arith.constant 0 : i32
    %c8_i32_66 = arith.constant 8 : i32
    %224 = arith.muli %c0_i32_65, %c8_i32_66 : i32
    %225 = tpu.assume_multiple %224, 8 : i32
    %226 = arith.index_cast %225 : i32 to index
    %c0_67 = arith.constant 0 : index
    %227 = vector.load %arg8[%226, %c0_67] : memref<64x128xf32, #tpu.memory_space<vmem>>, vector<8x128xf32>
    %228 = arith.truncf %209 : vector<8x32xf32> to vector<8x32xbf16>
    %cst_68 = arith.constant dense<0.000000e+00> : vector<8x128xf32>
    %229 = tpu.matmul %228, %215, %cst_68 {dimension_numbers = #tpu.dot_dimension_numbers<[1], [0], [0], [1], [0, 0, 1, 1], [], []>} : vector<8x32xbf16>, vector<32x128xbf16>, vector<8x128xf32> -> vector<8x128xf32>
    %230 = arith.addf %227, %229 : vector<8x128xf32>
    %231 = vector.extract_strided_slice %230 {offsets = [0, 0], sizes = [8, 96], strides = [1, 1]} : vector<8x128xf32> to vector<8x96xf32>
    %232 = arith.negf %231 : vector<8x96xf32>
    %233 = math.exp %232 : vector<8x96xf32>
    %cst_69 = arith.constant 1.000000e+00 : f32
    %234 = vector.broadcast %cst_69 : f32 to vector<8x96xf32>
    %235 = arith.addf %234, %233 : vector<8x96xf32>
    %236 = arith.divf %234, %235 : vector<8x96xf32>
    %237 = vector.extract_strided_slice %230 {offsets = [0, 96], sizes = [8, 32], strides = [1, 1]} : vector<8x128xf32> to vector<8x32xf32>
    %238 = math.tanh %237 : vector<8x32xf32>
    %239 = vector.extract_strided_slice %236 {offsets = [0, 0], sizes = [8, 32], strides = [1, 1]} : vector<8x96xf32> to vector<8x32xf32>
    %240 = vector.extract_strided_slice %236 {offsets = [0, 32], sizes = [8, 32], strides = [1, 1]} : vector<8x96xf32> to vector<8x32xf32>
    %241 = vector.extract_strided_slice %236 {offsets = [0, 64], sizes = [8, 32], strides = [1, 1]} : vector<8x96xf32> to vector<8x32xf32>
    %242 = arith.mulf %240, %207 : vector<8x32xf32>
    %243 = arith.mulf %239, %238 : vector<8x32xf32>
    %244 = arith.addf %242, %243 : vector<8x32xf32>
    %245 = math.tanh %244 : vector<8x32xf32>
    %246 = arith.mulf %241, %245 : vector<8x32xf32>
    %247 = arith.index_cast %225 : i32 to index
    %c0_70 = arith.constant 0 : index
    %248 = vector.load %arg7[%247, %c0_70] : memref<64x32xf32, #tpu.memory_space<vmem>>, vector<8x32xf32>
    tpu.vector_store %arg7[%247, %c0_70], %246 {strides = array<i32>} : memref<64x32xf32, #tpu.memory_space<vmem>>, vector<8x32xf32>,
    %c1_i32_71 = arith.constant 1 : i32
    %c8_i32_72 = arith.constant 8 : i32
    %249 = arith.muli %c1_i32_71, %c8_i32_72 : i32
    %250 = tpu.assume_multiple %249, 8 : i32
    %251 = arith.index_cast %250 : i32 to index
    %c0_73 = arith.constant 0 : index
    %252 = vector.load %arg8[%251, %c0_73] : memref<64x128xf32, #tpu.memory_space<vmem>>, vector<8x128xf32>
    %253 = arith.truncf %246 : vector<8x32xf32> to vector<8x32xbf16>
    %cst_74 = arith.constant dense<0.000000e+00> : vector<8x128xf32>
    %254 = tpu.matmul %253, %215, %cst_74 {dimension_numbers = #tpu.dot_dimension_numbers<[1], [0], [0], [1], [0, 0, 1, 1], [], []>} : vector<8x32xbf16>, vector<32x128xbf16>, vector<8x128xf32> -> vector<8x128xf32>
    %255 = arith.addf %252, %254 : vector<8x128xf32>
    %256 = vector.extract_strided_slice %255 {offsets = [0, 0], sizes = [8, 96], strides = [1, 1]} : vector<8x128xf32> to vector<8x96xf32>
    %257 = arith.negf %256 : vector<8x96xf32>
    %258 = math.exp %257 : vector<8x96xf32>
    %cst_75 = arith.constant 1.000000e+00 : f32
    %259 = vector.broadcast %cst_75 : f32 to vector<8x96xf32>
    %260 = arith.addf %259, %258 : vector<8x96xf32>
    %261 = arith.divf %259, %260 : vector<8x96xf32>
    %262 = vector.extract_strided_slice %255 {offsets = [0, 96], sizes = [8, 32], strides = [1, 1]} : vector<8x128xf32> to vector<8x32xf32>
    %263 = math.tanh %262 : vector<8x32xf32>
    %264 = vector.extract_strided_slice %261 {offsets = [0, 0], sizes = [8, 32], strides = [1, 1]} : vector<8x96xf32> to vector<8x32xf32>
    %265 = vector.extract_strided_slice %261 {offsets = [0, 32], sizes = [8, 32], strides = [1, 1]} : vector<8x96xf32> to vector<8x32xf32>
    %266 = vector.extract_strided_slice %261 {offsets = [0, 64], sizes = [8, 32], strides = [1, 1]} : vector<8x96xf32> to vector<8x32xf32>
    %267 = arith.mulf %265, %244 : vector<8x32xf32>
    %268 = arith.mulf %264, %263 : vector<8x32xf32>
    %269 = arith.addf %267, %268 : vector<8x32xf32>
    %270 = math.tanh %269 : vector<8x32xf32>
    %271 = arith.mulf %266, %270 : vector<8x32xf32>
    %272 = arith.index_cast %250 : i32 to index
    %c0_76 = arith.constant 0 : index
    %273 = vector.load %arg7[%272, %c0_76] : memref<64x32xf32, #tpu.memory_space<vmem>>, vector<8x32xf32>
    tpu.vector_store %arg7[%272, %c0_76], %271 {strides = array<i32>} : memref<64x32xf32, #tpu.memory_space<vmem>>, vector<8x32xf32>,
    %c2_i32_77 = arith.constant 2 : i32
    %c8_i32_78 = arith.constant 8 : i32
    %274 = arith.muli %c2_i32_77, %c8_i32_78 : i32
    %275 = tpu.assume_multiple %274, 8 : i32
    %276 = arith.index_cast %275 : i32 to index
    %c0_79 = arith.constant 0 : index
    %277 = vector.load %arg8[%276, %c0_79] : memref<64x128xf32, #tpu.memory_space<vmem>>, vector<8x128xf32>
    %278 = arith.truncf %271 : vector<8x32xf32> to vector<8x32xbf16>
    %cst_80 = arith.constant dense<0.000000e+00> : vector<8x128xf32>
    %279 = tpu.matmul %278, %215, %cst_80 {dimension_numbers = #tpu.dot_dimension_numbers<[1], [0], [0], [1], [0, 0, 1, 1], [], []>} : vector<8x32xbf16>, vector<32x128xbf16>, vector<8x128xf32> -> vector<8x128xf32>
    %280 = arith.addf %277, %279 : vector<8x128xf32>
    %281 = vector.extract_strided_slice %280 {offsets = [0, 0], sizes = [8, 96], strides = [1, 1]} : vector<8x128xf32> to vector<8x96xf32>
    %282 = arith.negf %281 : vector<8x96xf32>
    %283 = math.exp %282 : vector<8x96xf32>
    %cst_81 = arith.constant 1.000000e+00 : f32
    %284 = vector.broadcast %cst_81 : f32 to vector<8x96xf32>
    %285 = arith.addf %284, %283 : vector<8x96xf32>
    %286 = arith.divf %284, %285 : vector<8x96xf32>
    %287 = vector.extract_strided_slice %280 {offsets = [0, 96], sizes = [8, 32], strides = [1, 1]} : vector<8x128xf32> to vector<8x32xf32>
    %288 = math.tanh %287 : vector<8x32xf32>
    %289 = vector.extract_strided_slice %286 {offsets = [0, 0], sizes = [8, 32], strides = [1, 1]} : vector<8x96xf32> to vector<8x32xf32>
    %290 = vector.extract_strided_slice %286 {offsets = [0, 32], sizes = [8, 32], strides = [1, 1]} : vector<8x96xf32> to vector<8x32xf32>
    %291 = vector.extract_strided_slice %286 {offsets = [0, 64], sizes = [8, 32], strides = [1, 1]} : vector<8x96xf32> to vector<8x32xf32>
    %292 = arith.mulf %290, %269 : vector<8x32xf32>
    %293 = arith.mulf %289, %288 : vector<8x32xf32>
    %294 = arith.addf %292, %293 : vector<8x32xf32>
    %295 = math.tanh %294 : vector<8x32xf32>
    %296 = arith.mulf %291, %295 : vector<8x32xf32>
    %297 = arith.index_cast %275 : i32 to index
    %c0_82 = arith.constant 0 : index
    %298 = vector.load %arg7[%297, %c0_82] : memref<64x32xf32, #tpu.memory_space<vmem>>, vector<8x32xf32>
    tpu.vector_store %arg7[%297, %c0_82], %296 {strides = array<i32>} : memref<64x32xf32, #tpu.memory_space<vmem>>, vector<8x32xf32>,
    %c3_i32_83 = arith.constant 3 : i32
    %c8_i32_84 = arith.constant 8 : i32
    %299 = arith.muli %c3_i32_83, %c8_i32_84 : i32
    %300 = tpu.assume_multiple %299, 8 : i32
    %301 = arith.index_cast %300 : i32 to index
    %c0_85 = arith.constant 0 : index
    %302 = vector.load %arg8[%301, %c0_85] : memref<64x128xf32, #tpu.memory_space<vmem>>, vector<8x128xf32>
    %303 = arith.truncf %296 : vector<8x32xf32> to vector<8x32xbf16>
    %cst_86 = arith.constant dense<0.000000e+00> : vector<8x128xf32>
    %304 = tpu.matmul %303, %215, %cst_86 {dimension_numbers = #tpu.dot_dimension_numbers<[1], [0], [0], [1], [0, 0, 1, 1], [], []>} : vector<8x32xbf16>, vector<32x128xbf16>, vector<8x128xf32> -> vector<8x128xf32>
    %305 = arith.addf %302, %304 : vector<8x128xf32>
    %306 = vector.extract_strided_slice %305 {offsets = [0, 0], sizes = [8, 96], strides = [1, 1]} : vector<8x128xf32> to vector<8x96xf32>
    %307 = arith.negf %306 : vector<8x96xf32>
    %308 = math.exp %307 : vector<8x96xf32>
    %cst_87 = arith.constant 1.000000e+00 : f32
    %309 = vector.broadcast %cst_87 : f32 to vector<8x96xf32>
    %310 = arith.addf %309, %308 : vector<8x96xf32>
    %311 = arith.divf %309, %310 : vector<8x96xf32>
    %312 = vector.extract_strided_slice %305 {offsets = [0, 96], sizes = [8, 32], strides = [1, 1]} : vector<8x128xf32> to vector<8x32xf32>
    %313 = math.tanh %312 : vector<8x32xf32>
    %314 = vector.extract_strided_slice %311 {offsets = [0, 0], sizes = [8, 32], strides = [1, 1]} : vector<8x96xf32> to vector<8x32xf32>
    %315 = vector.extract_strided_slice %311 {offsets = [0, 32], sizes = [8, 32], strides = [1, 1]} : vector<8x96xf32> to vector<8x32xf32>
    %316 = vector.extract_strided_slice %311 {offsets = [0, 64], sizes = [8, 32], strides = [1, 1]} : vector<8x96xf32> to vector<8x32xf32>
    %317 = arith.mulf %315, %294 : vector<8x32xf32>
    %318 = arith.mulf %314, %313 : vector<8x32xf32>
    %319 = arith.addf %317, %318 : vector<8x32xf32>
    %320 = math.tanh %319 : vector<8x32xf32>
    %321 = arith.mulf %316, %320 : vector<8x32xf32>
    %322 = arith.index_cast %300 : i32 to index
    %c0_88 = arith.constant 0 : index
    %323 = vector.load %arg7[%322, %c0_88] : memref<64x32xf32, #tpu.memory_space<vmem>>, vector<8x32xf32>
    tpu.vector_store %arg7[%322, %c0_88], %321 {strides = array<i32>} : memref<64x32xf32, #tpu.memory_space<vmem>>, vector<8x32xf32>,
    %c4_i32_89 = arith.constant 4 : i32
    %c8_i32_90 = arith.constant 8 : i32
    %324 = arith.muli %c4_i32_89, %c8_i32_90 : i32
    %325 = tpu.assume_multiple %324, 8 : i32
    %326 = arith.index_cast %325 : i32 to index
    %c0_91 = arith.constant 0 : index
    %327 = vector.load %arg8[%326, %c0_91] : memref<64x128xf32, #tpu.memory_space<vmem>>, vector<8x128xf32>
    %328 = arith.truncf %321 : vector<8x32xf32> to vector<8x32xbf16>
    %cst_92 = arith.constant dense<0.000000e+00> : vector<8x128xf32>
    %329 = tpu.matmul %328, %215, %cst_92 {dimension_numbers = #tpu.dot_dimension_numbers<[1], [0], [0], [1], [0, 0, 1, 1], [], []>} : vector<8x32xbf16>, vector<32x128xbf16>, vector<8x128xf32> -> vector<8x128xf32>
    %330 = arith.addf %327, %329 : vector<8x128xf32>
    %331 = vector.extract_strided_slice %330 {offsets = [0, 0], sizes = [8, 96], strides = [1, 1]} : vector<8x128xf32> to vector<8x96xf32>
    %332 = arith.negf %331 : vector<8x96xf32>
    %333 = math.exp %332 : vector<8x96xf32>
    %cst_93 = arith.constant 1.000000e+00 : f32
    %334 = vector.broadcast %cst_93 : f32 to vector<8x96xf32>
    %335 = arith.addf %334, %333 : vector<8x96xf32>
    %336 = arith.divf %334, %335 : vector<8x96xf32>
    %337 = vector.extract_strided_slice %330 {offsets = [0, 96], sizes = [8, 32], strides = [1, 1]} : vector<8x128xf32> to vector<8x32xf32>
    %338 = math.tanh %337 : vector<8x32xf32>
    %339 = vector.extract_strided_slice %336 {offsets = [0, 0], sizes = [8, 32], strides = [1, 1]} : vector<8x96xf32> to vector<8x32xf32>
    %340 = vector.extract_strided_slice %336 {offsets = [0, 32], sizes = [8, 32], strides = [1, 1]} : vector<8x96xf32> to vector<8x32xf32>
    %341 = vector.extract_strided_slice %336 {offsets = [0, 64], sizes = [8, 32], strides = [1, 1]} : vector<8x96xf32> to vector<8x32xf32>
    %342 = arith.mulf %340, %319 : vector<8x32xf32>
    %343 = arith.mulf %339, %338 : vector<8x32xf32>
    %344 = arith.addf %342, %343 : vector<8x32xf32>
    %345 = math.tanh %344 : vector<8x32xf32>
    %346 = arith.mulf %341, %345 : vector<8x32xf32>
    %347 = arith.index_cast %325 : i32 to index
    %c0_94 = arith.constant 0 : index
    %348 = vector.load %arg7[%347, %c0_94] : memref<64x32xf32, #tpu.memory_space<vmem>>, vector<8x32xf32>
    tpu.vector_store %arg7[%347, %c0_94], %346 {strides = array<i32>} : memref<64x32xf32, #tpu.memory_space<vmem>>, vector<8x32xf32>,
    %c5_i32_95 = arith.constant 5 : i32
    %c8_i32_96 = arith.constant 8 : i32
    %349 = arith.muli %c5_i32_95, %c8_i32_96 : i32
    %350 = tpu.assume_multiple %349, 8 : i32
    %351 = arith.index_cast %350 : i32 to index
    %c0_97 = arith.constant 0 : index
    %352 = vector.load %arg8[%351, %c0_97] : memref<64x128xf32, #tpu.memory_space<vmem>>, vector<8x128xf32>
    %353 = arith.truncf %346 : vector<8x32xf32> to vector<8x32xbf16>
    %cst_98 = arith.constant dense<0.000000e+00> : vector<8x128xf32>
    %354 = tpu.matmul %353, %215, %cst_98 {dimension_numbers = #tpu.dot_dimension_numbers<[1], [0], [0], [1], [0, 0, 1, 1], [], []>} : vector<8x32xbf16>, vector<32x128xbf16>, vector<8x128xf32> -> vector<8x128xf32>
    %355 = arith.addf %352, %354 : vector<8x128xf32>
    %356 = vector.extract_strided_slice %355 {offsets = [0, 0], sizes = [8, 96], strides = [1, 1]} : vector<8x128xf32> to vector<8x96xf32>
    %357 = arith.negf %356 : vector<8x96xf32>
    %358 = math.exp %357 : vector<8x96xf32>
    %cst_99 = arith.constant 1.000000e+00 : f32
    %359 = vector.broadcast %cst_99 : f32 to vector<8x96xf32>
    %360 = arith.addf %359, %358 : vector<8x96xf32>
    %361 = arith.divf %359, %360 : vector<8x96xf32>
    %362 = vector.extract_strided_slice %355 {offsets = [0, 96], sizes = [8, 32], strides = [1, 1]} : vector<8x128xf32> to vector<8x32xf32>
    %363 = math.tanh %362 : vector<8x32xf32>
    %364 = vector.extract_strided_slice %361 {offsets = [0, 0], sizes = [8, 32], strides = [1, 1]} : vector<8x96xf32> to vector<8x32xf32>
    %365 = vector.extract_strided_slice %361 {offsets = [0, 32], sizes = [8, 32], strides = [1, 1]} : vector<8x96xf32> to vector<8x32xf32>
    %366 = vector.extract_strided_slice %361 {offsets = [0, 64], sizes = [8, 32], strides = [1, 1]} : vector<8x96xf32> to vector<8x32xf32>
    %367 = arith.mulf %365, %344 : vector<8x32xf32>
    %368 = arith.mulf %364, %363 : vector<8x32xf32>
    %369 = arith.addf %367, %368 : vector<8x32xf32>
    %370 = math.tanh %369 : vector<8x32xf32>
    %371 = arith.mulf %366, %370 : vector<8x32xf32>
    %372 = arith.index_cast %350 : i32 to index
    %c0_100 = arith.constant 0 : index
    %373 = vector.load %arg7[%372, %c0_100] : memref<64x32xf32, #tpu.memory_space<vmem>>, vector<8x32xf32>
    tpu.vector_store %arg7[%372, %c0_100], %371 {strides = array<i32>} : memref<64x32xf32, #tpu.memory_space<vmem>>, vector<8x32xf32>,
    %c6_i32_101 = arith.constant 6 : i32
    %c8_i32_102 = arith.constant 8 : i32
    %374 = arith.muli %c6_i32_101, %c8_i32_102 : i32
    %375 = tpu.assume_multiple %374, 8 : i32
    %376 = arith.index_cast %375 : i32 to index
    %c0_103 = arith.constant 0 : index
    %377 = vector.load %arg8[%376, %c0_103] : memref<64x128xf32, #tpu.memory_space<vmem>>, vector<8x128xf32>
    %378 = arith.truncf %371 : vector<8x32xf32> to vector<8x32xbf16>
    %cst_104 = arith.constant dense<0.000000e+00> : vector<8x128xf32>
    %379 = tpu.matmul %378, %215, %cst_104 {dimension_numbers = #tpu.dot_dimension_numbers<[1], [0], [0], [1], [0, 0, 1, 1], [], []>} : vector<8x32xbf16>, vector<32x128xbf16>, vector<8x128xf32> -> vector<8x128xf32>
    %380 = arith.addf %377, %379 : vector<8x128xf32>
    %381 = vector.extract_strided_slice %380 {offsets = [0, 0], sizes = [8, 96], strides = [1, 1]} : vector<8x128xf32> to vector<8x96xf32>
    %382 = arith.negf %381 : vector<8x96xf32>
    %383 = math.exp %382 : vector<8x96xf32>
    %cst_105 = arith.constant 1.000000e+00 : f32
    %384 = vector.broadcast %cst_105 : f32 to vector<8x96xf32>
    %385 = arith.addf %384, %383 : vector<8x96xf32>
    %386 = arith.divf %384, %385 : vector<8x96xf32>
    %387 = vector.extract_strided_slice %380 {offsets = [0, 96], sizes = [8, 32], strides = [1, 1]} : vector<8x128xf32> to vector<8x32xf32>
    %388 = math.tanh %387 : vector<8x32xf32>
    %389 = vector.extract_strided_slice %386 {offsets = [0, 0], sizes = [8, 32], strides = [1, 1]} : vector<8x96xf32> to vector<8x32xf32>
    %390 = vector.extract_strided_slice %386 {offsets = [0, 32], sizes = [8, 32], strides = [1, 1]} : vector<8x96xf32> to vector<8x32xf32>
    %391 = vector.extract_strided_slice %386 {offsets = [0, 64], sizes = [8, 32], strides = [1, 1]} : vector<8x96xf32> to vector<8x32xf32>
    %392 = arith.mulf %390, %369 : vector<8x32xf32>
    %393 = arith.mulf %389, %388 : vector<8x32xf32>
    %394 = arith.addf %392, %393 : vector<8x32xf32>
    %395 = math.tanh %394 : vector<8x32xf32>
    %396 = arith.mulf %391, %395 : vector<8x32xf32>
    %397 = arith.index_cast %375 : i32 to index
    %c0_106 = arith.constant 0 : index
    %398 = vector.load %arg7[%397, %c0_106] : memref<64x32xf32, #tpu.memory_space<vmem>>, vector<8x32xf32>
    tpu.vector_store %arg7[%397, %c0_106], %396 {strides = array<i32>} : memref<64x32xf32, #tpu.memory_space<vmem>>, vector<8x32xf32>,
    %c7_i32_107 = arith.constant 7 : i32
    %c8_i32_108 = arith.constant 8 : i32
    %399 = arith.muli %c7_i32_107, %c8_i32_108 : i32
    %400 = tpu.assume_multiple %399, 8 : i32
    %401 = arith.index_cast %400 : i32 to index
    %c0_109 = arith.constant 0 : index
    %402 = vector.load %arg8[%401, %c0_109] : memref<64x128xf32, #tpu.memory_space<vmem>>, vector<8x128xf32>
    %403 = arith.truncf %396 : vector<8x32xf32> to vector<8x32xbf16>
    %cst_110 = arith.constant dense<0.000000e+00> : vector<8x128xf32>
    %404 = tpu.matmul %403, %215, %cst_110 {dimension_numbers = #tpu.dot_dimension_numbers<[1], [0], [0], [1], [0, 0, 1, 1], [], []>} : vector<8x32xbf16>, vector<32x128xbf16>, vector<8x128xf32> -> vector<8x128xf32>
    %405 = arith.addf %402, %404 : vector<8x128xf32>
    %406 = vector.extract_strided_slice %405 {offsets = [0, 0], sizes = [8, 96], strides = [1, 1]} : vector<8x128xf32> to vector<8x96xf32>
    %407 = arith.negf %406 : vector<8x96xf32>
    %408 = math.exp %407 : vector<8x96xf32>
    %cst_111 = arith.constant 1.000000e+00 : f32
    %409 = vector.broadcast %cst_111 : f32 to vector<8x96xf32>
    %410 = arith.addf %409, %408 : vector<8x96xf32>
    %411 = arith.divf %409, %410 : vector<8x96xf32>
    %412 = vector.extract_strided_slice %405 {offsets = [0, 96], sizes = [8, 32], strides = [1, 1]} : vector<8x128xf32> to vector<8x32xf32>
    %413 = math.tanh %412 : vector<8x32xf32>
    %414 = vector.extract_strided_slice %411 {offsets = [0, 0], sizes = [8, 32], strides = [1, 1]} : vector<8x96xf32> to vector<8x32xf32>
    %415 = vector.extract_strided_slice %411 {offsets = [0, 32], sizes = [8, 32], strides = [1, 1]} : vector<8x96xf32> to vector<8x32xf32>
    %416 = vector.extract_strided_slice %411 {offsets = [0, 64], sizes = [8, 32], strides = [1, 1]} : vector<8x96xf32> to vector<8x32xf32>
    %417 = arith.mulf %415, %394 : vector<8x32xf32>
    %418 = arith.mulf %414, %413 : vector<8x32xf32>
    %419 = arith.addf %417, %418 : vector<8x32xf32>
    %420 = math.tanh %419 : vector<8x32xf32>
    %421 = arith.mulf %416, %420 : vector<8x32xf32>
    %422 = arith.index_cast %400 : i32 to index
    %c0_112 = arith.constant 0 : index
    %423 = vector.load %arg7[%422, %c0_112] : memref<64x32xf32, #tpu.memory_space<vmem>>, vector<8x32xf32>
    tpu.vector_store %arg7[%422, %c0_112], %421 {strides = array<i32>} : memref<64x32xf32, #tpu.memory_space<vmem>>, vector<8x32xf32>,
    %c8_i32_113 = arith.constant 8 : i32
    %c1_114 = arith.constant 1 : index
    %c0_115 = arith.constant 0 : index
    %c0_116 = arith.constant 0 : index
    %424 = vector.load %arg2[%c1_114, %c0_115, %c0_116] : memref<7x32x128xbf16, #tpu.memory_space<vmem>>, vector<1x32x128xbf16>
    %425 = vector.shape_cast %424 : vector<1x32x128xbf16> to vector<32x128xbf16>
    %c2 = arith.constant 2 : index
    %c0_117 = arith.constant 0 : index
    %c0_118 = arith.constant 0 : index
    %426 = vector.load %arg3[%c2, %c0_117, %c0_118] : memref<8x32x128xbf16, #tpu.memory_space<vmem>>, vector<1x32x128xbf16>
    %427 = vector.shape_cast %426 : vector<1x32x128xbf16> to vector<32x128xbf16>
    %c2_119 = arith.constant 2 : index
    %c0_120 = arith.constant 0 : index
    %c0_121 = arith.constant 0 : index
    %428 = vector.load %arg4[%c2_119, %c0_120, %c0_121] : memref<8x1x128xf32, #tpu.memory_space<vmem>>, vector<1x1x128xf32>
    %429 = vector.shape_cast %428 : vector<1x1x128xf32> to vector<1x128xf32>
    %c0_122 = arith.constant 0 : index
    %c0_123 = arith.constant 0 : index
    %430 = vector.load %arg7[%c0_122, %c0_123] : memref<64x32xf32, #tpu.memory_space<vmem>>, vector<64x32xf32>
    %431 = arith.truncf %430 : vector<64x32xf32> to vector<64x32xbf16>
    %cst_124 = arith.constant dense<0.000000e+00> : vector<64x128xf32>
    %432 = tpu.matmul %431, %425, %cst_124 {dimension_numbers = #tpu.dot_dimension_numbers<[1], [0], [0], [1], [0, 0, 1, 1], [], []>} : vector<64x32xbf16>, vector<32x128xbf16>, vector<64x128xf32> -> vector<64x128xf32>
    %433 = vector.broadcast %429 : vector<1x128xf32> to vector<64x128xf32>
    %434 = arith.addf %432, %433 : vector<64x128xf32>
    %c0_125 = arith.constant 0 : index
    %c0_126 = arith.constant 0 : index
    %435 = vector.load %arg8[%c0_125, %c0_126] : memref<64x128xf32, #tpu.memory_space<vmem>>, vector<64x128xf32>
    tpu.vector_store %arg8[%c0_125, %c0_126], %434 {strides = array<i32>} : memref<64x128xf32, #tpu.memory_space<vmem>>, vector<64x128xf32>,
    %c0_i32_127 = arith.constant 0 : i32
    %c8_i32_128 = arith.constant 8 : i32
    %436 = arith.muli %c0_i32_127, %c8_i32_128 : i32
    %437 = tpu.assume_multiple %436, 8 : i32
    %438 = arith.index_cast %437 : i32 to index
    %c0_129 = arith.constant 0 : index
    %439 = vector.load %arg8[%438, %c0_129] : memref<64x128xf32, #tpu.memory_space<vmem>>, vector<8x128xf32>
    %440 = arith.truncf %421 : vector<8x32xf32> to vector<8x32xbf16>
    %cst_130 = arith.constant dense<0.000000e+00> : vector<8x128xf32>
    %441 = tpu.matmul %440, %427, %cst_130 {dimension_numbers = #tpu.dot_dimension_numbers<[1], [0], [0], [1], [0, 0, 1, 1], [], []>} : vector<8x32xbf16>, vector<32x128xbf16>, vector<8x128xf32> -> vector<8x128xf32>
    %442 = arith.addf %439, %441 : vector<8x128xf32>
    %443 = vector.extract_strided_slice %442 {offsets = [0, 0], sizes = [8, 96], strides = [1, 1]} : vector<8x128xf32> to vector<8x96xf32>
    %444 = arith.negf %443 : vector<8x96xf32>
    %445 = math.exp %444 : vector<8x96xf32>
    %cst_131 = arith.constant 1.000000e+00 : f32
    %446 = vector.broadcast %cst_131 : f32 to vector<8x96xf32>
    %447 = arith.addf %446, %445 : vector<8x96xf32>
    %448 = arith.divf %446, %447 : vector<8x96xf32>
    %449 = vector.extract_strided_slice %442 {offsets = [0, 96], sizes = [8, 32], strides = [1, 1]} : vector<8x128xf32> to vector<8x32xf32>
    %450 = math.tanh %449 : vector<8x32xf32>
    %451 = vector.extract_strided_slice %448 {offsets = [0, 0], sizes = [8, 32], strides = [1, 1]} : vector<8x96xf32> to vector<8x32xf32>
    %452 = vector.extract_strided_slice %448 {offsets = [0, 32], sizes = [8, 32], strides = [1, 1]} : vector<8x96xf32> to vector<8x32xf32>
    %453 = vector.extract_strided_slice %448 {offsets = [0, 64], sizes = [8, 32], strides = [1, 1]} : vector<8x96xf32> to vector<8x32xf32>
    %454 = arith.mulf %452, %419 : vector<8x32xf32>
    %455 = arith.mulf %451, %450 : vector<8x32xf32>
    %456 = arith.addf %454, %455 : vector<8x32xf32>
    %457 = math.tanh %456 : vector<8x32xf32>
    %458 = arith.mulf %453, %457 : vector<8x32xf32>
    %459 = arith.index_cast %437 : i32 to index
    %c0_132 = arith.constant 0 : index
    %460 = vector.load %arg6[%459, %c0_132] : memref<64x32xf32, #tpu.memory_space<vmem>>, vector<8x32xf32>
    %461 = arith.addf %460, %458 : vector<8x32xf32>
    %462 = arith.index_cast %437 : i32 to index
    %c0_133 = arith.constant 0 : index
    %463 = vector.load %arg6[%462, %c0_133] : memref<64x32xf32, #tpu.memory_space<vmem>>, vector<8x32xf32>
    tpu.vector_store %arg6[%462, %c0_133], %461 {strides = array<i32>} : memref<64x32xf32, #tpu.memory_space<vmem>>, vector<8x32xf32>,
    %c1_i32_134 = arith.constant 1 : i32
    %c8_i32_135 = arith.constant 8 : i32
    %464 = arith.muli %c1_i32_134, %c8_i32_135 : i32
    %465 = tpu.assume_multiple %464, 8 : i32
    %466 = arith.index_cast %465 : i32 to index
    %c0_136 = arith.constant 0 : index
    %467 = vector.load %arg8[%466, %c0_136] : memref<64x128xf32, #tpu.memory_space<vmem>>, vector<8x128xf32>
    %468 = arith.truncf %458 : vector<8x32xf32> to vector<8x32xbf16>
    %cst_137 = arith.constant dense<0.000000e+00> : vector<8x128xf32>
    %469 = tpu.matmul %468, %427, %cst_137 {dimension_numbers = #tpu.dot_dimension_numbers<[1], [0], [0], [1], [0, 0, 1, 1], [], []>} : vector<8x32xbf16>, vector<32x128xbf16>, vector<8x128xf32> -> vector<8x128xf32>
    %470 = arith.addf %467, %469 : vector<8x128xf32>
    %471 = vector.extract_strided_slice %470 {offsets = [0, 0], sizes = [8, 96], strides = [1, 1]} : vector<8x128xf32> to vector<8x96xf32>
    %472 = arith.negf %471 : vector<8x96xf32>
    %473 = math.exp %472 : vector<8x96xf32>
    %cst_138 = arith.constant 1.000000e+00 : f32
    %474 = vector.broadcast %cst_138 : f32 to vector<8x96xf32>
    %475 = arith.addf %474, %473 : vector<8x96xf32>
    %476 = arith.divf %474, %475 : vector<8x96xf32>
    %477 = vector.extract_strided_slice %470 {offsets = [0, 96], sizes = [8, 32], strides = [1, 1]} : vector<8x128xf32> to vector<8x32xf32>
    %478 = math.tanh %477 : vector<8x32xf32>
    %479 = vector.extract_strided_slice %476 {offsets = [0, 0], sizes = [8, 32], strides = [1, 1]} : vector<8x96xf32> to vector<8x32xf32>
    %480 = vector.extract_strided_slice %476 {offsets = [0, 32], sizes = [8, 32], strides = [1, 1]} : vector<8x96xf32> to vector<8x32xf32>
    %481 = vector.extract_strided_slice %476 {offsets = [0, 64], sizes = [8, 32], strides = [1, 1]} : vector<8x96xf32> to vector<8x32xf32>
    %482 = arith.mulf %480, %456 : vector<8x32xf32>
    %483 = arith.mulf %479, %478 : vector<8x32xf32>
    %484 = arith.addf %482, %483 : vector<8x32xf32>
    %485 = math.tanh %484 : vector<8x32xf32>
    %486 = arith.mulf %481, %485 : vector<8x32xf32>
    %487 = arith.index_cast %465 : i32 to index
    %c0_139 = arith.constant 0 : index
    %488 = vector.load %arg6[%487, %c0_139] : memref<64x32xf32, #tpu.memory_space<vmem>>, vector<8x32xf32>
    %489 = arith.addf %488, %486 : vector<8x32xf32>
    %490 = arith.index_cast %465 : i32 to index
    %c0_140 = arith.constant 0 : index
    %491 = vector.load %arg6[%490, %c0_140] : memref<64x32xf32, #tpu.memory_space<vmem>>, vector<8x32xf32>
    tpu.vector_store %arg6[%490, %c0_140], %489 {strides = array<i32>} : memref<64x32xf32, #tpu.memory_space<vmem>>, vector<8x32xf32>,
    %c2_i32_141 = arith.constant 2 : i32
    %c8_i32_142 = arith.constant 8 : i32
    %492 = arith.muli %c2_i32_141, %c8_i32_142 : i32
    %493 = tpu.assume_multiple %492, 8 : i32
    %494 = arith.index_cast %493 : i32 to index
    %c0_143 = arith.constant 0 : index
    %495 = vector.load %arg8[%494, %c0_143] : memref<64x128xf32, #tpu.memory_space<vmem>>, vector<8x128xf32>
    %496 = arith.truncf %486 : vector<8x32xf32> to vector<8x32xbf16>
    %cst_144 = arith.constant dense<0.000000e+00> : vector<8x128xf32>
    %497 = tpu.matmul %496, %427, %cst_144 {dimension_numbers = #tpu.dot_dimension_numbers<[1], [0], [0], [1], [0, 0, 1, 1], [], []>} : vector<8x32xbf16>, vector<32x128xbf16>, vector<8x128xf32> -> vector<8x128xf32>
    %498 = arith.addf %495, %497 : vector<8x128xf32>
    %499 = vector.extract_strided_slice %498 {offsets = [0, 0], sizes = [8, 96], strides = [1, 1]} : vector<8x128xf32> to vector<8x96xf32>
    %500 = arith.negf %499 : vector<8x96xf32>
    %501 = math.exp %500 : vector<8x96xf32>
    %cst_145 = arith.constant 1.000000e+00 : f32
    %502 = vector.broadcast %cst_145 : f32 to vector<8x96xf32>
    %503 = arith.addf %502, %501 : vector<8x96xf32>
    %504 = arith.divf %502, %503 : vector<8x96xf32>
    %505 = vector.extract_strided_slice %498 {offsets = [0, 96], sizes = [8, 32], strides = [1, 1]} : vector<8x128xf32> to vector<8x32xf32>
    %506 = math.tanh %505 : vector<8x32xf32>
    %507 = vector.extract_strided_slice %504 {offsets = [0, 0], sizes = [8, 32], strides = [1, 1]} : vector<8x96xf32> to vector<8x32xf32>
    %508 = vector.extract_strided_slice %504 {offsets = [0, 32], sizes = [8, 32], strides = [1, 1]} : vector<8x96xf32> to vector<8x32xf32>
    %509 = vector.extract_strided_slice %504 {offsets = [0, 64], sizes = [8, 32], strides = [1, 1]} : vector<8x96xf32> to vector<8x32xf32>
    %510 = arith.mulf %508, %484 : vector<8x32xf32>
    %511 = arith.mulf %507, %506 : vector<8x32xf32>
    %512 = arith.addf %510, %511 : vector<8x32xf32>
    %513 = math.tanh %512 : vector<8x32xf32>
    %514 = arith.mulf %509, %513 : vector<8x32xf32>
    %515 = arith.index_cast %493 : i32 to index
    %c0_146 = arith.constant 0 : index
    %516 = vector.load %arg6[%515, %c0_146] : memref<64x32xf32, #tpu.memory_space<vmem>>, vector<8x32xf32>
    %517 = arith.addf %516, %514 : vector<8x32xf32>
    %518 = arith.index_cast %493 : i32 to index
    %c0_147 = arith.constant 0 : index
    %519 = vector.load %arg6[%518, %c0_147] : memref<64x32xf32, #tpu.memory_space<vmem>>, vector<8x32xf32>
    tpu.vector_store %arg6[%518, %c0_147], %517 {strides = array<i32>} : memref<64x32xf32, #tpu.memory_space<vmem>>, vector<8x32xf32>,
    %c3_i32_148 = arith.constant 3 : i32
    %c8_i32_149 = arith.constant 8 : i32
    %520 = arith.muli %c3_i32_148, %c8_i32_149 : i32
    %521 = tpu.assume_multiple %520, 8 : i32
    %522 = arith.index_cast %521 : i32 to index
    %c0_150 = arith.constant 0 : index
    %523 = vector.load %arg8[%522, %c0_150] : memref<64x128xf32, #tpu.memory_space<vmem>>, vector<8x128xf32>
    %524 = arith.truncf %514 : vector<8x32xf32> to vector<8x32xbf16>
    %cst_151 = arith.constant dense<0.000000e+00> : vector<8x128xf32>
    %525 = tpu.matmul %524, %427, %cst_151 {dimension_numbers = #tpu.dot_dimension_numbers<[1], [0], [0], [1], [0, 0, 1, 1], [], []>} : vector<8x32xbf16>, vector<32x128xbf16>, vector<8x128xf32> -> vector<8x128xf32>
    %526 = arith.addf %523, %525 : vector<8x128xf32>
    %527 = vector.extract_strided_slice %526 {offsets = [0, 0], sizes = [8, 96], strides = [1, 1]} : vector<8x128xf32> to vector<8x96xf32>
    %528 = arith.negf %527 : vector<8x96xf32>
    %529 = math.exp %528 : vector<8x96xf32>
    %cst_152 = arith.constant 1.000000e+00 : f32
    %530 = vector.broadcast %cst_152 : f32 to vector<8x96xf32>
    %531 = arith.addf %530, %529 : vector<8x96xf32>
    %532 = arith.divf %530, %531 : vector<8x96xf32>
    %533 = vector.extract_strided_slice %526 {offsets = [0, 96], sizes = [8, 32], strides = [1, 1]} : vector<8x128xf32> to vector<8x32xf32>
    %534 = math.tanh %533 : vector<8x32xf32>
    %535 = vector.extract_strided_slice %532 {offsets = [0, 0], sizes = [8, 32], strides = [1, 1]} : vector<8x96xf32> to vector<8x32xf32>
    %536 = vector.extract_strided_slice %532 {offsets = [0, 32], sizes = [8, 32], strides = [1, 1]} : vector<8x96xf32> to vector<8x32xf32>
    %537 = vector.extract_strided_slice %532 {offsets = [0, 64], sizes = [8, 32], strides = [1, 1]} : vector<8x96xf32> to vector<8x32xf32>
    %538 = arith.mulf %536, %512 : vector<8x32xf32>
    %539 = arith.mulf %535, %534 : vector<8x32xf32>
    %540 = arith.addf %538, %539 : vector<8x32xf32>
    %541 = math.tanh %540 : vector<8x32xf32>
    %542 = arith.mulf %537, %541 : vector<8x32xf32>
    %543 = arith.index_cast %521 : i32 to index
    %c0_153 = arith.constant 0 : index
    %544 = vector.load %arg6[%543, %c0_153] : memref<64x32xf32, #tpu.memory_space<vmem>>, vector<8x32xf32>
    %545 = arith.addf %544, %542 : vector<8x32xf32>
    %546 = arith.index_cast %521 : i32 to index
    %c0_154 = arith.constant 0 : index
    %547 = vector.load %arg6[%546, %c0_154] : memref<64x32xf32, #tpu.memory_space<vmem>>, vector<8x32xf32>
    tpu.vector_store %arg6[%546, %c0_154], %545 {strides = array<i32>} : memref<64x32xf32, #tpu.memory_space<vmem>>, vector<8x32xf32>,
    %c4_i32_155 = arith.constant 4 : i32
    %c8_i32_156 = arith.constant 8 : i32
    %548 = arith.muli %c4_i32_155, %c8_i32_156 : i32
    %549 = tpu.assume_multiple %548, 8 : i32
    %550 = arith.index_cast %549 : i32 to index
    %c0_157 = arith.constant 0 : index
    %551 = vector.load %arg8[%550, %c0_157] : memref<64x128xf32, #tpu.memory_space<vmem>>, vector<8x128xf32>
    %552 = arith.truncf %542 : vector<8x32xf32> to vector<8x32xbf16>
    %cst_158 = arith.constant dense<0.000000e+00> : vector<8x128xf32>
    %553 = tpu.matmul %552, %427, %cst_158 {dimension_numbers = #tpu.dot_dimension_numbers<[1], [0], [0], [1], [0, 0, 1, 1], [], []>} : vector<8x32xbf16>, vector<32x128xbf16>, vector<8x128xf32> -> vector<8x128xf32>
    %554 = arith.addf %551, %553 : vector<8x128xf32>
    %555 = vector.extract_strided_slice %554 {offsets = [0, 0], sizes = [8, 96], strides = [1, 1]} : vector<8x128xf32> to vector<8x96xf32>
    %556 = arith.negf %555 : vector<8x96xf32>
    %557 = math.exp %556 : vector<8x96xf32>
    %cst_159 = arith.constant 1.000000e+00 : f32
    %558 = vector.broadcast %cst_159 : f32 to vector<8x96xf32>
    %559 = arith.addf %558, %557 : vector<8x96xf32>
    %560 = arith.divf %558, %559 : vector<8x96xf32>
    %561 = vector.extract_strided_slice %554 {offsets = [0, 96], sizes = [8, 32], strides = [1, 1]} : vector<8x128xf32> to vector<8x32xf32>
    %562 = math.tanh %561 : vector<8x32xf32>
    %563 = vector.extract_strided_slice %560 {offsets = [0, 0], sizes = [8, 32], strides = [1, 1]} : vector<8x96xf32> to vector<8x32xf32>
    %564 = vector.extract_strided_slice %560 {offsets = [0, 32], sizes = [8, 32], strides = [1, 1]} : vector<8x96xf32> to vector<8x32xf32>
    %565 = vector.extract_strided_slice %560 {offsets = [0, 64], sizes = [8, 32], strides = [1, 1]} : vector<8x96xf32> to vector<8x32xf32>
    %566 = arith.mulf %564, %540 : vector<8x32xf32>
    %567 = arith.mulf %563, %562 : vector<8x32xf32>
    %568 = arith.addf %566, %567 : vector<8x32xf32>
    %569 = math.tanh %568 : vector<8x32xf32>
    %570 = arith.mulf %565, %569 : vector<8x32xf32>
    %571 = arith.index_cast %549 : i32 to index
    %c0_160 = arith.constant 0 : index
    %572 = vector.load %arg6[%571, %c0_160] : memref<64x32xf32, #tpu.memory_space<vmem>>, vector<8x32xf32>
    %573 = arith.addf %572, %570 : vector<8x32xf32>
    %574 = arith.index_cast %549 : i32 to index
    %c0_161 = arith.constant 0 : index
    %575 = vector.load %arg6[%574, %c0_161] : memref<64x32xf32, #tpu.memory_space<vmem>>, vector<8x32xf32>
    tpu.vector_store %arg6[%574, %c0_161], %573 {strides = array<i32>} : memref<64x32xf32, #tpu.memory_space<vmem>>, vector<8x32xf32>,
    %c5_i32_162 = arith.constant 5 : i32
    %c8_i32_163 = arith.constant 8 : i32
    %576 = arith.muli %c5_i32_162, %c8_i32_163 : i32
    %577 = tpu.assume_multiple %576, 8 : i32
    %578 = arith.index_cast %577 : i32 to index
    %c0_164 = arith.constant 0 : index
    %579 = vector.load %arg8[%578, %c0_164] : memref<64x128xf32, #tpu.memory_space<vmem>>, vector<8x128xf32>
    %580 = arith.truncf %570 : vector<8x32xf32> to vector<8x32xbf16>
    %cst_165 = arith.constant dense<0.000000e+00> : vector<8x128xf32>
    %581 = tpu.matmul %580, %427, %cst_165 {dimension_numbers = #tpu.dot_dimension_numbers<[1], [0], [0], [1], [0, 0, 1, 1], [], []>} : vector<8x32xbf16>, vector<32x128xbf16>, vector<8x128xf32> -> vector<8x128xf32>
    %582 = arith.addf %579, %581 : vector<8x128xf32>
    %583 = vector.extract_strided_slice %582 {offsets = [0, 0], sizes = [8, 96], strides = [1, 1]} : vector<8x128xf32> to vector<8x96xf32>
    %584 = arith.negf %583 : vector<8x96xf32>
    %585 = math.exp %584 : vector<8x96xf32>
    %cst_166 = arith.constant 1.000000e+00 : f32
    %586 = vector.broadcast %cst_166 : f32 to vector<8x96xf32>
    %587 = arith.addf %586, %585 : vector<8x96xf32>
    %588 = arith.divf %586, %587 : vector<8x96xf32>
    %589 = vector.extract_strided_slice %582 {offsets = [0, 96], sizes = [8, 32], strides = [1, 1]} : vector<8x128xf32> to vector<8x32xf32>
    %590 = math.tanh %589 : vector<8x32xf32>
    %591 = vector.extract_strided_slice %588 {offsets = [0, 0], sizes = [8, 32], strides = [1, 1]} : vector<8x96xf32> to vector<8x32xf32>
    %592 = vector.extract_strided_slice %588 {offsets = [0, 32], sizes = [8, 32], strides = [1, 1]} : vector<8x96xf32> to vector<8x32xf32>
    %593 = vector.extract_strided_slice %588 {offsets = [0, 64], sizes = [8, 32], strides = [1, 1]} : vector<8x96xf32> to vector<8x32xf32>
    %594 = arith.mulf %592, %568 : vector<8x32xf32>
    %595 = arith.mulf %591, %590 : vector<8x32xf32>
    %596 = arith.addf %594, %595 : vector<8x32xf32>
    %597 = math.tanh %596 : vector<8x32xf32>
    %598 = arith.mulf %593, %597 : vector<8x32xf32>
    %599 = arith.index_cast %577 : i32 to index
    %c0_167 = arith.constant 0 : index
    %600 = vector.load %arg6[%599, %c0_167] : memref<64x32xf32, #tpu.memory_space<vmem>>, vector<8x32xf32>
    %601 = arith.addf %600, %598 : vector<8x32xf32>
    %602 = arith.index_cast %577 : i32 to index
    %c0_168 = arith.constant 0 : index
    %603 = vector.load %arg6[%602, %c0_168] : memref<64x32xf32, #tpu.memory_space<vmem>>, vector<8x32xf32>
    tpu.vector_store %arg6[%602, %c0_168], %601 {strides = array<i32>} : memref<64x32xf32, #tpu.memory_space<vmem>>, vector<8x32xf32>,
    %c6_i32_169 = arith.constant 6 : i32
    %c8_i32_170 = arith.constant 8 : i32
    %604 = arith.muli %c6_i32_169, %c8_i32_170 : i32
    %605 = tpu.assume_multiple %604, 8 : i32
    %606 = arith.index_cast %605 : i32 to index
    %c0_171 = arith.constant 0 : index
    %607 = vector.load %arg8[%606, %c0_171] : memref<64x128xf32, #tpu.memory_space<vmem>>, vector<8x128xf32>
    %608 = arith.truncf %598 : vector<8x32xf32> to vector<8x32xbf16>
    %cst_172 = arith.constant dense<0.000000e+00> : vector<8x128xf32>
    %609 = tpu.matmul %608, %427, %cst_172 {dimension_numbers = #tpu.dot_dimension_numbers<[1], [0], [0], [1], [0, 0, 1, 1], [], []>} : vector<8x32xbf16>, vector<32x128xbf16>, vector<8x128xf32> -> vector<8x128xf32>
    %610 = arith.addf %607, %609 : vector<8x128xf32>
    %611 = vector.extract_strided_slice %610 {offsets = [0, 0], sizes = [8, 96], strides = [1, 1]} : vector<8x128xf32> to vector<8x96xf32>
    %612 = arith.negf %611 : vector<8x96xf32>
    %613 = math.exp %612 : vector<8x96xf32>
    %cst_173 = arith.constant 1.000000e+00 : f32
    %614 = vector.broadcast %cst_173 : f32 to vector<8x96xf32>
    %615 = arith.addf %614, %613 : vector<8x96xf32>
    %616 = arith.divf %614, %615 : vector<8x96xf32>
    %617 = vector.extract_strided_slice %610 {offsets = [0, 96], sizes = [8, 32], strides = [1, 1]} : vector<8x128xf32> to vector<8x32xf32>
    %618 = math.tanh %617 : vector<8x32xf32>
    %619 = vector.extract_strided_slice %616 {offsets = [0, 0], sizes = [8, 32], strides = [1, 1]} : vector<8x96xf32> to vector<8x32xf32>
    %620 = vector.extract_strided_slice %616 {offsets = [0, 32], sizes = [8, 32], strides = [1, 1]} : vector<8x96xf32> to vector<8x32xf32>
    %621 = vector.extract_strided_slice %616 {offsets = [0, 64], sizes = [8, 32], strides = [1, 1]} : vector<8x96xf32> to vector<8x32xf32>
    %622 = arith.mulf %620, %596 : vector<8x32xf32>
    %623 = arith.mulf %619, %618 : vector<8x32xf32>
    %624 = arith.addf %622, %623 : vector<8x32xf32>
    %625 = math.tanh %624 : vector<8x32xf32>
    %626 = arith.mulf %621, %625 : vector<8x32xf32>
    %627 = arith.index_cast %605 : i32 to index
    %c0_174 = arith.constant 0 : index
    %628 = vector.load %arg6[%627, %c0_174] : memref<64x32xf32, #tpu.memory_space<vmem>>, vector<8x32xf32>
    %629 = arith.addf %628, %626 : vector<8x32xf32>
    %630 = arith.index_cast %605 : i32 to index
    %c0_175 = arith.constant 0 : index
    %631 = vector.load %arg6[%630, %c0_175] : memref<64x32xf32, #tpu.memory_space<vmem>>, vector<8x32xf32>
    tpu.vector_store %arg6[%630, %c0_175], %629 {strides = array<i32>} : memref<64x32xf32, #tpu.memory_space<vmem>>, vector<8x32xf32>,
    %c7_i32_176 = arith.constant 7 : i32
    %c8_i32_177 = arith.constant 8 : i32
    %632 = arith.muli %c7_i32_176, %c8_i32_177 : i32
    %633 = tpu.assume_multiple %632, 8 : i32
    %634 = arith.index_cast %633 : i32 to index
    %c0_178 = arith.constant 0 : index
    %635 = vector.load %arg8[%634, %c0_178] : memref<64x128xf32, #tpu.memory_space<vmem>>, vector<8x128xf32>
    %636 = arith.truncf %626 : vector<8x32xf32> to vector<8x32xbf16>
    %cst_179 = arith.constant dense<0.000000e+00> : vector<8x128xf32>
    %637 = tpu.matmul %636, %427, %cst_179 {dimension_numbers = #tpu.dot_dimension_numbers<[1], [0], [0], [1], [0, 0, 1, 1], [], []>} : vector<8x32xbf16>, vector<32x128xbf16>, vector<8x128xf32> -> vector<8x128xf32>
    %638 = arith.addf %635, %637 : vector<8x128xf32>
    %639 = vector.extract_strided_slice %638 {offsets = [0, 0], sizes = [8, 96], strides = [1, 1]} : vector<8x128xf32> to vector<8x96xf32>
    %640 = arith.negf %639 : vector<8x96xf32>
    %641 = math.exp %640 : vector<8x96xf32>
    %cst_180 = arith.constant 1.000000e+00 : f32
    %642 = vector.broadcast %cst_180 : f32 to vector<8x96xf32>
    %643 = arith.addf %642, %641 : vector<8x96xf32>
    %644 = arith.divf %642, %643 : vector<8x96xf32>
    %645 = vector.extract_strided_slice %638 {offsets = [0, 96], sizes = [8, 32], strides = [1, 1]} : vector<8x128xf32> to vector<8x32xf32>
    %646 = math.tanh %645 : vector<8x32xf32>
    %647 = vector.extract_strided_slice %644 {offsets = [0, 0], sizes = [8, 32], strides = [1, 1]} : vector<8x96xf32> to vector<8x32xf32>
    %648 = vector.extract_strided_slice %644 {offsets = [0, 32], sizes = [8, 32], strides = [1, 1]} : vector<8x96xf32> to vector<8x32xf32>
    %649 = vector.extract_strided_slice %644 {offsets = [0, 64], sizes = [8, 32], strides = [1, 1]} : vector<8x96xf32> to vector<8x32xf32>
    %650 = arith.mulf %648, %624 : vector<8x32xf32>
    %651 = arith.mulf %647, %646 : vector<8x32xf32>
    %652 = arith.addf %650, %651 : vector<8x32xf32>
    %653 = math.tanh %652 : vector<8x32xf32>
    %654 = arith.mulf %649, %653 : vector<8x32xf32>
    %655 = arith.index_cast %633 : i32 to index
    %c0_181 = arith.constant 0 : index
    %656 = vector.load %arg6[%655, %c0_181] : memref<64x32xf32, #tpu.memory_space<vmem>>, vector<8x32xf32>
    %657 = arith.addf %656, %654 : vector<8x32xf32>
    %658 = arith.index_cast %633 : i32 to index
    %c0_182 = arith.constant 0 : index
    %659 = vector.load %arg6[%658, %c0_182] : memref<64x32xf32, #tpu.memory_space<vmem>>, vector<8x32xf32>
    tpu.vector_store %arg6[%658, %c0_182], %657 {strides = array<i32>} : memref<64x32xf32, #tpu.memory_space<vmem>>, vector<8x32xf32>,
    %c8_i32_183 = arith.constant 8 : i32
    %c2_184 = arith.constant 2 : index
    %c0_185 = arith.constant 0 : index
    %c0_186 = arith.constant 0 : index
    %660 = vector.load %arg2[%c2_184, %c0_185, %c0_186] : memref<7x32x128xbf16, #tpu.memory_space<vmem>>, vector<1x32x128xbf16>
    %661 = vector.shape_cast %660 : vector<1x32x128xbf16> to vector<32x128xbf16>
    %c3 = arith.constant 3 : index
    %c0_187 = arith.constant 0 : index
    %c0_188 = arith.constant 0 : index
    %662 = vector.load %arg3[%c3, %c0_187, %c0_188] : memref<8x32x128xbf16, #tpu.memory_space<vmem>>, vector<1x32x128xbf16>
    %663 = vector.shape_cast %662 : vector<1x32x128xbf16> to vector<32x128xbf16>
    %c3_189 = arith.constant 3 : index
    %c0_190 = arith.constant 0 : index
    %c0_191 = arith.constant 0 : index
    %664 = vector.load %arg4[%c3_189, %c0_190, %c0_191] : memref<8x1x128xf32, #tpu.memory_space<vmem>>, vector<1x1x128xf32>
    %665 = vector.shape_cast %664 : vector<1x1x128xf32> to vector<1x128xf32>
    %c0_192 = arith.constant 0 : index
    %c0_193 = arith.constant 0 : index
    %666 = vector.load %arg6[%c0_192, %c0_193] : memref<64x32xf32, #tpu.memory_space<vmem>>, vector<64x32xf32>
    %667 = arith.truncf %666 : vector<64x32xf32> to vector<64x32xbf16>
    %cst_194 = arith.constant dense<0.000000e+00> : vector<64x128xf32>
    %668 = tpu.matmul %667, %661, %cst_194 {dimension_numbers = #tpu.dot_dimension_numbers<[1], [0], [0], [1], [0, 0, 1, 1], [], []>} : vector<64x32xbf16>, vector<32x128xbf16>, vector<64x128xf32> -> vector<64x128xf32>
    %669 = vector.broadcast %665 : vector<1x128xf32> to vector<64x128xf32>
    %670 = arith.addf %668, %669 : vector<64x128xf32>
    %c0_195 = arith.constant 0 : index
    %c0_196 = arith.constant 0 : index
    %671 = vector.load %arg8[%c0_195, %c0_196] : memref<64x128xf32, #tpu.memory_space<vmem>>, vector<64x128xf32>
    tpu.vector_store %arg8[%c0_195, %c0_196], %670 {strides = array<i32>} : memref<64x128xf32, #tpu.memory_space<vmem>>, vector<64x128xf32>,
    %c0_i32_197 = arith.constant 0 : i32
    %c8_i32_198 = arith.constant 8 : i32
    %672 = arith.muli %c0_i32_197, %c8_i32_198 : i32
    %673 = tpu.assume_multiple %672, 8 : i32
    %674 = arith.index_cast %673 : i32 to index
    %c0_199 = arith.constant 0 : index
    %675 = vector.load %arg8[%674, %c0_199] : memref<64x128xf32, #tpu.memory_space<vmem>>, vector<8x128xf32>
    %676 = arith.truncf %654 : vector<8x32xf32> to vector<8x32xbf16>
    %cst_200 = arith.constant dense<0.000000e+00> : vector<8x128xf32>
    %677 = tpu.matmul %676, %663, %cst_200 {dimension_numbers = #tpu.dot_dimension_numbers<[1], [0], [0], [1], [0, 0, 1, 1], [], []>} : vector<8x32xbf16>, vector<32x128xbf16>, vector<8x128xf32> -> vector<8x128xf32>
    %678 = arith.addf %675, %677 : vector<8x128xf32>
    %679 = vector.extract_strided_slice %678 {offsets = [0, 0], sizes = [8, 96], strides = [1, 1]} : vector<8x128xf32> to vector<8x96xf32>
    %680 = arith.negf %679 : vector<8x96xf32>
    %681 = math.exp %680 : vector<8x96xf32>
    %cst_201 = arith.constant 1.000000e+00 : f32
    %682 = vector.broadcast %cst_201 : f32 to vector<8x96xf32>
    %683 = arith.addf %682, %681 : vector<8x96xf32>
    %684 = arith.divf %682, %683 : vector<8x96xf32>
    %685 = vector.extract_strided_slice %678 {offsets = [0, 96], sizes = [8, 32], strides = [1, 1]} : vector<8x128xf32> to vector<8x32xf32>
    %686 = math.tanh %685 : vector<8x32xf32>
    %687 = vector.extract_strided_slice %684 {offsets = [0, 0], sizes = [8, 32], strides = [1, 1]} : vector<8x96xf32> to vector<8x32xf32>
    %688 = vector.extract_strided_slice %684 {offsets = [0, 32], sizes = [8, 32], strides = [1, 1]} : vector<8x96xf32> to vector<8x32xf32>
    %689 = vector.extract_strided_slice %684 {offsets = [0, 64], sizes = [8, 32], strides = [1, 1]} : vector<8x96xf32> to vector<8x32xf32>
    %690 = arith.mulf %688, %652 : vector<8x32xf32>
    %691 = arith.mulf %687, %686 : vector<8x32xf32>
    %692 = arith.addf %690, %691 : vector<8x32xf32>
    %693 = math.tanh %692 : vector<8x32xf32>
    %694 = arith.mulf %689, %693 : vector<8x32xf32>
    %695 = arith.index_cast %673 : i32 to index
    %c0_202 = arith.constant 0 : index
    %696 = vector.load %arg7[%695, %c0_202] : memref<64x32xf32, #tpu.memory_space<vmem>>, vector<8x32xf32>
    tpu.vector_store %arg7[%695, %c0_202], %694 {strides = array<i32>} : memref<64x32xf32, #tpu.memory_space<vmem>>, vector<8x32xf32>,
    %c1_i32_203 = arith.constant 1 : i32
    %c8_i32_204 = arith.constant 8 : i32
    %697 = arith.muli %c1_i32_203, %c8_i32_204 : i32
    %698 = tpu.assume_multiple %697, 8 : i32
    %699 = arith.index_cast %698 : i32 to index
    %c0_205 = arith.constant 0 : index
    %700 = vector.load %arg8[%699, %c0_205] : memref<64x128xf32, #tpu.memory_space<vmem>>, vector<8x128xf32>
    %701 = arith.truncf %694 : vector<8x32xf32> to vector<8x32xbf16>
    %cst_206 = arith.constant dense<0.000000e+00> : vector<8x128xf32>
    %702 = tpu.matmul %701, %663, %cst_206 {dimension_numbers = #tpu.dot_dimension_numbers<[1], [0], [0], [1], [0, 0, 1, 1], [], []>} : vector<8x32xbf16>, vector<32x128xbf16>, vector<8x128xf32> -> vector<8x128xf32>
    %703 = arith.addf %700, %702 : vector<8x128xf32>
    %704 = vector.extract_strided_slice %703 {offsets = [0, 0], sizes = [8, 96], strides = [1, 1]} : vector<8x128xf32> to vector<8x96xf32>
    %705 = arith.negf %704 : vector<8x96xf32>
    %706 = math.exp %705 : vector<8x96xf32>
    %cst_207 = arith.constant 1.000000e+00 : f32
    %707 = vector.broadcast %cst_207 : f32 to vector<8x96xf32>
    %708 = arith.addf %707, %706 : vector<8x96xf32>
    %709 = arith.divf %707, %708 : vector<8x96xf32>
    %710 = vector.extract_strided_slice %703 {offsets = [0, 96], sizes = [8, 32], strides = [1, 1]} : vector<8x128xf32> to vector<8x32xf32>
    %711 = math.tanh %710 : vector<8x32xf32>
    %712 = vector.extract_strided_slice %709 {offsets = [0, 0], sizes = [8, 32], strides = [1, 1]} : vector<8x96xf32> to vector<8x32xf32>
    %713 = vector.extract_strided_slice %709 {offsets = [0, 32], sizes = [8, 32], strides = [1, 1]} : vector<8x96xf32> to vector<8x32xf32>
    %714 = vector.extract_strided_slice %709 {offsets = [0, 64], sizes = [8, 32], strides = [1, 1]} : vector<8x96xf32> to vector<8x32xf32>
    %715 = arith.mulf %713, %692 : vector<8x32xf32>
    %716 = arith.mulf %712, %711 : vector<8x32xf32>
    %717 = arith.addf %715, %716 : vector<8x32xf32>
    %718 = math.tanh %717 : vector<8x32xf32>
    %719 = arith.mulf %714, %718 : vector<8x32xf32>
    %720 = arith.index_cast %698 : i32 to index
    %c0_208 = arith.constant 0 : index
    %721 = vector.load %arg7[%720, %c0_208] : memref<64x32xf32, #tpu.memory_space<vmem>>, vector<8x32xf32>
    tpu.vector_store %arg7[%720, %c0_208], %719 {strides = array<i32>} : memref<64x32xf32, #tpu.memory_space<vmem>>, vector<8x32xf32>,
    %c2_i32_209 = arith.constant 2 : i32
    %c8_i32_210 = arith.constant 8 : i32
    %722 = arith.muli %c2_i32_209, %c8_i32_210 : i32
    %723 = tpu.assume_multiple %722, 8 : i32
    %724 = arith.index_cast %723 : i32 to index
    %c0_211 = arith.constant 0 : index
    %725 = vector.load %arg8[%724, %c0_211] : memref<64x128xf32, #tpu.memory_space<vmem>>, vector<8x128xf32>
    %726 = arith.truncf %719 : vector<8x32xf32> to vector<8x32xbf16>
    %cst_212 = arith.constant dense<0.000000e+00> : vector<8x128xf32>
    %727 = tpu.matmul %726, %663, %cst_212 {dimension_numbers = #tpu.dot_dimension_numbers<[1], [0], [0], [1], [0, 0, 1, 1], [], []>} : vector<8x32xbf16>, vector<32x128xbf16>, vector<8x128xf32> -> vector<8x128xf32>
    %728 = arith.addf %725, %727 : vector<8x128xf32>
    %729 = vector.extract_strided_slice %728 {offsets = [0, 0], sizes = [8, 96], strides = [1, 1]} : vector<8x128xf32> to vector<8x96xf32>
    %730 = arith.negf %729 : vector<8x96xf32>
    %731 = math.exp %730 : vector<8x96xf32>
    %cst_213 = arith.constant 1.000000e+00 : f32
    %732 = vector.broadcast %cst_213 : f32 to vector<8x96xf32>
    %733 = arith.addf %732, %731 : vector<8x96xf32>
    %734 = arith.divf %732, %733 : vector<8x96xf32>
    %735 = vector.extract_strided_slice %728 {offsets = [0, 96], sizes = [8, 32], strides = [1, 1]} : vector<8x128xf32> to vector<8x32xf32>
    %736 = math.tanh %735 : vector<8x32xf32>
    %737 = vector.extract_strided_slice %734 {offsets = [0, 0], sizes = [8, 32], strides = [1, 1]} : vector<8x96xf32> to vector<8x32xf32>
    %738 = vector.extract_strided_slice %734 {offsets = [0, 32], sizes = [8, 32], strides = [1, 1]} : vector<8x96xf32> to vector<8x32xf32>
    %739 = vector.extract_strided_slice %734 {offsets = [0, 64], sizes = [8, 32], strides = [1, 1]} : vector<8x96xf32> to vector<8x32xf32>
    %740 = arith.mulf %738, %717 : vector<8x32xf32>
    %741 = arith.mulf %737, %736 : vector<8x32xf32>
    %742 = arith.addf %740, %741 : vector<8x32xf32>
    %743 = math.tanh %742 : vector<8x32xf32>
    %744 = arith.mulf %739, %743 : vector<8x32xf32>
    %745 = arith.index_cast %723 : i32 to index
    %c0_214 = arith.constant 0 : index
    %746 = vector.load %arg7[%745, %c0_214] : memref<64x32xf32, #tpu.memory_space<vmem>>, vector<8x32xf32>
    tpu.vector_store %arg7[%745, %c0_214], %744 {strides = array<i32>} : memref<64x32xf32, #tpu.memory_space<vmem>>, vector<8x32xf32>,
    %c3_i32_215 = arith.constant 3 : i32
    %c8_i32_216 = arith.constant 8 : i32
    %747 = arith.muli %c3_i32_215, %c8_i32_216 : i32
    %748 = tpu.assume_multiple %747, 8 : i32
    %749 = arith.index_cast %748 : i32 to index
    %c0_217 = arith.constant 0 : index
    %750 = vector.load %arg8[%749, %c0_217] : memref<64x128xf32, #tpu.memory_space<vmem>>, vector<8x128xf32>
    %751 = arith.truncf %744 : vector<8x32xf32> to vector<8x32xbf16>
    %cst_218 = arith.constant dense<0.000000e+00> : vector<8x128xf32>
    %752 = tpu.matmul %751, %663, %cst_218 {dimension_numbers = #tpu.dot_dimension_numbers<[1], [0], [0], [1], [0, 0, 1, 1], [], []>} : vector<8x32xbf16>, vector<32x128xbf16>, vector<8x128xf32> -> vector<8x128xf32>
    %753 = arith.addf %750, %752 : vector<8x128xf32>
    %754 = vector.extract_strided_slice %753 {offsets = [0, 0], sizes = [8, 96], strides = [1, 1]} : vector<8x128xf32> to vector<8x96xf32>
    %755 = arith.negf %754 : vector<8x96xf32>
    %756 = math.exp %755 : vector<8x96xf32>
    %cst_219 = arith.constant 1.000000e+00 : f32
    %757 = vector.broadcast %cst_219 : f32 to vector<8x96xf32>
    %758 = arith.addf %757, %756 : vector<8x96xf32>
    %759 = arith.divf %757, %758 : vector<8x96xf32>
    %760 = vector.extract_strided_slice %753 {offsets = [0, 96], sizes = [8, 32], strides = [1, 1]} : vector<8x128xf32> to vector<8x32xf32>
    %761 = math.tanh %760 : vector<8x32xf32>
    %762 = vector.extract_strided_slice %759 {offsets = [0, 0], sizes = [8, 32], strides = [1, 1]} : vector<8x96xf32> to vector<8x32xf32>
    %763 = vector.extract_strided_slice %759 {offsets = [0, 32], sizes = [8, 32], strides = [1, 1]} : vector<8x96xf32> to vector<8x32xf32>
    %764 = vector.extract_strided_slice %759 {offsets = [0, 64], sizes = [8, 32], strides = [1, 1]} : vector<8x96xf32> to vector<8x32xf32>
    %765 = arith.mulf %763, %742 : vector<8x32xf32>
    %766 = arith.mulf %762, %761 : vector<8x32xf32>
    %767 = arith.addf %765, %766 : vector<8x32xf32>
    %768 = math.tanh %767 : vector<8x32xf32>
    %769 = arith.mulf %764, %768 : vector<8x32xf32>
    %770 = arith.index_cast %748 : i32 to index
    %c0_220 = arith.constant 0 : index
    %771 = vector.load %arg7[%770, %c0_220] : memref<64x32xf32, #tpu.memory_space<vmem>>, vector<8x32xf32>
    tpu.vector_store %arg7[%770, %c0_220], %769 {strides = array<i32>} : memref<64x32xf32, #tpu.memory_space<vmem>>, vector<8x32xf32>,
    %c4_i32_221 = arith.constant 4 : i32
    %c8_i32_222 = arith.constant 8 : i32
    %772 = arith.muli %c4_i32_221, %c8_i32_222 : i32
    %773 = tpu.assume_multiple %772, 8 : i32
    %774 = arith.index_cast %773 : i32 to index
    %c0_223 = arith.constant 0 : index
    %775 = vector.load %arg8[%774, %c0_223] : memref<64x128xf32, #tpu.memory_space<vmem>>, vector<8x128xf32>
    %776 = arith.truncf %769 : vector<8x32xf32> to vector<8x32xbf16>
    %cst_224 = arith.constant dense<0.000000e+00> : vector<8x128xf32>
    %777 = tpu.matmul %776, %663, %cst_224 {dimension_numbers = #tpu.dot_dimension_numbers<[1], [0], [0], [1], [0, 0, 1, 1], [], []>} : vector<8x32xbf16>, vector<32x128xbf16>, vector<8x128xf32> -> vector<8x128xf32>
    %778 = arith.addf %775, %777 : vector<8x128xf32>
    %779 = vector.extract_strided_slice %778 {offsets = [0, 0], sizes = [8, 96], strides = [1, 1]} : vector<8x128xf32> to vector<8x96xf32>
    %780 = arith.negf %779 : vector<8x96xf32>
    %781 = math.exp %780 : vector<8x96xf32>
    %cst_225 = arith.constant 1.000000e+00 : f32
    %782 = vector.broadcast %cst_225 : f32 to vector<8x96xf32>
    %783 = arith.addf %782, %781 : vector<8x96xf32>
    %784 = arith.divf %782, %783 : vector<8x96xf32>
    %785 = vector.extract_strided_slice %778 {offsets = [0, 96], sizes = [8, 32], strides = [1, 1]} : vector<8x128xf32> to vector<8x32xf32>
    %786 = math.tanh %785 : vector<8x32xf32>
    %787 = vector.extract_strided_slice %784 {offsets = [0, 0], sizes = [8, 32], strides = [1, 1]} : vector<8x96xf32> to vector<8x32xf32>
    %788 = vector.extract_strided_slice %784 {offsets = [0, 32], sizes = [8, 32], strides = [1, 1]} : vector<8x96xf32> to vector<8x32xf32>
    %789 = vector.extract_strided_slice %784 {offsets = [0, 64], sizes = [8, 32], strides = [1, 1]} : vector<8x96xf32> to vector<8x32xf32>
    %790 = arith.mulf %788, %767 : vector<8x32xf32>
    %791 = arith.mulf %787, %786 : vector<8x32xf32>
    %792 = arith.addf %790, %791 : vector<8x32xf32>
    %793 = math.tanh %792 : vector<8x32xf32>
    %794 = arith.mulf %789, %793 : vector<8x32xf32>
    %795 = arith.index_cast %773 : i32 to index
    %c0_226 = arith.constant 0 : index
    %796 = vector.load %arg7[%795, %c0_226] : memref<64x32xf32, #tpu.memory_space<vmem>>, vector<8x32xf32>
    tpu.vector_store %arg7[%795, %c0_226], %794 {strides = array<i32>} : memref<64x32xf32, #tpu.memory_space<vmem>>, vector<8x32xf32>,
    %c5_i32_227 = arith.constant 5 : i32
    %c8_i32_228 = arith.constant 8 : i32
    %797 = arith.muli %c5_i32_227, %c8_i32_228 : i32
    %798 = tpu.assume_multiple %797, 8 : i32
    %799 = arith.index_cast %798 : i32 to index
    %c0_229 = arith.constant 0 : index
    %800 = vector.load %arg8[%799, %c0_229] : memref<64x128xf32, #tpu.memory_space<vmem>>, vector<8x128xf32>
    %801 = arith.truncf %794 : vector<8x32xf32> to vector<8x32xbf16>
    %cst_230 = arith.constant dense<0.000000e+00> : vector<8x128xf32>
    %802 = tpu.matmul %801, %663, %cst_230 {dimension_numbers = #tpu.dot_dimension_numbers<[1], [0], [0], [1], [0, 0, 1, 1], [], []>} : vector<8x32xbf16>, vector<32x128xbf16>, vector<8x128xf32> -> vector<8x128xf32>
    %803 = arith.addf %800, %802 : vector<8x128xf32>
    %804 = vector.extract_strided_slice %803 {offsets = [0, 0], sizes = [8, 96], strides = [1, 1]} : vector<8x128xf32> to vector<8x96xf32>
    %805 = arith.negf %804 : vector<8x96xf32>
    %806 = math.exp %805 : vector<8x96xf32>
    %cst_231 = arith.constant 1.000000e+00 : f32
    %807 = vector.broadcast %cst_231 : f32 to vector<8x96xf32>
    %808 = arith.addf %807, %806 : vector<8x96xf32>
    %809 = arith.divf %807, %808 : vector<8x96xf32>
    %810 = vector.extract_strided_slice %803 {offsets = [0, 96], sizes = [8, 32], strides = [1, 1]} : vector<8x128xf32> to vector<8x32xf32>
    %811 = math.tanh %810 : vector<8x32xf32>
    %812 = vector.extract_strided_slice %809 {offsets = [0, 0], sizes = [8, 32], strides = [1, 1]} : vector<8x96xf32> to vector<8x32xf32>
    %813 = vector.extract_strided_slice %809 {offsets = [0, 32], sizes = [8, 32], strides = [1, 1]} : vector<8x96xf32> to vector<8x32xf32>
    %814 = vector.extract_strided_slice %809 {offsets = [0, 64], sizes = [8, 32], strides = [1, 1]} : vector<8x96xf32> to vector<8x32xf32>
    %815 = arith.mulf %813, %792 : vector<8x32xf32>
    %816 = arith.mulf %812, %811 : vector<8x32xf32>
    %817 = arith.addf %815, %816 : vector<8x32xf32>
    %818 = math.tanh %817 : vector<8x32xf32>
    %819 = arith.mulf %814, %818 : vector<8x32xf32>
    %820 = arith.index_cast %798 : i32 to index
    %c0_232 = arith.constant 0 : index
    %821 = vector.load %arg7[%820, %c0_232] : memref<64x32xf32, #tpu.memory_space<vmem>>, vector<8x32xf32>
    tpu.vector_store %arg7[%820, %c0_232], %819 {strides = array<i32>} : memref<64x32xf32, #tpu.memory_space<vmem>>, vector<8x32xf32>,
    %c6_i32_233 = arith.constant 6 : i32
    %c8_i32_234 = arith.constant 8 : i32
    %822 = arith.muli %c6_i32_233, %c8_i32_234 : i32
    %823 = tpu.assume_multiple %822, 8 : i32
    %824 = arith.index_cast %823 : i32 to index
    %c0_235 = arith.constant 0 : index
    %825 = vector.load %arg8[%824, %c0_235] : memref<64x128xf32, #tpu.memory_space<vmem>>, vector<8x128xf32>
    %826 = arith.truncf %819 : vector<8x32xf32> to vector<8x32xbf16>
    %cst_236 = arith.constant dense<0.000000e+00> : vector<8x128xf32>
    %827 = tpu.matmul %826, %663, %cst_236 {dimension_numbers = #tpu.dot_dimension_numbers<[1], [0], [0], [1], [0, 0, 1, 1], [], []>} : vector<8x32xbf16>, vector<32x128xbf16>, vector<8x128xf32> -> vector<8x128xf32>
    %828 = arith.addf %825, %827 : vector<8x128xf32>
    %829 = vector.extract_strided_slice %828 {offsets = [0, 0], sizes = [8, 96], strides = [1, 1]} : vector<8x128xf32> to vector<8x96xf32>
    %830 = arith.negf %829 : vector<8x96xf32>
    %831 = math.exp %830 : vector<8x96xf32>
    %cst_237 = arith.constant 1.000000e+00 : f32
    %832 = vector.broadcast %cst_237 : f32 to vector<8x96xf32>
    %833 = arith.addf %832, %831 : vector<8x96xf32>
    %834 = arith.divf %832, %833 : vector<8x96xf32>
    %835 = vector.extract_strided_slice %828 {offsets = [0, 96], sizes = [8, 32], strides = [1, 1]} : vector<8x128xf32> to vector<8x32xf32>
    %836 = math.tanh %835 : vector<8x32xf32>
    %837 = vector.extract_strided_slice %834 {offsets = [0, 0], sizes = [8, 32], strides = [1, 1]} : vector<8x96xf32> to vector<8x32xf32>
    %838 = vector.extract_strided_slice %834 {offsets = [0, 32], sizes = [8, 32], strides = [1, 1]} : vector<8x96xf32> to vector<8x32xf32>
    %839 = vector.extract_strided_slice %834 {offsets = [0, 64], sizes = [8, 32], strides = [1, 1]} : vector<8x96xf32> to vector<8x32xf32>
    %840 = arith.mulf %838, %817 : vector<8x32xf32>
    %841 = arith.mulf %837, %836 : vector<8x32xf32>
    %842 = arith.addf %840, %841 : vector<8x32xf32>
    %843 = math.tanh %842 : vector<8x32xf32>
    %844 = arith.mulf %839, %843 : vector<8x32xf32>
    %845 = arith.index_cast %823 : i32 to index
    %c0_238 = arith.constant 0 : index
    %846 = vector.load %arg7[%845, %c0_238] : memref<64x32xf32, #tpu.memory_space<vmem>>, vector<8x32xf32>
    tpu.vector_store %arg7[%845, %c0_238], %844 {strides = array<i32>} : memref<64x32xf32, #tpu.memory_space<vmem>>, vector<8x32xf32>,
    %c7_i32_239 = arith.constant 7 : i32
    %c8_i32_240 = arith.constant 8 : i32
    %847 = arith.muli %c7_i32_239, %c8_i32_240 : i32
    %848 = tpu.assume_multiple %847, 8 : i32
    %849 = arith.index_cast %848 : i32 to index
    %c0_241 = arith.constant 0 : index
    %850 = vector.load %arg8[%849, %c0_241] : memref<64x128xf32, #tpu.memory_space<vmem>>, vector<8x128xf32>
    %851 = arith.truncf %844 : vector<8x32xf32> to vector<8x32xbf16>
    %cst_242 = arith.constant dense<0.000000e+00> : vector<8x128xf32>
    %852 = tpu.matmul %851, %663, %cst_242 {dimension_numbers = #tpu.dot_dimension_numbers<[1], [0], [0], [1], [0, 0, 1, 1], [], []>} : vector<8x32xbf16>, vector<32x128xbf16>, vector<8x128xf32> -> vector<8x128xf32>
    %853 = arith.addf %850, %852 : vector<8x128xf32>
    %854 = vector.extract_strided_slice %853 {offsets = [0, 0], sizes = [8, 96], strides = [1, 1]} : vector<8x128xf32> to vector<8x96xf32>
    %855 = arith.negf %854 : vector<8x96xf32>
    %856 = math.exp %855 : vector<8x96xf32>
    %cst_243 = arith.constant 1.000000e+00 : f32
    %857 = vector.broadcast %cst_243 : f32 to vector<8x96xf32>
    %858 = arith.addf %857, %856 : vector<8x96xf32>
    %859 = arith.divf %857, %858 : vector<8x96xf32>
    %860 = vector.extract_strided_slice %853 {offsets = [0, 96], sizes = [8, 32], strides = [1, 1]} : vector<8x128xf32> to vector<8x32xf32>
    %861 = math.tanh %860 : vector<8x32xf32>
    %862 = vector.extract_strided_slice %859 {offsets = [0, 0], sizes = [8, 32], strides = [1, 1]} : vector<8x96xf32> to vector<8x32xf32>
    %863 = vector.extract_strided_slice %859 {offsets = [0, 32], sizes = [8, 32], strides = [1, 1]} : vector<8x96xf32> to vector<8x32xf32>
    %864 = vector.extract_strided_slice %859 {offsets = [0, 64], sizes = [8, 32], strides = [1, 1]} : vector<8x96xf32> to vector<8x32xf32>
    %865 = arith.mulf %863, %842 : vector<8x32xf32>
    %866 = arith.mulf %862, %861 : vector<8x32xf32>
    %867 = arith.addf %865, %866 : vector<8x32xf32>
    %868 = math.tanh %867 : vector<8x32xf32>
    %869 = arith.mulf %864, %868 : vector<8x32xf32>
    %870 = arith.index_cast %848 : i32 to index
    %c0_244 = arith.constant 0 : index
    %871 = vector.load %arg7[%870, %c0_244] : memref<64x32xf32, #tpu.memory_space<vmem>>, vector<8x32xf32>
    tpu.vector_store %arg7[%870, %c0_244], %869 {strides = array<i32>} : memref<64x32xf32, #tpu.memory_space<vmem>>, vector<8x32xf32>,
    %c8_i32_245 = arith.constant 8 : i32
    %c3_246 = arith.constant 3 : index
    %c0_247 = arith.constant 0 : index
    %c0_248 = arith.constant 0 : index
    %872 = vector.load %arg2[%c3_246, %c0_247, %c0_248] : memref<7x32x128xbf16, #tpu.memory_space<vmem>>, vector<1x32x128xbf16>
    %873 = vector.shape_cast %872 : vector<1x32x128xbf16> to vector<32x128xbf16>
    %c4 = arith.constant 4 : index
    %c0_249 = arith.constant 0 : index
    %c0_250 = arith.constant 0 : index
    %874 = vector.load %arg3[%c4, %c0_249, %c0_250] : memref<8x32x128xbf16, #tpu.memory_space<vmem>>, vector<1x32x128xbf16>
    %875 = vector.shape_cast %874 : vector<1x32x128xbf16> to vector<32x128xbf16>
    %c4_251 = arith.constant 4 : index
    %c0_252 = arith.constant 0 : index
    %c0_253 = arith.constant 0 : index
    %876 = vector.load %arg4[%c4_251, %c0_252, %c0_253] : memref<8x1x128xf32, #tpu.memory_space<vmem>>, vector<1x1x128xf32>
    %877 = vector.shape_cast %876 : vector<1x1x128xf32> to vector<1x128xf32>
    %c0_254 = arith.constant 0 : index
    %c0_255 = arith.constant 0 : index
    %878 = vector.load %arg7[%c0_254, %c0_255] : memref<64x32xf32, #tpu.memory_space<vmem>>, vector<64x32xf32>
    %879 = arith.truncf %878 : vector<64x32xf32> to vector<64x32xbf16>
    %cst_256 = arith.constant dense<0.000000e+00> : vector<64x128xf32>
    %880 = tpu.matmul %879, %873, %cst_256 {dimension_numbers = #tpu.dot_dimension_numbers<[1], [0], [0], [1], [0, 0, 1, 1], [], []>} : vector<64x32xbf16>, vector<32x128xbf16>, vector<64x128xf32> -> vector<64x128xf32>
    %881 = vector.broadcast %877 : vector<1x128xf32> to vector<64x128xf32>
    %882 = arith.addf %880, %881 : vector<64x128xf32>
    %c0_257 = arith.constant 0 : index
    %c0_258 = arith.constant 0 : index
    %883 = vector.load %arg8[%c0_257, %c0_258] : memref<64x128xf32, #tpu.memory_space<vmem>>, vector<64x128xf32>
    tpu.vector_store %arg8[%c0_257, %c0_258], %882 {strides = array<i32>} : memref<64x128xf32, #tpu.memory_space<vmem>>, vector<64x128xf32>,
    %c0_i32_259 = arith.constant 0 : i32
    %c8_i32_260 = arith.constant 8 : i32
    %884 = arith.muli %c0_i32_259, %c8_i32_260 : i32
    %885 = tpu.assume_multiple %884, 8 : i32
    %886 = arith.index_cast %885 : i32 to index
    %c0_261 = arith.constant 0 : index
    %887 = vector.load %arg8[%886, %c0_261] : memref<64x128xf32, #tpu.memory_space<vmem>>, vector<8x128xf32>
    %888 = arith.truncf %869 : vector<8x32xf32> to vector<8x32xbf16>
    %cst_262 = arith.constant dense<0.000000e+00> : vector<8x128xf32>
    %889 = tpu.matmul %888, %875, %cst_262 {dimension_numbers = #tpu.dot_dimension_numbers<[1], [0], [0], [1], [0, 0, 1, 1], [], []>} : vector<8x32xbf16>, vector<32x128xbf16>, vector<8x128xf32> -> vector<8x128xf32>
    %890 = arith.addf %887, %889 : vector<8x128xf32>
    %891 = vector.extract_strided_slice %890 {offsets = [0, 0], sizes = [8, 96], strides = [1, 1]} : vector<8x128xf32> to vector<8x96xf32>
    %892 = arith.negf %891 : vector<8x96xf32>
    %893 = math.exp %892 : vector<8x96xf32>
    %cst_263 = arith.constant 1.000000e+00 : f32
    %894 = vector.broadcast %cst_263 : f32 to vector<8x96xf32>
    %895 = arith.addf %894, %893 : vector<8x96xf32>
    %896 = arith.divf %894, %895 : vector<8x96xf32>
    %897 = vector.extract_strided_slice %890 {offsets = [0, 96], sizes = [8, 32], strides = [1, 1]} : vector<8x128xf32> to vector<8x32xf32>
    %898 = math.tanh %897 : vector<8x32xf32>
    %899 = vector.extract_strided_slice %896 {offsets = [0, 0], sizes = [8, 32], strides = [1, 1]} : vector<8x96xf32> to vector<8x32xf32>
    %900 = vector.extract_strided_slice %896 {offsets = [0, 32], sizes = [8, 32], strides = [1, 1]} : vector<8x96xf32> to vector<8x32xf32>
    %901 = vector.extract_strided_slice %896 {offsets = [0, 64], sizes = [8, 32], strides = [1, 1]} : vector<8x96xf32> to vector<8x32xf32>
    %902 = arith.mulf %900, %867 : vector<8x32xf32>
    %903 = arith.mulf %899, %898 : vector<8x32xf32>
    %904 = arith.addf %902, %903 : vector<8x32xf32>
    %905 = math.tanh %904 : vector<8x32xf32>
    %906 = arith.mulf %901, %905 : vector<8x32xf32>
    %907 = arith.index_cast %885 : i32 to index
    %c0_264 = arith.constant 0 : index
    %908 = vector.load %arg6[%907, %c0_264] : memref<64x32xf32, #tpu.memory_space<vmem>>, vector<8x32xf32>
    %909 = arith.addf %908, %906 : vector<8x32xf32>
    %910 = arith.index_cast %885 : i32 to index
    %c0_265 = arith.constant 0 : index
    %911 = vector.load %arg6[%910, %c0_265] : memref<64x32xf32, #tpu.memory_space<vmem>>, vector<8x32xf32>
    tpu.vector_store %arg6[%910, %c0_265], %909 {strides = array<i32>} : memref<64x32xf32, #tpu.memory_space<vmem>>, vector<8x32xf32>,
    %c1_i32_266 = arith.constant 1 : i32
    %c8_i32_267 = arith.constant 8 : i32
    %912 = arith.muli %c1_i32_266, %c8_i32_267 : i32
    %913 = tpu.assume_multiple %912, 8 : i32
    %914 = arith.index_cast %913 : i32 to index
    %c0_268 = arith.constant 0 : index
    %915 = vector.load %arg8[%914, %c0_268] : memref<64x128xf32, #tpu.memory_space<vmem>>, vector<8x128xf32>
    %916 = arith.truncf %906 : vector<8x32xf32> to vector<8x32xbf16>
    %cst_269 = arith.constant dense<0.000000e+00> : vector<8x128xf32>
    %917 = tpu.matmul %916, %875, %cst_269 {dimension_numbers = #tpu.dot_dimension_numbers<[1], [0], [0], [1], [0, 0, 1, 1], [], []>} : vector<8x32xbf16>, vector<32x128xbf16>, vector<8x128xf32> -> vector<8x128xf32>
    %918 = arith.addf %915, %917 : vector<8x128xf32>
    %919 = vector.extract_strided_slice %918 {offsets = [0, 0], sizes = [8, 96], strides = [1, 1]} : vector<8x128xf32> to vector<8x96xf32>
    %920 = arith.negf %919 : vector<8x96xf32>
    %921 = math.exp %920 : vector<8x96xf32>
    %cst_270 = arith.constant 1.000000e+00 : f32
    %922 = vector.broadcast %cst_270 : f32 to vector<8x96xf32>
    %923 = arith.addf %922, %921 : vector<8x96xf32>
    %924 = arith.divf %922, %923 : vector<8x96xf32>
    %925 = vector.extract_strided_slice %918 {offsets = [0, 96], sizes = [8, 32], strides = [1, 1]} : vector<8x128xf32> to vector<8x32xf32>
    %926 = math.tanh %925 : vector<8x32xf32>
    %927 = vector.extract_strided_slice %924 {offsets = [0, 0], sizes = [8, 32], strides = [1, 1]} : vector<8x96xf32> to vector<8x32xf32>
    %928 = vector.extract_strided_slice %924 {offsets = [0, 32], sizes = [8, 32], strides = [1, 1]} : vector<8x96xf32> to vector<8x32xf32>
    %929 = vector.extract_strided_slice %924 {offsets = [0, 64], sizes = [8, 32], strides = [1, 1]} : vector<8x96xf32> to vector<8x32xf32>
    %930 = arith.mulf %928, %904 : vector<8x32xf32>
    %931 = arith.mulf %927, %926 : vector<8x32xf32>
    %932 = arith.addf %930, %931 : vector<8x32xf32>
    %933 = math.tanh %932 : vector<8x32xf32>
    %934 = arith.mulf %929, %933 : vector<8x32xf32>
    %935 = arith.index_cast %913 : i32 to index
    %c0_271 = arith.constant 0 : index
    %936 = vector.load %arg6[%935, %c0_271] : memref<64x32xf32, #tpu.memory_space<vmem>>, vector<8x32xf32>
    %937 = arith.addf %936, %934 : vector<8x32xf32>
    %938 = arith.index_cast %913 : i32 to index
    %c0_272 = arith.constant 0 : index
    %939 = vector.load %arg6[%938, %c0_272] : memref<64x32xf32, #tpu.memory_space<vmem>>, vector<8x32xf32>
    tpu.vector_store %arg6[%938, %c0_272], %937 {strides = array<i32>} : memref<64x32xf32, #tpu.memory_space<vmem>>, vector<8x32xf32>,
    %c2_i32_273 = arith.constant 2 : i32
    %c8_i32_274 = arith.constant 8 : i32
    %940 = arith.muli %c2_i32_273, %c8_i32_274 : i32
    %941 = tpu.assume_multiple %940, 8 : i32
    %942 = arith.index_cast %941 : i32 to index
    %c0_275 = arith.constant 0 : index
    %943 = vector.load %arg8[%942, %c0_275] : memref<64x128xf32, #tpu.memory_space<vmem>>, vector<8x128xf32>
    %944 = arith.truncf %934 : vector<8x32xf32> to vector<8x32xbf16>
    %cst_276 = arith.constant dense<0.000000e+00> : vector<8x128xf32>
    %945 = tpu.matmul %944, %875, %cst_276 {dimension_numbers = #tpu.dot_dimension_numbers<[1], [0], [0], [1], [0, 0, 1, 1], [], []>} : vector<8x32xbf16>, vector<32x128xbf16>, vector<8x128xf32> -> vector<8x128xf32>
    %946 = arith.addf %943, %945 : vector<8x128xf32>
    %947 = vector.extract_strided_slice %946 {offsets = [0, 0], sizes = [8, 96], strides = [1, 1]} : vector<8x128xf32> to vector<8x96xf32>
    %948 = arith.negf %947 : vector<8x96xf32>
    %949 = math.exp %948 : vector<8x96xf32>
    %cst_277 = arith.constant 1.000000e+00 : f32
    %950 = vector.broadcast %cst_277 : f32 to vector<8x96xf32>
    %951 = arith.addf %950, %949 : vector<8x96xf32>
    %952 = arith.divf %950, %951 : vector<8x96xf32>
    %953 = vector.extract_strided_slice %946 {offsets = [0, 96], sizes = [8, 32], strides = [1, 1]} : vector<8x128xf32> to vector<8x32xf32>
    %954 = math.tanh %953 : vector<8x32xf32>
    %955 = vector.extract_strided_slice %952 {offsets = [0, 0], sizes = [8, 32], strides = [1, 1]} : vector<8x96xf32> to vector<8x32xf32>
    %956 = vector.extract_strided_slice %952 {offsets = [0, 32], sizes = [8, 32], strides = [1, 1]} : vector<8x96xf32> to vector<8x32xf32>
    %957 = vector.extract_strided_slice %952 {offsets = [0, 64], sizes = [8, 32], strides = [1, 1]} : vector<8x96xf32> to vector<8x32xf32>
    %958 = arith.mulf %956, %932 : vector<8x32xf32>
    %959 = arith.mulf %955, %954 : vector<8x32xf32>
    %960 = arith.addf %958, %959 : vector<8x32xf32>
    %961 = math.tanh %960 : vector<8x32xf32>
    %962 = arith.mulf %957, %961 : vector<8x32xf32>
    %963 = arith.index_cast %941 : i32 to index
    %c0_278 = arith.constant 0 : index
    %964 = vector.load %arg6[%963, %c0_278] : memref<64x32xf32, #tpu.memory_space<vmem>>, vector<8x32xf32>
    %965 = arith.addf %964, %962 : vector<8x32xf32>
    %966 = arith.index_cast %941 : i32 to index
    %c0_279 = arith.constant 0 : index
    %967 = vector.load %arg6[%966, %c0_279] : memref<64x32xf32, #tpu.memory_space<vmem>>, vector<8x32xf32>
    tpu.vector_store %arg6[%966, %c0_279], %965 {strides = array<i32>} : memref<64x32xf32, #tpu.memory_space<vmem>>, vector<8x32xf32>,
    %c3_i32_280 = arith.constant 3 : i32
    %c8_i32_281 = arith.constant 8 : i32
    %968 = arith.muli %c3_i32_280, %c8_i32_281 : i32
    %969 = tpu.assume_multiple %968, 8 : i32
    %970 = arith.index_cast %969 : i32 to index
    %c0_282 = arith.constant 0 : index
    %971 = vector.load %arg8[%970, %c0_282] : memref<64x128xf32, #tpu.memory_space<vmem>>, vector<8x128xf32>
    %972 = arith.truncf %962 : vector<8x32xf32> to vector<8x32xbf16>
    %cst_283 = arith.constant dense<0.000000e+00> : vector<8x128xf32>
    %973 = tpu.matmul %972, %875, %cst_283 {dimension_numbers = #tpu.dot_dimension_numbers<[1], [0], [0], [1], [0, 0, 1, 1], [], []>} : vector<8x32xbf16>, vector<32x128xbf16>, vector<8x128xf32> -> vector<8x128xf32>
    %974 = arith.addf %971, %973 : vector<8x128xf32>
    %975 = vector.extract_strided_slice %974 {offsets = [0, 0], sizes = [8, 96], strides = [1, 1]} : vector<8x128xf32> to vector<8x96xf32>
    %976 = arith.negf %975 : vector<8x96xf32>
    %977 = math.exp %976 : vector<8x96xf32>
    %cst_284 = arith.constant 1.000000e+00 : f32
    %978 = vector.broadcast %cst_284 : f32 to vector<8x96xf32>
    %979 = arith.addf %978, %977 : vector<8x96xf32>
    %980 = arith.divf %978, %979 : vector<8x96xf32>
    %981 = vector.extract_strided_slice %974 {offsets = [0, 96], sizes = [8, 32], strides = [1, 1]} : vector<8x128xf32> to vector<8x32xf32>
    %982 = math.tanh %981 : vector<8x32xf32>
    %983 = vector.extract_strided_slice %980 {offsets = [0, 0], sizes = [8, 32], strides = [1, 1]} : vector<8x96xf32> to vector<8x32xf32>
    %984 = vector.extract_strided_slice %980 {offsets = [0, 32], sizes = [8, 32], strides = [1, 1]} : vector<8x96xf32> to vector<8x32xf32>
    %985 = vector.extract_strided_slice %980 {offsets = [0, 64], sizes = [8, 32], strides = [1, 1]} : vector<8x96xf32> to vector<8x32xf32>
    %986 = arith.mulf %984, %960 : vector<8x32xf32>
    %987 = arith.mulf %983, %982 : vector<8x32xf32>
    %988 = arith.addf %986, %987 : vector<8x32xf32>
    %989 = math.tanh %988 : vector<8x32xf32>
    %990 = arith.mulf %985, %989 : vector<8x32xf32>
    %991 = arith.index_cast %969 : i32 to index
    %c0_285 = arith.constant 0 : index
    %992 = vector.load %arg6[%991, %c0_285] : memref<64x32xf32, #tpu.memory_space<vmem>>, vector<8x32xf32>
    %993 = arith.addf %992, %990 : vector<8x32xf32>
    %994 = arith.index_cast %969 : i32 to index
    %c0_286 = arith.constant 0 : index
    %995 = vector.load %arg6[%994, %c0_286] : memref<64x32xf32, #tpu.memory_space<vmem>>, vector<8x32xf32>
    tpu.vector_store %arg6[%994, %c0_286], %993 {strides = array<i32>} : memref<64x32xf32, #tpu.memory_space<vmem>>, vector<8x32xf32>,
    %c4_i32_287 = arith.constant 4 : i32
    %c8_i32_288 = arith.constant 8 : i32
    %996 = arith.muli %c4_i32_287, %c8_i32_288 : i32
    %997 = tpu.assume_multiple %996, 8 : i32
    %998 = arith.index_cast %997 : i32 to index
    %c0_289 = arith.constant 0 : index
    %999 = vector.load %arg8[%998, %c0_289] : memref<64x128xf32, #tpu.memory_space<vmem>>, vector<8x128xf32>
    %1000 = arith.truncf %990 : vector<8x32xf32> to vector<8x32xbf16>
    %cst_290 = arith.constant dense<0.000000e+00> : vector<8x128xf32>
    %1001 = tpu.matmul %1000, %875, %cst_290 {dimension_numbers = #tpu.dot_dimension_numbers<[1], [0], [0], [1], [0, 0, 1, 1], [], []>} : vector<8x32xbf16>, vector<32x128xbf16>, vector<8x128xf32> -> vector<8x128xf32>
    %1002 = arith.addf %999, %1001 : vector<8x128xf32>
    %1003 = vector.extract_strided_slice %1002 {offsets = [0, 0], sizes = [8, 96], strides = [1, 1]} : vector<8x128xf32> to vector<8x96xf32>
    %1004 = arith.negf %1003 : vector<8x96xf32>
    %1005 = math.exp %1004 : vector<8x96xf32>
    %cst_291 = arith.constant 1.000000e+00 : f32
    %1006 = vector.broadcast %cst_291 : f32 to vector<8x96xf32>
    %1007 = arith.addf %1006, %1005 : vector<8x96xf32>
    %1008 = arith.divf %1006, %1007 : vector<8x96xf32>
    %1009 = vector.extract_strided_slice %1002 {offsets = [0, 96], sizes = [8, 32], strides = [1, 1]} : vector<8x128xf32> to vector<8x32xf32>
    %1010 = math.tanh %1009 : vector<8x32xf32>
    %1011 = vector.extract_strided_slice %1008 {offsets = [0, 0], sizes = [8, 32], strides = [1, 1]} : vector<8x96xf32> to vector<8x32xf32>
    %1012 = vector.extract_strided_slice %1008 {offsets = [0, 32], sizes = [8, 32], strides = [1, 1]} : vector<8x96xf32> to vector<8x32xf32>
    %1013 = vector.extract_strided_slice %1008 {offsets = [0, 64], sizes = [8, 32], strides = [1, 1]} : vector<8x96xf32> to vector<8x32xf32>
    %1014 = arith.mulf %1012, %988 : vector<8x32xf32>
    %1015 = arith.mulf %1011, %1010 : vector<8x32xf32>
    %1016 = arith.addf %1014, %1015 : vector<8x32xf32>
    %1017 = math.tanh %1016 : vector<8x32xf32>
    %1018 = arith.mulf %1013, %1017 : vector<8x32xf32>
    %1019 = arith.index_cast %997 : i32 to index
    %c0_292 = arith.constant 0 : index
    %1020 = vector.load %arg6[%1019, %c0_292] : memref<64x32xf32, #tpu.memory_space<vmem>>, vector<8x32xf32>
    %1021 = arith.addf %1020, %1018 : vector<8x32xf32>
    %1022 = arith.index_cast %997 : i32 to index
    %c0_293 = arith.constant 0 : index
    %1023 = vector.load %arg6[%1022, %c0_293] : memref<64x32xf32, #tpu.memory_space<vmem>>, vector<8x32xf32>
    tpu.vector_store %arg6[%1022, %c0_293], %1021 {strides = array<i32>} : memref<64x32xf32, #tpu.memory_space<vmem>>, vector<8x32xf32>,
    %c5_i32_294 = arith.constant 5 : i32
    %c8_i32_295 = arith.constant 8 : i32
    %1024 = arith.muli %c5_i32_294, %c8_i32_295 : i32
    %1025 = tpu.assume_multiple %1024, 8 : i32
    %1026 = arith.index_cast %1025 : i32 to index
    %c0_296 = arith.constant 0 : index
    %1027 = vector.load %arg8[%1026, %c0_296] : memref<64x128xf32, #tpu.memory_space<vmem>>, vector<8x128xf32>
    %1028 = arith.truncf %1018 : vector<8x32xf32> to vector<8x32xbf16>
    %cst_297 = arith.constant dense<0.000000e+00> : vector<8x128xf32>
    %1029 = tpu.matmul %1028, %875, %cst_297 {dimension_numbers = #tpu.dot_dimension_numbers<[1], [0], [0], [1], [0, 0, 1, 1], [], []>} : vector<8x32xbf16>, vector<32x128xbf16>, vector<8x128xf32> -> vector<8x128xf32>
    %1030 = arith.addf %1027, %1029 : vector<8x128xf32>
    %1031 = vector.extract_strided_slice %1030 {offsets = [0, 0], sizes = [8, 96], strides = [1, 1]} : vector<8x128xf32> to vector<8x96xf32>
    %1032 = arith.negf %1031 : vector<8x96xf32>
    %1033 = math.exp %1032 : vector<8x96xf32>
    %cst_298 = arith.constant 1.000000e+00 : f32
    %1034 = vector.broadcast %cst_298 : f32 to vector<8x96xf32>
    %1035 = arith.addf %1034, %1033 : vector<8x96xf32>
    %1036 = arith.divf %1034, %1035 : vector<8x96xf32>
    %1037 = vector.extract_strided_slice %1030 {offsets = [0, 96], sizes = [8, 32], strides = [1, 1]} : vector<8x128xf32> to vector<8x32xf32>
    %1038 = math.tanh %1037 : vector<8x32xf32>
    %1039 = vector.extract_strided_slice %1036 {offsets = [0, 0], sizes = [8, 32], strides = [1, 1]} : vector<8x96xf32> to vector<8x32xf32>
    %1040 = vector.extract_strided_slice %1036 {offsets = [0, 32], sizes = [8, 32], strides = [1, 1]} : vector<8x96xf32> to vector<8x32xf32>
    %1041 = vector.extract_strided_slice %1036 {offsets = [0, 64], sizes = [8, 32], strides = [1, 1]} : vector<8x96xf32> to vector<8x32xf32>
    %1042 = arith.mulf %1040, %1016 : vector<8x32xf32>
    %1043 = arith.mulf %1039, %1038 : vector<8x32xf32>
    %1044 = arith.addf %1042, %1043 : vector<8x32xf32>
    %1045 = math.tanh %1044 : vector<8x32xf32>
    %1046 = arith.mulf %1041, %1045 : vector<8x32xf32>
    %1047 = arith.index_cast %1025 : i32 to index
    %c0_299 = arith.constant 0 : index
    %1048 = vector.load %arg6[%1047, %c0_299] : memref<64x32xf32, #tpu.memory_space<vmem>>, vector<8x32xf32>
    %1049 = arith.addf %1048, %1046 : vector<8x32xf32>
    %1050 = arith.index_cast %1025 : i32 to index
    %c0_300 = arith.constant 0 : index
    %1051 = vector.load %arg6[%1050, %c0_300] : memref<64x32xf32, #tpu.memory_space<vmem>>, vector<8x32xf32>
    tpu.vector_store %arg6[%1050, %c0_300], %1049 {strides = array<i32>} : memref<64x32xf32, #tpu.memory_space<vmem>>, vector<8x32xf32>,
    %c6_i32_301 = arith.constant 6 : i32
    %c8_i32_302 = arith.constant 8 : i32
    %1052 = arith.muli %c6_i32_301, %c8_i32_302 : i32
    %1053 = tpu.assume_multiple %1052, 8 : i32
    %1054 = arith.index_cast %1053 : i32 to index
    %c0_303 = arith.constant 0 : index
    %1055 = vector.load %arg8[%1054, %c0_303] : memref<64x128xf32, #tpu.memory_space<vmem>>, vector<8x128xf32>
    %1056 = arith.truncf %1046 : vector<8x32xf32> to vector<8x32xbf16>
    %cst_304 = arith.constant dense<0.000000e+00> : vector<8x128xf32>
    %1057 = tpu.matmul %1056, %875, %cst_304 {dimension_numbers = #tpu.dot_dimension_numbers<[1], [0], [0], [1], [0, 0, 1, 1], [], []>} : vector<8x32xbf16>, vector<32x128xbf16>, vector<8x128xf32> -> vector<8x128xf32>
    %1058 = arith.addf %1055, %1057 : vector<8x128xf32>
    %1059 = vector.extract_strided_slice %1058 {offsets = [0, 0], sizes = [8, 96], strides = [1, 1]} : vector<8x128xf32> to vector<8x96xf32>
    %1060 = arith.negf %1059 : vector<8x96xf32>
    %1061 = math.exp %1060 : vector<8x96xf32>
    %cst_305 = arith.constant 1.000000e+00 : f32
    %1062 = vector.broadcast %cst_305 : f32 to vector<8x96xf32>
    %1063 = arith.addf %1062, %1061 : vector<8x96xf32>
    %1064 = arith.divf %1062, %1063 : vector<8x96xf32>
    %1065 = vector.extract_strided_slice %1058 {offsets = [0, 96], sizes = [8, 32], strides = [1, 1]} : vector<8x128xf32> to vector<8x32xf32>
    %1066 = math.tanh %1065 : vector<8x32xf32>
    %1067 = vector.extract_strided_slice %1064 {offsets = [0, 0], sizes = [8, 32], strides = [1, 1]} : vector<8x96xf32> to vector<8x32xf32>
    %1068 = vector.extract_strided_slice %1064 {offsets = [0, 32], sizes = [8, 32], strides = [1, 1]} : vector<8x96xf32> to vector<8x32xf32>
    %1069 = vector.extract_strided_slice %1064 {offsets = [0, 64], sizes = [8, 32], strides = [1, 1]} : vector<8x96xf32> to vector<8x32xf32>
    %1070 = arith.mulf %1068, %1044 : vector<8x32xf32>
    %1071 = arith.mulf %1067, %1066 : vector<8x32xf32>
    %1072 = arith.addf %1070, %1071 : vector<8x32xf32>
    %1073 = math.tanh %1072 : vector<8x32xf32>
    %1074 = arith.mulf %1069, %1073 : vector<8x32xf32>
    %1075 = arith.index_cast %1053 : i32 to index
    %c0_306 = arith.constant 0 : index
    %1076 = vector.load %arg6[%1075, %c0_306] : memref<64x32xf32, #tpu.memory_space<vmem>>, vector<8x32xf32>
    %1077 = arith.addf %1076, %1074 : vector<8x32xf32>
    %1078 = arith.index_cast %1053 : i32 to index
    %c0_307 = arith.constant 0 : index
    %1079 = vector.load %arg6[%1078, %c0_307] : memref<64x32xf32, #tpu.memory_space<vmem>>, vector<8x32xf32>
    tpu.vector_store %arg6[%1078, %c0_307], %1077 {strides = array<i32>} : memref<64x32xf32, #tpu.memory_space<vmem>>, vector<8x32xf32>,
    %c7_i32_308 = arith.constant 7 : i32
    %c8_i32_309 = arith.constant 8 : i32
    %1080 = arith.muli %c7_i32_308, %c8_i32_309 : i32
    %1081 = tpu.assume_multiple %1080, 8 : i32
    %1082 = arith.index_cast %1081 : i32 to index
    %c0_310 = arith.constant 0 : index
    %1083 = vector.load %arg8[%1082, %c0_310] : memref<64x128xf32, #tpu.memory_space<vmem>>, vector<8x128xf32>
    %1084 = arith.truncf %1074 : vector<8x32xf32> to vector<8x32xbf16>
    %cst_311 = arith.constant dense<0.000000e+00> : vector<8x128xf32>
    %1085 = tpu.matmul %1084, %875, %cst_311 {dimension_numbers = #tpu.dot_dimension_numbers<[1], [0], [0], [1], [0, 0, 1, 1], [], []>} : vector<8x32xbf16>, vector<32x128xbf16>, vector<8x128xf32> -> vector<8x128xf32>
    %1086 = arith.addf %1083, %1085 : vector<8x128xf32>
    %1087 = vector.extract_strided_slice %1086 {offsets = [0, 0], sizes = [8, 96], strides = [1, 1]} : vector<8x128xf32> to vector<8x96xf32>
    %1088 = arith.negf %1087 : vector<8x96xf32>
    %1089 = math.exp %1088 : vector<8x96xf32>
    %cst_312 = arith.constant 1.000000e+00 : f32
    %1090 = vector.broadcast %cst_312 : f32 to vector<8x96xf32>
    %1091 = arith.addf %1090, %1089 : vector<8x96xf32>
    %1092 = arith.divf %1090, %1091 : vector<8x96xf32>
    %1093 = vector.extract_strided_slice %1086 {offsets = [0, 96], sizes = [8, 32], strides = [1, 1]} : vector<8x128xf32> to vector<8x32xf32>
    %1094 = math.tanh %1093 : vector<8x32xf32>
    %1095 = vector.extract_strided_slice %1092 {offsets = [0, 0], sizes = [8, 32], strides = [1, 1]} : vector<8x96xf32> to vector<8x32xf32>
    %1096 = vector.extract_strided_slice %1092 {offsets = [0, 32], sizes = [8, 32], strides = [1, 1]} : vector<8x96xf32> to vector<8x32xf32>
    %1097 = vector.extract_strided_slice %1092 {offsets = [0, 64], sizes = [8, 32], strides = [1, 1]} : vector<8x96xf32> to vector<8x32xf32>
    %1098 = arith.mulf %1096, %1072 : vector<8x32xf32>
    %1099 = arith.mulf %1095, %1094 : vector<8x32xf32>
    %1100 = arith.addf %1098, %1099 : vector<8x32xf32>
    %1101 = math.tanh %1100 : vector<8x32xf32>
    %1102 = arith.mulf %1097, %1101 : vector<8x32xf32>
    %1103 = arith.index_cast %1081 : i32 to index
    %c0_313 = arith.constant 0 : index
    %1104 = vector.load %arg6[%1103, %c0_313] : memref<64x32xf32, #tpu.memory_space<vmem>>, vector<8x32xf32>
    %1105 = arith.addf %1104, %1102 : vector<8x32xf32>
    %1106 = arith.index_cast %1081 : i32 to index
    %c0_314 = arith.constant 0 : index
    %1107 = vector.load %arg6[%1106, %c0_314] : memref<64x32xf32, #tpu.memory_space<vmem>>, vector<8x32xf32>
    tpu.vector_store %arg6[%1106, %c0_314], %1105 {strides = array<i32>} : memref<64x32xf32, #tpu.memory_space<vmem>>, vector<8x32xf32>,
    %c8_i32_315 = arith.constant 8 : i32
    %c4_316 = arith.constant 4 : index
    %c0_317 = arith.constant 0 : index
    %c0_318 = arith.constant 0 : index
    %1108 = vector.load %arg2[%c4_316, %c0_317, %c0_318] : memref<7x32x128xbf16, #tpu.memory_space<vmem>>, vector<1x32x128xbf16>
    %1109 = vector.shape_cast %1108 : vector<1x32x128xbf16> to vector<32x128xbf16>
    %c5 = arith.constant 5 : index
    %c0_319 = arith.constant 0 : index
    %c0_320 = arith.constant 0 : index
    %1110 = vector.load %arg3[%c5, %c0_319, %c0_320] : memref<8x32x128xbf16, #tpu.memory_space<vmem>>, vector<1x32x128xbf16>
    %1111 = vector.shape_cast %1110 : vector<1x32x128xbf16> to vector<32x128xbf16>
    %c5_321 = arith.constant 5 : index
    %c0_322 = arith.constant 0 : index
    %c0_323 = arith.constant 0 : index
    %1112 = vector.load %arg4[%c5_321, %c0_322, %c0_323] : memref<8x1x128xf32, #tpu.memory_space<vmem>>, vector<1x1x128xf32>
    %1113 = vector.shape_cast %1112 : vector<1x1x128xf32> to vector<1x128xf32>
    %c0_324 = arith.constant 0 : index
    %c0_325 = arith.constant 0 : index
    %1114 = vector.load %arg6[%c0_324, %c0_325] : memref<64x32xf32, #tpu.memory_space<vmem>>, vector<64x32xf32>
    %1115 = arith.truncf %1114 : vector<64x32xf32> to vector<64x32xbf16>
    %cst_326 = arith.constant dense<0.000000e+00> : vector<64x128xf32>
    %1116 = tpu.matmul %1115, %1109, %cst_326 {dimension_numbers = #tpu.dot_dimension_numbers<[1], [0], [0], [1], [0, 0, 1, 1], [], []>} : vector<64x32xbf16>, vector<32x128xbf16>, vector<64x128xf32> -> vector<64x128xf32>
    %1117 = vector.broadcast %1113 : vector<1x128xf32> to vector<64x128xf32>
    %1118 = arith.addf %1116, %1117 : vector<64x128xf32>
    %c0_327 = arith.constant 0 : index
    %c0_328 = arith.constant 0 : index
    %1119 = vector.load %arg8[%c0_327, %c0_328] : memref<64x128xf32, #tpu.memory_space<vmem>>, vector<64x128xf32>
    tpu.vector_store %arg8[%c0_327, %c0_328], %1118 {strides = array<i32>} : memref<64x128xf32, #tpu.memory_space<vmem>>, vector<64x128xf32>,
    %c0_i32_329 = arith.constant 0 : i32
    %c8_i32_330 = arith.constant 8 : i32
    %1120 = arith.muli %c0_i32_329, %c8_i32_330 : i32
    %1121 = tpu.assume_multiple %1120, 8 : i32
    %1122 = arith.index_cast %1121 : i32 to index
    %c0_331 = arith.constant 0 : index
    %1123 = vector.load %arg8[%1122, %c0_331] : memref<64x128xf32, #tpu.memory_space<vmem>>, vector<8x128xf32>
    %1124 = arith.truncf %1102 : vector<8x32xf32> to vector<8x32xbf16>
    %cst_332 = arith.constant dense<0.000000e+00> : vector<8x128xf32>
    %1125 = tpu.matmul %1124, %1111, %cst_332 {dimension_numbers = #tpu.dot_dimension_numbers<[1], [0], [0], [1], [0, 0, 1, 1], [], []>} : vector<8x32xbf16>, vector<32x128xbf16>, vector<8x128xf32> -> vector<8x128xf32>
    %1126 = arith.addf %1123, %1125 : vector<8x128xf32>
    %1127 = vector.extract_strided_slice %1126 {offsets = [0, 0], sizes = [8, 96], strides = [1, 1]} : vector<8x128xf32> to vector<8x96xf32>
    %1128 = arith.negf %1127 : vector<8x96xf32>
    %1129 = math.exp %1128 : vector<8x96xf32>
    %cst_333 = arith.constant 1.000000e+00 : f32
    %1130 = vector.broadcast %cst_333 : f32 to vector<8x96xf32>
    %1131 = arith.addf %1130, %1129 : vector<8x96xf32>
    %1132 = arith.divf %1130, %1131 : vector<8x96xf32>
    %1133 = vector.extract_strided_slice %1126 {offsets = [0, 96], sizes = [8, 32], strides = [1, 1]} : vector<8x128xf32> to vector<8x32xf32>
    %1134 = math.tanh %1133 : vector<8x32xf32>
    %1135 = vector.extract_strided_slice %1132 {offsets = [0, 0], sizes = [8, 32], strides = [1, 1]} : vector<8x96xf32> to vector<8x32xf32>
    %1136 = vector.extract_strided_slice %1132 {offsets = [0, 32], sizes = [8, 32], strides = [1, 1]} : vector<8x96xf32> to vector<8x32xf32>
    %1137 = vector.extract_strided_slice %1132 {offsets = [0, 64], sizes = [8, 32], strides = [1, 1]} : vector<8x96xf32> to vector<8x32xf32>
    %1138 = arith.mulf %1136, %1100 : vector<8x32xf32>
    %1139 = arith.mulf %1135, %1134 : vector<8x32xf32>
    %1140 = arith.addf %1138, %1139 : vector<8x32xf32>
    %1141 = math.tanh %1140 : vector<8x32xf32>
    %1142 = arith.mulf %1137, %1141 : vector<8x32xf32>
    %1143 = arith.index_cast %1121 : i32 to index
    %c0_334 = arith.constant 0 : index
    %1144 = vector.load %arg7[%1143, %c0_334] : memref<64x32xf32, #tpu.memory_space<vmem>>, vector<8x32xf32>
    tpu.vector_store %arg7[%1143, %c0_334], %1142 {strides = array<i32>} : memref<64x32xf32, #tpu.memory_space<vmem>>, vector<8x32xf32>,
    %c1_i32_335 = arith.constant 1 : i32
    %c8_i32_336 = arith.constant 8 : i32
    %1145 = arith.muli %c1_i32_335, %c8_i32_336 : i32
    %1146 = tpu.assume_multiple %1145, 8 : i32
    %1147 = arith.index_cast %1146 : i32 to index
    %c0_337 = arith.constant 0 : index
    %1148 = vector.load %arg8[%1147, %c0_337] : memref<64x128xf32, #tpu.memory_space<vmem>>, vector<8x128xf32>
    %1149 = arith.truncf %1142 : vector<8x32xf32> to vector<8x32xbf16>
    %cst_338 = arith.constant dense<0.000000e+00> : vector<8x128xf32>
    %1150 = tpu.matmul %1149, %1111, %cst_338 {dimension_numbers = #tpu.dot_dimension_numbers<[1], [0], [0], [1], [0, 0, 1, 1], [], []>} : vector<8x32xbf16>, vector<32x128xbf16>, vector<8x128xf32> -> vector<8x128xf32>
    %1151 = arith.addf %1148, %1150 : vector<8x128xf32>
    %1152 = vector.extract_strided_slice %1151 {offsets = [0, 0], sizes = [8, 96], strides = [1, 1]} : vector<8x128xf32> to vector<8x96xf32>
    %1153 = arith.negf %1152 : vector<8x96xf32>
    %1154 = math.exp %1153 : vector<8x96xf32>
    %cst_339 = arith.constant 1.000000e+00 : f32
    %1155 = vector.broadcast %cst_339 : f32 to vector<8x96xf32>
    %1156 = arith.addf %1155, %1154 : vector<8x96xf32>
    %1157 = arith.divf %1155, %1156 : vector<8x96xf32>
    %1158 = vector.extract_strided_slice %1151 {offsets = [0, 96], sizes = [8, 32], strides = [1, 1]} : vector<8x128xf32> to vector<8x32xf32>
    %1159 = math.tanh %1158 : vector<8x32xf32>
    %1160 = vector.extract_strided_slice %1157 {offsets = [0, 0], sizes = [8, 32], strides = [1, 1]} : vector<8x96xf32> to vector<8x32xf32>
    %1161 = vector.extract_strided_slice %1157 {offsets = [0, 32], sizes = [8, 32], strides = [1, 1]} : vector<8x96xf32> to vector<8x32xf32>
    %1162 = vector.extract_strided_slice %1157 {offsets = [0, 64], sizes = [8, 32], strides = [1, 1]} : vector<8x96xf32> to vector<8x32xf32>
    %1163 = arith.mulf %1161, %1140 : vector<8x32xf32>
    %1164 = arith.mulf %1160, %1159 : vector<8x32xf32>
    %1165 = arith.addf %1163, %1164 : vector<8x32xf32>
    %1166 = math.tanh %1165 : vector<8x32xf32>
    %1167 = arith.mulf %1162, %1166 : vector<8x32xf32>
    %1168 = arith.index_cast %1146 : i32 to index
    %c0_340 = arith.constant 0 : index
    %1169 = vector.load %arg7[%1168, %c0_340] : memref<64x32xf32, #tpu.memory_space<vmem>>, vector<8x32xf32>
    tpu.vector_store %arg7[%1168, %c0_340], %1167 {strides = array<i32>} : memref<64x32xf32, #tpu.memory_space<vmem>>, vector<8x32xf32>,
    %c2_i32_341 = arith.constant 2 : i32
    %c8_i32_342 = arith.constant 8 : i32
    %1170 = arith.muli %c2_i32_341, %c8_i32_342 : i32
    %1171 = tpu.assume_multiple %1170, 8 : i32
    %1172 = arith.index_cast %1171 : i32 to index
    %c0_343 = arith.constant 0 : index
    %1173 = vector.load %arg8[%1172, %c0_343] : memref<64x128xf32, #tpu.memory_space<vmem>>, vector<8x128xf32>
    %1174 = arith.truncf %1167 : vector<8x32xf32> to vector<8x32xbf16>
    %cst_344 = arith.constant dense<0.000000e+00> : vector<8x128xf32>
    %1175 = tpu.matmul %1174, %1111, %cst_344 {dimension_numbers = #tpu.dot_dimension_numbers<[1], [0], [0], [1], [0, 0, 1, 1], [], []>} : vector<8x32xbf16>, vector<32x128xbf16>, vector<8x128xf32> -> vector<8x128xf32>
    %1176 = arith.addf %1173, %1175 : vector<8x128xf32>
    %1177 = vector.extract_strided_slice %1176 {offsets = [0, 0], sizes = [8, 96], strides = [1, 1]} : vector<8x128xf32> to vector<8x96xf32>
    %1178 = arith.negf %1177 : vector<8x96xf32>
    %1179 = math.exp %1178 : vector<8x96xf32>
    %cst_345 = arith.constant 1.000000e+00 : f32
    %1180 = vector.broadcast %cst_345 : f32 to vector<8x96xf32>
    %1181 = arith.addf %1180, %1179 : vector<8x96xf32>
    %1182 = arith.divf %1180, %1181 : vector<8x96xf32>
    %1183 = vector.extract_strided_slice %1176 {offsets = [0, 96], sizes = [8, 32], strides = [1, 1]} : vector<8x128xf32> to vector<8x32xf32>
    %1184 = math.tanh %1183 : vector<8x32xf32>
    %1185 = vector.extract_strided_slice %1182 {offsets = [0, 0], sizes = [8, 32], strides = [1, 1]} : vector<8x96xf32> to vector<8x32xf32>
    %1186 = vector.extract_strided_slice %1182 {offsets = [0, 32], sizes = [8, 32], strides = [1, 1]} : vector<8x96xf32> to vector<8x32xf32>
    %1187 = vector.extract_strided_slice %1182 {offsets = [0, 64], sizes = [8, 32], strides = [1, 1]} : vector<8x96xf32> to vector<8x32xf32>
    %1188 = arith.mulf %1186, %1165 : vector<8x32xf32>
    %1189 = arith.mulf %1185, %1184 : vector<8x32xf32>
    %1190 = arith.addf %1188, %1189 : vector<8x32xf32>
    %1191 = math.tanh %1190 : vector<8x32xf32>
    %1192 = arith.mulf %1187, %1191 : vector<8x32xf32>
    %1193 = arith.index_cast %1171 : i32 to index
    %c0_346 = arith.constant 0 : index
    %1194 = vector.load %arg7[%1193, %c0_346] : memref<64x32xf32, #tpu.memory_space<vmem>>, vector<8x32xf32>
    tpu.vector_store %arg7[%1193, %c0_346], %1192 {strides = array<i32>} : memref<64x32xf32, #tpu.memory_space<vmem>>, vector<8x32xf32>,
    %c3_i32_347 = arith.constant 3 : i32
    %c8_i32_348 = arith.constant 8 : i32
    %1195 = arith.muli %c3_i32_347, %c8_i32_348 : i32
    %1196 = tpu.assume_multiple %1195, 8 : i32
    %1197 = arith.index_cast %1196 : i32 to index
    %c0_349 = arith.constant 0 : index
    %1198 = vector.load %arg8[%1197, %c0_349] : memref<64x128xf32, #tpu.memory_space<vmem>>, vector<8x128xf32>
    %1199 = arith.truncf %1192 : vector<8x32xf32> to vector<8x32xbf16>
    %cst_350 = arith.constant dense<0.000000e+00> : vector<8x128xf32>
    %1200 = tpu.matmul %1199, %1111, %cst_350 {dimension_numbers = #tpu.dot_dimension_numbers<[1], [0], [0], [1], [0, 0, 1, 1], [], []>} : vector<8x32xbf16>, vector<32x128xbf16>, vector<8x128xf32> -> vector<8x128xf32>
    %1201 = arith.addf %1198, %1200 : vector<8x128xf32>
    %1202 = vector.extract_strided_slice %1201 {offsets = [0, 0], sizes = [8, 96], strides = [1, 1]} : vector<8x128xf32> to vector<8x96xf32>
    %1203 = arith.negf %1202 : vector<8x96xf32>
    %1204 = math.exp %1203 : vector<8x96xf32>
    %cst_351 = arith.constant 1.000000e+00 : f32
    %1205 = vector.broadcast %cst_351 : f32 to vector<8x96xf32>
    %1206 = arith.addf %1205, %1204 : vector<8x96xf32>
    %1207 = arith.divf %1205, %1206 : vector<8x96xf32>
    %1208 = vector.extract_strided_slice %1201 {offsets = [0, 96], sizes = [8, 32], strides = [1, 1]} : vector<8x128xf32> to vector<8x32xf32>
    %1209 = math.tanh %1208 : vector<8x32xf32>
    %1210 = vector.extract_strided_slice %1207 {offsets = [0, 0], sizes = [8, 32], strides = [1, 1]} : vector<8x96xf32> to vector<8x32xf32>
    %1211 = vector.extract_strided_slice %1207 {offsets = [0, 32], sizes = [8, 32], strides = [1, 1]} : vector<8x96xf32> to vector<8x32xf32>
    %1212 = vector.extract_strided_slice %1207 {offsets = [0, 64], sizes = [8, 32], strides = [1, 1]} : vector<8x96xf32> to vector<8x32xf32>
    %1213 = arith.mulf %1211, %1190 : vector<8x32xf32>
    %1214 = arith.mulf %1210, %1209 : vector<8x32xf32>
    %1215 = arith.addf %1213, %1214 : vector<8x32xf32>
    %1216 = math.tanh %1215 : vector<8x32xf32>
    %1217 = arith.mulf %1212, %1216 : vector<8x32xf32>
    %1218 = arith.index_cast %1196 : i32 to index
    %c0_352 = arith.constant 0 : index
    %1219 = vector.load %arg7[%1218, %c0_352] : memref<64x32xf32, #tpu.memory_space<vmem>>, vector<8x32xf32>
    tpu.vector_store %arg7[%1218, %c0_352], %1217 {strides = array<i32>} : memref<64x32xf32, #tpu.memory_space<vmem>>, vector<8x32xf32>,
    %c4_i32_353 = arith.constant 4 : i32
    %c8_i32_354 = arith.constant 8 : i32
    %1220 = arith.muli %c4_i32_353, %c8_i32_354 : i32
    %1221 = tpu.assume_multiple %1220, 8 : i32
    %1222 = arith.index_cast %1221 : i32 to index
    %c0_355 = arith.constant 0 : index
    %1223 = vector.load %arg8[%1222, %c0_355] : memref<64x128xf32, #tpu.memory_space<vmem>>, vector<8x128xf32>
    %1224 = arith.truncf %1217 : vector<8x32xf32> to vector<8x32xbf16>
    %cst_356 = arith.constant dense<0.000000e+00> : vector<8x128xf32>
    %1225 = tpu.matmul %1224, %1111, %cst_356 {dimension_numbers = #tpu.dot_dimension_numbers<[1], [0], [0], [1], [0, 0, 1, 1], [], []>} : vector<8x32xbf16>, vector<32x128xbf16>, vector<8x128xf32> -> vector<8x128xf32>
    %1226 = arith.addf %1223, %1225 : vector<8x128xf32>
    %1227 = vector.extract_strided_slice %1226 {offsets = [0, 0], sizes = [8, 96], strides = [1, 1]} : vector<8x128xf32> to vector<8x96xf32>
    %1228 = arith.negf %1227 : vector<8x96xf32>
    %1229 = math.exp %1228 : vector<8x96xf32>
    %cst_357 = arith.constant 1.000000e+00 : f32
    %1230 = vector.broadcast %cst_357 : f32 to vector<8x96xf32>
    %1231 = arith.addf %1230, %1229 : vector<8x96xf32>
    %1232 = arith.divf %1230, %1231 : vector<8x96xf32>
    %1233 = vector.extract_strided_slice %1226 {offsets = [0, 96], sizes = [8, 32], strides = [1, 1]} : vector<8x128xf32> to vector<8x32xf32>
    %1234 = math.tanh %1233 : vector<8x32xf32>
    %1235 = vector.extract_strided_slice %1232 {offsets = [0, 0], sizes = [8, 32], strides = [1, 1]} : vector<8x96xf32> to vector<8x32xf32>
    %1236 = vector.extract_strided_slice %1232 {offsets = [0, 32], sizes = [8, 32], strides = [1, 1]} : vector<8x96xf32> to vector<8x32xf32>
    %1237 = vector.extract_strided_slice %1232 {offsets = [0, 64], sizes = [8, 32], strides = [1, 1]} : vector<8x96xf32> to vector<8x32xf32>
    %1238 = arith.mulf %1236, %1215 : vector<8x32xf32>
    %1239 = arith.mulf %1235, %1234 : vector<8x32xf32>
    %1240 = arith.addf %1238, %1239 : vector<8x32xf32>
    %1241 = math.tanh %1240 : vector<8x32xf32>
    %1242 = arith.mulf %1237, %1241 : vector<8x32xf32>
    %1243 = arith.index_cast %1221 : i32 to index
    %c0_358 = arith.constant 0 : index
    %1244 = vector.load %arg7[%1243, %c0_358] : memref<64x32xf32, #tpu.memory_space<vmem>>, vector<8x32xf32>
    tpu.vector_store %arg7[%1243, %c0_358], %1242 {strides = array<i32>} : memref<64x32xf32, #tpu.memory_space<vmem>>, vector<8x32xf32>,
    %c5_i32_359 = arith.constant 5 : i32
    %c8_i32_360 = arith.constant 8 : i32
    %1245 = arith.muli %c5_i32_359, %c8_i32_360 : i32
    %1246 = tpu.assume_multiple %1245, 8 : i32
    %1247 = arith.index_cast %1246 : i32 to index
    %c0_361 = arith.constant 0 : index
    %1248 = vector.load %arg8[%1247, %c0_361] : memref<64x128xf32, #tpu.memory_space<vmem>>, vector<8x128xf32>
    %1249 = arith.truncf %1242 : vector<8x32xf32> to vector<8x32xbf16>
    %cst_362 = arith.constant dense<0.000000e+00> : vector<8x128xf32>
    %1250 = tpu.matmul %1249, %1111, %cst_362 {dimension_numbers = #tpu.dot_dimension_numbers<[1], [0], [0], [1], [0, 0, 1, 1], [], []>} : vector<8x32xbf16>, vector<32x128xbf16>, vector<8x128xf32> -> vector<8x128xf32>
    %1251 = arith.addf %1248, %1250 : vector<8x128xf32>
    %1252 = vector.extract_strided_slice %1251 {offsets = [0, 0], sizes = [8, 96], strides = [1, 1]} : vector<8x128xf32> to vector<8x96xf32>
    %1253 = arith.negf %1252 : vector<8x96xf32>
    %1254 = math.exp %1253 : vector<8x96xf32>
    %cst_363 = arith.constant 1.000000e+00 : f32
    %1255 = vector.broadcast %cst_363 : f32 to vector<8x96xf32>
    %1256 = arith.addf %1255, %1254 : vector<8x96xf32>
    %1257 = arith.divf %1255, %1256 : vector<8x96xf32>
    %1258 = vector.extract_strided_slice %1251 {offsets = [0, 96], sizes = [8, 32], strides = [1, 1]} : vector<8x128xf32> to vector<8x32xf32>
    %1259 = math.tanh %1258 : vector<8x32xf32>
    %1260 = vector.extract_strided_slice %1257 {offsets = [0, 0], sizes = [8, 32], strides = [1, 1]} : vector<8x96xf32> to vector<8x32xf32>
    %1261 = vector.extract_strided_slice %1257 {offsets = [0, 32], sizes = [8, 32], strides = [1, 1]} : vector<8x96xf32> to vector<8x32xf32>
    %1262 = vector.extract_strided_slice %1257 {offsets = [0, 64], sizes = [8, 32], strides = [1, 1]} : vector<8x96xf32> to vector<8x32xf32>
    %1263 = arith.mulf %1261, %1240 : vector<8x32xf32>
    %1264 = arith.mulf %1260, %1259 : vector<8x32xf32>
    %1265 = arith.addf %1263, %1264 : vector<8x32xf32>
    %1266 = math.tanh %1265 : vector<8x32xf32>
    %1267 = arith.mulf %1262, %1266 : vector<8x32xf32>
    %1268 = arith.index_cast %1246 : i32 to index
    %c0_364 = arith.constant 0 : index
    %1269 = vector.load %arg7[%1268, %c0_364] : memref<64x32xf32, #tpu.memory_space<vmem>>, vector<8x32xf32>
    tpu.vector_store %arg7[%1268, %c0_364], %1267 {strides = array<i32>} : memref<64x32xf32, #tpu.memory_space<vmem>>, vector<8x32xf32>,
    %c6_i32_365 = arith.constant 6 : i32
    %c8_i32_366 = arith.constant 8 : i32
    %1270 = arith.muli %c6_i32_365, %c8_i32_366 : i32
    %1271 = tpu.assume_multiple %1270, 8 : i32
    %1272 = arith.index_cast %1271 : i32 to index
    %c0_367 = arith.constant 0 : index
    %1273 = vector.load %arg8[%1272, %c0_367] : memref<64x128xf32, #tpu.memory_space<vmem>>, vector<8x128xf32>
    %1274 = arith.truncf %1267 : vector<8x32xf32> to vector<8x32xbf16>
    %cst_368 = arith.constant dense<0.000000e+00> : vector<8x128xf32>
    %1275 = tpu.matmul %1274, %1111, %cst_368 {dimension_numbers = #tpu.dot_dimension_numbers<[1], [0], [0], [1], [0, 0, 1, 1], [], []>} : vector<8x32xbf16>, vector<32x128xbf16>, vector<8x128xf32> -> vector<8x128xf32>
    %1276 = arith.addf %1273, %1275 : vector<8x128xf32>
    %1277 = vector.extract_strided_slice %1276 {offsets = [0, 0], sizes = [8, 96], strides = [1, 1]} : vector<8x128xf32> to vector<8x96xf32>
    %1278 = arith.negf %1277 : vector<8x96xf32>
    %1279 = math.exp %1278 : vector<8x96xf32>
    %cst_369 = arith.constant 1.000000e+00 : f32
    %1280 = vector.broadcast %cst_369 : f32 to vector<8x96xf32>
    %1281 = arith.addf %1280, %1279 : vector<8x96xf32>
    %1282 = arith.divf %1280, %1281 : vector<8x96xf32>
    %1283 = vector.extract_strided_slice %1276 {offsets = [0, 96], sizes = [8, 32], strides = [1, 1]} : vector<8x128xf32> to vector<8x32xf32>
    %1284 = math.tanh %1283 : vector<8x32xf32>
    %1285 = vector.extract_strided_slice %1282 {offsets = [0, 0], sizes = [8, 32], strides = [1, 1]} : vector<8x96xf32> to vector<8x32xf32>
    %1286 = vector.extract_strided_slice %1282 {offsets = [0, 32], sizes = [8, 32], strides = [1, 1]} : vector<8x96xf32> to vector<8x32xf32>
    %1287 = vector.extract_strided_slice %1282 {offsets = [0, 64], sizes = [8, 32], strides = [1, 1]} : vector<8x96xf32> to vector<8x32xf32>
    %1288 = arith.mulf %1286, %1265 : vector<8x32xf32>
    %1289 = arith.mulf %1285, %1284 : vector<8x32xf32>
    %1290 = arith.addf %1288, %1289 : vector<8x32xf32>
    %1291 = math.tanh %1290 : vector<8x32xf32>
    %1292 = arith.mulf %1287, %1291 : vector<8x32xf32>
    %1293 = arith.index_cast %1271 : i32 to index
    %c0_370 = arith.constant 0 : index
    %1294 = vector.load %arg7[%1293, %c0_370] : memref<64x32xf32, #tpu.memory_space<vmem>>, vector<8x32xf32>
    tpu.vector_store %arg7[%1293, %c0_370], %1292 {strides = array<i32>} : memref<64x32xf32, #tpu.memory_space<vmem>>, vector<8x32xf32>,
    %c7_i32_371 = arith.constant 7 : i32
    %c8_i32_372 = arith.constant 8 : i32
    %1295 = arith.muli %c7_i32_371, %c8_i32_372 : i32
    %1296 = tpu.assume_multiple %1295, 8 : i32
    %1297 = arith.index_cast %1296 : i32 to index
    %c0_373 = arith.constant 0 : index
    %1298 = vector.load %arg8[%1297, %c0_373] : memref<64x128xf32, #tpu.memory_space<vmem>>, vector<8x128xf32>
    %1299 = arith.truncf %1292 : vector<8x32xf32> to vector<8x32xbf16>
    %cst_374 = arith.constant dense<0.000000e+00> : vector<8x128xf32>
    %1300 = tpu.matmul %1299, %1111, %cst_374 {dimension_numbers = #tpu.dot_dimension_numbers<[1], [0], [0], [1], [0, 0, 1, 1], [], []>} : vector<8x32xbf16>, vector<32x128xbf16>, vector<8x128xf32> -> vector<8x128xf32>
    %1301 = arith.addf %1298, %1300 : vector<8x128xf32>
    %1302 = vector.extract_strided_slice %1301 {offsets = [0, 0], sizes = [8, 96], strides = [1, 1]} : vector<8x128xf32> to vector<8x96xf32>
    %1303 = arith.negf %1302 : vector<8x96xf32>
    %1304 = math.exp %1303 : vector<8x96xf32>
    %cst_375 = arith.constant 1.000000e+00 : f32
    %1305 = vector.broadcast %cst_375 : f32 to vector<8x96xf32>
    %1306 = arith.addf %1305, %1304 : vector<8x96xf32>
    %1307 = arith.divf %1305, %1306 : vector<8x96xf32>
    %1308 = vector.extract_strided_slice %1301 {offsets = [0, 96], sizes = [8, 32], strides = [1, 1]} : vector<8x128xf32> to vector<8x32xf32>
    %1309 = math.tanh %1308 : vector<8x32xf32>
    %1310 = vector.extract_strided_slice %1307 {offsets = [0, 0], sizes = [8, 32], strides = [1, 1]} : vector<8x96xf32> to vector<8x32xf32>
    %1311 = vector.extract_strided_slice %1307 {offsets = [0, 32], sizes = [8, 32], strides = [1, 1]} : vector<8x96xf32> to vector<8x32xf32>
    %1312 = vector.extract_strided_slice %1307 {offsets = [0, 64], sizes = [8, 32], strides = [1, 1]} : vector<8x96xf32> to vector<8x32xf32>
    %1313 = arith.mulf %1311, %1290 : vector<8x32xf32>
    %1314 = arith.mulf %1310, %1309 : vector<8x32xf32>
    %1315 = arith.addf %1313, %1314 : vector<8x32xf32>
    %1316 = math.tanh %1315 : vector<8x32xf32>
    %1317 = arith.mulf %1312, %1316 : vector<8x32xf32>
    %1318 = arith.index_cast %1296 : i32 to index
    %c0_376 = arith.constant 0 : index
    %1319 = vector.load %arg7[%1318, %c0_376] : memref<64x32xf32, #tpu.memory_space<vmem>>, vector<8x32xf32>
    tpu.vector_store %arg7[%1318, %c0_376], %1317 {strides = array<i32>} : memref<64x32xf32, #tpu.memory_space<vmem>>, vector<8x32xf32>,
    %c8_i32_377 = arith.constant 8 : i32
    %c5_378 = arith.constant 5 : index
    %c0_379 = arith.constant 0 : index
    %c0_380 = arith.constant 0 : index
    %1320 = vector.load %arg2[%c5_378, %c0_379, %c0_380] : memref<7x32x128xbf16, #tpu.memory_space<vmem>>, vector<1x32x128xbf16>
    %1321 = vector.shape_cast %1320 : vector<1x32x128xbf16> to vector<32x128xbf16>
    %c6 = arith.constant 6 : index
    %c0_381 = arith.constant 0 : index
    %c0_382 = arith.constant 0 : index
    %1322 = vector.load %arg3[%c6, %c0_381, %c0_382] : memref<8x32x128xbf16, #tpu.memory_space<vmem>>, vector<1x32x128xbf16>
    %1323 = vector.shape_cast %1322 : vector<1x32x128xbf16> to vector<32x128xbf16>
    %c6_383 = arith.constant 6 : index
    %c0_384 = arith.constant 0 : index
    %c0_385 = arith.constant 0 : index
    %1324 = vector.load %arg4[%c6_383, %c0_384, %c0_385] : memref<8x1x128xf32, #tpu.memory_space<vmem>>, vector<1x1x128xf32>
    %1325 = vector.shape_cast %1324 : vector<1x1x128xf32> to vector<1x128xf32>
    %c0_386 = arith.constant 0 : index
    %c0_387 = arith.constant 0 : index
    %1326 = vector.load %arg7[%c0_386, %c0_387] : memref<64x32xf32, #tpu.memory_space<vmem>>, vector<64x32xf32>
    %1327 = arith.truncf %1326 : vector<64x32xf32> to vector<64x32xbf16>
    %cst_388 = arith.constant dense<0.000000e+00> : vector<64x128xf32>
    %1328 = tpu.matmul %1327, %1321, %cst_388 {dimension_numbers = #tpu.dot_dimension_numbers<[1], [0], [0], [1], [0, 0, 1, 1], [], []>} : vector<64x32xbf16>, vector<32x128xbf16>, vector<64x128xf32> -> vector<64x128xf32>
    %1329 = vector.broadcast %1325 : vector<1x128xf32> to vector<64x128xf32>
    %1330 = arith.addf %1328, %1329 : vector<64x128xf32>
    %c0_389 = arith.constant 0 : index
    %c0_390 = arith.constant 0 : index
    %1331 = vector.load %arg8[%c0_389, %c0_390] : memref<64x128xf32, #tpu.memory_space<vmem>>, vector<64x128xf32>
    tpu.vector_store %arg8[%c0_389, %c0_390], %1330 {strides = array<i32>} : memref<64x128xf32, #tpu.memory_space<vmem>>, vector<64x128xf32>,
    %c0_i32_391 = arith.constant 0 : i32
    %c8_i32_392 = arith.constant 8 : i32
    %1332 = arith.muli %c0_i32_391, %c8_i32_392 : i32
    %1333 = tpu.assume_multiple %1332, 8 : i32
    %1334 = arith.index_cast %1333 : i32 to index
    %c0_393 = arith.constant 0 : index
    %1335 = vector.load %arg8[%1334, %c0_393] : memref<64x128xf32, #tpu.memory_space<vmem>>, vector<8x128xf32>
    %1336 = arith.truncf %1317 : vector<8x32xf32> to vector<8x32xbf16>
    %cst_394 = arith.constant dense<0.000000e+00> : vector<8x128xf32>
    %1337 = tpu.matmul %1336, %1323, %cst_394 {dimension_numbers = #tpu.dot_dimension_numbers<[1], [0], [0], [1], [0, 0, 1, 1], [], []>} : vector<8x32xbf16>, vector<32x128xbf16>, vector<8x128xf32> -> vector<8x128xf32>
    %1338 = arith.addf %1335, %1337 : vector<8x128xf32>
    %1339 = vector.extract_strided_slice %1338 {offsets = [0, 0], sizes = [8, 96], strides = [1, 1]} : vector<8x128xf32> to vector<8x96xf32>
    %1340 = arith.negf %1339 : vector<8x96xf32>
    %1341 = math.exp %1340 : vector<8x96xf32>
    %cst_395 = arith.constant 1.000000e+00 : f32
    %1342 = vector.broadcast %cst_395 : f32 to vector<8x96xf32>
    %1343 = arith.addf %1342, %1341 : vector<8x96xf32>
    %1344 = arith.divf %1342, %1343 : vector<8x96xf32>
    %1345 = vector.extract_strided_slice %1338 {offsets = [0, 96], sizes = [8, 32], strides = [1, 1]} : vector<8x128xf32> to vector<8x32xf32>
    %1346 = math.tanh %1345 : vector<8x32xf32>
    %1347 = vector.extract_strided_slice %1344 {offsets = [0, 0], sizes = [8, 32], strides = [1, 1]} : vector<8x96xf32> to vector<8x32xf32>
    %1348 = vector.extract_strided_slice %1344 {offsets = [0, 32], sizes = [8, 32], strides = [1, 1]} : vector<8x96xf32> to vector<8x32xf32>
    %1349 = vector.extract_strided_slice %1344 {offsets = [0, 64], sizes = [8, 32], strides = [1, 1]} : vector<8x96xf32> to vector<8x32xf32>
    %1350 = arith.mulf %1348, %1315 : vector<8x32xf32>
    %1351 = arith.mulf %1347, %1346 : vector<8x32xf32>
    %1352 = arith.addf %1350, %1351 : vector<8x32xf32>
    %1353 = math.tanh %1352 : vector<8x32xf32>
    %1354 = arith.mulf %1349, %1353 : vector<8x32xf32>
    %1355 = arith.index_cast %1333 : i32 to index
    %c0_396 = arith.constant 0 : index
    %1356 = vector.load %arg6[%1355, %c0_396] : memref<64x32xf32, #tpu.memory_space<vmem>>, vector<8x32xf32>
    %1357 = arith.addf %1356, %1354 : vector<8x32xf32>
    %1358 = arith.index_cast %1333 : i32 to index
    %c0_397 = arith.constant 0 : index
    %1359 = vector.load %arg6[%1358, %c0_397] : memref<64x32xf32, #tpu.memory_space<vmem>>, vector<8x32xf32>
    tpu.vector_store %arg6[%1358, %c0_397], %1357 {strides = array<i32>} : memref<64x32xf32, #tpu.memory_space<vmem>>, vector<8x32xf32>,
    %c1_i32_398 = arith.constant 1 : i32
    %c8_i32_399 = arith.constant 8 : i32
    %1360 = arith.muli %c1_i32_398, %c8_i32_399 : i32
    %1361 = tpu.assume_multiple %1360, 8 : i32
    %1362 = arith.index_cast %1361 : i32 to index
    %c0_400 = arith.constant 0 : index
    %1363 = vector.load %arg8[%1362, %c0_400] : memref<64x128xf32, #tpu.memory_space<vmem>>, vector<8x128xf32>
    %1364 = arith.truncf %1354 : vector<8x32xf32> to vector<8x32xbf16>
    %cst_401 = arith.constant dense<0.000000e+00> : vector<8x128xf32>
    %1365 = tpu.matmul %1364, %1323, %cst_401 {dimension_numbers = #tpu.dot_dimension_numbers<[1], [0], [0], [1], [0, 0, 1, 1], [], []>} : vector<8x32xbf16>, vector<32x128xbf16>, vector<8x128xf32> -> vector<8x128xf32>
    %1366 = arith.addf %1363, %1365 : vector<8x128xf32>
    %1367 = vector.extract_strided_slice %1366 {offsets = [0, 0], sizes = [8, 96], strides = [1, 1]} : vector<8x128xf32> to vector<8x96xf32>
    %1368 = arith.negf %1367 : vector<8x96xf32>
    %1369 = math.exp %1368 : vector<8x96xf32>
    %cst_402 = arith.constant 1.000000e+00 : f32
    %1370 = vector.broadcast %cst_402 : f32 to vector<8x96xf32>
    %1371 = arith.addf %1370, %1369 : vector<8x96xf32>
    %1372 = arith.divf %1370, %1371 : vector<8x96xf32>
    %1373 = vector.extract_strided_slice %1366 {offsets = [0, 96], sizes = [8, 32], strides = [1, 1]} : vector<8x128xf32> to vector<8x32xf32>
    %1374 = math.tanh %1373 : vector<8x32xf32>
    %1375 = vector.extract_strided_slice %1372 {offsets = [0, 0], sizes = [8, 32], strides = [1, 1]} : vector<8x96xf32> to vector<8x32xf32>
    %1376 = vector.extract_strided_slice %1372 {offsets = [0, 32], sizes = [8, 32], strides = [1, 1]} : vector<8x96xf32> to vector<8x32xf32>
    %1377 = vector.extract_strided_slice %1372 {offsets = [0, 64], sizes = [8, 32], strides = [1, 1]} : vector<8x96xf32> to vector<8x32xf32>
    %1378 = arith.mulf %1376, %1352 : vector<8x32xf32>
    %1379 = arith.mulf %1375, %1374 : vector<8x32xf32>
    %1380 = arith.addf %1378, %1379 : vector<8x32xf32>
    %1381 = math.tanh %1380 : vector<8x32xf32>
    %1382 = arith.mulf %1377, %1381 : vector<8x32xf32>
    %1383 = arith.index_cast %1361 : i32 to index
    %c0_403 = arith.constant 0 : index
    %1384 = vector.load %arg6[%1383, %c0_403] : memref<64x32xf32, #tpu.memory_space<vmem>>, vector<8x32xf32>
    %1385 = arith.addf %1384, %1382 : vector<8x32xf32>
    %1386 = arith.index_cast %1361 : i32 to index
    %c0_404 = arith.constant 0 : index
    %1387 = vector.load %arg6[%1386, %c0_404] : memref<64x32xf32, #tpu.memory_space<vmem>>, vector<8x32xf32>
    tpu.vector_store %arg6[%1386, %c0_404], %1385 {strides = array<i32>} : memref<64x32xf32, #tpu.memory_space<vmem>>, vector<8x32xf32>,
    %c2_i32_405 = arith.constant 2 : i32
    %c8_i32_406 = arith.constant 8 : i32
    %1388 = arith.muli %c2_i32_405, %c8_i32_406 : i32
    %1389 = tpu.assume_multiple %1388, 8 : i32
    %1390 = arith.index_cast %1389 : i32 to index
    %c0_407 = arith.constant 0 : index
    %1391 = vector.load %arg8[%1390, %c0_407] : memref<64x128xf32, #tpu.memory_space<vmem>>, vector<8x128xf32>
    %1392 = arith.truncf %1382 : vector<8x32xf32> to vector<8x32xbf16>
    %cst_408 = arith.constant dense<0.000000e+00> : vector<8x128xf32>
    %1393 = tpu.matmul %1392, %1323, %cst_408 {dimension_numbers = #tpu.dot_dimension_numbers<[1], [0], [0], [1], [0, 0, 1, 1], [], []>} : vector<8x32xbf16>, vector<32x128xbf16>, vector<8x128xf32> -> vector<8x128xf32>
    %1394 = arith.addf %1391, %1393 : vector<8x128xf32>
    %1395 = vector.extract_strided_slice %1394 {offsets = [0, 0], sizes = [8, 96], strides = [1, 1]} : vector<8x128xf32> to vector<8x96xf32>
    %1396 = arith.negf %1395 : vector<8x96xf32>
    %1397 = math.exp %1396 : vector<8x96xf32>
    %cst_409 = arith.constant 1.000000e+00 : f32
    %1398 = vector.broadcast %cst_409 : f32 to vector<8x96xf32>
    %1399 = arith.addf %1398, %1397 : vector<8x96xf32>
    %1400 = arith.divf %1398, %1399 : vector<8x96xf32>
    %1401 = vector.extract_strided_slice %1394 {offsets = [0, 96], sizes = [8, 32], strides = [1, 1]} : vector<8x128xf32> to vector<8x32xf32>
    %1402 = math.tanh %1401 : vector<8x32xf32>
    %1403 = vector.extract_strided_slice %1400 {offsets = [0, 0], sizes = [8, 32], strides = [1, 1]} : vector<8x96xf32> to vector<8x32xf32>
    %1404 = vector.extract_strided_slice %1400 {offsets = [0, 32], sizes = [8, 32], strides = [1, 1]} : vector<8x96xf32> to vector<8x32xf32>
    %1405 = vector.extract_strided_slice %1400 {offsets = [0, 64], sizes = [8, 32], strides = [1, 1]} : vector<8x96xf32> to vector<8x32xf32>
    %1406 = arith.mulf %1404, %1380 : vector<8x32xf32>
    %1407 = arith.mulf %1403, %1402 : vector<8x32xf32>
    %1408 = arith.addf %1406, %1407 : vector<8x32xf32>
    %1409 = math.tanh %1408 : vector<8x32xf32>
    %1410 = arith.mulf %1405, %1409 : vector<8x32xf32>
    %1411 = arith.index_cast %1389 : i32 to index
    %c0_410 = arith.constant 0 : index
    %1412 = vector.load %arg6[%1411, %c0_410] : memref<64x32xf32, #tpu.memory_space<vmem>>, vector<8x32xf32>
    %1413 = arith.addf %1412, %1410 : vector<8x32xf32>
    %1414 = arith.index_cast %1389 : i32 to index
    %c0_411 = arith.constant 0 : index
    %1415 = vector.load %arg6[%1414, %c0_411] : memref<64x32xf32, #tpu.memory_space<vmem>>, vector<8x32xf32>
    tpu.vector_store %arg6[%1414, %c0_411], %1413 {strides = array<i32>} : memref<64x32xf32, #tpu.memory_space<vmem>>, vector<8x32xf32>,
    %c3_i32_412 = arith.constant 3 : i32
    %c8_i32_413 = arith.constant 8 : i32
    %1416 = arith.muli %c3_i32_412, %c8_i32_413 : i32
    %1417 = tpu.assume_multiple %1416, 8 : i32
    %1418 = arith.index_cast %1417 : i32 to index
    %c0_414 = arith.constant 0 : index
    %1419 = vector.load %arg8[%1418, %c0_414] : memref<64x128xf32, #tpu.memory_space<vmem>>, vector<8x128xf32>
    %1420 = arith.truncf %1410 : vector<8x32xf32> to vector<8x32xbf16>
    %cst_415 = arith.constant dense<0.000000e+00> : vector<8x128xf32>
    %1421 = tpu.matmul %1420, %1323, %cst_415 {dimension_numbers = #tpu.dot_dimension_numbers<[1], [0], [0], [1], [0, 0, 1, 1], [], []>} : vector<8x32xbf16>, vector<32x128xbf16>, vector<8x128xf32> -> vector<8x128xf32>
    %1422 = arith.addf %1419, %1421 : vector<8x128xf32>
    %1423 = vector.extract_strided_slice %1422 {offsets = [0, 0], sizes = [8, 96], strides = [1, 1]} : vector<8x128xf32> to vector<8x96xf32>
    %1424 = arith.negf %1423 : vector<8x96xf32>
    %1425 = math.exp %1424 : vector<8x96xf32>
    %cst_416 = arith.constant 1.000000e+00 : f32
    %1426 = vector.broadcast %cst_416 : f32 to vector<8x96xf32>
    %1427 = arith.addf %1426, %1425 : vector<8x96xf32>
    %1428 = arith.divf %1426, %1427 : vector<8x96xf32>
    %1429 = vector.extract_strided_slice %1422 {offsets = [0, 96], sizes = [8, 32], strides = [1, 1]} : vector<8x128xf32> to vector<8x32xf32>
    %1430 = math.tanh %1429 : vector<8x32xf32>
    %1431 = vector.extract_strided_slice %1428 {offsets = [0, 0], sizes = [8, 32], strides = [1, 1]} : vector<8x96xf32> to vector<8x32xf32>
    %1432 = vector.extract_strided_slice %1428 {offsets = [0, 32], sizes = [8, 32], strides = [1, 1]} : vector<8x96xf32> to vector<8x32xf32>
    %1433 = vector.extract_strided_slice %1428 {offsets = [0, 64], sizes = [8, 32], strides = [1, 1]} : vector<8x96xf32> to vector<8x32xf32>
    %1434 = arith.mulf %1432, %1408 : vector<8x32xf32>
    %1435 = arith.mulf %1431, %1430 : vector<8x32xf32>
    %1436 = arith.addf %1434, %1435 : vector<8x32xf32>
    %1437 = math.tanh %1436 : vector<8x32xf32>
    %1438 = arith.mulf %1433, %1437 : vector<8x32xf32>
    %1439 = arith.index_cast %1417 : i32 to index
    %c0_417 = arith.constant 0 : index
    %1440 = vector.load %arg6[%1439, %c0_417] : memref<64x32xf32, #tpu.memory_space<vmem>>, vector<8x32xf32>
    %1441 = arith.addf %1440, %1438 : vector<8x32xf32>
    %1442 = arith.index_cast %1417 : i32 to index
    %c0_418 = arith.constant 0 : index
    %1443 = vector.load %arg6[%1442, %c0_418] : memref<64x32xf32, #tpu.memory_space<vmem>>, vector<8x32xf32>
    tpu.vector_store %arg6[%1442, %c0_418], %1441 {strides = array<i32>} : memref<64x32xf32, #tpu.memory_space<vmem>>, vector<8x32xf32>,
    %c4_i32_419 = arith.constant 4 : i32
    %c8_i32_420 = arith.constant 8 : i32
    %1444 = arith.muli %c4_i32_419, %c8_i32_420 : i32
    %1445 = tpu.assume_multiple %1444, 8 : i32
    %1446 = arith.index_cast %1445 : i32 to index
    %c0_421 = arith.constant 0 : index
    %1447 = vector.load %arg8[%1446, %c0_421] : memref<64x128xf32, #tpu.memory_space<vmem>>, vector<8x128xf32>
    %1448 = arith.truncf %1438 : vector<8x32xf32> to vector<8x32xbf16>
    %cst_422 = arith.constant dense<0.000000e+00> : vector<8x128xf32>
    %1449 = tpu.matmul %1448, %1323, %cst_422 {dimension_numbers = #tpu.dot_dimension_numbers<[1], [0], [0], [1], [0, 0, 1, 1], [], []>} : vector<8x32xbf16>, vector<32x128xbf16>, vector<8x128xf32> -> vector<8x128xf32>
    %1450 = arith.addf %1447, %1449 : vector<8x128xf32>
    %1451 = vector.extract_strided_slice %1450 {offsets = [0, 0], sizes = [8, 96], strides = [1, 1]} : vector<8x128xf32> to vector<8x96xf32>
    %1452 = arith.negf %1451 : vector<8x96xf32>
    %1453 = math.exp %1452 : vector<8x96xf32>
    %cst_423 = arith.constant 1.000000e+00 : f32
    %1454 = vector.broadcast %cst_423 : f32 to vector<8x96xf32>
    %1455 = arith.addf %1454, %1453 : vector<8x96xf32>
    %1456 = arith.divf %1454, %1455 : vector<8x96xf32>
    %1457 = vector.extract_strided_slice %1450 {offsets = [0, 96], sizes = [8, 32], strides = [1, 1]} : vector<8x128xf32> to vector<8x32xf32>
    %1458 = math.tanh %1457 : vector<8x32xf32>
    %1459 = vector.extract_strided_slice %1456 {offsets = [0, 0], sizes = [8, 32], strides = [1, 1]} : vector<8x96xf32> to vector<8x32xf32>
    %1460 = vector.extract_strided_slice %1456 {offsets = [0, 32], sizes = [8, 32], strides = [1, 1]} : vector<8x96xf32> to vector<8x32xf32>
    %1461 = vector.extract_strided_slice %1456 {offsets = [0, 64], sizes = [8, 32], strides = [1, 1]} : vector<8x96xf32> to vector<8x32xf32>
    %1462 = arith.mulf %1460, %1436 : vector<8x32xf32>
    %1463 = arith.mulf %1459, %1458 : vector<8x32xf32>
    %1464 = arith.addf %1462, %1463 : vector<8x32xf32>
    %1465 = math.tanh %1464 : vector<8x32xf32>
    %1466 = arith.mulf %1461, %1465 : vector<8x32xf32>
    %1467 = arith.index_cast %1445 : i32 to index
    %c0_424 = arith.constant 0 : index
    %1468 = vector.load %arg6[%1467, %c0_424] : memref<64x32xf32, #tpu.memory_space<vmem>>, vector<8x32xf32>
    %1469 = arith.addf %1468, %1466 : vector<8x32xf32>
    %1470 = arith.index_cast %1445 : i32 to index
    %c0_425 = arith.constant 0 : index
    %1471 = vector.load %arg6[%1470, %c0_425] : memref<64x32xf32, #tpu.memory_space<vmem>>, vector<8x32xf32>
    tpu.vector_store %arg6[%1470, %c0_425], %1469 {strides = array<i32>} : memref<64x32xf32, #tpu.memory_space<vmem>>, vector<8x32xf32>,
    %c5_i32_426 = arith.constant 5 : i32
    %c8_i32_427 = arith.constant 8 : i32
    %1472 = arith.muli %c5_i32_426, %c8_i32_427 : i32
    %1473 = tpu.assume_multiple %1472, 8 : i32
    %1474 = arith.index_cast %1473 : i32 to index
    %c0_428 = arith.constant 0 : index
    %1475 = vector.load %arg8[%1474, %c0_428] : memref<64x128xf32, #tpu.memory_space<vmem>>, vector<8x128xf32>
    %1476 = arith.truncf %1466 : vector<8x32xf32> to vector<8x32xbf16>
    %cst_429 = arith.constant dense<0.000000e+00> : vector<8x128xf32>
    %1477 = tpu.matmul %1476, %1323, %cst_429 {dimension_numbers = #tpu.dot_dimension_numbers<[1], [0], [0], [1], [0, 0, 1, 1], [], []>} : vector<8x32xbf16>, vector<32x128xbf16>, vector<8x128xf32> -> vector<8x128xf32>
    %1478 = arith.addf %1475, %1477 : vector<8x128xf32>
    %1479 = vector.extract_strided_slice %1478 {offsets = [0, 0], sizes = [8, 96], strides = [1, 1]} : vector<8x128xf32> to vector<8x96xf32>
    %1480 = arith.negf %1479 : vector<8x96xf32>
    %1481 = math.exp %1480 : vector<8x96xf32>
    %cst_430 = arith.constant 1.000000e+00 : f32
    %1482 = vector.broadcast %cst_430 : f32 to vector<8x96xf32>
    %1483 = arith.addf %1482, %1481 : vector<8x96xf32>
    %1484 = arith.divf %1482, %1483 : vector<8x96xf32>
    %1485 = vector.extract_strided_slice %1478 {offsets = [0, 96], sizes = [8, 32], strides = [1, 1]} : vector<8x128xf32> to vector<8x32xf32>
    %1486 = math.tanh %1485 : vector<8x32xf32>
    %1487 = vector.extract_strided_slice %1484 {offsets = [0, 0], sizes = [8, 32], strides = [1, 1]} : vector<8x96xf32> to vector<8x32xf32>
    %1488 = vector.extract_strided_slice %1484 {offsets = [0, 32], sizes = [8, 32], strides = [1, 1]} : vector<8x96xf32> to vector<8x32xf32>
    %1489 = vector.extract_strided_slice %1484 {offsets = [0, 64], sizes = [8, 32], strides = [1, 1]} : vector<8x96xf32> to vector<8x32xf32>
    %1490 = arith.mulf %1488, %1464 : vector<8x32xf32>
    %1491 = arith.mulf %1487, %1486 : vector<8x32xf32>
    %1492 = arith.addf %1490, %1491 : vector<8x32xf32>
    %1493 = math.tanh %1492 : vector<8x32xf32>
    %1494 = arith.mulf %1489, %1493 : vector<8x32xf32>
    %1495 = arith.index_cast %1473 : i32 to index
    %c0_431 = arith.constant 0 : index
    %1496 = vector.load %arg6[%1495, %c0_431] : memref<64x32xf32, #tpu.memory_space<vmem>>, vector<8x32xf32>
    %1497 = arith.addf %1496, %1494 : vector<8x32xf32>
    %1498 = arith.index_cast %1473 : i32 to index
    %c0_432 = arith.constant 0 : index
    %1499 = vector.load %arg6[%1498, %c0_432] : memref<64x32xf32, #tpu.memory_space<vmem>>, vector<8x32xf32>
    tpu.vector_store %arg6[%1498, %c0_432], %1497 {strides = array<i32>} : memref<64x32xf32, #tpu.memory_space<vmem>>, vector<8x32xf32>,
    %c6_i32_433 = arith.constant 6 : i32
    %c8_i32_434 = arith.constant 8 : i32
    %1500 = arith.muli %c6_i32_433, %c8_i32_434 : i32
    %1501 = tpu.assume_multiple %1500, 8 : i32
    %1502 = arith.index_cast %1501 : i32 to index
    %c0_435 = arith.constant 0 : index
    %1503 = vector.load %arg8[%1502, %c0_435] : memref<64x128xf32, #tpu.memory_space<vmem>>, vector<8x128xf32>
    %1504 = arith.truncf %1494 : vector<8x32xf32> to vector<8x32xbf16>
    %cst_436 = arith.constant dense<0.000000e+00> : vector<8x128xf32>
    %1505 = tpu.matmul %1504, %1323, %cst_436 {dimension_numbers = #tpu.dot_dimension_numbers<[1], [0], [0], [1], [0, 0, 1, 1], [], []>} : vector<8x32xbf16>, vector<32x128xbf16>, vector<8x128xf32> -> vector<8x128xf32>
    %1506 = arith.addf %1503, %1505 : vector<8x128xf32>
    %1507 = vector.extract_strided_slice %1506 {offsets = [0, 0], sizes = [8, 96], strides = [1, 1]} : vector<8x128xf32> to vector<8x96xf32>
    %1508 = arith.negf %1507 : vector<8x96xf32>
    %1509 = math.exp %1508 : vector<8x96xf32>
    %cst_437 = arith.constant 1.000000e+00 : f32
    %1510 = vector.broadcast %cst_437 : f32 to vector<8x96xf32>
    %1511 = arith.addf %1510, %1509 : vector<8x96xf32>
    %1512 = arith.divf %1510, %1511 : vector<8x96xf32>
    %1513 = vector.extract_strided_slice %1506 {offsets = [0, 96], sizes = [8, 32], strides = [1, 1]} : vector<8x128xf32> to vector<8x32xf32>
    %1514 = math.tanh %1513 : vector<8x32xf32>
    %1515 = vector.extract_strided_slice %1512 {offsets = [0, 0], sizes = [8, 32], strides = [1, 1]} : vector<8x96xf32> to vector<8x32xf32>
    %1516 = vector.extract_strided_slice %1512 {offsets = [0, 32], sizes = [8, 32], strides = [1, 1]} : vector<8x96xf32> to vector<8x32xf32>
    %1517 = vector.extract_strided_slice %1512 {offsets = [0, 64], sizes = [8, 32], strides = [1, 1]} : vector<8x96xf32> to vector<8x32xf32>
    %1518 = arith.mulf %1516, %1492 : vector<8x32xf32>
    %1519 = arith.mulf %1515, %1514 : vector<8x32xf32>
    %1520 = arith.addf %1518, %1519 : vector<8x32xf32>
    %1521 = math.tanh %1520 : vector<8x32xf32>
    %1522 = arith.mulf %1517, %1521 : vector<8x32xf32>
    %1523 = arith.index_cast %1501 : i32 to index
    %c0_438 = arith.constant 0 : index
    %1524 = vector.load %arg6[%1523, %c0_438] : memref<64x32xf32, #tpu.memory_space<vmem>>, vector<8x32xf32>
    %1525 = arith.addf %1524, %1522 : vector<8x32xf32>
    %1526 = arith.index_cast %1501 : i32 to index
    %c0_439 = arith.constant 0 : index
    %1527 = vector.load %arg6[%1526, %c0_439] : memref<64x32xf32, #tpu.memory_space<vmem>>, vector<8x32xf32>
    tpu.vector_store %arg6[%1526, %c0_439], %1525 {strides = array<i32>} : memref<64x32xf32, #tpu.memory_space<vmem>>, vector<8x32xf32>,
    %c7_i32_440 = arith.constant 7 : i32
    %c8_i32_441 = arith.constant 8 : i32
    %1528 = arith.muli %c7_i32_440, %c8_i32_441 : i32
    %1529 = tpu.assume_multiple %1528, 8 : i32
    %1530 = arith.index_cast %1529 : i32 to index
    %c0_442 = arith.constant 0 : index
    %1531 = vector.load %arg8[%1530, %c0_442] : memref<64x128xf32, #tpu.memory_space<vmem>>, vector<8x128xf32>
    %1532 = arith.truncf %1522 : vector<8x32xf32> to vector<8x32xbf16>
    %cst_443 = arith.constant dense<0.000000e+00> : vector<8x128xf32>
    %1533 = tpu.matmul %1532, %1323, %cst_443 {dimension_numbers = #tpu.dot_dimension_numbers<[1], [0], [0], [1], [0, 0, 1, 1], [], []>} : vector<8x32xbf16>, vector<32x128xbf16>, vector<8x128xf32> -> vector<8x128xf32>
    %1534 = arith.addf %1531, %1533 : vector<8x128xf32>
    %1535 = vector.extract_strided_slice %1534 {offsets = [0, 0], sizes = [8, 96], strides = [1, 1]} : vector<8x128xf32> to vector<8x96xf32>
    %1536 = arith.negf %1535 : vector<8x96xf32>
    %1537 = math.exp %1536 : vector<8x96xf32>
    %cst_444 = arith.constant 1.000000e+00 : f32
    %1538 = vector.broadcast %cst_444 : f32 to vector<8x96xf32>
    %1539 = arith.addf %1538, %1537 : vector<8x96xf32>
    %1540 = arith.divf %1538, %1539 : vector<8x96xf32>
    %1541 = vector.extract_strided_slice %1534 {offsets = [0, 96], sizes = [8, 32], strides = [1, 1]} : vector<8x128xf32> to vector<8x32xf32>
    %1542 = math.tanh %1541 : vector<8x32xf32>
    %1543 = vector.extract_strided_slice %1540 {offsets = [0, 0], sizes = [8, 32], strides = [1, 1]} : vector<8x96xf32> to vector<8x32xf32>
    %1544 = vector.extract_strided_slice %1540 {offsets = [0, 32], sizes = [8, 32], strides = [1, 1]} : vector<8x96xf32> to vector<8x32xf32>
    %1545 = vector.extract_strided_slice %1540 {offsets = [0, 64], sizes = [8, 32], strides = [1, 1]} : vector<8x96xf32> to vector<8x32xf32>
    %1546 = arith.mulf %1544, %1520 : vector<8x32xf32>
    %1547 = arith.mulf %1543, %1542 : vector<8x32xf32>
    %1548 = arith.addf %1546, %1547 : vector<8x32xf32>
    %1549 = math.tanh %1548 : vector<8x32xf32>
    %1550 = arith.mulf %1545, %1549 : vector<8x32xf32>
    %1551 = arith.index_cast %1529 : i32 to index
    %c0_445 = arith.constant 0 : index
    %1552 = vector.load %arg6[%1551, %c0_445] : memref<64x32xf32, #tpu.memory_space<vmem>>, vector<8x32xf32>
    %1553 = arith.addf %1552, %1550 : vector<8x32xf32>
    %1554 = arith.index_cast %1529 : i32 to index
    %c0_446 = arith.constant 0 : index
    %1555 = vector.load %arg6[%1554, %c0_446] : memref<64x32xf32, #tpu.memory_space<vmem>>, vector<8x32xf32>
    tpu.vector_store %arg6[%1554, %c0_446], %1553 {strides = array<i32>} : memref<64x32xf32, #tpu.memory_space<vmem>>, vector<8x32xf32>,
    %c8_i32_447 = arith.constant 8 : i32
    %c6_448 = arith.constant 6 : index
    %c0_449 = arith.constant 0 : index
    %c0_450 = arith.constant 0 : index
    %1556 = vector.load %arg2[%c6_448, %c0_449, %c0_450] : memref<7x32x128xbf16, #tpu.memory_space<vmem>>, vector<1x32x128xbf16>
    %1557 = vector.shape_cast %1556 : vector<1x32x128xbf16> to vector<32x128xbf16>
    %c7 = arith.constant 7 : index
    %c0_451 = arith.constant 0 : index
    %c0_452 = arith.constant 0 : index
    %1558 = vector.load %arg3[%c7, %c0_451, %c0_452] : memref<8x32x128xbf16, #tpu.memory_space<vmem>>, vector<1x32x128xbf16>
    %1559 = vector.shape_cast %1558 : vector<1x32x128xbf16> to vector<32x128xbf16>
    %c7_453 = arith.constant 7 : index
    %c0_454 = arith.constant 0 : index
    %c0_455 = arith.constant 0 : index
    %1560 = vector.load %arg4[%c7_453, %c0_454, %c0_455] : memref<8x1x128xf32, #tpu.memory_space<vmem>>, vector<1x1x128xf32>
    %1561 = vector.shape_cast %1560 : vector<1x1x128xf32> to vector<1x128xf32>
    %c0_456 = arith.constant 0 : index
    %c0_457 = arith.constant 0 : index
    %1562 = vector.load %arg6[%c0_456, %c0_457] : memref<64x32xf32, #tpu.memory_space<vmem>>, vector<64x32xf32>
    %1563 = arith.truncf %1562 : vector<64x32xf32> to vector<64x32xbf16>
    %cst_458 = arith.constant dense<0.000000e+00> : vector<64x128xf32>
    %1564 = tpu.matmul %1563, %1557, %cst_458 {dimension_numbers = #tpu.dot_dimension_numbers<[1], [0], [0], [1], [0, 0, 1, 1], [], []>} : vector<64x32xbf16>, vector<32x128xbf16>, vector<64x128xf32> -> vector<64x128xf32>
    %1565 = vector.broadcast %1561 : vector<1x128xf32> to vector<64x128xf32>
    %1566 = arith.addf %1564, %1565 : vector<64x128xf32>
    %c0_459 = arith.constant 0 : index
    %c0_460 = arith.constant 0 : index
    %1567 = vector.load %arg8[%c0_459, %c0_460] : memref<64x128xf32, #tpu.memory_space<vmem>>, vector<64x128xf32>
    tpu.vector_store %arg8[%c0_459, %c0_460], %1566 {strides = array<i32>} : memref<64x128xf32, #tpu.memory_space<vmem>>, vector<64x128xf32>,
    %c0_i32_461 = arith.constant 0 : i32
    %c8_i32_462 = arith.constant 8 : i32
    %1568 = arith.muli %c0_i32_461, %c8_i32_462 : i32
    %1569 = tpu.assume_multiple %1568, 8 : i32
    %1570 = arith.index_cast %1569 : i32 to index
    %c0_463 = arith.constant 0 : index
    %1571 = vector.load %arg8[%1570, %c0_463] : memref<64x128xf32, #tpu.memory_space<vmem>>, vector<8x128xf32>
    %1572 = arith.truncf %1550 : vector<8x32xf32> to vector<8x32xbf16>
    %cst_464 = arith.constant dense<0.000000e+00> : vector<8x128xf32>
    %1573 = tpu.matmul %1572, %1559, %cst_464 {dimension_numbers = #tpu.dot_dimension_numbers<[1], [0], [0], [1], [0, 0, 1, 1], [], []>} : vector<8x32xbf16>, vector<32x128xbf16>, vector<8x128xf32> -> vector<8x128xf32>
    %1574 = arith.addf %1571, %1573 : vector<8x128xf32>
    %1575 = vector.extract_strided_slice %1574 {offsets = [0, 0], sizes = [8, 96], strides = [1, 1]} : vector<8x128xf32> to vector<8x96xf32>
    %1576 = arith.negf %1575 : vector<8x96xf32>
    %1577 = math.exp %1576 : vector<8x96xf32>
    %cst_465 = arith.constant 1.000000e+00 : f32
    %1578 = vector.broadcast %cst_465 : f32 to vector<8x96xf32>
    %1579 = arith.addf %1578, %1577 : vector<8x96xf32>
    %1580 = arith.divf %1578, %1579 : vector<8x96xf32>
    %1581 = vector.extract_strided_slice %1574 {offsets = [0, 96], sizes = [8, 32], strides = [1, 1]} : vector<8x128xf32> to vector<8x32xf32>
    %1582 = math.tanh %1581 : vector<8x32xf32>
    %1583 = vector.extract_strided_slice %1580 {offsets = [0, 0], sizes = [8, 32], strides = [1, 1]} : vector<8x96xf32> to vector<8x32xf32>
    %1584 = vector.extract_strided_slice %1580 {offsets = [0, 32], sizes = [8, 32], strides = [1, 1]} : vector<8x96xf32> to vector<8x32xf32>
    %1585 = vector.extract_strided_slice %1580 {offsets = [0, 64], sizes = [8, 32], strides = [1, 1]} : vector<8x96xf32> to vector<8x32xf32>
    %1586 = arith.mulf %1584, %1548 : vector<8x32xf32>
    %1587 = arith.mulf %1583, %1582 : vector<8x32xf32>
    %1588 = arith.addf %1586, %1587 : vector<8x32xf32>
    %1589 = math.tanh %1588 : vector<8x32xf32>
    %1590 = arith.mulf %1585, %1589 : vector<8x32xf32>
    %c1_i32_466 = arith.constant 1 : i32
    %c8_i32_467 = arith.constant 8 : i32
    %1591 = arith.muli %c1_i32_466, %c8_i32_467 : i32
    %1592 = tpu.assume_multiple %1591, 8 : i32
    %1593 = arith.index_cast %1592 : i32 to index
    %c0_468 = arith.constant 0 : index
    %1594 = vector.load %arg8[%1593, %c0_468] : memref<64x128xf32, #tpu.memory_space<vmem>>, vector<8x128xf32>
    %1595 = arith.truncf %1590 : vector<8x32xf32> to vector<8x32xbf16>
    %cst_469 = arith.constant dense<0.000000e+00> : vector<8x128xf32>
    %1596 = tpu.matmul %1595, %1559, %cst_469 {dimension_numbers = #tpu.dot_dimension_numbers<[1], [0], [0], [1], [0, 0, 1, 1], [], []>} : vector<8x32xbf16>, vector<32x128xbf16>, vector<8x128xf32> -> vector<8x128xf32>
    %1597 = arith.addf %1594, %1596 : vector<8x128xf32>
    %1598 = vector.extract_strided_slice %1597 {offsets = [0, 0], sizes = [8, 96], strides = [1, 1]} : vector<8x128xf32> to vector<8x96xf32>
    %1599 = arith.negf %1598 : vector<8x96xf32>
    %1600 = math.exp %1599 : vector<8x96xf32>
    %cst_470 = arith.constant 1.000000e+00 : f32
    %1601 = vector.broadcast %cst_470 : f32 to vector<8x96xf32>
    %1602 = arith.addf %1601, %1600 : vector<8x96xf32>
    %1603 = arith.divf %1601, %1602 : vector<8x96xf32>
    %1604 = vector.extract_strided_slice %1597 {offsets = [0, 96], sizes = [8, 32], strides = [1, 1]} : vector<8x128xf32> to vector<8x32xf32>
    %1605 = math.tanh %1604 : vector<8x32xf32>
    %1606 = vector.extract_strided_slice %1603 {offsets = [0, 0], sizes = [8, 32], strides = [1, 1]} : vector<8x96xf32> to vector<8x32xf32>
    %1607 = vector.extract_strided_slice %1603 {offsets = [0, 32], sizes = [8, 32], strides = [1, 1]} : vector<8x96xf32> to vector<8x32xf32>
    %1608 = vector.extract_strided_slice %1603 {offsets = [0, 64], sizes = [8, 32], strides = [1, 1]} : vector<8x96xf32> to vector<8x32xf32>
    %1609 = arith.mulf %1607, %1588 : vector<8x32xf32>
    %1610 = arith.mulf %1606, %1605 : vector<8x32xf32>
    %1611 = arith.addf %1609, %1610 : vector<8x32xf32>
    %1612 = math.tanh %1611 : vector<8x32xf32>
    %1613 = arith.mulf %1608, %1612 : vector<8x32xf32>
    %c2_i32_471 = arith.constant 2 : i32
    %c8_i32_472 = arith.constant 8 : i32
    %1614 = arith.muli %c2_i32_471, %c8_i32_472 : i32
    %1615 = tpu.assume_multiple %1614, 8 : i32
    %1616 = arith.index_cast %1615 : i32 to index
    %c0_473 = arith.constant 0 : index
    %1617 = vector.load %arg8[%1616, %c0_473] : memref<64x128xf32, #tpu.memory_space<vmem>>, vector<8x128xf32>
    %1618 = arith.truncf %1613 : vector<8x32xf32> to vector<8x32xbf16>
    %cst_474 = arith.constant dense<0.000000e+00> : vector<8x128xf32>
    %1619 = tpu.matmul %1618, %1559, %cst_474 {dimension_numbers = #tpu.dot_dimension_numbers<[1], [0], [0], [1], [0, 0, 1, 1], [], []>} : vector<8x32xbf16>, vector<32x128xbf16>, vector<8x128xf32> -> vector<8x128xf32>
    %1620 = arith.addf %1617, %1619 : vector<8x128xf32>
    %1621 = vector.extract_strided_slice %1620 {offsets = [0, 0], sizes = [8, 96], strides = [1, 1]} : vector<8x128xf32> to vector<8x96xf32>
    %1622 = arith.negf %1621 : vector<8x96xf32>
    %1623 = math.exp %1622 : vector<8x96xf32>
    %cst_475 = arith.constant 1.000000e+00 : f32
    %1624 = vector.broadcast %cst_475 : f32 to vector<8x96xf32>
    %1625 = arith.addf %1624, %1623 : vector<8x96xf32>
    %1626 = arith.divf %1624, %1625 : vector<8x96xf32>
    %1627 = vector.extract_strided_slice %1620 {offsets = [0, 96], sizes = [8, 32], strides = [1, 1]} : vector<8x128xf32> to vector<8x32xf32>
    %1628 = math.tanh %1627 : vector<8x32xf32>
    %1629 = vector.extract_strided_slice %1626 {offsets = [0, 0], sizes = [8, 32], strides = [1, 1]} : vector<8x96xf32> to vector<8x32xf32>
    %1630 = vector.extract_strided_slice %1626 {offsets = [0, 32], sizes = [8, 32], strides = [1, 1]} : vector<8x96xf32> to vector<8x32xf32>
    %1631 = vector.extract_strided_slice %1626 {offsets = [0, 64], sizes = [8, 32], strides = [1, 1]} : vector<8x96xf32> to vector<8x32xf32>
    %1632 = arith.mulf %1630, %1611 : vector<8x32xf32>
    %1633 = arith.mulf %1629, %1628 : vector<8x32xf32>
    %1634 = arith.addf %1632, %1633 : vector<8x32xf32>
    %1635 = math.tanh %1634 : vector<8x32xf32>
    %1636 = arith.mulf %1631, %1635 : vector<8x32xf32>
    %c3_i32_476 = arith.constant 3 : i32
    %c8_i32_477 = arith.constant 8 : i32
    %1637 = arith.muli %c3_i32_476, %c8_i32_477 : i32
    %1638 = tpu.assume_multiple %1637, 8 : i32
    %1639 = arith.index_cast %1638 : i32 to index
    %c0_478 = arith.constant 0 : index
    %1640 = vector.load %arg8[%1639, %c0_478] : memref<64x128xf32, #tpu.memory_space<vmem>>, vector<8x128xf32>
    %1641 = arith.truncf %1636 : vector<8x32xf32> to vector<8x32xbf16>
    %cst_479 = arith.constant dense<0.000000e+00> : vector<8x128xf32>
    %1642 = tpu.matmul %1641, %1559, %cst_479 {dimension_numbers = #tpu.dot_dimension_numbers<[1], [0], [0], [1], [0, 0, 1, 1], [], []>} : vector<8x32xbf16>, vector<32x128xbf16>, vector<8x128xf32> -> vector<8x128xf32>
    %1643 = arith.addf %1640, %1642 : vector<8x128xf32>
    %1644 = vector.extract_strided_slice %1643 {offsets = [0, 0], sizes = [8, 96], strides = [1, 1]} : vector<8x128xf32> to vector<8x96xf32>
    %1645 = arith.negf %1644 : vector<8x96xf32>
    %1646 = math.exp %1645 : vector<8x96xf32>
    %cst_480 = arith.constant 1.000000e+00 : f32
    %1647 = vector.broadcast %cst_480 : f32 to vector<8x96xf32>
    %1648 = arith.addf %1647, %1646 : vector<8x96xf32>
    %1649 = arith.divf %1647, %1648 : vector<8x96xf32>
    %1650 = vector.extract_strided_slice %1643 {offsets = [0, 96], sizes = [8, 32], strides = [1, 1]} : vector<8x128xf32> to vector<8x32xf32>
    %1651 = math.tanh %1650 : vector<8x32xf32>
    %1652 = vector.extract_strided_slice %1649 {offsets = [0, 0], sizes = [8, 32], strides = [1, 1]} : vector<8x96xf32> to vector<8x32xf32>
    %1653 = vector.extract_strided_slice %1649 {offsets = [0, 32], sizes = [8, 32], strides = [1, 1]} : vector<8x96xf32> to vector<8x32xf32>
    %1654 = vector.extract_strided_slice %1649 {offsets = [0, 64], sizes = [8, 32], strides = [1, 1]} : vector<8x96xf32> to vector<8x32xf32>
    %1655 = arith.mulf %1653, %1634 : vector<8x32xf32>
    %1656 = arith.mulf %1652, %1651 : vector<8x32xf32>
    %1657 = arith.addf %1655, %1656 : vector<8x32xf32>
    %1658 = math.tanh %1657 : vector<8x32xf32>
    %1659 = arith.mulf %1654, %1658 : vector<8x32xf32>
    %c4_i32_481 = arith.constant 4 : i32
    %c8_i32_482 = arith.constant 8 : i32
    %1660 = arith.muli %c4_i32_481, %c8_i32_482 : i32
    %1661 = tpu.assume_multiple %1660, 8 : i32
    %1662 = arith.index_cast %1661 : i32 to index
    %c0_483 = arith.constant 0 : index
    %1663 = vector.load %arg8[%1662, %c0_483] : memref<64x128xf32, #tpu.memory_space<vmem>>, vector<8x128xf32>
    %1664 = arith.truncf %1659 : vector<8x32xf32> to vector<8x32xbf16>
    %cst_484 = arith.constant dense<0.000000e+00> : vector<8x128xf32>
    %1665 = tpu.matmul %1664, %1559, %cst_484 {dimension_numbers = #tpu.dot_dimension_numbers<[1], [0], [0], [1], [0, 0, 1, 1], [], []>} : vector<8x32xbf16>, vector<32x128xbf16>, vector<8x128xf32> -> vector<8x128xf32>
    %1666 = arith.addf %1663, %1665 : vector<8x128xf32>
    %1667 = vector.extract_strided_slice %1666 {offsets = [0, 0], sizes = [8, 96], strides = [1, 1]} : vector<8x128xf32> to vector<8x96xf32>
    %1668 = arith.negf %1667 : vector<8x96xf32>
    %1669 = math.exp %1668 : vector<8x96xf32>
    %cst_485 = arith.constant 1.000000e+00 : f32
    %1670 = vector.broadcast %cst_485 : f32 to vector<8x96xf32>
    %1671 = arith.addf %1670, %1669 : vector<8x96xf32>
    %1672 = arith.divf %1670, %1671 : vector<8x96xf32>
    %1673 = vector.extract_strided_slice %1666 {offsets = [0, 96], sizes = [8, 32], strides = [1, 1]} : vector<8x128xf32> to vector<8x32xf32>
    %1674 = math.tanh %1673 : vector<8x32xf32>
    %1675 = vector.extract_strided_slice %1672 {offsets = [0, 0], sizes = [8, 32], strides = [1, 1]} : vector<8x96xf32> to vector<8x32xf32>
    %1676 = vector.extract_strided_slice %1672 {offsets = [0, 32], sizes = [8, 32], strides = [1, 1]} : vector<8x96xf32> to vector<8x32xf32>
    %1677 = vector.extract_strided_slice %1672 {offsets = [0, 64], sizes = [8, 32], strides = [1, 1]} : vector<8x96xf32> to vector<8x32xf32>
    %1678 = arith.mulf %1676, %1657 : vector<8x32xf32>
    %1679 = arith.mulf %1675, %1674 : vector<8x32xf32>
    %1680 = arith.addf %1678, %1679 : vector<8x32xf32>
    %1681 = math.tanh %1680 : vector<8x32xf32>
    %1682 = arith.mulf %1677, %1681 : vector<8x32xf32>
    %c5_i32_486 = arith.constant 5 : i32
    %c8_i32_487 = arith.constant 8 : i32
    %1683 = arith.muli %c5_i32_486, %c8_i32_487 : i32
    %1684 = tpu.assume_multiple %1683, 8 : i32
    %1685 = arith.index_cast %1684 : i32 to index
    %c0_488 = arith.constant 0 : index
    %1686 = vector.load %arg8[%1685, %c0_488] : memref<64x128xf32, #tpu.memory_space<vmem>>, vector<8x128xf32>
    %1687 = arith.truncf %1682 : vector<8x32xf32> to vector<8x32xbf16>
    %cst_489 = arith.constant dense<0.000000e+00> : vector<8x128xf32>
    %1688 = tpu.matmul %1687, %1559, %cst_489 {dimension_numbers = #tpu.dot_dimension_numbers<[1], [0], [0], [1], [0, 0, 1, 1], [], []>} : vector<8x32xbf16>, vector<32x128xbf16>, vector<8x128xf32> -> vector<8x128xf32>
    %1689 = arith.addf %1686, %1688 : vector<8x128xf32>
    %1690 = vector.extract_strided_slice %1689 {offsets = [0, 0], sizes = [8, 96], strides = [1, 1]} : vector<8x128xf32> to vector<8x96xf32>
    %1691 = arith.negf %1690 : vector<8x96xf32>
    %1692 = math.exp %1691 : vector<8x96xf32>
    %cst_490 = arith.constant 1.000000e+00 : f32
    %1693 = vector.broadcast %cst_490 : f32 to vector<8x96xf32>
    %1694 = arith.addf %1693, %1692 : vector<8x96xf32>
    %1695 = arith.divf %1693, %1694 : vector<8x96xf32>
    %1696 = vector.extract_strided_slice %1689 {offsets = [0, 96], sizes = [8, 32], strides = [1, 1]} : vector<8x128xf32> to vector<8x32xf32>
    %1697 = math.tanh %1696 : vector<8x32xf32>
    %1698 = vector.extract_strided_slice %1695 {offsets = [0, 0], sizes = [8, 32], strides = [1, 1]} : vector<8x96xf32> to vector<8x32xf32>
    %1699 = vector.extract_strided_slice %1695 {offsets = [0, 32], sizes = [8, 32], strides = [1, 1]} : vector<8x96xf32> to vector<8x32xf32>
    %1700 = vector.extract_strided_slice %1695 {offsets = [0, 64], sizes = [8, 32], strides = [1, 1]} : vector<8x96xf32> to vector<8x32xf32>
    %1701 = arith.mulf %1699, %1680 : vector<8x32xf32>
    %1702 = arith.mulf %1698, %1697 : vector<8x32xf32>
    %1703 = arith.addf %1701, %1702 : vector<8x32xf32>
    %1704 = math.tanh %1703 : vector<8x32xf32>
    %1705 = arith.mulf %1700, %1704 : vector<8x32xf32>
    %c6_i32_491 = arith.constant 6 : i32
    %c8_i32_492 = arith.constant 8 : i32
    %1706 = arith.muli %c6_i32_491, %c8_i32_492 : i32
    %1707 = tpu.assume_multiple %1706, 8 : i32
    %1708 = arith.index_cast %1707 : i32 to index
    %c0_493 = arith.constant 0 : index
    %1709 = vector.load %arg8[%1708, %c0_493] : memref<64x128xf32, #tpu.memory_space<vmem>>, vector<8x128xf32>
    %1710 = arith.truncf %1705 : vector<8x32xf32> to vector<8x32xbf16>
    %cst_494 = arith.constant dense<0.000000e+00> : vector<8x128xf32>
    %1711 = tpu.matmul %1710, %1559, %cst_494 {dimension_numbers = #tpu.dot_dimension_numbers<[1], [0], [0], [1], [0, 0, 1, 1], [], []>} : vector<8x32xbf16>, vector<32x128xbf16>, vector<8x128xf32> -> vector<8x128xf32>
    %1712 = arith.addf %1709, %1711 : vector<8x128xf32>
    %1713 = vector.extract_strided_slice %1712 {offsets = [0, 0], sizes = [8, 96], strides = [1, 1]} : vector<8x128xf32> to vector<8x96xf32>
    %1714 = arith.negf %1713 : vector<8x96xf32>
    %1715 = math.exp %1714 : vector<8x96xf32>
    %cst_495 = arith.constant 1.000000e+00 : f32
    %1716 = vector.broadcast %cst_495 : f32 to vector<8x96xf32>
    %1717 = arith.addf %1716, %1715 : vector<8x96xf32>
    %1718 = arith.divf %1716, %1717 : vector<8x96xf32>
    %1719 = vector.extract_strided_slice %1712 {offsets = [0, 96], sizes = [8, 32], strides = [1, 1]} : vector<8x128xf32> to vector<8x32xf32>
    %1720 = math.tanh %1719 : vector<8x32xf32>
    %1721 = vector.extract_strided_slice %1718 {offsets = [0, 0], sizes = [8, 32], strides = [1, 1]} : vector<8x96xf32> to vector<8x32xf32>
    %1722 = vector.extract_strided_slice %1718 {offsets = [0, 32], sizes = [8, 32], strides = [1, 1]} : vector<8x96xf32> to vector<8x32xf32>
    %1723 = vector.extract_strided_slice %1718 {offsets = [0, 64], sizes = [8, 32], strides = [1, 1]} : vector<8x96xf32> to vector<8x32xf32>
    %1724 = arith.mulf %1722, %1703 : vector<8x32xf32>
    %1725 = arith.mulf %1721, %1720 : vector<8x32xf32>
    %1726 = arith.addf %1724, %1725 : vector<8x32xf32>
    %1727 = math.tanh %1726 : vector<8x32xf32>
    %1728 = arith.mulf %1723, %1727 : vector<8x32xf32>
    %c7_i32_496 = arith.constant 7 : i32
    %c8_i32_497 = arith.constant 8 : i32
    %1729 = arith.muli %c7_i32_496, %c8_i32_497 : i32
    %1730 = tpu.assume_multiple %1729, 8 : i32
    %1731 = arith.index_cast %1730 : i32 to index
    %c0_498 = arith.constant 0 : index
    %1732 = vector.load %arg8[%1731, %c0_498] : memref<64x128xf32, #tpu.memory_space<vmem>>, vector<8x128xf32>
    %1733 = arith.truncf %1728 : vector<8x32xf32> to vector<8x32xbf16>
    %cst_499 = arith.constant dense<0.000000e+00> : vector<8x128xf32>
    %1734 = tpu.matmul %1733, %1559, %cst_499 {dimension_numbers = #tpu.dot_dimension_numbers<[1], [0], [0], [1], [0, 0, 1, 1], [], []>} : vector<8x32xbf16>, vector<32x128xbf16>, vector<8x128xf32> -> vector<8x128xf32>
    %1735 = arith.addf %1732, %1734 : vector<8x128xf32>
    %1736 = vector.extract_strided_slice %1735 {offsets = [0, 0], sizes = [8, 96], strides = [1, 1]} : vector<8x128xf32> to vector<8x96xf32>
    %1737 = arith.negf %1736 : vector<8x96xf32>
    %1738 = math.exp %1737 : vector<8x96xf32>
    %cst_500 = arith.constant 1.000000e+00 : f32
    %1739 = vector.broadcast %cst_500 : f32 to vector<8x96xf32>
    %1740 = arith.addf %1739, %1738 : vector<8x96xf32>
    %1741 = arith.divf %1739, %1740 : vector<8x96xf32>
    %1742 = vector.extract_strided_slice %1735 {offsets = [0, 96], sizes = [8, 32], strides = [1, 1]} : vector<8x128xf32> to vector<8x32xf32>
    %1743 = math.tanh %1742 : vector<8x32xf32>
    %1744 = vector.extract_strided_slice %1741 {offsets = [0, 0], sizes = [8, 32], strides = [1, 1]} : vector<8x96xf32> to vector<8x32xf32>
    %1745 = vector.extract_strided_slice %1741 {offsets = [0, 32], sizes = [8, 32], strides = [1, 1]} : vector<8x96xf32> to vector<8x32xf32>
    %1746 = vector.extract_strided_slice %1741 {offsets = [0, 64], sizes = [8, 32], strides = [1, 1]} : vector<8x96xf32> to vector<8x32xf32>
    %1747 = arith.mulf %1745, %1726 : vector<8x32xf32>
    %1748 = arith.mulf %1744, %1743 : vector<8x32xf32>
    %1749 = arith.addf %1747, %1748 : vector<8x32xf32>
    %1750 = math.tanh %1749 : vector<8x32xf32>
    %1751 = arith.mulf %1746, %1750 : vector<8x32xf32>
    %c8_i32_501 = arith.constant 8 : i32
    %c0_502 = arith.constant 0 : index
    %c0_503 = arith.constant 0 : index
    %1752 = vector.load %arg5[%c0_502, %c0_503] : memref<8x32xf32, #tpu.memory_space<vmem>>, vector<8x32xf32>
    tpu.vector_store %arg5[%c0_502, %c0_503], %1751 {strides = array<i32>} : memref<8x32xf32, #tpu.memory_space<vmem>>, vector<8x32xf32>,
    return
  }
}

</mosaic_0001>

<llo_original>
// kernel: res_lstm_forward.1
$region0: #{res_lstm_forward.1}
  #allocation0 [shape = 'u32[]', space=smem, size = 0x4, offset = 0x4, fixed_abs, tag = 'smem constant byte address 0x4 - core index']
  #allocation1 [shape = 'u32[72,128]{1,0:T(1,128)}', space=vmem, size = 0x9000, scoped, tag = 'internal scratch']
  #allocation2 [shape = 'f32[64,32]{1,0:T(8,128)}', space=vmem, size = 0x8000, scoped, tag = 'scratch operand']
  #allocation3 [shape = 'f32[64,32]{1,0:T(8,128)}', space=vmem, size = 0x8000, scoped, tag = 'scratch operand']
  #allocation4 [shape = 'f32[64,128]{1,0:T(8,128)}', space=vmem, size = 0x8000, scoped, tag = 'scratch operand']
  %s0 = inlined_call_operand.vmem [shape: f32[64,4], index: 0, kind: input, shape index: {}]
  %s1 = inlined_call_operand.vmem [shape: bf16[4,128], index: 1, kind: input, shape index: {}]
  %s2 = inlined_call_operand.hbm [shape: bf16[7,32,128], index: 2, kind: input, shape index: {}]
  %s3 = inlined_call_operand.hbm [shape: bf16[8,32,128], index: 3, kind: input, shape index: {}]
  %s4 = inlined_call_operand.vmem [shape: f32[8,1,128], index: 4, kind: input, shape index: {}]
  %s5 = inlined_call_operand.vmem [shape: f32[8,32], index: 5, kind: output, shape index: {}]
  %s6 = sld [smem:[#allocation0]]
  $region38: #{res_lstm_forward.1} parent=0
    _
  %s8 = ssub.s32 1, %s6
  %s9 = scalar_select 0, %s8, %s6
  $region1: #{res_lstm_forward.1} parent=0
    #allocation5 [shape = 'u8[57344]{0}', space=vmem, size = 0xe000, scoped, tag = 'input window, operand 2, single buffered']
    #allocation6 [shape = 's32[1]{0}', space=sflag, size = 0x4, scoped, tag = 'scoped memory for res_lstm_forward.1']
    #allocation7 [shape = 'u8[65536]{0}', space=vmem, size = 0x10000, scoped, tag = 'input window, operand 3, single buffered']
    #allocation8 [shape = 's32[1]{0}', space=sflag, size = 0x4, scoped, tag = 'scoped memory for res_lstm_forward.1']
    %10 = vsyncpa [#allocation6], 0
    %11 = vsyncpa [#allocation8], 0
    // Predicated region
    $region2: #{res_lstm_forward.1} parent=1 // pred_check
      _
    $region3: #{res_lstm_forward.1} parent=1 // pred_check_branch
      %13 = sbr.rel (0) target = $region5
    $region4: #{res_lstm_forward.1} parent=1 // pred_region
      _
    $region5: #{res_lstm_forward.1} parent=1 // pred_fallthru
      _
    // Predicated region
    $region6: #{res_lstm_forward.1} parent=1 // pred_check
      _
    $region7: #{res_lstm_forward.1} parent=1 // pred_check_branch
      %15 = sbr.rel (0) target = $region9
    $region8: #{res_lstm_forward.1} parent=1 // pred_region
      _
    $region9: #{res_lstm_forward.1} parent=1 // pred_fallthru
      _
    // Predicated region
    $region10: #{res_lstm_forward.1} parent=1 // pred_check
      _
    $region11: #{res_lstm_forward.1} parent=1 // pred_check_branch
      %17 = sbr.rel (0) target = $region13
    $region12: #{res_lstm_forward.1} parent=1 // pred_region
      %19 = vsyncadd [#allocation6], 0
      %s20 = sshll.u32 %s2, 4
      %s21 = int_to_ptr.hbm [resolvable:$true] %s20
      %s22 = sshll.u32 [#allocation5], 4
      %s23 = int_to_ptr.vmem [resolvable:$true] %s22
      %28 = dma.hbm_to_vmem [thread:$0]  %s21, 1792, %s23, [#allocation6], 64, 64, 4
    $region13: #{res_lstm_forward.1} parent=1 // pred_fallthru
      _
    // Predicated region
    $region14: #{res_lstm_forward.1} parent=1 // pred_check
      _
    $region15: #{res_lstm_forward.1} parent=1 // pred_check_branch
      %30 = sbr.rel (0) target = $region17
    $region16: #{res_lstm_forward.1} parent=1 // pred_region
      %32 = vsyncadd [#allocation8], 0
      %s33 = sshll.u32 %s3, 4
      %s34 = int_to_ptr.hbm [resolvable:$true] %s33
      %s35 = sshll.u32 [#allocation7], 4
      %s36 = int_to_ptr.vmem [resolvable:$true] %s35
      %41 = dma.hbm_to_vmem [thread:$0]  %s34, 2048, %s36, [#allocation8], 64, 64, 4
    $region17: #{res_lstm_forward.1} parent=1 // pred_fallthru
      _
    // Predicated region
    $region18: #{res_lstm_forward.1} parent=1 // pred_check
      _
    $region19: #{res_lstm_forward.1} parent=1 // pred_check_branch
      %43 = sbr.rel (0) target = $region21
    $region20: #{res_lstm_forward.1} parent=1 // pred_region
      _
    $region21: #{res_lstm_forward.1} parent=1 // pred_fallthru
      _
    // Predicated region
    $region22: #{res_lstm_forward.1} parent=1 // pred_check
      _
    $region23: #{res_lstm_forward.1} parent=1 // pred_check_branch
      %45 = sbr.rel (0) target = $region25
    $region24: #{res_lstm_forward.1} parent=1 // pred_region
      %47 = dma.done [#allocation6], 1792
    $region25: #{res_lstm_forward.1} parent=1 // pred_fallthru
      _
    // Predicated region
    $region26: #{res_lstm_forward.1} parent=1 // pred_check
      _
    $region27: #{res_lstm_forward.1} parent=1 // pred_check_branch
      %49 = sbr.rel (0) target = $region29
    $region28: #{res_lstm_forward.1} parent=1 // pred_region
      %51 = dma.done [#allocation8], 2048
    $region29: #{res_lstm_forward.1} parent=1 // pred_fallthru
      _
    %v53 = vld [vmem:[%s1] sm:$0x3]
    %v54 = vld [vmem:[#allocation7] sm:$0xf]
    %v55 = vld [vmem:[#allocation7 + $0x4] sm:$0xf]
    %v56 = vld [vmem:[#allocation7 + $0x8] sm:$0xf]
    %v57 = vld [vmem:[#allocation7 + $0xc] sm:$0xf]
    %v58 = vld [vmem:[%s4] sm:$0x1]
    %v59 = vld [vmem:[%s0] sm:$0xff]
    %v60 = vld [vmem:[%s0 + $0x8] sm:$0xff]
    %v61 = vld [vmem:[%s0 + $0x10] sm:$0xff]
    %v62 = vld [vmem:[%s0 + $0x18] sm:$0xff]
    %v63 = vld [vmem:[%s0 + $0x20] sm:$0xff]
    %v64 = vld [vmem:[%s0 + $0x28] sm:$0xff]
    %v65 = vld [vmem:[%s0 + $0x30] sm:$0xff]
    %v66 = vld [vmem:[%s0 + $0x38] sm:$0xff]
    %v67 = vpack.c.bf16 %v60, %v59
    %v68 = vpack.c.bf16 %v62, %v61
    %v69 = vpack.c.bf16 %v64, %v63
    %v70 = vpack.c.bf16 %v66, %v65
    %v72 = vperm.slane %v58, 0
    %vm74 = vcmask 31744
    %v76 = vsel %vm74, %v67, 0
    %v79 = vsel %vm74, %v68, 0
    %v82 = vsel %vm74, %v69, 0
    %v85 = vsel %vm74, %v70, 0
    %vm87 = vcmask 1041408
    %v89 = vsel %vm87, %v53, 0
    %91 = vmatpush.bf16.msra.mxu0 0
    %92 = vmatpush.bf16.msra.mxu0 0
    %93 = vmatpush.bf16.msra.mxu0 0
    %94 = vmatpush.bf16.msra.mxu0 0
    %95 = vmatpush.bf16.msra.mxu0 0
    %96 = vmatpush.bf16.msra.mxu0 0
    %97 = vmatpush.bf16.msra.mxu0 0
    %98 = vmatpush.bf16.msra.mxu0 %v89
    %99 = vmatmul.bf16.gmra.mxu0 %v76
    %v100 = vpop.f32.mrf.mxu0
    %v101 = vadd.f32 %v72, %v100
    %v102 = vpop.f32.mrf.mxu0
    %v103 = vadd.f32 %v72, %v102
    %104 = vmatmul.bf16.gmra.mxu0 %v79
    %v105 = vpop.f32.mrf.mxu0
    %v106 = vadd.f32 %v72, %v105
    %v107 = vpop.f32.mrf.mxu0
    %v108 = vadd.f32 %v72, %v107
    %109 = vmatmul.bf16.gmra.mxu0 %v82
    %v110 = vpop.f32.mrf.mxu0
    %v111 = vadd.f32 %v72, %v110
    %v112 = vpop.f32.mrf.mxu0
    %v113 = vadd.f32 %v72, %v112
    %114 = vmatmul.bf16.gmra.mxu0 %v85
    %v115 = vpop.f32.mrf.mxu0
    %v116 = vadd.f32 %v72, %v115
    %v117 = vpop.f32.mrf.mxu0
    %v118 = vadd.f32 %v72, %v117
    %119 = vdwg.mxu0
    %120 = vst [vmem:[#allocation4] sm:$0xff] %v101
    %121 = vst [vmem:[#allocation4 + $0x8] sm:$0xff] %v103
    %122 = vst [vmem:[#allocation4 + $0x10] sm:$0xff] %v106
    %123 = vst [vmem:[#allocation4 + $0x18] sm:$0xff] %v108
    %124 = vst [vmem:[#allocation4 + $0x20] sm:$0xff] %v111
    %125 = vst [vmem:[#allocation4 + $0x28] sm:$0xff] %v113
    %126 = vst [vmem:[#allocation4 + $0x30] sm:$0xff] %v116
    %127 = vst [vmem:[#allocation4 + $0x38] sm:$0xff] %v118
    %v128 = vld [vmem:[#allocation4] sm:$0xff]
    %v133 = vunpack.c.l.b16 %v54
    %v134 = vunpack.c.l.b16 %v55
    %v135 = vunpack.c.l.b16 %v56
    %v136 = vunpack.c.l.b16 %v57
    %v137 = vpack.c.b16 %v134, %v133
    %v138 = vpack.c.b16 %v136, %v135
    %vm141 = vcmask 261120
    %v143 = vsel %vm141, 0, 0
    %145 = vmatpush.bf16.msra.mxu0 0
    %146 = vmatpush.bf16.msra.mxu0 0
    %147 = vmatpush.bf16.msra.mxu0 0
    %148 = vmatpush.bf16.msra.mxu0 0
    %149 = vmatpush.bf16.msra.mxu0 0
    %150 = vmatpush.bf16.msra.mxu0 0
    %151 = vmatpush.bf16.msra.mxu0 %v138
    %152 = vmatpush.bf16.msra.mxu0 %v137
    %153 = vmatmul.bf16.gmra.mxu0 %v143
    %v154 = vpop.f32.mrf.mxu0
    %v155 = vadd.f32 0.0, %v154
    %v156 = vpop.f32.mrf.mxu0
    %157 = vdwg.mxu0
    %v158 = vadd.f32 %v128, %v155
    %v159 = vxor.u32 %v158, 2147483648
    %v160 = vmul.f32 %v159, 1.442695
    %v161 = vpow.pop %v160
    %v162 = vadd.f32 %v161, 1.0
    %v163 = vrcp.pop %v162
    %v164 = vmul.f32 %v162, %v163
    %v165 = vsub.f32 1.0, %v164
    %v166 = vmul.f32 %v163, %v165
    %v167 = vadd.f32 %v163, %v166
    %vm168 = vweird.f32 %v162
    %vm169 = vweird.f32 %v163
    %vm170 = vmor %vm168, %vm169
    %v171 = vsel %vm170, %v163, %v167
    %v172 = vand.u32 2147483647, %v162
    %vm173 = vcmp.eq.f32.partialorder %v172, 8.507059e+37
    %v174 = vand.u32 %v162, 2147483648
    %v175 = vor.u32 1.1754944e-38, %v174
    %v176 = vsel %vm173, %v175, %v171
    %v177 = vmul.f32 1.0, %v176
    %v178 = vtanh.pop %v158
    %v179 = vmul.f32 %v177, 0.0
    %181 = vrot.lane.b32.xlu0 %v178, 32
    %v182 = vpop.permute.xlu0 %181
    %v184 = vmul.f32 %v177, %v182
    %186 = vrot.lane.b32.xlu0 %v184, 32
    %v187 = vpop.permute.xlu0 %186
    %v189 = vadd.f32 %v179, %v187
    %v190 = vtanh.pop %v189
    %192 = vrot.lane.b32.xlu0 %v190, 32
    %v193 = vpop.permute.xlu0 %192
    %v195 = vmul.f32 %v177, %v193
    %197 = vrot.lane.b32.xlu0 %v195, 64
    %v198 = vpop.permute.xlu0 %197
    %200 = vst.msk [vmem:[#allocation2] sm:$0xff] %vm141, %v198
    %s201 = scalar_lea.vmem [#allocation4], 8
    %v202 = vld [vmem:[%s201] sm:$0xff]
    %v203 = vpack.c.bf16 %v195, %v195
    %205 = vrot.lane.b32.xlu0 %v203, 64
    %v206 = vpop.permute.xlu0 %205
    %v208 = vsel %vm141, %v206, 0
    %210 = vmatpush.bf16.msra.mxu0 0
    %211 = vmatpush.bf16.msra.mxu0 0
    %212 = vmatpush.bf16.msra.mxu0 0
    %213 = vmatpush.bf16.msra.mxu0 0
    %214 = vmatpush.bf16.msra.mxu0 0
    %215 = vmatpush.bf16.msra.mxu0 0
    %216 = vmatpush.bf16.msra.mxu0 %v138
    %217 = vmatpush.bf16.msra.mxu0 %v137
    %218 = vmatmul.bf16.gmra.mxu0 %v208
    %v219 = vpop.f32.mrf.mxu0
    %v220 = vadd.f32 0.0, %v219
    %v221 = vpop.f32.mrf.mxu0
    %222 = vdwg.mxu0
    %v223 = vadd.f32 %v202, %v220
    %v224 = vxor.u32 %v223, 2147483648
    %v225 = vmul.f32 %v224, 1.442695
    %v226 = vpow.pop %v225
    %v227 = vadd.f32 %v226, 1.0
    %v228 = vrcp.pop %v227
    %v229 = vmul.f32 %v227, %v228
    %v230 = vsub.f32 1.0, %v229
    %v231 = vmul.f32 %v228, %v230
    %v232 = vadd.f32 %v228, %v231
    %vm233 = vweird.f32 %v227
    %vm234 = vweird.f32 %v228
    %vm235 = vmor %vm233, %vm234
    %v236 = vsel %vm235, %v228, %v232
    %v237 = vand.u32 2147483647, %v227
    %vm238 = vcmp.eq.f32.partialorder %v237, 8.507059e+37
    %v239 = vand.u32 %v227, 2147483648
    %v240 = vor.u32 1.1754944e-38, %v239
    %v241 = vsel %vm238, %v240, %v236
    %v242 = vmul.f32 1.0, %v241
    %v243 = vtanh.pop %v223
    %v244 = vmul.f32 %v242, %v189
    %246 = vrot.lane.b32.xlu0 %v243, 32
    %v247 = vpop.permute.xlu0 %246
    %v249 = vmul.f32 %v242, %v247
    %251 = vrot.lane.b32.xlu0 %v249, 32
    %v252 = vpop.permute.xlu0 %251
    %v254 = vadd.f32 %v244, %v252
    %v255 = vtanh.pop %v254
    %257 = vrot.lane.b32.xlu0 %v255, 32
    %v258 = vpop.permute.xlu0 %257
    %v260 = vmul.f32 %v242, %v258
    %262 = vrot.lane.b32.xlu0 %v260, 64
    %v263 = vpop.permute.xlu0 %262
    %s265 = scalar_lea.vmem [#allocation2], 8
    %266 = vst.msk [vmem:[%s265] sm:$0xff] %vm141, %v263
    %s267 = scalar_lea.vmem [#allocation4], 16
    %v268 = vld [vmem:[%s267] sm:$0xff]
    %v269 = vpack.c.bf16 %v260, %v260
    %271 = vrot.lane.b32.xlu0 %v269, 64
    %v272 = vpop.permute.xlu0 %271
    %v274 = vsel %vm141, %v272, 0
    %276 = vmatpush.bf16.msra.mxu0 0
    %277 = vmatpush.bf16.msra.mxu0 0
    %278 = vmatpush.bf16.msra.mxu0 0
    %279 = vmatpush.bf16.msra.mxu0 0
    %280 = vmatpush.bf16.msra.mxu0 0
    %281 = vmatpush.bf16.msra.mxu0 0
    %282 = vmatpush.bf16.msra.mxu0 %v138
    %283 = vmatpush.bf16.msra.mxu0 %v137
    %284 = vmatmul.bf16.gmra.mxu0 %v274
    %v285 = vpop.f32.mrf.mxu0
    %v286 = vadd.f32 0.0, %v285
    %v287 = vpop.f32.mrf.mxu0
    %288 = vdwg.mxu0
    %v289 = vadd.f32 %v268, %v286
    %v290 = vxor.u32 %v289, 2147483648
    %v291 = vmul.f32 %v290, 1.442695
    %v292 = vpow.pop %v291
    %v293 = vadd.f32 %v292, 1.0
    %v294 = vrcp.pop %v293
    %v295 = vmul.f32 %v293, %v294
    %v296 = vsub.f32 1.0, %v295
    %v297 = vmul.f32 %v294, %v296
    %v298 = vadd.f32 %v294, %v297
    %vm299 = vweird.f32 %v293
    %vm300 = vweird.f32 %v294
    %vm301 = vmor %vm299, %vm300
    %v302 = vsel %vm301, %v294, %v298
    %v303 = vand.u32 2147483647, %v293
    %vm304 = vcmp.eq.f32.partialorder %v303, 8.507059e+37
    %v305 = vand.u32 %v293, 2147483648
    %v306 = vor.u32 1.1754944e-38, %v305
    %v307 = vsel %vm304, %v306, %v302
    %v308 = vmul.f32 1.0, %v307
    %v309 = vtanh.pop %v289
    %v310 = vmul.f32 %v308, %v254
    %312 = vrot.lane.b32.xlu0 %v309, 32
    %v313 = vpop.permute.xlu0 %312
    %v315 = vmul.f32 %v308, %v313
    %317 = vrot.lane.b32.xlu0 %v315, 32
    %v318 = vpop.permute.xlu0 %317
    %v320 = vadd.f32 %v310, %v318
    %v321 = vtanh.pop %v320
    %323 = vrot.lane.b32.xlu0 %v321, 32
    %v324 = vpop.permute.xlu0 %323
    %v326 = vmul.f32 %v308, %v324
    %328 = vrot.lane.b32.xlu0 %v326, 64
    %v329 = vpop.permute.xlu0 %328
    %s331 = scalar_lea.vmem [#allocation2], 16
    %332 = vst.msk [vmem:[%s331] sm:$0xff] %vm141, %v329
    %s333 = scalar_lea.vmem [#allocation4], 24
    %v334 = vld [vmem:[%s333] sm:$0xff]
    %v335 = vpack.c.bf16 %v326, %v326
    %337 = vrot.lane.b32.xlu0 %v335, 64
    %v338 = vpop.permute.xlu0 %337
    %v340 = vsel %vm141, %v338, 0
    %342 = vmatpush.bf16.msra.mxu0 0
    %343 = vmatpush.bf16.msra.mxu0 0
    %344 = vmatpush.bf16.msra.mxu0 0
    %345 = vmatpush.bf16.msra.mxu0 0
    %346 = vmatpush.bf16.msra.mxu0 0
    %347 = vmatpush.bf16.msra.mxu0 0
    %348 = vmatpush.bf16.msra.mxu0 %v138
    %349 = vmatpush.bf16.msra.mxu0 %v137
    %350 = vmatmul.bf16.gmra.mxu0 %v340
    %v351 = vpop.f32.mrf.mxu0
    %v352 = vadd.f32 0.0, %v351
    %v353 = vpop.f32.mrf.mxu0
    %354 = vdwg.mxu0
    %v355 = vadd.f32 %v334, %v352
    %v356 = vxor.u32 %v355, 2147483648
    %v357 = vmul.f32 %v356, 1.442695
    %v358 = vpow.pop %v357
    %v359 = vadd.f32 %v358, 1.0
    %v360 = vrcp.pop %v359
    %v361 = vmul.f32 %v359, %v360
    %v362 = vsub.f32 1.0, %v361
    %v363 = vmul.f32 %v360, %v362
    %v364 = vadd.f32 %v360, %v363
    %vm365 = vweird.f32 %v359
    %vm366 = vweird.f32 %v360
    %vm367 = vmor %vm365, %vm366
    %v368 = vsel %vm367, %v360, %v364
    %v369 = vand.u32 2147483647, %v359
    %vm370 = vcmp.eq.f32.partialorder %v369, 8.507059e+37
    %v371 = vand.u32 %v359, 2147483648
    %v372 = vor.u32 1.1754944e-38, %v371
    %v373 = vsel %vm370, %v372, %v368
    %v374 = vmul.f32 1.0, %v373
    %v375 = vtanh.pop %v355
    %v376 = vmul.f32 %v374, %v320
    %378 = vrot.lane.b32.xlu0 %v375, 32
    %v379 = vpop.permute.xlu0 %378
    %v381 = vmul.f32 %v374, %v379
    %383 = vrot.lane.b32.xlu0 %v381, 32
    %v384 = vpop.permute.xlu0 %383
    %v386 = vadd.f32 %v376, %v384
    %v387 = vtanh.pop %v386
    %389 = vrot.lane.b32.xlu0 %v387, 32
    %v390 = vpop.permute.xlu0 %389
    %v392 = vmul.f32 %v374, %v390
    %394 = vrot.lane.b32.xlu0 %v392, 64
    %v395 = vpop.permute.xlu0 %394
    %s397 = scalar_lea.vmem [#allocation2], 24
    %398 = vst.msk [vmem:[%s397] sm:$0xff] %vm141, %v395
    %s399 = scalar_lea.vmem [#allocation4], 32
    %v400 = vld [vmem:[%s399] sm:$0xff]
    %v401 = vpack.c.bf16 %v392, %v392
    %403 = vrot.lane.b32.xlu0 %v401, 64
    %v404 = vpop.permute.xlu0 %403
    %v406 = vsel %vm141, %v404, 0
    %408 = vmatpush.bf16.msra.mxu0 0
    %409 = vmatpush.bf16.msra.mxu0 0
    %410 = vmatpush.bf16.msra.mxu0 0
    %411 = vmatpush.bf16.msra.mxu0 0
    %412 = vmatpush.bf16.msra.mxu0 0
    %413 = vmatpush.bf16.msra.mxu0 0
    %414 = vmatpush.bf16.msra.mxu0 %v138
    %415 = vmatpush.bf16.msra.mxu0 %v137
    %416 = vmatmul.bf16.gmra.mxu0 %v406
    %v417 = vpop.f32.mrf.mxu0
    %v418 = vadd.f32 0.0, %v417
    %v419 = vpop.f32.mrf.mxu0
    %420 = vdwg.mxu0
    %v421 = vadd.f32 %v400, %v418
    %v422 = vxor.u32 %v421, 2147483648
    %v423 = vmul.f32 %v422, 1.442695
    %v424 = vpow.pop %v423
    %v425 = vadd.f32 %v424, 1.0
    %v426 = vrcp.pop %v425
    %v427 = vmul.f32 %v425, %v426
    %v428 = vsub.f32 1.0, %v427
    %v429 = vmul.f32 %v426, %v428
    %v430 = vadd.f32 %v426, %v429
    %vm431 = vweird.f32 %v425
    %vm432 = vweird.f32 %v426
    %vm433 = vmor %vm431, %vm432
    %v434 = vsel %vm433, %v426, %v430
    %v435 = vand.u32 2147483647, %v425
    %vm436 = vcmp.eq.f32.partialorder %v435, 8.507059e+37
    %v437 = vand.u32 %v425, 2147483648
    %v438 = vor.u32 1.1754944e-38, %v437
    %v439 = vsel %vm436, %v438, %v434
    %v440 = vmul.f32 1.0, %v439
    %v441 = vtanh.pop %v421
    %v442 = vmul.f32 %v440, %v386
    %444 = vrot.lane.b32.xlu0 %v441, 32
    %v445 = vpop.permute.xlu0 %444
    %v447 = vmul.f32 %v440, %v445
    %449 = vrot.lane.b32.xlu0 %v447, 32
    %v450 = vpop.permute.xlu0 %449
    %v452 = vadd.f32 %v442, %v450
    %v453 = vtanh.pop %v452
    %455 = vrot.lane.b32.xlu0 %v453, 32
    %v456 = vpop.permute.xlu0 %455
    %v458 = vmul.f32 %v440, %v456
    %460 = vrot.lane.b32.xlu0 %v458, 64
    %v461 = vpop.permute.xlu0 %460
    %s463 = scalar_lea.vmem [#allocation2], 32
    %464 = vst.msk [vmem:[%s463] sm:$0xff] %vm141, %v461
    %s465 = scalar_lea.vmem [#allocation4], 40
    %v466 = vld [vmem:[%s465] sm:$0xff]
    %v467 = vpack.c.bf16 %v458, %v458
    %469 = vrot.lane.b32.xlu0 %v467, 64
    %v470 = vpop.permute.xlu0 %469
    %v472 = vsel %vm141, %v470, 0
    %474 = vmatpush.bf16.msra.mxu0 0
    %475 = vmatpush.bf16.msra.mxu0 0
    %476 = vmatpush.bf16.msra.mxu0 0
    %477 = vmatpush.bf16.msra.mxu0 0
    %478 = vmatpush.bf16.msra.mxu0 0
    %479 = vmatpush.bf16.msra.mxu0 0
    %480 = vmatpush.bf16.msra.mxu0 %v138
    %481 = vmatpush.bf16.msra.mxu0 %v137
    %482 = vmatmul.bf16.gmra.mxu0 %v472
    %v483 = vpop.f32.mrf.mxu0
    %v484 = vadd.f32 0.0, %v483
    %v485 = vpop.f32.mrf.mxu0
    %486 = vdwg.mxu0
    %v487 = vadd.f32 %v466, %v484
    %v488 = vxor.u32 %v487, 2147483648
    %v489 = vmul.f32 %v488, 1.442695
    %v490 = vpow.pop %v489
    %v491 = vadd.f32 %v490, 1.0
    %v492 = vrcp.pop %v491
    %v493 = vmul.f32 %v491, %v492
    %v494 = vsub.f32 1.0, %v493
    %v495 = vmul.f32 %v492, %v494
    %v496 = vadd.f32 %v492, %v495
    %vm497 = vweird.f32 %v491
    %vm498 = vweird.f32 %v492
    %vm499 = vmor %vm497, %vm498
    %v500 = vsel %vm499, %v492, %v496
    %v501 = vand.u32 2147483647, %v491
    %vm502 = vcmp.eq.f32.partialorder %v501, 8.507059e+37
    %v503 = vand.u32 %v491, 2147483648
    %v504 = vor.u32 1.1754944e-38, %v503
    %v505 = vsel %vm502, %v504, %v500
    %v506 = vmul.f32 1.0, %v505
    %v507 = vtanh.pop %v487
    %v508 = vmul.f32 %v506, %v452
    %510 = vrot.lane.b32.xlu0 %v507, 32
    %v511 = vpop.permute.xlu0 %510
    %v513 = vmul.f32 %v506, %v511
    %515 = vrot.lane.b32.xlu0 %v513, 32
    %v516 = vpop.permute.xlu0 %515
    %v518 = vadd.f32 %v508, %v516
    %v519 = vtanh.pop %v518
    %521 = vrot.lane.b32.xlu0 %v519, 32
    %v522 = vpop.permute.xlu0 %521
    %v524 = vmul.f32 %v506, %v522
    %526 = vrot.lane.b32.xlu0 %v524, 64
    %v527 = vpop.permute.xlu0 %526
    %s529 = scalar_lea.vmem [#allocation2], 40
    %530 = vst.msk [vmem:[%s529] sm:$0xff] %vm141, %v527
    %s531 = scalar_lea.vmem [#allocation4], 48
    %v532 = vld [vmem:[%s531] sm:$0xff]
    %v533 = vpack.c.bf16 %v524, %v524
    %535 = vrot.lane.b32.xlu0 %v533, 64
    %v536 = vpop.permute.xlu0 %535
    %v538 = vsel %vm141, %v536, 0
    %540 = vmatpush.bf16.msra.mxu0 0
    %541 = vmatpush.bf16.msra.mxu0 0
    %542 = vmatpush.bf16.msra.mxu0 0
    %543 = vmatpush.bf16.msra.mxu0 0
    %544 = vmatpush.bf16.msra.mxu0 0
    %545 = vmatpush.bf16.msra.mxu0 0
    %546 = vmatpush.bf16.msra.mxu0 %v138
    %547 = vmatpush.bf16.msra.mxu0 %v137
    %548 = vmatmul.bf16.gmra.mxu0 %v538
    %v549 = vpop.f32.mrf.mxu0
    %v550 = vadd.f32 0.0, %v549
    %v551 = vpop.f32.mrf.mxu0
    %552 = vdwg.mxu0
    %v553 = vadd.f32 %v532, %v550
    %v554 = vxor.u32 %v553, 2147483648
    %v555 = vmul.f32 %v554, 1.442695
    %v556 = vpow.pop %v555
    %v557 = vadd.f32 %v556, 1.0
    %v558 = vrcp.pop %v557
    %v559 = vmul.f32 %v557, %v558
    %v560 = vsub.f32 1.0, %v559
    %v561 = vmul.f32 %v558, %v560
    %v562 = vadd.f32 %v558, %v561
    %vm563 = vweird.f32 %v557
    %vm564 = vweird.f32 %v558
    %vm565 = vmor %vm563, %vm564
    %v566 = vsel %vm565, %v558, %v562
    %v567 = vand.u32 2147483647, %v557
    %vm568 = vcmp.eq.f32.partialorder %v567, 8.507059e+37
    %v569 = vand.u32 %v557, 2147483648
    %v570 = vor.u32 1.1754944e-38, %v569
    %v571 = vsel %vm568, %v570, %v566
    %v572 = vmul.f32 1.0, %v571
    %v573 = vtanh.pop %v553
    %v574 = vmul.f32 %v572, %v518
    %576 = vrot.lane.b32.xlu0 %v573, 32
    %v577 = vpop.permute.xlu0 %576
    %v579 = vmul.f32 %v572, %v577
    %581 = vrot.lane.b32.xlu0 %v579, 32
    %v582 = vpop.permute.xlu0 %581
    %v584 = vadd.f32 %v574, %v582
    %v585 = vtanh.pop %v584
    %587 = vrot.lane.b32.xlu0 %v585, 32
    %v588 = vpop.permute.xlu0 %587
    %v590 = vmul.f32 %v572, %v588
    %592 = vrot.lane.b32.xlu0 %v590, 64
    %v593 = vpop.permute.xlu0 %592
    %s595 = scalar_lea.vmem [#allocation2], 48
    %596 = vst.msk [vmem:[%s595] sm:$0xff] %vm141, %v593
    %s597 = scalar_lea.vmem [#allocation4], 56
    %v598 = vld [vmem:[%s597] sm:$0xff]
    %v599 = vpack.c.bf16 %v590, %v590
    %601 = vrot.lane.b32.xlu0 %v599, 64
    %v602 = vpop.permute.xlu0 %601
    %v604 = vsel %vm141, %v602, 0
    %606 = vmatpush.bf16.msra.mxu0 0
    %607 = vmatpush.bf16.msra.mxu0 0
    %608 = vmatpush.bf16.msra.mxu0 0
    %609 = vmatpush.bf16.msra.mxu0 0
    %610 = vmatpush.bf16.msra.mxu0 0
    %611 = vmatpush.bf16.msra.mxu0 0
    %612 = vmatpush.bf16.msra.mxu0 %v138
    %613 = vmatpush.bf16.msra.mxu0 %v137
    %614 = vmatmul.bf16.gmra.mxu0 %v604
    %v615 = vpop.f32.mrf.mxu0
    %v616 = vadd.f32 0.0, %v615
    %v617 = vpop.f32.mrf.mxu0
    %618 = vdwg.mxu0
    %v619 = vadd.f32 %v598, %v616
    %v620 = vxor.u32 %v619, 2147483648
    %v621 = vmul.f32 %v620, 1.442695
    %v622 = vpow.pop %v621
    %v623 = vadd.f32 %v622, 1.0
    %v624 = vrcp.pop %v623
    %v625 = vmul.f32 %v623, %v624
    %v626 = vsub.f32 1.0, %v625
    %v627 = vmul.f32 %v624, %v626
    %v628 = vadd.f32 %v624, %v627
    %vm629 = vweird.f32 %v623
    %vm630 = vweird.f32 %v624
    %vm631 = vmor %vm629, %vm630
    %v632 = vsel %vm631, %v624, %v628
    %v633 = vand.u32 2147483647, %v623
    %vm634 = vcmp.eq.f32.partialorder %v633, 8.507059e+37
    %v635 = vand.u32 %v623, 2147483648
    %v636 = vor.u32 1.1754944e-38, %v635
    %v637 = vsel %vm634, %v636, %v632
    %v638 = vmul.f32 1.0, %v637
    %v639 = vtanh.pop %v619
    %v640 = vmul.f32 %v638, %v584
    %642 = vrot.lane.b32.xlu0 %v639, 32
    %v643 = vpop.permute.xlu0 %642
    %v645 = vmul.f32 %v638, %v643
    %647 = vrot.lane.b32.xlu0 %v645, 32
    %v648 = vpop.permute.xlu0 %647
    %v650 = vadd.f32 %v640, %v648
    %v651 = vtanh.pop %v650
    %653 = vrot.lane.b32.xlu0 %v651, 32
    %v654 = vpop.permute.xlu0 %653
    %v656 = vmul.f32 %v638, %v654
    %658 = vrot.lane.b32.xlu0 %v656, 64
    %v659 = vpop.permute.xlu0 %658
    %s661 = scalar_lea.vmem [#allocation2], 56
    %662 = vst.msk [vmem:[%s661] sm:$0xff] %vm141, %v659
    %v663 = vld [vmem:[#allocation5] sm:$0xf]
    %v664 = vld [vmem:[#allocation5 + $0x4] sm:$0xf]
    %v665 = vld [vmem:[#allocation5 + $0x8] sm:$0xf]
    %v666 = vld [vmem:[#allocation5 + $0xc] sm:$0xf]
    %s667 = scalar_lea.vmem [#allocation7], 16
    %v668 = vld [vmem:[%s667] sm:$0xf]
    %v669 = vld [vmem:[%s667 + $0x4] sm:$0xf]
    %v670 = vld [vmem:[%s667 + $0x8] sm:$0xf]
    %v671 = vld [vmem:[%s667 + $0xc] sm:$0xf]
    %s672 = scalar_lea.vmem %s4, 1
    %v673 = vld [vmem:[%s672] sm:$0x1]
    %v674 = vld [vmem:[#allocation2] sm:$0xff]
    %v675 = vld [vmem:[#allocation2 + $0x8] sm:$0xff]
    %v676 = vld [vmem:[#allocation2 + $0x10] sm:$0xff]
    %v677 = vld [vmem:[#allocation2 + $0x18] sm:$0xff]
    %v678 = vld [vmem:[#allocation2 + $0x20] sm:$0xff]
    %v679 = vld [vmem:[#allocation2 + $0x28] sm:$0xff]
    %v680 = vld [vmem:[#allocation2 + $0x30] sm:$0xff]
    %v681 = vld [vmem:[#allocation2 + $0x38] sm:$0xff]
    %v682 = vpack.c.bf16 %v675, %v674
    %v683 = vpack.c.bf16 %v677, %v676
    %v684 = vpack.c.bf16 %v679, %v678
    %v685 = vpack.c.bf16 %v681, %v680
    %v687 = vperm.slane %v673, 0
    %v693 = vunpack.c.l.b16 %v663
    %v694 = vunpack.c.l.b16 %v664
    %v695 = vunpack.c.l.b16 %v665
    %v696 = vunpack.c.l.b16 %v666
    %v697 = vpack.c.b16 %v694, %v693
    %v698 = vpack.c.b16 %v696, %v695
    %v702 = vsel %vm141, %v682, 0
    %v705 = vsel %vm141, %v683, 0
    %v708 = vsel %vm141, %v684, 0
    %v711 = vsel %vm141, %v685, 0
    %713 = vmatpush.bf16.msra.mxu0 0
    %714 = vmatpush.bf16.msra.mxu0 0
    %715 = vmatpush.bf16.msra.mxu0 0
    %716 = vmatpush.bf16.msra.mxu0 0
    %717 = vmatpush.bf16.msra.mxu0 0
    %718 = vmatpush.bf16.msra.mxu0 0
    %719 = vmatpush.bf16.msra.mxu0 %v698
    %720 = vmatpush.bf16.msra.mxu0 %v697
    %721 = vmatmul.bf16.gmra.mxu0 %v702
    %v722 = vpop.f32.mrf.mxu0
    %v723 = vadd.f32 %v687, %v722
    %v724 = vpop.f32.mrf.mxu0
    %v725 = vadd.f32 %v687, %v724
    %726 = vmatmul.bf16.gmra.mxu0 %v705
    %v727 = vpop.f32.mrf.mxu0
    %v728 = vadd.f32 %v687, %v727
    %v729 = vpop.f32.mrf.mxu0
    %v730 = vadd.f32 %v687, %v729
    %731 = vmatmul.bf16.gmra.mxu0 %v708
    %v732 = vpop.f32.mrf.mxu0
    %v733 = vadd.f32 %v687, %v732
    %v734 = vpop.f32.mrf.mxu0
    %v735 = vadd.f32 %v687, %v734
    %736 = vmatmul.bf16.gmra.mxu0 %v711
    %v737 = vpop.f32.mrf.mxu0
    %v738 = vadd.f32 %v687, %v737
    %v739 = vpop.f32.mrf.mxu0
    %v740 = vadd.f32 %v687, %v739
    %741 = vdwg.mxu0
    %742 = vst [vmem:[#allocation4] sm:$0xff] %v723
    %743 = vst [vmem:[#allocation4 + $0x8] sm:$0xff] %v725
    %744 = vst [vmem:[#allocation4 + $0x10] sm:$0xff] %v728
    %745 = vst [vmem:[#allocation4 + $0x18] sm:$0xff] %v730
    %746 = vst [vmem:[#allocation4 + $0x20] sm:$0xff] %v733
    %747 = vst [vmem:[#allocation4 + $0x28] sm:$0xff] %v735
    %748 = vst [vmem:[#allocation4 + $0x30] sm:$0xff] %v738
    %749 = vst [vmem:[#allocation4 + $0x38] sm:$0xff] %v740
    %v750 = vld [vmem:[#allocation4] sm:$0xff]
    %v751 = vpack.c.bf16 %v656, %v656
    %753 = vrot.lane.b32.xlu0 %v751, 64
    %v754 = vpop.permute.xlu0 %753
    %v759 = vunpack.c.l.b16 %v668
    %v760 = vunpack.c.l.b16 %v669
    %v761 = vunpack.c.l.b16 %v670
    %v762 = vunpack.c.l.b16 %v671
    %v763 = vpack.c.b16 %v760, %v759
    %v764 = vpack.c.b16 %v762, %v761
    %v768 = vsel %vm141, %v754, 0
    %770 = vmatpush.bf16.msra.mxu0 0
    %771 = vmatpush.bf16.msra.mxu0 0
    %772 = vmatpush.bf16.msra.mxu0 0
    %773 = vmatpush.bf16.msra.mxu0 0
    %774 = vmatpush.bf16.msra.mxu0 0
    %775 = vmatpush.bf16.msra.mxu0 0
    %776 = vmatpush.bf16.msra.mxu0 %v764
    %777 = vmatpush.bf16.msra.mxu0 %v763
    %778 = vmatmul.bf16.gmra.mxu0 %v768
    %v779 = vpop.f32.mrf.mxu0
    %v780 = vadd.f32 0.0, %v779
    %v781 = vpop.f32.mrf.mxu0
    %782 = vdwg.mxu0
    %v783 = vadd.f32 %v750, %v780
    %v784 = vxor.u32 %v783, 2147483648
    %v785 = vmul.f32 %v784, 1.442695
    %v786 = vpow.pop %v785
    %v787 = vadd.f32 %v786, 1.0
    %v788 = vrcp.pop %v787
    %v789 = vmul.f32 %v787, %v788
    %v790 = vsub.f32 1.0, %v789
    %v791 = vmul.f32 %v788, %v790
    %v792 = vadd.f32 %v788, %v791
    %vm793 = vweird.f32 %v787
    %vm794 = vweird.f32 %v788
    %vm795 = vmor %vm793, %vm794
    %v796 = vsel %vm795, %v788, %v792
    %v797 = vand.u32 2147483647, %v787
    %vm798 = vcmp.eq.f32.partialorder %v797, 8.507059e+37
    %v799 = vand.u32 %v787, 2147483648
    %v800 = vor.u32 1.1754944e-38, %v799
    %v801 = vsel %vm798, %v800, %v796
    %v802 = vmul.f32 1.0, %v801
    %v803 = vtanh.pop %v783
    %v804 = vmul.f32 %v802, %v650
    %806 = vrot.lane.b32.xlu0 %v803, 32
    %v807 = vpop.permute.xlu0 %806
    %v809 = vmul.f32 %v802, %v807
    %811 = vrot.lane.b32.xlu0 %v809, 32
    %v812 = vpop.permute.xlu0 %811
    %v814 = vadd.f32 %v804, %v812
    %v815 = vtanh.pop %v814
    %817 = vrot.lane.b32.xlu0 %v815, 32
    %v818 = vpop.permute.xlu0 %817
    %v820 = vmul.f32 %v802, %v818
    %822 = vrot.lane.b32.xlu0 %v820, 64
    %v823 = vpop.permute.xlu0 %822
    %825 = vst.msk [vmem:[#allocation3] sm:$0xff] %vm141, %v823
    %v826 = vld [vmem:[%s201] sm:$0xff]
    %v827 = vpack.c.bf16 %v820, %v820
    %829 = vrot.lane.b32.xlu0 %v827, 64
    %v830 = vpop.permute.xlu0 %829
    %v832 = vsel %vm141, %v830, 0
    %834 = vmatpush.bf16.msra.mxu0 0
    %835 = vmatpush.bf16.msra.mxu0 0
    %836 = vmatpush.bf16.msra.mxu0 0
    %837 = vmatpush.bf16.msra.mxu0 0
    %838 = vmatpush.bf16.msra.mxu0 0
    %839 = vmatpush.bf16.msra.mxu0 0
    %840 = vmatpush.bf16.msra.mxu0 %v764
    %841 = vmatpush.bf16.msra.mxu0 %v763
    %842 = vmatmul.bf16.gmra.mxu0 %v832
    %v843 = vpop.f32.mrf.mxu0
    %v844 = vadd.f32 0.0, %v843
    %v845 = vpop.f32.mrf.mxu0
    %846 = vdwg.mxu0
    %v847 = vadd.f32 %v826, %v844
    %v848 = vxor.u32 %v847, 2147483648
    %v849 = vmul.f32 %v848, 1.442695
    %v850 = vpow.pop %v849
    %v851 = vadd.f32 %v850, 1.0
    %v852 = vrcp.pop %v851
    %v853 = vmul.f32 %v851, %v852
    %v854 = vsub.f32 1.0, %v853
    %v855 = vmul.f32 %v852, %v854
    %v856 = vadd.f32 %v852, %v855
    %vm857 = vweird.f32 %v851
    %vm858 = vweird.f32 %v852
    %vm859 = vmor %vm857, %vm858
    %v860 = vsel %vm859, %v852, %v856
    %v861 = vand.u32 2147483647, %v851
    %vm862 = vcmp.eq.f32.partialorder %v861, 8.507059e+37
    %v863 = vand.u32 %v851, 2147483648
    %v864 = vor.u32 1.1754944e-38, %v863
    %v865 = vsel %vm862, %v864, %v860
    %v866 = vmul.f32 1.0, %v865
    %v867 = vtanh.pop %v847
    %v868 = vmul.f32 %v866, %v814
    %870 = vrot.lane.b32.xlu0 %v867, 32
    %v871 = vpop.permute.xlu0 %870
    %v873 = vmul.f32 %v866, %v871
    %875 = vrot.lane.b32.xlu0 %v873, 32
    %v876 = vpop.permute.xlu0 %875
    %v878 = vadd.f32 %v868, %v876
    %v879 = vtanh.pop %v878
    %881 = vrot.lane.b32.xlu0 %v879, 32
    %v882 = vpop.permute.xlu0 %881
    %v884 = vmul.f32 %v866, %v882
    %886 = vrot.lane.b32.xlu0 %v884, 64
    %v887 = vpop.permute.xlu0 %886
    %s889 = scalar_lea.vmem [#allocation3], 8
    %890 = vst.msk [vmem:[%s889] sm:$0xff] %vm141, %v887
    %v891 = vld [vmem:[%s267] sm:$0xff]
    %v892 = vpack.c.bf16 %v884, %v884
    %894 = vrot.lane.b32.xlu0 %v892, 64
    %v895 = vpop.permute.xlu0 %894
    %v897 = vsel %vm141, %v895, 0
    %899 = vmatpush.bf16.msra.mxu0 0
    %900 = vmatpush.bf16.msra.mxu0 0
    %901 = vmatpush.bf16.msra.mxu0 0
    %902 = vmatpush.bf16.msra.mxu0 0
    %903 = vmatpush.bf16.msra.mxu0 0
    %904 = vmatpush.bf16.msra.mxu0 0
    %905 = vmatpush.bf16.msra.mxu0 %v764
    %906 = vmatpush.bf16.msra.mxu0 %v763
    %907 = vmatmul.bf16.gmra.mxu0 %v897
    %v908 = vpop.f32.mrf.mxu0
    %v909 = vadd.f32 0.0, %v908
    %v910 = vpop.f32.mrf.mxu0
    %911 = vdwg.mxu0
    %v912 = vadd.f32 %v891, %v909
    %v913 = vxor.u32 %v912, 2147483648
    %v914 = vmul.f32 %v913, 1.442695
    %v915 = vpow.pop %v914
    %v916 = vadd.f32 %v915, 1.0
    %v917 = vrcp.pop %v916
    %v918 = vmul.f32 %v916, %v917
    %v919 = vsub.f32 1.0, %v918
    %v920 = vmul.f32 %v917, %v919
    %v921 = vadd.f32 %v917, %v920
    %vm922 = vweird.f32 %v916
    %vm923 = vweird.f32 %v917
    %vm924 = vmor %vm922, %vm923
    %v925 = vsel %vm924, %v917, %v921
    %v926 = vand.u32 2147483647, %v916
    %vm927 = vcmp.eq.f32.partialorder %v926, 8.507059e+37
    %v928 = vand.u32 %v916, 2147483648
    %v929 = vor.u32 1.1754944e-38, %v928
    %v930 = vsel %vm927, %v929, %v925
    %v931 = vmul.f32 1.0, %v930
    %v932 = vtanh.pop %v912
    %v933 = vmul.f32 %v931, %v878
    %935 = vrot.lane.b32.xlu0 %v932, 32
    %v936 = vpop.permute.xlu0 %935
    %v938 = vmul.f32 %v931, %v936
    %940 = vrot.lane.b32.xlu0 %v938, 32
    %v941 = vpop.permute.xlu0 %940
    %v943 = vadd.f32 %v933, %v941
    %v944 = vtanh.pop %v943
    %946 = vrot.lane.b32.xlu0 %v944, 32
    %v947 = vpop.permute.xlu0 %946
    %v949 = vmul.f32 %v931, %v947
    %951 = vrot.lane.b32.xlu0 %v949, 64
    %v952 = vpop.permute.xlu0 %951
    %s954 = scalar_lea.vmem [#allocation3], 16
    %955 = vst.msk [vmem:[%s954] sm:$0xff] %vm141, %v952
    %v956 = vld [vmem:[%s333] sm:$0xff]
    %v957 = vpack.c.bf16 %v949, %v949
    %959 = vrot.lane.b32.xlu0 %v957, 64
    %v960 = vpop.permute.xlu0 %959
    %v962 = vsel %vm141, %v960, 0
    %964 = vmatpush.bf16.msra.mxu0 0
    %965 = vmatpush.bf16.msra.mxu0 0
    %966 = vmatpush.bf16.msra.mxu0 0
    %967 = vmatpush.bf16.msra.mxu0 0
    %968 = vmatpush.bf16.msra.mxu0 0
    %969 = vmatpush.bf16.msra.mxu0 0
    %970 = vmatpush.bf16.msra.mxu0 %v764
    %971 = vmatpush.bf16.msra.mxu0 %v763
    %972 = vmatmul.bf16.gmra.mxu0 %v962
    %v973 = vpop.f32.mrf.mxu0
    %v974 = vadd.f32 0.0, %v973
    %v975 = vpop.f32.mrf.mxu0
    %976 = vdwg.mxu0
    %v977 = vadd.f32 %v956, %v974
    %v978 = vxor.u32 %v977, 2147483648
    %v979 = vmul.f32 %v978, 1.442695
    %v980 = vpow.pop %v979
    %v981 = vadd.f32 %v980, 1.0
    %v982 = vrcp.pop %v981
    %v983 = vmul.f32 %v981, %v982
    %v984 = vsub.f32 1.0, %v983
    %v985 = vmul.f32 %v982, %v984
    %v986 = vadd.f32 %v982, %v985
    %vm987 = vweird.f32 %v981
    %vm988 = vweird.f32 %v982
    %vm989 = vmor %vm987, %vm988
    %v990 = vsel %vm989, %v982, %v986
    %v991 = vand.u32 2147483647, %v981
    %vm992 = vcmp.eq.f32.partialorder %v991, 8.507059e+37
    %v993 = vand.u32 %v981, 2147483648
    %v994 = vor.u32 1.1754944e-38, %v993
    %v995 = vsel %vm992, %v994, %v990
    %v996 = vmul.f32 1.0, %v995
    %v997 = vtanh.pop %v977
    %v998 = vmul.f32 %v996, %v943
    %1000 = vrot.lane.b32.xlu0 %v997, 32
    %v1001 = vpop.permute.xlu0 %1000
    %v1003 = vmul.f32 %v996, %v1001
    %1005 = vrot.lane.b32.xlu0 %v1003, 32
    %v1006 = vpop.permute.xlu0 %1005
    %v1008 = vadd.f32 %v998, %v1006
    %v1009 = vtanh.pop %v1008
    %1011 = vrot.lane.b32.xlu0 %v1009, 32
    %v1012 = vpop.permute.xlu0 %1011
    %v1014 = vmul.f32 %v996, %v1012
    %1016 = vrot.lane.b32.xlu0 %v1014, 64
    %v1017 = vpop.permute.xlu0 %1016
    %s1019 = scalar_lea.vmem [#allocation3], 24
    %1020 = vst.msk [vmem:[%s1019] sm:$0xff] %vm141, %v1017
    %v1021 = vld [vmem:[%s399] sm:$0xff]
    %v1022 = vpack.c.bf16 %v1014, %v1014
    %1024 = vrot.lane.b32.xlu0 %v1022, 64
    %v1025 = vpop.permute.xlu0 %1024
    %v1027 = vsel %vm141, %v1025, 0
    %1029 = vmatpush.bf16.msra.mxu0 0
    %1030 = vmatpush.bf16.msra.mxu0 0
    %1031 = vmatpush.bf16.msra.mxu0 0
    %1032 = vmatpush.bf16.msra.mxu0 0
    %1033 = vmatpush.bf16.msra.mxu0 0
    %1034 = vmatpush.bf16.msra.mxu0 0
    %1035 = vmatpush.bf16.msra.mxu0 %v764
    %1036 = vmatpush.bf16.msra.mxu0 %v763
    %1037 = vmatmul.bf16.gmra.mxu0 %v1027
    %v1038 = vpop.f32.mrf.mxu0
    %v1039 = vadd.f32 0.0, %v1038
    %v1040 = vpop.f32.mrf.mxu0
    %1041 = vdwg.mxu0
    %v1042 = vadd.f32 %v1021, %v1039
    %v1043 = vxor.u32 %v1042, 2147483648
    %v1044 = vmul.f32 %v1043, 1.442695
    %v1045 = vpow.pop %v1044
    %v1046 = vadd.f32 %v1045, 1.0
    %v1047 = vrcp.pop %v1046
    %v1048 = vmul.f32 %v1046, %v1047
    %v1049 = vsub.f32 1.0, %v1048
    %v1050 = vmul.f32 %v1047, %v1049
    %v1051 = vadd.f32 %v1047, %v1050
    %vm1052 = vweird.f32 %v1046
    %vm1053 = vweird.f32 %v1047
    %vm1054 = vmor %vm1052, %vm1053
    %v1055 = vsel %vm1054, %v1047, %v1051
    %v1056 = vand.u32 2147483647, %v1046
    %vm1057 = vcmp.eq.f32.partialorder %v1056, 8.507059e+37
    %v1058 = vand.u32 %v1046, 2147483648
    %v1059 = vor.u32 1.1754944e-38, %v1058
    %v1060 = vsel %vm1057, %v1059, %v1055
    %v1061 = vmul.f32 1.0, %v1060
    %v1062 = vtanh.pop %v1042
    %v1063 = vmul.f32 %v1061, %v1008
    %1065 = vrot.lane.b32.xlu0 %v1062, 32
    %v1066 = vpop.permute.xlu0 %1065
    %v1068 = vmul.f32 %v1061, %v1066
    %1070 = vrot.lane.b32.xlu0 %v1068, 32
    %v1071 = vpop.permute.xlu0 %1070
    %v1073 = vadd.f32 %v1063, %v1071
    %v1074 = vtanh.pop %v1073
    %1076 = vrot.lane.b32.xlu0 %v1074, 32
    %v1077 = vpop.permute.xlu0 %1076
    %v1079 = vmul.f32 %v1061, %v1077
    %1081 = vrot.lane.b32.xlu0 %v1079, 64
    %v1082 = vpop.permute.xlu0 %1081
    %s1084 = scalar_lea.vmem [#allocation3], 32
    %1085 = vst.msk [vmem:[%s1084] sm:$0xff] %vm141, %v1082
    %v1086 = vld [vmem:[%s465] sm:$0xff]
    %v1087 = vpack.c.bf16 %v1079, %v1079
    %1089 = vrot.lane.b32.xlu0 %v1087, 64
    %v1090 = vpop.permute.xlu0 %1089
    %v1092 = vsel %vm141, %v1090, 0
    %1094 = vmatpush.bf16.msra.mxu0 0
    %1095 = vmatpush.bf16.msra.mxu0 0
    %1096 = vmatpush.bf16.msra.mxu0 0
    %1097 = vmatpush.bf16.msra.mxu0 0
    %1098 = vmatpush.bf16.msra.mxu0 0
    %1099 = vmatpush.bf16.msra.mxu0 0
    %1100 = vmatpush.bf16.msra.mxu0 %v764
    %1101 = vmatpush.bf16.msra.mxu0 %v763
    %1102 = vmatmul.bf16.gmra.mxu0 %v1092
    %v1103 = vpop.f32.mrf.mxu0
    %v1104 = vadd.f32 0.0, %v1103
    %v1105 = vpop.f32.mrf.mxu0
    %1106 = vdwg.mxu0
    %v1107 = vadd.f32 %v1086, %v1104
    %v1108 = vxor.u32 %v1107, 2147483648
    %v1109 = vmul.f32 %v1108, 1.442695
    %v1110 = vpow.pop %v1109
    %v1111 = vadd.f32 %v1110, 1.0
    %v1112 = vrcp.pop %v1111
    %v1113 = vmul.f32 %v1111, %v1112
    %v1114 = vsub.f32 1.0, %v1113
    %v1115 = vmul.f32 %v1112, %v1114
    %v1116 = vadd.f32 %v1112, %v1115
    %vm1117 = vweird.f32 %v1111
    %vm1118 = vweird.f32 %v1112
    %vm1119 = vmor %vm1117, %vm1118
    %v1120 = vsel %vm1119, %v1112, %v1116
    %v1121 = vand.u32 2147483647, %v1111
    %vm1122 = vcmp.eq.f32.partialorder %v1121, 8.507059e+37
    %v1123 = vand.u32 %v1111, 2147483648
    %v1124 = vor.u32 1.1754944e-38, %v1123
    %v1125 = vsel %vm1122, %v1124, %v1120
    %v1126 = vmul.f32 1.0, %v1125
    %v1127 = vtanh.pop %v1107
    %v1128 = vmul.f32 %v1126, %v1073
    %1130 = vrot.lane.b32.xlu0 %v1127, 32
    %v1131 = vpop.permute.xlu0 %1130
    %v1133 = vmul.f32 %v1126, %v1131
    %1135 = vrot.lane.b32.xlu0 %v1133, 32
    %v1136 = vpop.permute.xlu0 %1135
    %v1138 = vadd.f32 %v1128, %v1136
    %v1139 = vtanh.pop %v1138
    %1141 = vrot.lane.b32.xlu0 %v1139, 32
    %v1142 = vpop.permute.xlu0 %1141
    %v1144 = vmul.f32 %v1126, %v1142
    %1146 = vrot.lane.b32.xlu0 %v1144, 64
    %v1147 = vpop.permute.xlu0 %1146
    %s1149 = scalar_lea.vmem [#allocation3], 40
    %1150 = vst.msk [vmem:[%s1149] sm:$0xff] %vm141, %v1147
    %v1151 = vld [vmem:[%s531] sm:$0xff]
    %v1152 = vpack.c.bf16 %v1144, %v1144
    %1154 = vrot.lane.b32.xlu0 %v1152, 64
    %v1155 = vpop.permute.xlu0 %1154
    %v1157 = vsel %vm141, %v1155, 0
    %1159 = vmatpush.bf16.msra.mxu0 0
    %1160 = vmatpush.bf16.msra.mxu0 0
    %1161 = vmatpush.bf16.msra.mxu0 0
    %1162 = vmatpush.bf16.msra.mxu0 0
    %1163 = vmatpush.bf16.msra.mxu0 0
    %1164 = vmatpush.bf16.msra.mxu0 0
    %1165 = vmatpush.bf16.msra.mxu0 %v764
    %1166 = vmatpush.bf16.msra.mxu0 %v763
    %1167 = vmatmul.bf16.gmra.mxu0 %v1157
    %v1168 = vpop.f32.mrf.mxu0
    %v1169 = vadd.f32 0.0, %v1168
    %v1170 = vpop.f32.mrf.mxu0
    %1171 = vdwg.mxu0
    %v1172 = vadd.f32 %v1151, %v1169
    %v1173 = vxor.u32 %v1172, 2147483648
    %v1174 = vmul.f32 %v1173, 1.442695
    %v1175 = vpow.pop %v1174
    %v1176 = vadd.f32 %v1175, 1.0
    %v1177 = vrcp.pop %v1176
    %v1178 = vmul.f32 %v1176, %v1177
    %v1179 = vsub.f32 1.0, %v1178
    %v1180 = vmul.f32 %v1177, %v1179
    %v1181 = vadd.f32 %v1177, %v1180
    %vm1182 = vweird.f32 %v1176
    %vm1183 = vweird.f32 %v1177
    %vm1184 = vmor %vm1182, %vm1183
    %v1185 = vsel %vm1184, %v1177, %v1181
    %v1186 = vand.u32 2147483647, %v1176
    %vm1187 = vcmp.eq.f32.partialorder %v1186, 8.507059e+37
    %v1188 = vand.u32 %v1176, 2147483648
    %v1189 = vor.u32 1.1754944e-38, %v1188
    %v1190 = vsel %vm1187, %v1189, %v1185
    %v1191 = vmul.f32 1.0, %v1190
    %v1192 = vtanh.pop %v1172
    %v1193 = vmul.f32 %v1191, %v1138
    %1195 = vrot.lane.b32.xlu0 %v1192, 32
    %v1196 = vpop.permute.xlu0 %1195
    %v1198 = vmul.f32 %v1191, %v1196
    %1200 = vrot.lane.b32.xlu0 %v1198, 32
    %v1201 = vpop.permute.xlu0 %1200
    %v1203 = vadd.f32 %v1193, %v1201
    %v1204 = vtanh.pop %v1203
    %1206 = vrot.lane.b32.xlu0 %v1204, 32
    %v1207 = vpop.permute.xlu0 %1206
    %v1209 = vmul.f32 %v1191, %v1207
    %1211 = vrot.lane.b32.xlu0 %v1209, 64
    %v1212 = vpop.permute.xlu0 %1211
    %s1214 = scalar_lea.vmem [#allocation3], 48
    %1215 = vst.msk [vmem:[%s1214] sm:$0xff] %vm141, %v1212
    %v1216 = vld [vmem:[%s597] sm:$0xff]
    %v1217 = vpack.c.bf16 %v1209, %v1209
    %1219 = vrot.lane.b32.xlu0 %v1217, 64
    %v1220 = vpop.permute.xlu0 %1219
    %v1222 = vsel %vm141, %v1220, 0
    %1224 = vmatpush.bf16.msra.mxu0 0
    %1225 = vmatpush.bf16.msra.mxu0 0
    %1226 = vmatpush.bf16.msra.mxu0 0
    %1227 = vmatpush.bf16.msra.mxu0 0
    %1228 = vmatpush.bf16.msra.mxu0 0
    %1229 = vmatpush.bf16.msra.mxu0 0
    %1230 = vmatpush.bf16.msra.mxu0 %v764
    %1231 = vmatpush.bf16.msra.mxu0 %v763
    %1232 = vmatmul.bf16.gmra.mxu0 %v1222
    %v1233 = vpop.f32.mrf.mxu0
    %v1234 = vadd.f32 0.0, %v1233
    %v1235 = vpop.f32.mrf.mxu0
    %1236 = vdwg.mxu0
    %v1237 = vadd.f32 %v1216, %v1234
    %v1238 = vxor.u32 %v1237, 2147483648
    %v1239 = vmul.f32 %v1238, 1.442695
    %v1240 = vpow.pop %v1239
    %v1241 = vadd.f32 %v1240, 1.0
    %v1242 = vrcp.pop %v1241
    %v1243 = vmul.f32 %v1241, %v1242
    %v1244 = vsub.f32 1.0, %v1243
    %v1245 = vmul.f32 %v1242, %v1244
    %v1246 = vadd.f32 %v1242, %v1245
    %vm1247 = vweird.f32 %v1241
    %vm1248 = vweird.f32 %v1242
    %vm1249 = vmor %vm1247, %vm1248
    %v1250 = vsel %vm1249, %v1242, %v1246
    %v1251 = vand.u32 2147483647, %v1241
    %vm1252 = vcmp.eq.f32.partialorder %v1251, 8.507059e+37
    %v1253 = vand.u32 %v1241, 2147483648
    %v1254 = vor.u32 1.1754944e-38, %v1253
    %v1255 = vsel %vm1252, %v1254, %v1250
    %v1256 = vmul.f32 1.0, %v1255
    %v1257 = vtanh.pop %v1237
    %v1258 = vmul.f32 %v1256, %v1203
    %1260 = vrot.lane.b32.xlu0 %v1257, 32
    %v1261 = vpop.permute.xlu0 %1260
    %v1263 = vmul.f32 %v1256, %v1261
    %1265 = vrot.lane.b32.xlu0 %v1263, 32
    %v1266 = vpop.permute.xlu0 %1265
    %v1268 = vadd.f32 %v1258, %v1266
    %v1269 = vtanh.pop %v1268
    %1271 = vrot.lane.b32.xlu0 %v1269, 32
    %v1272 = vpop.permute.xlu0 %1271
    %v1274 = vmul.f32 %v1256, %v1272
    %1276 = vrot.lane.b32.xlu0 %v1274, 64
    %v1277 = vpop.permute.xlu0 %1276
    %s1279 = scalar_lea.vmem [#allocation3], 56
    %1280 = vst.msk [vmem:[%s1279] sm:$0xff] %vm141, %v1277
    %s1281 = scalar_lea.vmem [#allocation5], 16
    %v1282 = vld [vmem:[%s1281] sm:$0xf]
    %v1283 = vld [vmem:[%s1281 + $0x4] sm:$0xf]
    %v1284 = vld [vmem:[%s1281 + $0x8] sm:$0xf]
    %v1285 = vld [vmem:[%s1281 + $0xc] sm:$0xf]
    %s1286 = scalar_lea.vmem [#allocation7], 32
    %v1287 = vld [vmem:[%s1286] sm:$0xf]
    %v1288 = vld [vmem:[%s1286 + $0x4] sm:$0xf]
    %v1289 = vld [vmem:[%s1286 + $0x8] sm:$0xf]
    %v1290 = vld [vmem:[%s1286 + $0xc] sm:$0xf]
    %s1291 = scalar_lea.vmem %s4, 2
    %v1292 = vld [vmem:[%s1291] sm:$0x1]
    %v1293 = vld [vmem:[#allocation3] sm:$0xff]
    %v1294 = vld [vmem:[#allocation3 + $0x8] sm:$0xff]
    %v1295 = vld [vmem:[#allocation3 + $0x10] sm:$0xff]
    %v1296 = vld [vmem:[#allocation3 + $0x18] sm:$0xff]
    %v1297 = vld [vmem:[#allocation3 + $0x20] sm:$0xff]
    %v1298 = vld [vmem:[#allocation3 + $0x28] sm:$0xff]
    %v1299 = vld [vmem:[#allocation3 + $0x30] sm:$0xff]
    %v1300 = vld [vmem:[#allocation3 + $0x38] sm:$0xff]
    %v1301 = vpack.c.bf16 %v1294, %v1293
    %v1302 = vpack.c.bf16 %v1296, %v1295
    %v1303 = vpack.c.bf16 %v1298, %v1297
    %v1304 = vpack.c.bf16 %v1300, %v1299
    %v1306 = vperm.slane %v1292, 0
    %v1312 = vunpack.c.l.b16 %v1282
    %v1313 = vunpack.c.l.b16 %v1283
    %v1314 = vunpack.c.l.b16 %v1284
    %v1315 = vunpack.c.l.b16 %v1285
    %v1316 = vpack.c.b16 %v1313, %v1312
    %v1317 = vpack.c.b16 %v1315, %v1314
    %v1321 = vsel %vm141, %v1301, 0
    %v1324 = vsel %vm141, %v1302, 0
    %v1327 = vsel %vm141, %v1303, 0
    %v1330 = vsel %vm141, %v1304, 0
    %1332 = vmatpush.bf16.msra.mxu0 0
    %1333 = vmatpush.bf16.msra.mxu0 0
    %1334 = vmatpush.bf16.msra.mxu0 0
    %1335 = vmatpush.bf16.msra.mxu0 0
    %1336 = vmatpush.bf16.msra.mxu0 0
    %1337 = vmatpush.bf16.msra.mxu0 0
    %1338 = vmatpush.bf16.msra.mxu0 %v1317
    %1339 = vmatpush.bf16.msra.mxu0 %v1316
    %1340 = vmatmul.bf16.gmra.mxu0 %v1321
    %v1341 = vpop.f32.mrf.mxu0
    %v1342 = vadd.f32 %v1306, %v1341
    %v1343 = vpop.f32.mrf.mxu0
    %v1344 = vadd.f32 %v1306, %v1343
    %1345 = vmatmul.bf16.gmra.mxu0 %v1324
    %v1346 = vpop.f32.mrf.mxu0
    %v1347 = vadd.f32 %v1306, %v1346
    %v1348 = vpop.f32.mrf.mxu0
    %v1349 = vadd.f32 %v1306, %v1348
    %1350 = vmatmul.bf16.gmra.mxu0 %v1327
    %v1351 = vpop.f32.mrf.mxu0
    %v1352 = vadd.f32 %v1306, %v1351
    %v1353 = vpop.f32.mrf.mxu0
    %v1354 = vadd.f32 %v1306, %v1353
    %1355 = vmatmul.bf16.gmra.mxu0 %v1330
    %v1356 = vpop.f32.mrf.mxu0
    %v1357 = vadd.f32 %v1306, %v1356
    %v1358 = vpop.f32.mrf.mxu0
    %v1359 = vadd.f32 %v1306, %v1358
    %1360 = vdwg.mxu0
    %1361 = vst [vmem:[#allocation4] sm:$0xff] %v1342
    %1362 = vst [vmem:[#allocation4 + $0x8] sm:$0xff] %v1344
    %1363 = vst [vmem:[#allocation4 + $0x10] sm:$0xff] %v1347
    %1364 = vst [vmem:[#allocation4 + $0x18] sm:$0xff] %v1349
    %1365 = vst [vmem:[#allocation4 + $0x20] sm:$0xff] %v1352
    %1366 = vst [vmem:[#allocation4 + $0x28] sm:$0xff] %v1354
    %1367 = vst [vmem:[#allocation4 + $0x30] sm:$0xff] %v1357
    %1368 = vst [vmem:[#allocation4 + $0x38] sm:$0xff] %v1359
    %v1369 = vld [vmem:[#allocation4] sm:$0xff]
    %v1370 = vpack.c.bf16 %v1274, %v1274
    %1372 = vrot.lane.b32.xlu0 %v1370, 64
    %v1373 = vpop.permute.xlu0 %1372
    %v1378 = vunpack.c.l.b16 %v1287
    %v1379 = vunpack.c.l.b16 %v1288
    %v1380 = vunpack.c.l.b16 %v1289
    %v1381 = vunpack.c.l.b16 %v1290
    %v1382 = vpack.c.b16 %v1379, %v1378
    %v1383 = vpack.c.b16 %v1381, %v1380
    %v1387 = vsel %vm141, %v1373, 0
    %1389 = vmatpush.bf16.msra.mxu0 0
    %1390 = vmatpush.bf16.msra.mxu0 0
    %1391 = vmatpush.bf16.msra.mxu0 0
    %1392 = vmatpush.bf16.msra.mxu0 0
    %1393 = vmatpush.bf16.msra.mxu0 0
    %1394 = vmatpush.bf16.msra.mxu0 0
    %1395 = vmatpush.bf16.msra.mxu0 %v1383
    %1396 = vmatpush.bf16.msra.mxu0 %v1382
    %1397 = vmatmul.bf16.gmra.mxu0 %v1387
    %v1398 = vpop.f32.mrf.mxu0
    %v1399 = vadd.f32 0.0, %v1398
    %v1400 = vpop.f32.mrf.mxu0
    %1401 = vdwg.mxu0
    %v1402 = vadd.f32 %v1369, %v1399
    %v1403 = vxor.u32 %v1402, 2147483648
    %v1404 = vmul.f32 %v1403, 1.442695
    %v1405 = vpow.pop %v1404
    %v1406 = vadd.f32 %v1405, 1.0
    %v1407 = vrcp.pop %v1406
    %v1408 = vmul.f32 %v1406, %v1407
    %v1409 = vsub.f32 1.0, %v1408
    %v1410 = vmul.f32 %v1407, %v1409
    %v1411 = vadd.f32 %v1407, %v1410
    %vm1412 = vweird.f32 %v1406
    %vm1413 = vweird.f32 %v1407
    %vm1414 = vmor %vm1412, %vm1413
    %v1415 = vsel %vm1414, %v1407, %v1411
    %v1416 = vand.u32 2147483647, %v1406
    %vm1417 = vcmp.eq.f32.partialorder %v1416, 8.507059e+37
    %v1418 = vand.u32 %v1406, 2147483648
    %v1419 = vor.u32 1.1754944e-38, %v1418
    %v1420 = vsel %vm1417, %v1419, %v1415
    %v1421 = vmul.f32 1.0, %v1420
    %v1422 = vtanh.pop %v1402
    %v1423 = vmul.f32 %v1421, %v1268
    %1425 = vrot.lane.b32.xlu0 %v1422, 32
    %v1426 = vpop.permute.xlu0 %1425
    %v1428 = vmul.f32 %v1421, %v1426
    %1430 = vrot.lane.b32.xlu0 %v1428, 32
    %v1431 = vpop.permute.xlu0 %1430
    %v1433 = vadd.f32 %v1423, %v1431
    %v1434 = vtanh.pop %v1433
    %1436 = vrot.lane.b32.xlu0 %v1434, 32
    %v1437 = vpop.permute.xlu0 %1436
    %v1439 = vmul.f32 %v1421, %v1437
    %v1440 = vld [vmem:[#allocation2] sm:$0xff]
    %1442 = vrot.lane.b32.xlu0 %v1439, 64
    %v1443 = vpop.permute.xlu0 %1442
    %v1445 = vadd.f32 %v1440, %v1443
    %1446 = vst.msk [vmem:[#allocation2] sm:$0xff] %vm141, %v1445
    %v1447 = vld [vmem:[%s201] sm:$0xff]
    %v1448 = vpack.c.bf16 %v1439, %v1439
    %1450 = vrot.lane.b32.xlu0 %v1448, 64
    %v1451 = vpop.permute.xlu0 %1450
    %v1453 = vsel %vm141, %v1451, 0
    %1455 = vmatpush.bf16.msra.mxu0 0
    %1456 = vmatpush.bf16.msra.mxu0 0
    %1457 = vmatpush.bf16.msra.mxu0 0
    %1458 = vmatpush.bf16.msra.mxu0 0
    %1459 = vmatpush.bf16.msra.mxu0 0
    %1460 = vmatpush.bf16.msra.mxu0 0
    %1461 = vmatpush.bf16.msra.mxu0 %v1383
    %1462 = vmatpush.bf16.msra.mxu0 %v1382
    %1463 = vmatmul.bf16.gmra.mxu0 %v1453
    %v1464 = vpop.f32.mrf.mxu0
    %v1465 = vadd.f32 0.0, %v1464
    %v1466 = vpop.f32.mrf.mxu0
    %1467 = vdwg.mxu0
    %v1468 = vadd.f32 %v1447, %v1465
    %v1469 = vxor.u32 %v1468, 2147483648
    %v1470 = vmul.f32 %v1469, 1.442695
    %v1471 = vpow.pop %v1470
    %v1472 = vadd.f32 %v1471, 1.0
    %v1473 = vrcp.pop %v1472
    %v1474 = vmul.f32 %v1472, %v1473
    %v1475 = vsub.f32 1.0, %v1474
    %v1476 = vmul.f32 %v1473, %v1475
    %v1477 = vadd.f32 %v1473, %v1476
    %vm1478 = vweird.f32 %v1472
    %vm1479 = vweird.f32 %v1473
    %vm1480 = vmor %vm1478, %vm1479
    %v1481 = vsel %vm1480, %v1473, %v1477
    %v1482 = vand.u32 2147483647, %v1472
    %vm1483 = vcmp.eq.f32.partialorder %v1482, 8.507059e+37
    %v1484 = vand.u32 %v1472, 2147483648
    %v1485 = vor.u32 1.1754944e-38, %v1484
    %v1486 = vsel %vm1483, %v1485, %v1481
    %v1487 = vmul.f32 1.0, %v1486
    %v1488 = vtanh.pop %v1468
    %v1489 = vmul.f32 %v1487, %v1433
    %1491 = vrot.lane.b32.xlu0 %v1488, 32
    %v1492 = vpop.permute.xlu0 %1491
    %v1494 = vmul.f32 %v1487, %v1492
    %1496 = vrot.lane.b32.xlu0 %v1494, 32
    %v1497 = vpop.permute.xlu0 %1496
    %v1499 = vadd.f32 %v1489, %v1497
    %v1500 = vtanh.pop %v1499
    %1502 = vrot.lane.b32.xlu0 %v1500, 32
    %v1503 = vpop.permute.xlu0 %1502
    %v1505 = vmul.f32 %v1487, %v1503
    %v1506 = vld [vmem:[%s265] sm:$0xff]
    %1508 = vrot.lane.b32.xlu0 %v1505, 64
    %v1509 = vpop.permute.xlu0 %1508
    %v1511 = vadd.f32 %v1506, %v1509
    %1512 = vst.msk [vmem:[%s265] sm:$0xff] %vm141, %v1511
    %v1513 = vld [vmem:[%s267] sm:$0xff]
    %v1514 = vpack.c.bf16 %v1505, %v1505
    %1516 = vrot.lane.b32.xlu0 %v1514, 64
    %v1517 = vpop.permute.xlu0 %1516
    %v1519 = vsel %vm141, %v1517, 0
    %1521 = vmatpush.bf16.msra.mxu0 0
    %1522 = vmatpush.bf16.msra.mxu0 0
    %1523 = vmatpush.bf16.msra.mxu0 0
    %1524 = vmatpush.bf16.msra.mxu0 0
    %1525 = vmatpush.bf16.msra.mxu0 0
    %1526 = vmatpush.bf16.msra.mxu0 0
    %1527 = vmatpush.bf16.msra.mxu0 %v1383
    %1528 = vmatpush.bf16.msra.mxu0 %v1382
    %1529 = vmatmul.bf16.gmra.mxu0 %v1519
    %v1530 = vpop.f32.mrf.mxu0
    %v1531 = vadd.f32 0.0, %v1530
    %v1532 = vpop.f32.mrf.mxu0
    %1533 = vdwg.mxu0
    %v1534 = vadd.f32 %v1513, %v1531
    %v1535 = vxor.u32 %v1534, 2147483648
    %v1536 = vmul.f32 %v1535, 1.442695
    %v1537 = vpow.pop %v1536
    %v1538 = vadd.f32 %v1537, 1.0
    %v1539 = vrcp.pop %v1538
    %v1540 = vmul.f32 %v1538, %v1539
    %v1541 = vsub.f32 1.0, %v1540
    %v1542 = vmul.f32 %v1539, %v1541
    %v1543 = vadd.f32 %v1539, %v1542
    %vm1544 = vweird.f32 %v1538
    %vm1545 = vweird.f32 %v1539
    %vm1546 = vmor %vm1544, %vm1545
    %v1547 = vsel %vm1546, %v1539, %v1543
    %v1548 = vand.u32 2147483647, %v1538
    %vm1549 = vcmp.eq.f32.partialorder %v1548, 8.507059e+37
    %v1550 = vand.u32 %v1538, 2147483648
    %v1551 = vor.u32 1.1754944e-38, %v1550
    %v1552 = vsel %vm1549, %v1551, %v1547
    %v1553 = vmul.f32 1.0, %v1552
    %v1554 = vtanh.pop %v1534
    %v1555 = vmul.f32 %v1553, %v1499
    %1557 = vrot.lane.b32.xlu0 %v1554, 32
    %v1558 = vpop.permute.xlu0 %1557
    %v1560 = vmul.f32 %v1553, %v1558
    %1562 = vrot.lane.b32.xlu0 %v1560, 32
    %v1563 = vpop.permute.xlu0 %1562
    %v1565 = vadd.f32 %v1555, %v1563
    %v1566 = vtanh.pop %v1565
    %1568 = vrot.lane.b32.xlu0 %v1566, 32
    %v1569 = vpop.permute.xlu0 %1568
    %v1571 = vmul.f32 %v1553, %v1569
    %v1572 = vld [vmem:[%s331] sm:$0xff]
    %1574 = vrot.lane.b32.xlu0 %v1571, 64
    %v1575 = vpop.permute.xlu0 %1574
    %v1577 = vadd.f32 %v1572, %v1575
    %1578 = vst.msk [vmem:[%s331] sm:$0xff] %vm141, %v1577
    %v1579 = vld [vmem:[%s333] sm:$0xff]
    %v1580 = vpack.c.bf16 %v1571, %v1571
    %1582 = vrot.lane.b32.xlu0 %v1580, 64
    %v1583 = vpop.permute.xlu0 %1582
    %v1585 = vsel %vm141, %v1583, 0
    %1587 = vmatpush.bf16.msra.mxu0 0
    %1588 = vmatpush.bf16.msra.mxu0 0
    %1589 = vmatpush.bf16.msra.mxu0 0
    %1590 = vmatpush.bf16.msra.mxu0 0
    %1591 = vmatpush.bf16.msra.mxu0 0
    %1592 = vmatpush.bf16.msra.mxu0 0
    %1593 = vmatpush.bf16.msra.mxu0 %v1383
    %1594 = vmatpush.bf16.msra.mxu0 %v1382
    %1595 = vmatmul.bf16.gmra.mxu0 %v1585
    %v1596 = vpop.f32.mrf.mxu0
    %v1597 = vadd.f32 0.0, %v1596
    %v1598 = vpop.f32.mrf.mxu0
    %1599 = vdwg.mxu0
    %v1600 = vadd.f32 %v1579, %v1597
    %v1601 = vxor.u32 %v1600, 2147483648
    %v1602 = vmul.f32 %v1601, 1.442695
    %v1603 = vpow.pop %v1602
    %v1604 = vadd.f32 %v1603, 1.0
    %v1605 = vrcp.pop %v1604
    %v1606 = vmul.f32 %v1604, %v1605
    %v1607 = vsub.f32 1.0, %v1606
    %v1608 = vmul.f32 %v1605, %v1607
    %v1609 = vadd.f32 %v1605, %v1608
    %vm1610 = vweird.f32 %v1604
    %vm1611 = vweird.f32 %v1605
    %vm1612 = vmor %vm1610, %vm1611
    %v1613 = vsel %vm1612, %v1605, %v1609
    %v1614 = vand.u32 2147483647, %v1604
    %vm1615 = vcmp.eq.f32.partialorder %v1614, 8.507059e+37
    %v1616 = vand.u32 %v1604, 2147483648
    %v1617 = vor.u32 1.1754944e-38, %v1616
    %v1618 = vsel %vm1615, %v1617, %v1613
    %v1619 = vmul.f32 1.0, %v1618
    %v1620 = vtanh.pop %v1600
    %v1621 = vmul.f32 %v1619, %v1565
    %1623 = vrot.lane.b32.xlu0 %v1620, 32
    %v1624 = vpop.permute.xlu0 %1623
    %v1626 = vmul.f32 %v1619, %v1624
    %1628 = vrot.lane.b32.xlu0 %v1626, 32
    %v1629 = vpop.permute.xlu0 %1628
    %v1631 = vadd.f32 %v1621, %v1629
    %v1632 = vtanh.pop %v1631
    %1634 = vrot.lane.b32.xlu0 %v1632, 32
    %v1635 = vpop.permute.xlu0 %1634
    %v1637 = vmul.f32 %v1619, %v1635
    %v1638 = vld [vmem:[%s397] sm:$0xff]
    %1640 = vrot.lane.b32.xlu0 %v1637, 64
    %v1641 = vpop.permute.xlu0 %1640
    %v1643 = vadd.f32 %v1638, %v1641
    %1644 = vst.msk [vmem:[%s397] sm:$0xff] %vm141, %v1643
    %v1645 = vld [vmem:[%s399] sm:$0xff]
    %v1646 = vpack.c.bf16 %v1637, %v1637
    %1648 = vrot.lane.b32.xlu0 %v1646, 64
    %v1649 = vpop.permute.xlu0 %1648
    %v1651 = vsel %vm141, %v1649, 0
    %1653 = vmatpush.bf16.msra.mxu0 0
    %1654 = vmatpush.bf16.msra.mxu0 0
    %1655 = vmatpush.bf16.msra.mxu0 0
    %1656 = vmatpush.bf16.msra.mxu0 0
    %1657 = vmatpush.bf16.msra.mxu0 0
    %1658 = vmatpush.bf16.msra.mxu0 0
    %1659 = vmatpush.bf16.msra.mxu0 %v1383
    %1660 = vmatpush.bf16.msra.mxu0 %v1382
    %1661 = vmatmul.bf16.gmra.mxu0 %v1651
    %v1662 = vpop.f32.mrf.mxu0
    %v1663 = vadd.f32 0.0, %v1662
    %v1664 = vpop.f32.mrf.mxu0
    %1665 = vdwg.mxu0
    %v1666 = vadd.f32 %v1645, %v1663
    %v1667 = vxor.u32 %v1666, 2147483648
    %v1668 = vmul.f32 %v1667, 1.442695
    %v1669 = vpow.pop %v1668
    %v1670 = vadd.f32 %v1669, 1.0
    %v1671 = vrcp.pop %v1670
    %v1672 = vmul.f32 %v1670, %v1671
    %v1673 = vsub.f32 1.0, %v1672
    %v1674 = vmul.f32 %v1671, %v1673
    %v1675 = vadd.f32 %v1671, %v1674
    %vm1676 = vweird.f32 %v1670
    %vm1677 = vweird.f32 %v1671
    %vm1678 = vmor %vm1676, %vm1677
    %v1679 = vsel %vm1678, %v1671, %v1675
    %v1680 = vand.u32 2147483647, %v1670
    %vm1681 = vcmp.eq.f32.partialorder %v1680, 8.507059e+37
    %v1682 = vand.u32 %v1670, 2147483648
    %v1683 = vor.u32 1.1754944e-38, %v1682
    %v1684 = vsel %vm1681, %v1683, %v1679
    %v1685 = vmul.f32 1.0, %v1684
    %v1686 = vtanh.pop %v1666
    %v1687 = vmul.f32 %v1685, %v1631
    %1689 = vrot.lane.b32.xlu0 %v1686, 32
    %v1690 = vpop.permute.xlu0 %1689
    %v1692 = vmul.f32 %v1685, %v1690
    %1694 = vrot.lane.b32.xlu0 %v1692, 32
    %v1695 = vpop.permute.xlu0 %1694
    %v1697 = vadd.f32 %v1687, %v1695
    %v1698 = vtanh.pop %v1697
    %1700 = vrot.lane.b32.xlu0 %v1698, 32
    %v1701 = vpop.permute.xlu0 %1700
    %v1703 = vmul.f32 %v1685, %v1701
    %v1704 = vld [vmem:[%s463] sm:$0xff]
    %1706 = vrot.lane.b32.xlu0 %v1703, 64
    %v1707 = vpop.permute.xlu0 %1706
    %v1709 = vadd.f32 %v1704, %v1707
    %1710 = vst.msk [vmem:[%s463] sm:$0xff] %vm141, %v1709
    %v1711 = vld [vmem:[%s465] sm:$0xff]
    %v1712 = vpack.c.bf16 %v1703, %v1703
    %1714 = vrot.lane.b32.xlu0 %v1712, 64
    %v1715 = vpop.permute.xlu0 %1714
    %v1717 = vsel %vm141, %v1715, 0
    %1719 = vmatpush.bf16.msra.mxu0 0
    %1720 = vmatpush.bf16.msra.mxu0 0
    %1721 = vmatpush.bf16.msra.mxu0 0
    %1722 = vmatpush.bf16.msra.mxu0 0
    %1723 = vmatpush.bf16.msra.mxu0 0
    %1724 = vmatpush.bf16.msra.mxu0 0
    %1725 = vmatpush.bf16.msra.mxu0 %v1383
    %1726 = vmatpush.bf16.msra.mxu0 %v1382
    %1727 = vmatmul.bf16.gmra.mxu0 %v1717
    %v1728 = vpop.f32.mrf.mxu0
    %v1729 = vadd.f32 0.0, %v1728
    %v1730 = vpop.f32.mrf.mxu0
    %1731 = vdwg.mxu0
    %v1732 = vadd.f32 %v1711, %v1729
    %v1733 = vxor.u32 %v1732, 2147483648
    %v1734 = vmul.f32 %v1733, 1.442695
    %v1735 = vpow.pop %v1734
    %v1736 = vadd.f32 %v1735, 1.0
    %v1737 = vrcp.pop %v1736
    %v1738 = vmul.f32 %v1736, %v1737
    %v1739 = vsub.f32 1.0, %v1738
    %v1740 = vmul.f32 %v1737, %v1739
    %v1741 = vadd.f32 %v1737, %v1740
    %vm1742 = vweird.f32 %v1736
    %vm1743 = vweird.f32 %v1737
    %vm1744 = vmor %vm1742, %vm1743
    %v1745 = vsel %vm1744, %v1737, %v1741
    %v1746 = vand.u32 2147483647, %v1736
    %vm1747 = vcmp.eq.f32.partialorder %v1746, 8.507059e+37
    %v1748 = vand.u32 %v1736, 2147483648
    %v1749 = vor.u32 1.1754944e-38, %v1748
    %v1750 = vsel %vm1747, %v1749, %v1745
    %v1751 = vmul.f32 1.0, %v1750
    %v1752 = vtanh.pop %v1732
    %v1753 = vmul.f32 %v1751, %v1697
    %1755 = vrot.lane.b32.xlu0 %v1752, 32
    %v1756 = vpop.permute.xlu0 %1755
    %v1758 = vmul.f32 %v1751, %v1756
    %1760 = vrot.lane.b32.xlu0 %v1758, 32
    %v1761 = vpop.permute.xlu0 %1760
    %v1763 = vadd.f32 %v1753, %v1761
    %v1764 = vtanh.pop %v1763
    %1766 = vrot.lane.b32.xlu0 %v1764, 32
    %v1767 = vpop.permute.xlu0 %1766
    %v1769 = vmul.f32 %v1751, %v1767
    %v1770 = vld [vmem:[%s529] sm:$0xff]
    %1772 = vrot.lane.b32.xlu0 %v1769, 64
    %v1773 = vpop.permute.xlu0 %1772
    %v1775 = vadd.f32 %v1770, %v1773
    %1776 = vst.msk [vmem:[%s529] sm:$0xff] %vm141, %v1775
    %v1777 = vld [vmem:[%s531] sm:$0xff]
    %v1778 = vpack.c.bf16 %v1769, %v1769
    %1780 = vrot.lane.b32.xlu0 %v1778, 64
    %v1781 = vpop.permute.xlu0 %1780
    %v1783 = vsel %vm141, %v1781, 0
    %1785 = vmatpush.bf16.msra.mxu0 0
    %1786 = vmatpush.bf16.msra.mxu0 0
    %1787 = vmatpush.bf16.msra.mxu0 0
    %1788 = vmatpush.bf16.msra.mxu0 0
    %1789 = vmatpush.bf16.msra.mxu0 0
    %1790 = vmatpush.bf16.msra.mxu0 0
    %1791 = vmatpush.bf16.msra.mxu0 %v1383
    %1792 = vmatpush.bf16.msra.mxu0 %v1382
    %1793 = vmatmul.bf16.gmra.mxu0 %v1783
    %v1794 = vpop.f32.mrf.mxu0
    %v1795 = vadd.f32 0.0, %v1794
    %v1796 = vpop.f32.mrf.mxu0
    %1797 = vdwg.mxu0
    %v1798 = vadd.f32 %v1777, %v1795
    %v1799 = vxor.u32 %v1798, 2147483648
    %v1800 = vmul.f32 %v1799, 1.442695
    %v1801 = vpow.pop %v1800
    %v1802 = vadd.f32 %v1801, 1.0
    %v1803 = vrcp.pop %v1802
    %v1804 = vmul.f32 %v1802, %v1803
    %v1805 = vsub.f32 1.0, %v1804
    %v1806 = vmul.f32 %v1803, %v1805
    %v1807 = vadd.f32 %v1803, %v1806
    %vm1808 = vweird.f32 %v1802
    %vm1809 = vweird.f32 %v1803
    %vm1810 = vmor %vm1808, %vm1809
    %v1811 = vsel %vm1810, %v1803, %v1807
    %v1812 = vand.u32 2147483647, %v1802
    %vm1813 = vcmp.eq.f32.partialorder %v1812, 8.507059e+37
    %v1814 = vand.u32 %v1802, 2147483648
    %v1815 = vor.u32 1.1754944e-38, %v1814
    %v1816 = vsel %vm1813, %v1815, %v1811
    %v1817 = vmul.f32 1.0, %v1816
    %v1818 = vtanh.pop %v1798
    %v1819 = vmul.f32 %v1817, %v1763
    %1821 = vrot.lane.b32.xlu0 %v1818, 32
    %v1822 = vpop.permute.xlu0 %1821
    %v1824 = vmul.f32 %v1817, %v1822
    %1826 = vrot.lane.b32.xlu0 %v1824, 32
    %v1827 = vpop.permute.xlu0 %1826
    %v1829 = vadd.f32 %v1819, %v1827
    %v1830 = vtanh.pop %v1829
    %1832 = vrot.lane.b32.xlu0 %v1830, 32
    %v1833 = vpop.permute.xlu0 %1832
    %v1835 = vmul.f32 %v1817, %v1833
    %v1836 = vld [vmem:[%s595] sm:$0xff]
    %1838 = vrot.lane.b32.xlu0 %v1835, 64
    %v1839 = vpop.permute.xlu0 %1838
    %v1841 = vadd.f32 %v1836, %v1839
    %1842 = vst.msk [vmem:[%s595] sm:$0xff] %vm141, %v1841
    %v1843 = vld [vmem:[%s597] sm:$0xff]
    %v1844 = vpack.c.bf16 %v1835, %v1835
    %1846 = vrot.lane.b32.xlu0 %v1844, 64
    %v1847 = vpop.permute.xlu0 %1846
    %v1849 = vsel %vm141, %v1847, 0
    %1851 = vmatpush.bf16.msra.mxu0 0
    %1852 = vmatpush.bf16.msra.mxu0 0
    %1853 = vmatpush.bf16.msra.mxu0 0
    %1854 = vmatpush.bf16.msra.mxu0 0
    %1855 = vmatpush.bf16.msra.mxu0 0
    %1856 = vmatpush.bf16.msra.mxu0 0
    %1857 = vmatpush.bf16.msra.mxu0 %v1383
    %1858 = vmatpush.bf16.msra.mxu0 %v1382
    %1859 = vmatmul.bf16.gmra.mxu0 %v1849
    %v1860 = vpop.f32.mrf.mxu0
    %v1861 = vadd.f32 0.0, %v1860
    %v1862 = vpop.f32.mrf.mxu0
    %1863 = vdwg.mxu0
    %v1864 = vadd.f32 %v1843, %v1861
    %v1865 = vxor.u32 %v1864, 2147483648
    %v1866 = vmul.f32 %v1865, 1.442695
    %v1867 = vpow.pop %v1866
    %v1868 = vadd.f32 %v1867, 1.0
    %v1869 = vrcp.pop %v1868
    %v1870 = vmul.f32 %v1868, %v1869
    %v1871 = vsub.f32 1.0, %v1870
    %v1872 = vmul.f32 %v1869, %v1871
    %v1873 = vadd.f32 %v1869, %v1872
    %vm1874 = vweird.f32 %v1868
    %vm1875 = vweird.f32 %v1869
    %vm1876 = vmor %vm1874, %vm1875
    %v1877 = vsel %vm1876, %v1869, %v1873
    %v1878 = vand.u32 2147483647, %v1868
    %vm1879 = vcmp.eq.f32.partialorder %v1878, 8.507059e+37
    %v1880 = vand.u32 %v1868, 2147483648
    %v1881 = vor.u32 1.1754944e-38, %v1880
    %v1882 = vsel %vm1879, %v1881, %v1877
    %v1883 = vmul.f32 1.0, %v1882
    %v1884 = vtanh.pop %v1864
    %v1885 = vmul.f32 %v1883, %v1829
    %1887 = vrot.lane.b32.xlu0 %v1884, 32
    %v1888 = vpop.permute.xlu0 %1887
    %v1890 = vmul.f32 %v1883, %v1888
    %1892 = vrot.lane.b32.xlu0 %v1890, 32
    %v1893 = vpop.permute.xlu0 %1892
    %v1895 = vadd.f32 %v1885, %v1893
    %v1896 = vtanh.pop %v1895
    %1898 = vrot.lane.b32.xlu0 %v1896, 32
    %v1899 = vpop.permute.xlu0 %1898
    %v1901 = vmul.f32 %v1883, %v1899
    %v1902 = vld [vmem:[%s661] sm:$0xff]
    %1904 = vrot.lane.b32.xlu0 %v1901, 64
    %v1905 = vpop.permute.xlu0 %1904
    %v1907 = vadd.f32 %v1902, %v1905
    %1908 = vst.msk [vmem:[%s661] sm:$0xff] %vm141, %v1907
    %s1909 = scalar_lea.vmem [#allocation5], 32
    %v1910 = vld [vmem:[%s1909] sm:$0xf]
    %v1911 = vld [vmem:[%s1909 + $0x4] sm:$0xf]
    %v1912 = vld [vmem:[%s1909 + $0x8] sm:$0xf]
    %v1913 = vld [vmem:[%s1909 + $0xc] sm:$0xf]
    %s1914 = scalar_lea.vmem [#allocation7], 48
    %v1915 = vld [vmem:[%s1914] sm:$0xf]
    %v1916 = vld [vmem:[%s1914 + $0x4] sm:$0xf]
    %v1917 = vld [vmem:[%s1914 + $0x8] sm:$0xf]
    %v1918 = vld [vmem:[%s1914 + $0xc] sm:$0xf]
    %s1919 = scalar_lea.vmem %s4, 3
    %v1920 = vld [vmem:[%s1919] sm:$0x1]
    %v1921 = vld [vmem:[#allocation2] sm:$0xff]
    %v1922 = vld [vmem:[#allocation2 + $0x8] sm:$0xff]
    %v1923 = vld [vmem:[#allocation2 + $0x10] sm:$0xff]
    %v1924 = vld [vmem:[#allocation2 + $0x18] sm:$0xff]
    %v1925 = vld [vmem:[#allocation2 + $0x20] sm:$0xff]
    %v1926 = vld [vmem:[#allocation2 + $0x28] sm:$0xff]
    %v1927 = vld [vmem:[#allocation2 + $0x30] sm:$0xff]
    %v1928 = vld [vmem:[#allocation2 + $0x38] sm:$0xff]
    %v1929 = vpack.c.bf16 %v1922, %v1921
    %v1930 = vpack.c.bf16 %v1924, %v1923
    %v1931 = vpack.c.bf16 %v1926, %v1925
    %v1932 = vpack.c.bf16 %v1928, %v1927
    %v1934 = vperm.slane %v1920, 0
    %v1940 = vunpack.c.l.b16 %v1910
    %v1941 = vunpack.c.l.b16 %v1911
    %v1942 = vunpack.c.l.b16 %v1912
    %v1943 = vunpack.c.l.b16 %v1913
    %v1944 = vpack.c.b16 %v1941, %v1940
    %v1945 = vpack.c.b16 %v1943, %v1942
    %v1949 = vsel %vm141, %v1929, 0
    %v1952 = vsel %vm141, %v1930, 0
    %v1955 = vsel %vm141, %v1931, 0
    %v1958 = vsel %vm141, %v1932, 0
    %1960 = vmatpush.bf16.msra.mxu0 0
    %1961 = vmatpush.bf16.msra.mxu0 0
    %1962 = vmatpush.bf16.msra.mxu0 0
    %1963 = vmatpush.bf16.msra.mxu0 0
    %1964 = vmatpush.bf16.msra.mxu0 0
    %1965 = vmatpush.bf16.msra.mxu0 0
    %1966 = vmatpush.bf16.msra.mxu0 %v1945
    %1967 = vmatpush.bf16.msra.mxu0 %v1944
    %1968 = vmatmul.bf16.gmra.mxu0 %v1949
    %v1969 = vpop.f32.mrf.mxu0
    %v1970 = vadd.f32 %v1934, %v1969
    %v1971 = vpop.f32.mrf.mxu0
    %v1972 = vadd.f32 %v1934, %v1971
    %1973 = vmatmul.bf16.gmra.mxu0 %v1952
    %v1974 = vpop.f32.mrf.mxu0
    %v1975 = vadd.f32 %v1934, %v1974
    %v1976 = vpop.f32.mrf.mxu0
    %v1977 = vadd.f32 %v1934, %v1976
    %1978 = vmatmul.bf16.gmra.mxu0 %v1955
    %v1979 = vpop.f32.mrf.mxu0
    %v1980 = vadd.f32 %v1934, %v1979
    %v1981 = vpop.f32.mrf.mxu0
    %v1982 = vadd.f32 %v1934, %v1981
    %1983 = vmatmul.bf16.gmra.mxu0 %v1958
    %v1984 = vpop.f32.mrf.mxu0
    %v1985 = vadd.f32 %v1934, %v1984
    %v1986 = vpop.f32.mrf.mxu0
    %v1987 = vadd.f32 %v1934, %v1986
    %1988 = vdwg.mxu0
    %1989 = vst [vmem:[#allocation4] sm:$0xff] %v1970
    %1990 = vst [vmem:[#allocation4 + $0x8] sm:$0xff] %v1972
    %1991 = vst [vmem:[#allocation4 + $0x10] sm:$0xff] %v1975
    %1992 = vst [vmem:[#allocation4 + $0x18] sm:$0xff] %v1977
    %1993 = vst [vmem:[#allocation4 + $0x20] sm:$0xff] %v1980
    %1994 = vst [vmem:[#allocation4 + $0x28] sm:$0xff] %v1982
    %1995 = vst [vmem:[#allocation4 + $0x30] sm:$0xff] %v1985
    %1996 = vst [vmem:[#allocation4 + $0x38] sm:$0xff] %v1987
    %v1997 = vld [vmem:[#allocation4] sm:$0xff]
    %v1998 = vpack.c.bf16 %v1901, %v1901
    %2000 = vrot.lane.b32.xlu0 %v1998, 64
    %v2001 = vpop.permute.xlu0 %2000
    %v2006 = vunpack.c.l.b16 %v1915
    %v2007 = vunpack.c.l.b16 %v1916
    %v2008 = vunpack.c.l.b16 %v1917
    %v2009 = vunpack.c.l.b16 %v1918
    %v2010 = vpack.c.b16 %v2007, %v2006
    %v2011 = vpack.c.b16 %v2009, %v2008
    %v2015 = vsel %vm141, %v2001, 0
    %2017 = vmatpush.bf16.msra.mxu0 0
    %2018 = vmatpush.bf16.msra.mxu0 0
    %2019 = vmatpush.bf16.msra.mxu0 0
    %2020 = vmatpush.bf16.msra.mxu0 0
    %2021 = vmatpush.bf16.msra.mxu0 0
    %2022 = vmatpush.bf16.msra.mxu0 0
    %2023 = vmatpush.bf16.msra.mxu0 %v2011
    %2024 = vmatpush.bf16.msra.mxu0 %v2010
    %2025 = vmatmul.bf16.gmra.mxu0 %v2015
    %v2026 = vpop.f32.mrf.mxu0
    %v2027 = vadd.f32 0.0, %v2026
    %v2028 = vpop.f32.mrf.mxu0
    %2029 = vdwg.mxu0
    %v2030 = vadd.f32 %v1997, %v2027
    %v2031 = vxor.u32 %v2030, 2147483648
    %v2032 = vmul.f32 %v2031, 1.442695
    %v2033 = vpow.pop %v2032
    %v2034 = vadd.f32 %v2033, 1.0
    %v2035 = vrcp.pop %v2034
    %v2036 = vmul.f32 %v2034, %v2035
    %v2037 = vsub.f32 1.0, %v2036
    %v2038 = vmul.f32 %v2035, %v2037
    %v2039 = vadd.f32 %v2035, %v2038
    %vm2040 = vweird.f32 %v2034
    %vm2041 = vweird.f32 %v2035
    %vm2042 = vmor %vm2040, %vm2041
    %v2043 = vsel %vm2042, %v2035, %v2039
    %v2044 = vand.u32 2147483647, %v2034
    %vm2045 = vcmp.eq.f32.partialorder %v2044, 8.507059e+37
    %v2046 = vand.u32 %v2034, 2147483648
    %v2047 = vor.u32 1.1754944e-38, %v2046
    %v2048 = vsel %vm2045, %v2047, %v2043
    %v2049 = vmul.f32 1.0, %v2048
    %v2050 = vtanh.pop %v2030
    %v2051 = vmul.f32 %v2049, %v1895
    %2053 = vrot.lane.b32.xlu0 %v2050, 32
    %v2054 = vpop.permute.xlu0 %2053
    %v2056 = vmul.f32 %v2049, %v2054
    %2058 = vrot.lane.b32.xlu0 %v2056, 32
    %v2059 = vpop.permute.xlu0 %2058
    %v2061 = vadd.f32 %v2051, %v2059
    %v2062 = vtanh.pop %v2061
    %2064 = vrot.lane.b32.xlu0 %v2062, 32
    %v2065 = vpop.permute.xlu0 %2064
    %v2067 = vmul.f32 %v2049, %v2065
    %2069 = vrot.lane.b32.xlu0 %v2067, 64
    %v2070 = vpop.permute.xlu0 %2069
    %2072 = vst.msk [vmem:[#allocation3] sm:$0xff] %vm141, %v2070
    %v2073 = vld [vmem:[%s201] sm:$0xff]
    %v2074 = vpack.c.bf16 %v2067, %v2067
    %2076 = vrot.lane.b32.xlu0 %v2074, 64
    %v2077 = vpop.permute.xlu0 %2076
    %v2079 = vsel %vm141, %v2077, 0
    %2081 = vmatpush.bf16.msra.mxu0 0
    %2082 = vmatpush.bf16.msra.mxu0 0
    %2083 = vmatpush.bf16.msra.mxu0 0
    %2084 = vmatpush.bf16.msra.mxu0 0
    %2085 = vmatpush.bf16.msra.mxu0 0
    %2086 = vmatpush.bf16.msra.mxu0 0
    %2087 = vmatpush.bf16.msra.mxu0 %v2011
    %2088 = vmatpush.bf16.msra.mxu0 %v2010
    %2089 = vmatmul.bf16.gmra.mxu0 %v2079
    %v2090 = vpop.f32.mrf.mxu0
    %v2091 = vadd.f32 0.0, %v2090
    %v2092 = vpop.f32.mrf.mxu0
    %2093 = vdwg.mxu0
    %v2094 = vadd.f32 %v2073, %v2091
    %v2095 = vxor.u32 %v2094, 2147483648
    %v2096 = vmul.f32 %v2095, 1.442695
    %v2097 = vpow.pop %v2096
    %v2098 = vadd.f32 %v2097, 1.0
    %v2099 = vrcp.pop %v2098
    %v2100 = vmul.f32 %v2098, %v2099
    %v2101 = vsub.f32 1.0, %v2100
    %v2102 = vmul.f32 %v2099, %v2101
    %v2103 = vadd.f32 %v2099, %v2102
    %vm2104 = vweird.f32 %v2098
    %vm2105 = vweird.f32 %v2099
    %vm2106 = vmor %vm2104, %vm2105
    %v2107 = vsel %vm2106, %v2099, %v2103
    %v2108 = vand.u32 2147483647, %v2098
    %vm2109 = vcmp.eq.f32.partialorder %v2108, 8.507059e+37
    %v2110 = vand.u32 %v2098, 2147483648
    %v2111 = vor.u32 1.1754944e-38, %v2110
    %v2112 = vsel %vm2109, %v2111, %v2107
    %v2113 = vmul.f32 1.0, %v2112
    %v2114 = vtanh.pop %v2094
    %v2115 = vmul.f32 %v2113, %v2061
    %2117 = vrot.lane.b32.xlu0 %v2114, 32
    %v2118 = vpop.permute.xlu0 %2117
    %v2120 = vmul.f32 %v2113, %v2118
    %2122 = vrot.lane.b32.xlu0 %v2120, 32
    %v2123 = vpop.permute.xlu0 %2122
    %v2125 = vadd.f32 %v2115, %v2123
    %v2126 = vtanh.pop %v2125
    %2128 = vrot.lane.b32.xlu0 %v2126, 32
    %v2129 = vpop.permute.xlu0 %2128
    %v2131 = vmul.f32 %v2113, %v2129
    %2133 = vrot.lane.b32.xlu0 %v2131, 64
    %v2134 = vpop.permute.xlu0 %2133
    %2136 = vst.msk [vmem:[%s889] sm:$0xff] %vm141, %v2134
    %v2137 = vld [vmem:[%s267] sm:$0xff]
    %v2138 = vpack.c.bf16 %v2131, %v2131
    %2140 = vrot.lane.b32.xlu0 %v2138, 64
    %v2141 = vpop.permute.xlu0 %2140
    %v2143 = vsel %vm141, %v2141, 0
    %2145 = vmatpush.bf16.msra.mxu0 0
    %2146 = vmatpush.bf16.msra.mxu0 0
    %2147 = vmatpush.bf16.msra.mxu0 0
    %2148 = vmatpush.bf16.msra.mxu0 0
    %2149 = vmatpush.bf16.msra.mxu0 0
    %2150 = vmatpush.bf16.msra.mxu0 0
    %2151 = vmatpush.bf16.msra.mxu0 %v2011
    %2152 = vmatpush.bf16.msra.mxu0 %v2010
    %2153 = vmatmul.bf16.gmra.mxu0 %v2143
    %v2154 = vpop.f32.mrf.mxu0
    %v2155 = vadd.f32 0.0, %v2154
    %v2156 = vpop.f32.mrf.mxu0
    %2157 = vdwg.mxu0
    %v2158 = vadd.f32 %v2137, %v2155
    %v2159 = vxor.u32 %v2158, 2147483648
    %v2160 = vmul.f32 %v2159, 1.442695
    %v2161 = vpow.pop %v2160
    %v2162 = vadd.f32 %v2161, 1.0
    %v2163 = vrcp.pop %v2162
    %v2164 = vmul.f32 %v2162, %v2163
    %v2165 = vsub.f32 1.0, %v2164
    %v2166 = vmul.f32 %v2163, %v2165
    %v2167 = vadd.f32 %v2163, %v2166
    %vm2168 = vweird.f32 %v2162
    %vm2169 = vweird.f32 %v2163
    %vm2170 = vmor %vm2168, %vm2169
    %v2171 = vsel %vm2170, %v2163, %v2167
    %v2172 = vand.u32 2147483647, %v2162
    %vm2173 = vcmp.eq.f32.partialorder %v2172, 8.507059e+37
    %v2174 = vand.u32 %v2162, 2147483648
    %v2175 = vor.u32 1.1754944e-38, %v2174
    %v2176 = vsel %vm2173, %v2175, %v2171
    %v2177 = vmul.f32 1.0, %v2176
    %v2178 = vtanh.pop %v2158
    %v2179 = vmul.f32 %v2177, %v2125
    %2181 = vrot.lane.b32.xlu0 %v2178, 32
    %v2182 = vpop.permute.xlu0 %2181
    %v2184 = vmul.f32 %v2177, %v2182
    %2186 = vrot.lane.b32.xlu0 %v2184, 32
    %v2187 = vpop.permute.xlu0 %2186
    %v2189 = vadd.f32 %v2179, %v2187
    %v2190 = vtanh.pop %v2189
    %2192 = vrot.lane.b32.xlu0 %v2190, 32
    %v2193 = vpop.permute.xlu0 %2192
    %v2195 = vmul.f32 %v2177, %v2193
    %2197 = vrot.lane.b32.xlu0 %v2195, 64
    %v2198 = vpop.permute.xlu0 %2197
    %2200 = vst.msk [vmem:[%s954] sm:$0xff] %vm141, %v2198
    %v2201 = vld [vmem:[%s333] sm:$0xff]
    %v2202 = vpack.c.bf16 %v2195, %v2195
    %2204 = vrot.lane.b32.xlu0 %v2202, 64
    %v2205 = vpop.permute.xlu0 %2204
    %v2207 = vsel %vm141, %v2205, 0
    %2209 = vmatpush.bf16.msra.mxu0 0
    %2210 = vmatpush.bf16.msra.mxu0 0
    %2211 = vmatpush.bf16.msra.mxu0 0
    %2212 = vmatpush.bf16.msra.mxu0 0
    %2213 = vmatpush.bf16.msra.mxu0 0
    %2214 = vmatpush.bf16.msra.mxu0 0
    %2215 = vmatpush.bf16.msra.mxu0 %v2011
    %2216 = vmatpush.bf16.msra.mxu0 %v2010
    %2217 = vmatmul.bf16.gmra.mxu0 %v2207
    %v2218 = vpop.f32.mrf.mxu0
    %v2219 = vadd.f32 0.0, %v2218
    %v2220 = vpop.f32.mrf.mxu0
    %2221 = vdwg.mxu0
    %v2222 = vadd.f32 %v2201, %v2219
    %v2223 = vxor.u32 %v2222, 2147483648
    %v2224 = vmul.f32 %v2223, 1.442695
    %v2225 = vpow.pop %v2224
    %v2226 = vadd.f32 %v2225, 1.0
    %v2227 = vrcp.pop %v2226
    %v2228 = vmul.f32 %v2226, %v2227
    %v2229 = vsub.f32 1.0, %v2228
    %v2230 = vmul.f32 %v2227, %v2229
    %v2231 = vadd.f32 %v2227, %v2230
    %vm2232 = vweird.f32 %v2226
    %vm2233 = vweird.f32 %v2227
    %vm2234 = vmor %vm2232, %vm2233
    %v2235 = vsel %vm2234, %v2227, %v2231
    %v2236 = vand.u32 2147483647, %v2226
    %vm2237 = vcmp.eq.f32.partialorder %v2236, 8.507059e+37
    %v2238 = vand.u32 %v2226, 2147483648
    %v2239 = vor.u32 1.1754944e-38, %v2238
    %v2240 = vsel %vm2237, %v2239, %v2235
    %v2241 = vmul.f32 1.0, %v2240
    %v2242 = vtanh.pop %v2222
    %v2243 = vmul.f32 %v2241, %v2189
    %2245 = vrot.lane.b32.xlu0 %v2242, 32
    %v2246 = vpop.permute.xlu0 %2245
    %v2248 = vmul.f32 %v2241, %v2246
    %2250 = vrot.lane.b32.xlu0 %v2248, 32
    %v2251 = vpop.permute.xlu0 %2250
    %v2253 = vadd.f32 %v2243, %v2251
    %v2254 = vtanh.pop %v2253
    %2256 = vrot.lane.b32.xlu0 %v2254, 32
    %v2257 = vpop.permute.xlu0 %2256
    %v2259 = vmul.f32 %v2241, %v2257
    %2261 = vrot.lane.b32.xlu0 %v2259, 64
    %v2262 = vpop.permute.xlu0 %2261
    %2264 = vst.msk [vmem:[%s1019] sm:$0xff] %vm141, %v2262
    %v2265 = vld [vmem:[%s399] sm:$0xff]
    %v2266 = vpack.c.bf16 %v2259, %v2259
    %2268 = vrot.lane.b32.xlu0 %v2266, 64
    %v2269 = vpop.permute.xlu0 %2268
    %v2271 = vsel %vm141, %v2269, 0
    %2273 = vmatpush.bf16.msra.mxu0 0
    %2274 = vmatpush.bf16.msra.mxu0 0
    %2275 = vmatpush.bf16.msra.mxu0 0
    %2276 = vmatpush.bf16.msra.mxu0 0
    %2277 = vmatpush.bf16.msra.mxu0 0
    %2278 = vmatpush.bf16.msra.mxu0 0
    %2279 = vmatpush.bf16.msra.mxu0 %v2011
    %2280 = vmatpush.bf16.msra.mxu0 %v2010
    %2281 = vmatmul.bf16.gmra.mxu0 %v2271
    %v2282 = vpop.f32.mrf.mxu0
    %v2283 = vadd.f32 0.0, %v2282
    %v2284 = vpop.f32.mrf.mxu0
    %2285 = vdwg.mxu0
    %v2286 = vadd.f32 %v2265, %v2283
    %v2287 = vxor.u32 %v2286, 2147483648
    %v2288 = vmul.f32 %v2287, 1.442695
    %v2289 = vpow.pop %v2288
    %v2290 = vadd.f32 %v2289, 1.0
    %v2291 = vrcp.pop %v2290
    %v2292 = vmul.f32 %v2290, %v2291
    %v2293 = vsub.f32 1.0, %v2292
    %v2294 = vmul.f32 %v2291, %v2293
    %v2295 = vadd.f32 %v2291, %v2294
    %vm2296 = vweird.f32 %v2290
    %vm2297 = vweird.f32 %v2291
    %vm2298 = vmor %vm2296, %vm2297
    %v2299 = vsel %vm2298, %v2291, %v2295
    %v2300 = vand.u32 2147483647, %v2290
    %vm2301 = vcmp.eq.f32.partialorder %v2300, 8.507059e+37
    %v2302 = vand.u32 %v2290, 2147483648
    %v2303 = vor.u32 1.1754944e-38, %v2302
    %v2304 = vsel %vm2301, %v2303, %v2299
    %v2305 = vmul.f32 1.0, %v2304
    %v2306 = vtanh.pop %v2286
    %v2307 = vmul.f32 %v2305, %v2253
    %2309 = vrot.lane.b32.xlu0 %v2306, 32
    %v2310 = vpop.permute.xlu0 %2309
    %v2312 = vmul.f32 %v2305, %v2310
    %2314 = vrot.lane.b32.xlu0 %v2312, 32
    %v2315 = vpop.permute.xlu0 %2314
    %v2317 = vadd.f32 %v2307, %v2315
    %v2318 = vtanh.pop %v2317
    %2320 = vrot.lane.b32.xlu0 %v2318, 32
    %v2321 = vpop.permute.xlu0 %2320
    %v2323 = vmul.f32 %v2305, %v2321
    %2325 = vrot.lane.b32.xlu0 %v2323, 64
    %v2326 = vpop.permute.xlu0 %2325
    %2328 = vst.msk [vmem:[%s1084] sm:$0xff] %vm141, %v2326
    %v2329 = vld [vmem:[%s465] sm:$0xff]
    %v2330 = vpack.c.bf16 %v2323, %v2323
    %2332 = vrot.lane.b32.xlu0 %v2330, 64
    %v2333 = vpop.permute.xlu0 %2332
    %v2335 = vsel %vm141, %v2333, 0
    %2337 = vmatpush.bf16.msra.mxu0 0
    %2338 = vmatpush.bf16.msra.mxu0 0
    %2339 = vmatpush.bf16.msra.mxu0 0
    %2340 = vmatpush.bf16.msra.mxu0 0
    %2341 = vmatpush.bf16.msra.mxu0 0
    %2342 = vmatpush.bf16.msra.mxu0 0
    %2343 = vmatpush.bf16.msra.mxu0 %v2011
    %2344 = vmatpush.bf16.msra.mxu0 %v2010
    %2345 = vmatmul.bf16.gmra.mxu0 %v2335
    %v2346 = vpop.f32.mrf.mxu0
    %v2347 = vadd.f32 0.0, %v2346
    %v2348 = vpop.f32.mrf.mxu0
    %2349 = vdwg.mxu0
    %v2350 = vadd.f32 %v2329, %v2347
    %v2351 = vxor.u32 %v2350, 2147483648
    %v2352 = vmul.f32 %v2351, 1.442695
    %v2353 = vpow.pop %v2352
    %v2354 = vadd.f32 %v2353, 1.0
    %v2355 = vrcp.pop %v2354
    %v2356 = vmul.f32 %v2354, %v2355
    %v2357 = vsub.f32 1.0, %v2356
    %v2358 = vmul.f32 %v2355, %v2357
    %v2359 = vadd.f32 %v2355, %v2358
    %vm2360 = vweird.f32 %v2354
    %vm2361 = vweird.f32 %v2355
    %vm2362 = vmor %vm2360, %vm2361
    %v2363 = vsel %vm2362, %v2355, %v2359
    %v2364 = vand.u32 2147483647, %v2354
    %vm2365 = vcmp.eq.f32.partialorder %v2364, 8.507059e+37
    %v2366 = vand.u32 %v2354, 2147483648
    %v2367 = vor.u32 1.1754944e-38, %v2366
    %v2368 = vsel %vm2365, %v2367, %v2363
    %v2369 = vmul.f32 1.0, %v2368
    %v2370 = vtanh.pop %v2350
    %v2371 = vmul.f32 %v2369, %v2317
    %2373 = vrot.lane.b32.xlu0 %v2370, 32
    %v2374 = vpop.permute.xlu0 %2373
    %v2376 = vmul.f32 %v2369, %v2374
    %2378 = vrot.lane.b32.xlu0 %v2376, 32
    %v2379 = vpop.permute.xlu0 %2378
    %v2381 = vadd.f32 %v2371, %v2379
    %v2382 = vtanh.pop %v2381
    %2384 = vrot.lane.b32.xlu0 %v2382, 32
    %v2385 = vpop.permute.xlu0 %2384
    %v2387 = vmul.f32 %v2369, %v2385
    %2389 = vrot.lane.b32.xlu0 %v2387, 64
    %v2390 = vpop.permute.xlu0 %2389
    %2392 = vst.msk [vmem:[%s1149] sm:$0xff] %vm141, %v2390
    %v2393 = vld [vmem:[%s531] sm:$0xff]
    %v2394 = vpack.c.bf16 %v2387, %v2387
    %2396 = vrot.lane.b32.xlu0 %v2394, 64
    %v2397 = vpop.permute.xlu0 %2396
    %v2399 = vsel %vm141, %v2397, 0
    %2401 = vmatpush.bf16.msra.mxu0 0
    %2402 = vmatpush.bf16.msra.mxu0 0
    %2403 = vmatpush.bf16.msra.mxu0 0
    %2404 = vmatpush.bf16.msra.mxu0 0
    %2405 = vmatpush.bf16.msra.mxu0 0
    %2406 = vmatpush.bf16.msra.mxu0 0
    %2407 = vmatpush.bf16.msra.mxu0 %v2011
    %2408 = vmatpush.bf16.msra.mxu0 %v2010
    %2409 = vmatmul.bf16.gmra.mxu0 %v2399
    %v2410 = vpop.f32.mrf.mxu0
    %v2411 = vadd.f32 0.0, %v2410
    %v2412 = vpop.f32.mrf.mxu0
    %2413 = vdwg.mxu0
    %v2414 = vadd.f32 %v2393, %v2411
    %v2415 = vxor.u32 %v2414, 2147483648
    %v2416 = vmul.f32 %v2415, 1.442695
    %v2417 = vpow.pop %v2416
    %v2418 = vadd.f32 %v2417, 1.0
    %v2419 = vrcp.pop %v2418
    %v2420 = vmul.f32 %v2418, %v2419
    %v2421 = vsub.f32 1.0, %v2420
    %v2422 = vmul.f32 %v2419, %v2421
    %v2423 = vadd.f32 %v2419, %v2422
    %vm2424 = vweird.f32 %v2418
    %vm2425 = vweird.f32 %v2419
    %vm2426 = vmor %vm2424, %vm2425
    %v2427 = vsel %vm2426, %v2419, %v2423
    %v2428 = vand.u32 2147483647, %v2418
    %vm2429 = vcmp.eq.f32.partialorder %v2428, 8.507059e+37
    %v2430 = vand.u32 %v2418, 2147483648
    %v2431 = vor.u32 1.1754944e-38, %v2430
    %v2432 = vsel %vm2429, %v2431, %v2427
    %v2433 = vmul.f32 1.0, %v2432
    %v2434 = vtanh.pop %v2414
    %v2435 = vmul.f32 %v2433, %v2381
    %2437 = vrot.lane.b32.xlu0 %v2434, 32
    %v2438 = vpop.permute.xlu0 %2437
    %v2440 = vmul.f32 %v2433, %v2438
    %2442 = vrot.lane.b32.xlu0 %v2440, 32
    %v2443 = vpop.permute.xlu0 %2442
    %v2445 = vadd.f32 %v2435, %v2443
    %v2446 = vtanh.pop %v2445
    %2448 = vrot.lane.b32.xlu0 %v2446, 32
    %v2449 = vpop.permute.xlu0 %2448
    %v2451 = vmul.f32 %v2433, %v2449
    %2453 = vrot.lane.b32.xlu0 %v2451, 64
    %v2454 = vpop.permute.xlu0 %2453
    %2456 = vst.msk [vmem:[%s1214] sm:$0xff] %vm141, %v2454
    %v2457 = vld [vmem:[%s597] sm:$0xff]
    %v2458 = vpack.c.bf16 %v2451, %v2451
    %2460 = vrot.lane.b32.xlu0 %v2458, 64
    %v2461 = vpop.permute.xlu0 %2460
    %v2463 = vsel %vm141, %v2461, 0
    %2465 = vmatpush.bf16.msra.mxu0 0
    %2466 = vmatpush.bf16.msra.mxu0 0
    %2467 = vmatpush.bf16.msra.mxu0 0
    %2468 = vmatpush.bf16.msra.mxu0 0
    %2469 = vmatpush.bf16.msra.mxu0 0
    %2470 = vmatpush.bf16.msra.mxu0 0
    %2471 = vmatpush.bf16.msra.mxu0 %v2011
    %2472 = vmatpush.bf16.msra.mxu0 %v2010
    %2473 = vmatmul.bf16.gmra.mxu0 %v2463
    %v2474 = vpop.f32.mrf.mxu0
    %v2475 = vadd.f32 0.0, %v2474
    %v2476 = vpop.f32.mrf.mxu0
    %2477 = vdwg.mxu0
    %v2478 = vadd.f32 %v2457, %v2475
    %v2479 = vxor.u32 %v2478, 2147483648
    %v2480 = vmul.f32 %v2479, 1.442695
    %v2481 = vpow.pop %v2480
    %v2482 = vadd.f32 %v2481, 1.0
    %v2483 = vrcp.pop %v2482
    %v2484 = vmul.f32 %v2482, %v2483
    %v2485 = vsub.f32 1.0, %v2484
    %v2486 = vmul.f32 %v2483, %v2485
    %v2487 = vadd.f32 %v2483, %v2486
    %vm2488 = vweird.f32 %v2482
    %vm2489 = vweird.f32 %v2483
    %vm2490 = vmor %vm2488, %vm2489
    %v2491 = vsel %vm2490, %v2483, %v2487
    %v2492 = vand.u32 2147483647, %v2482
    %vm2493 = vcmp.eq.f32.partialorder %v2492, 8.507059e+37
    %v2494 = vand.u32 %v2482, 2147483648
    %v2495 = vor.u32 1.1754944e-38, %v2494
    %v2496 = vsel %vm2493, %v2495, %v2491
    %v2497 = vmul.f32 1.0, %v2496
    %v2498 = vtanh.pop %v2478
    %v2499 = vmul.f32 %v2497, %v2445
    %2501 = vrot.lane.b32.xlu0 %v2498, 32
    %v2502 = vpop.permute.xlu0 %2501
    %v2504 = vmul.f32 %v2497, %v2502
    %2506 = vrot.lane.b32.xlu0 %v2504, 32
    %v2507 = vpop.permute.xlu0 %2506
    %v2509 = vadd.f32 %v2499, %v2507
    %v2510 = vtanh.pop %v2509
    %2512 = vrot.lane.b32.xlu0 %v2510, 32
    %v2513 = vpop.permute.xlu0 %2512
    %v2515 = vmul.f32 %v2497, %v2513
    %2517 = vrot.lane.b32.xlu0 %v2515, 64
    %v2518 = vpop.permute.xlu0 %2517
    %2520 = vst.msk [vmem:[%s1279] sm:$0xff] %vm141, %v2518
    %s2521 = scalar_lea.vmem [#allocation5], 48
    %v2522 = vld [vmem:[%s2521] sm:$0xf]
    %v2523 = vld [vmem:[%s2521 + $0x4] sm:$0xf]
    %v2524 = vld [vmem:[%s2521 + $0x8] sm:$0xf]
    %v2525 = vld [vmem:[%s2521 + $0xc] sm:$0xf]
    %s2526 = scalar_lea.vmem [#allocation7], 64
    %v2527 = vld [vmem:[%s2526] sm:$0xf]
    %v2528 = vld [vmem:[%s2526 + $0x4] sm:$0xf]
    %v2529 = vld [vmem:[%s2526 + $0x8] sm:$0xf]
    %v2530 = vld [vmem:[%s2526 + $0xc] sm:$0xf]
    %s2531 = scalar_lea.vmem %s4, 4
    %v2532 = vld [vmem:[%s2531] sm:$0x1]
    %v2533 = vld [vmem:[#allocation3] sm:$0xff]
    %v2534 = vld [vmem:[#allocation3 + $0x8] sm:$0xff]
    %v2535 = vld [vmem:[#allocation3 + $0x10] sm:$0xff]
    %v2536 = vld [vmem:[#allocation3 + $0x18] sm:$0xff]
    %v2537 = vld [vmem:[#allocation3 + $0x20] sm:$0xff]
    %v2538 = vld [vmem:[#allocation3 + $0x28] sm:$0xff]
    %v2539 = vld [vmem:[#allocation3 + $0x30] sm:$0xff]
    %v2540 = vld [vmem:[#allocation3 + $0x38] sm:$0xff]
    %v2541 = vpack.c.bf16 %v2534, %v2533
    %v2542 = vpack.c.bf16 %v2536, %v2535
    %v2543 = vpack.c.bf16 %v2538, %v2537
    %v2544 = vpack.c.bf16 %v2540, %v2539
    %v2546 = vperm.slane %v2532, 0
    %v2552 = vunpack.c.l.b16 %v2522
    %v2553 = vunpack.c.l.b16 %v2523
    %v2554 = vunpack.c.l.b16 %v2524
    %v2555 = vunpack.c.l.b16 %v2525
    %v2556 = vpack.c.b16 %v2553, %v2552
    %v2557 = vpack.c.b16 %v2555, %v2554
    %v2561 = vsel %vm141, %v2541, 0
    %v2564 = vsel %vm141, %v2542, 0
    %v2567 = vsel %vm141, %v2543, 0
    %v2570 = vsel %vm141, %v2544, 0
    %2572 = vmatpush.bf16.msra.mxu0 0
    %2573 = vmatpush.bf16.msra.mxu0 0
    %2574 = vmatpush.bf16.msra.mxu0 0
    %2575 = vmatpush.bf16.msra.mxu0 0
    %2576 = vmatpush.bf16.msra.mxu0 0
    %2577 = vmatpush.bf16.msra.mxu0 0
    %2578 = vmatpush.bf16.msra.mxu0 %v2557
    %2579 = vmatpush.bf16.msra.mxu0 %v2556
    %2580 = vmatmul.bf16.gmra.mxu0 %v2561
    %v2581 = vpop.f32.mrf.mxu0
    %v2582 = vadd.f32 %v2546, %v2581
    %v2583 = vpop.f32.mrf.mxu0
    %v2584 = vadd.f32 %v2546, %v2583
    %2585 = vmatmul.bf16.gmra.mxu0 %v2564
    %v2586 = vpop.f32.mrf.mxu0
    %v2587 = vadd.f32 %v2546, %v2586
    %v2588 = vpop.f32.mrf.mxu0
    %v2589 = vadd.f32 %v2546, %v2588
    %2590 = vmatmul.bf16.gmra.mxu0 %v2567
    %v2591 = vpop.f32.mrf.mxu0
    %v2592 = vadd.f32 %v2546, %v2591
    %v2593 = vpop.f32.mrf.mxu0
    %v2594 = vadd.f32 %v2546, %v2593
    %2595 = vmatmul.bf16.gmra.mxu0 %v2570
    %v2596 = vpop.f32.mrf.mxu0
    %v2597 = vadd.f32 %v2546, %v2596
    %v2598 = vpop.f32.mrf.mxu0
    %v2599 = vadd.f32 %v2546, %v2598
    %2600 = vdwg.mxu0
    %2601 = vst [vmem:[#allocation4] sm:$0xff] %v2582
    %2602 = vst [vmem:[#allocation4 + $0x8] sm:$0xff] %v2584
    %2603 = vst [vmem:[#allocation4 + $0x10] sm:$0xff] %v2587
    %2604 = vst [vmem:[#allocation4 + $0x18] sm:$0xff] %v2589
    %2605 = vst [vmem:[#allocation4 + $0x20] sm:$0xff] %v2592
    %2606 = vst [vmem:[#allocation4 + $0x28] sm:$0xff] %v2594
    %2607 = vst [vmem:[#allocation4 + $0x30] sm:$0xff] %v2597
    %2608 = vst [vmem:[#allocation4 + $0x38] sm:$0xff] %v2599
    %v2609 = vld [vmem:[#allocation4] sm:$0xff]
    %v2610 = vpack.c.bf16 %v2515, %v2515
    %2612 = vrot.lane.b32.xlu0 %v2610, 64
    %v2613 = vpop.permute.xlu0 %2612
    %v2618 = vunpack.c.l.b16 %v2527
    %v2619 = vunpack.c.l.b16 %v2528
    %v2620 = vunpack.c.l.b16 %v2529
    %v2621 = vunpack.c.l.b16 %v2530
    %v2622 = vpack.c.b16 %v2619, %v2618
    %v2623 = vpack.c.b16 %v2621, %v2620
    %v2627 = vsel %vm141, %v2613, 0
    %2629 = vmatpush.bf16.msra.mxu0 0
    %2630 = vmatpush.bf16.msra.mxu0 0
    %2631 = vmatpush.bf16.msra.mxu0 0
    %2632 = vmatpush.bf16.msra.mxu0 0
    %2633 = vmatpush.bf16.msra.mxu0 0
    %2634 = vmatpush.bf16.msra.mxu0 0
    %2635 = vmatpush.bf16.msra.mxu0 %v2623
    %2636 = vmatpush.bf16.msra.mxu0 %v2622
    %2637 = vmatmul.bf16.gmra.mxu0 %v2627
    %v2638 = vpop.f32.mrf.mxu0
    %v2639 = vadd.f32 0.0, %v2638
    %v2640 = vpop.f32.mrf.mxu0
    %2641 = vdwg.mxu0
    %v2642 = vadd.f32 %v2609, %v2639
    %v2643 = vxor.u32 %v2642, 2147483648
    %v2644 = vmul.f32 %v2643, 1.442695
    %v2645 = vpow.pop %v2644
    %v2646 = vadd.f32 %v2645, 1.0
    %v2647 = vrcp.pop %v2646
    %v2648 = vmul.f32 %v2646, %v2647
    %v2649 = vsub.f32 1.0, %v2648
    %v2650 = vmul.f32 %v2647, %v2649
    %v2651 = vadd.f32 %v2647, %v2650
    %vm2652 = vweird.f32 %v2646
    %vm2653 = vweird.f32 %v2647
    %vm2654 = vmor %vm2652, %vm2653
    %v2655 = vsel %vm2654, %v2647, %v2651
    %v2656 = vand.u32 2147483647, %v2646
    %vm2657 = vcmp.eq.f32.partialorder %v2656, 8.507059e+37
    %v2658 = vand.u32 %v2646, 2147483648
    %v2659 = vor.u32 1.1754944e-38, %v2658
    %v2660 = vsel %vm2657, %v2659, %v2655
    %v2661 = vmul.f32 1.0, %v2660
    %v2662 = vtanh.pop %v2642
    %v2663 = vmul.f32 %v2661, %v2509
    %2665 = vrot.lane.b32.xlu0 %v2662, 32
    %v2666 = vpop.permute.xlu0 %2665
    %v2668 = vmul.f32 %v2661, %v2666
    %2670 = vrot.lane.b32.xlu0 %v2668, 32
    %v2671 = vpop.permute.xlu0 %2670
    %v2673 = vadd.f32 %v2663, %v2671
    %v2674 = vtanh.pop %v2673
    %2676 = vrot.lane.b32.xlu0 %v2674, 32
    %v2677 = vpop.permute.xlu0 %2676
    %v2679 = vmul.f32 %v2661, %v2677
    %v2680 = vld [vmem:[#allocation2] sm:$0xff]
    %2682 = vrot.lane.b32.xlu0 %v2679, 64
    %v2683 = vpop.permute.xlu0 %2682
    %v2685 = vadd.f32 %v2680, %v2683
    %2686 = vst.msk [vmem:[#allocation2] sm:$0xff] %vm141, %v2685
    %v2687 = vld [vmem:[%s201] sm:$0xff]
    %v2688 = vpack.c.bf16 %v2679, %v2679
    %2690 = vrot.lane.b32.xlu0 %v2688, 64
    %v2691 = vpop.permute.xlu0 %2690
    %v2693 = vsel %vm141, %v2691, 0
    %2695 = vmatpush.bf16.msra.mxu0 0
    %2696 = vmatpush.bf16.msra.mxu0 0
    %2697 = vmatpush.bf16.msra.mxu0 0
    %2698 = vmatpush.bf16.msra.mxu0 0
    %2699 = vmatpush.bf16.msra.mxu0 0
    %2700 = vmatpush.bf16.msra.mxu0 0
    %2701 = vmatpush.bf16.msra.mxu0 %v2623
    %2702 = vmatpush.bf16.msra.mxu0 %v2622
    %2703 = vmatmul.bf16.gmra.mxu0 %v2693
    %v2704 = vpop.f32.mrf.mxu0
    %v2705 = vadd.f32 0.0, %v2704
    %v2706 = vpop.f32.mrf.mxu0
    %2707 = vdwg.mxu0
    %v2708 = vadd.f32 %v2687, %v2705
    %v2709 = vxor.u32 %v2708, 2147483648
    %v2710 = vmul.f32 %v2709, 1.442695
    %v2711 = vpow.pop %v2710
    %v2712 = vadd.f32 %v2711, 1.0
    %v2713 = vrcp.pop %v2712
    %v2714 = vmul.f32 %v2712, %v2713
    %v2715 = vsub.f32 1.0, %v2714
    %v2716 = vmul.f32 %v2713, %v2715
    %v2717 = vadd.f32 %v2713, %v2716
    %vm2718 = vweird.f32 %v2712
    %vm2719 = vweird.f32 %v2713
    %vm2720 = vmor %vm2718, %vm2719
    %v2721 = vsel %vm2720, %v2713, %v2717
    %v2722 = vand.u32 2147483647, %v2712
    %vm2723 = vcmp.eq.f32.partialorder %v2722, 8.507059e+37
    %v2724 = vand.u32 %v2712, 2147483648
    %v2725 = vor.u32 1.1754944e-38, %v2724
    %v2726 = vsel %vm2723, %v2725, %v2721
    %v2727 = vmul.f32 1.0, %v2726
    %v2728 = vtanh.pop %v2708
    %v2729 = vmul.f32 %v2727, %v2673
    %2731 = vrot.lane.b32.xlu0 %v2728, 32
    %v2732 = vpop.permute.xlu0 %2731
    %v2734 = vmul.f32 %v2727, %v2732
    %2736 = vrot.lane.b32.xlu0 %v2734, 32
    %v2737 = vpop.permute.xlu0 %2736
    %v2739 = vadd.f32 %v2729, %v2737
    %v2740 = vtanh.pop %v2739
    %2742 = vrot.lane.b32.xlu0 %v2740, 32
    %v2743 = vpop.permute.xlu0 %2742
    %v2745 = vmul.f32 %v2727, %v2743
    %v2746 = vld [vmem:[%s265] sm:$0xff]
    %2748 = vrot.lane.b32.xlu0 %v2745, 64
    %v2749 = vpop.permute.xlu0 %2748
    %v2751 = vadd.f32 %v2746, %v2749
    %2752 = vst.msk [vmem:[%s265] sm:$0xff] %vm141, %v2751
    %v2753 = vld [vmem:[%s267] sm:$0xff]
    %v2754 = vpack.c.bf16 %v2745, %v2745
    %2756 = vrot.lane.b32.xlu0 %v2754, 64
    %v2757 = vpop.permute.xlu0 %2756
    %v2759 = vsel %vm141, %v2757, 0
    %2761 = vmatpush.bf16.msra.mxu0 0
    %2762 = vmatpush.bf16.msra.mxu0 0
    %2763 = vmatpush.bf16.msra.mxu0 0
    %2764 = vmatpush.bf16.msra.mxu0 0
    %2765 = vmatpush.bf16.msra.mxu0 0
    %2766 = vmatpush.bf16.msra.mxu0 0
    %2767 = vmatpush.bf16.msra.mxu0 %v2623
    %2768 = vmatpush.bf16.msra.mxu0 %v2622
    %2769 = vmatmul.bf16.gmra.mxu0 %v2759
    %v2770 = vpop.f32.mrf.mxu0
    %v2771 = vadd.f32 0.0, %v2770
    %v2772 = vpop.f32.mrf.mxu0
    %2773 = vdwg.mxu0
    %v2774 = vadd.f32 %v2753, %v2771
    %v2775 = vxor.u32 %v2774, 2147483648
    %v2776 = vmul.f32 %v2775, 1.442695
    %v2777 = vpow.pop %v2776
    %v2778 = vadd.f32 %v2777, 1.0
    %v2779 = vrcp.pop %v2778
    %v2780 = vmul.f32 %v2778, %v2779
    %v2781 = vsub.f32 1.0, %v2780
    %v2782 = vmul.f32 %v2779, %v2781
    %v2783 = vadd.f32 %v2779, %v2782
    %vm2784 = vweird.f32 %v2778
    %vm2785 = vweird.f32 %v2779
    %vm2786 = vmor %vm2784, %vm2785
    %v2787 = vsel %vm2786, %v2779, %v2783
    %v2788 = vand.u32 2147483647, %v2778
    %vm2789 = vcmp.eq.f32.partialorder %v2788, 8.507059e+37
    %v2790 = vand.u32 %v2778, 2147483648
    %v2791 = vor.u32 1.1754944e-38, %v2790
    %v2792 = vsel %vm2789, %v2791, %v2787
    %v2793 = vmul.f32 1.0, %v2792
    %v2794 = vtanh.pop %v2774
    %v2795 = vmul.f32 %v2793, %v2739
    %2797 = vrot.lane.b32.xlu0 %v2794, 32
    %v2798 = vpop.permute.xlu0 %2797
    %v2800 = vmul.f32 %v2793, %v2798
    %2802 = vrot.lane.b32.xlu0 %v2800, 32
    %v2803 = vpop.permute.xlu0 %2802
    %v2805 = vadd.f32 %v2795, %v2803
    %v2806 = vtanh.pop %v2805
    %2808 = vrot.lane.b32.xlu0 %v2806, 32
    %v2809 = vpop.permute.xlu0 %2808
    %v2811 = vmul.f32 %v2793, %v2809
    %v2812 = vld [vmem:[%s331] sm:$0xff]
    %2814 = vrot.lane.b32.xlu0 %v2811, 64
    %v2815 = vpop.permute.xlu0 %2814
    %v2817 = vadd.f32 %v2812, %v2815
    %2818 = vst.msk [vmem:[%s331] sm:$0xff] %vm141, %v2817
    %v2819 = vld [vmem:[%s333] sm:$0xff]
    %v2820 = vpack.c.bf16 %v2811, %v2811
    %2822 = vrot.lane.b32.xlu0 %v2820, 64
    %v2823 = vpop.permute.xlu0 %2822
    %v2825 = vsel %vm141, %v2823, 0
    %2827 = vmatpush.bf16.msra.mxu0 0
    %2828 = vmatpush.bf16.msra.mxu0 0
    %2829 = vmatpush.bf16.msra.mxu0 0
    %2830 = vmatpush.bf16.msra.mxu0 0
    %2831 = vmatpush.bf16.msra.mxu0 0
    %2832 = vmatpush.bf16.msra.mxu0 0
    %2833 = vmatpush.bf16.msra.mxu0 %v2623
    %2834 = vmatpush.bf16.msra.mxu0 %v2622
    %2835 = vmatmul.bf16.gmra.mxu0 %v2825
    %v2836 = vpop.f32.mrf.mxu0
    %v2837 = vadd.f32 0.0, %v2836
    %v2838 = vpop.f32.mrf.mxu0
    %2839 = vdwg.mxu0
    %v2840 = vadd.f32 %v2819, %v2837
    %v2841 = vxor.u32 %v2840, 2147483648
    %v2842 = vmul.f32 %v2841, 1.442695
    %v2843 = vpow.pop %v2842
    %v2844 = vadd.f32 %v2843, 1.0
    %v2845 = vrcp.pop %v2844
    %v2846 = vmul.f32 %v2844, %v2845
    %v2847 = vsub.f32 1.0, %v2846
    %v2848 = vmul.f32 %v2845, %v2847
    %v2849 = vadd.f32 %v2845, %v2848
    %vm2850 = vweird.f32 %v2844
    %vm2851 = vweird.f32 %v2845
    %vm2852 = vmor %vm2850, %vm2851
    %v2853 = vsel %vm2852, %v2845, %v2849
    %v2854 = vand.u32 2147483647, %v2844
    %vm2855 = vcmp.eq.f32.partialorder %v2854, 8.507059e+37
    %v2856 = vand.u32 %v2844, 2147483648
    %v2857 = vor.u32 1.1754944e-38, %v2856
    %v2858 = vsel %vm2855, %v2857, %v2853
    %v2859 = vmul.f32 1.0, %v2858
    %v2860 = vtanh.pop %v2840
    %v2861 = vmul.f32 %v2859, %v2805
    %2863 = vrot.lane.b32.xlu0 %v2860, 32
    %v2864 = vpop.permute.xlu0 %2863
    %v2866 = vmul.f32 %v2859, %v2864
    %2868 = vrot.lane.b32.xlu0 %v2866, 32
    %v2869 = vpop.permute.xlu0 %2868
    %v2871 = vadd.f32 %v2861, %v2869
    %v2872 = vtanh.pop %v2871
    %2874 = vrot.lane.b32.xlu0 %v2872, 32
    %v2875 = vpop.permute.xlu0 %2874
    %v2877 = vmul.f32 %v2859, %v2875
    %v2878 = vld [vmem:[%s397] sm:$0xff]
    %2880 = vrot.lane.b32.xlu0 %v2877, 64
    %v2881 = vpop.permute.xlu0 %2880
    %v2883 = vadd.f32 %v2878, %v2881
    %2884 = vst.msk [vmem:[%s397] sm:$0xff] %vm141, %v2883
    %v2885 = vld [vmem:[%s399] sm:$0xff]
    %v2886 = vpack.c.bf16 %v2877, %v2877
    %2888 = vrot.lane.b32.xlu0 %v2886, 64
    %v2889 = vpop.permute.xlu0 %2888
    %v2891 = vsel %vm141, %v2889, 0
    %2893 = vmatpush.bf16.msra.mxu0 0
    %2894 = vmatpush.bf16.msra.mxu0 0
    %2895 = vmatpush.bf16.msra.mxu0 0
    %2896 = vmatpush.bf16.msra.mxu0 0
    %2897 = vmatpush.bf16.msra.mxu0 0
    %2898 = vmatpush.bf16.msra.mxu0 0
    %2899 = vmatpush.bf16.msra.mxu0 %v2623
    %2900 = vmatpush.bf16.msra.mxu0 %v2622
    %2901 = vmatmul.bf16.gmra.mxu0 %v2891
    %v2902 = vpop.f32.mrf.mxu0
    %v2903 = vadd.f32 0.0, %v2902
    %v2904 = vpop.f32.mrf.mxu0
    %2905 = vdwg.mxu0
    %v2906 = vadd.f32 %v2885, %v2903
    %v2907 = vxor.u32 %v2906, 2147483648
    %v2908 = vmul.f32 %v2907, 1.442695
    %v2909 = vpow.pop %v2908
    %v2910 = vadd.f32 %v2909, 1.0
    %v2911 = vrcp.pop %v2910
    %v2912 = vmul.f32 %v2910, %v2911
    %v2913 = vsub.f32 1.0, %v2912
    %v2914 = vmul.f32 %v2911, %v2913
    %v2915 = vadd.f32 %v2911, %v2914
    %vm2916 = vweird.f32 %v2910
    %vm2917 = vweird.f32 %v2911
    %vm2918 = vmor %vm2916, %vm2917
    %v2919 = vsel %vm2918, %v2911, %v2915
    %v2920 = vand.u32 2147483647, %v2910
    %vm2921 = vcmp.eq.f32.partialorder %v2920, 8.507059e+37
    %v2922 = vand.u32 %v2910, 2147483648
    %v2923 = vor.u32 1.1754944e-38, %v2922
    %v2924 = vsel %vm2921, %v2923, %v2919
    %v2925 = vmul.f32 1.0, %v2924
    %v2926 = vtanh.pop %v2906
    %v2927 = vmul.f32 %v2925, %v2871
    %2929 = vrot.lane.b32.xlu0 %v2926, 32
    %v2930 = vpop.permute.xlu0 %2929
    %v2932 = vmul.f32 %v2925, %v2930
    %2934 = vrot.lane.b32.xlu0 %v2932, 32
    %v2935 = vpop.permute.xlu0 %2934
    %v2937 = vadd.f32 %v2927, %v2935
    %v2938 = vtanh.pop %v2937
    %2940 = vrot.lane.b32.xlu0 %v2938, 32
    %v2941 = vpop.permute.xlu0 %2940
    %v2943 = vmul.f32 %v2925, %v2941
    %v2944 = vld [vmem:[%s463] sm:$0xff]
    %2946 = vrot.lane.b32.xlu0 %v2943, 64
    %v2947 = vpop.permute.xlu0 %2946
    %v2949 = vadd.f32 %v2944, %v2947
    %2950 = vst.msk [vmem:[%s463] sm:$0xff] %vm141, %v2949
    %v2951 = vld [vmem:[%s465] sm:$0xff]
    %v2952 = vpack.c.bf16 %v2943, %v2943
    %2954 = vrot.lane.b32.xlu0 %v2952, 64
    %v2955 = vpop.permute.xlu0 %2954
    %v2957 = vsel %vm141, %v2955, 0
    %2959 = vmatpush.bf16.msra.mxu0 0
    %2960 = vmatpush.bf16.msra.mxu0 0
    %2961 = vmatpush.bf16.msra.mxu0 0
    %2962 = vmatpush.bf16.msra.mxu0 0
    %2963 = vmatpush.bf16.msra.mxu0 0
    %2964 = vmatpush.bf16.msra.mxu0 0
    %2965 = vmatpush.bf16.msra.mxu0 %v2623
    %2966 = vmatpush.bf16.msra.mxu0 %v2622
    %2967 = vmatmul.bf16.gmra.mxu0 %v2957
    %v2968 = vpop.f32.mrf.mxu0
    %v2969 = vadd.f32 0.0, %v2968
    %v2970 = vpop.f32.mrf.mxu0
    %2971 = vdwg.mxu0
    %v2972 = vadd.f32 %v2951, %v2969
    %v2973 = vxor.u32 %v2972, 2147483648
    %v2974 = vmul.f32 %v2973, 1.442695
    %v2975 = vpow.pop %v2974
    %v2976 = vadd.f32 %v2975, 1.0
    %v2977 = vrcp.pop %v2976
    %v2978 = vmul.f32 %v2976, %v2977
    %v2979 = vsub.f32 1.0, %v2978
    %v2980 = vmul.f32 %v2977, %v2979
    %v2981 = vadd.f32 %v2977, %v2980
    %vm2982 = vweird.f32 %v2976
    %vm2983 = vweird.f32 %v2977
    %vm2984 = vmor %vm2982, %vm2983
    %v2985 = vsel %vm2984, %v2977, %v2981
    %v2986 = vand.u32 2147483647, %v2976
    %vm2987 = vcmp.eq.f32.partialorder %v2986, 8.507059e+37
    %v2988 = vand.u32 %v2976, 2147483648
    %v2989 = vor.u32 1.1754944e-38, %v2988
    %v2990 = vsel %vm2987, %v2989, %v2985
    %v2991 = vmul.f32 1.0, %v2990
    %v2992 = vtanh.pop %v2972
    %v2993 = vmul.f32 %v2991, %v2937
    %2995 = vrot.lane.b32.xlu0 %v2992, 32
    %v2996 = vpop.permute.xlu0 %2995
    %v2998 = vmul.f32 %v2991, %v2996
    %3000 = vrot.lane.b32.xlu0 %v2998, 32
    %v3001 = vpop.permute.xlu0 %3000
    %v3003 = vadd.f32 %v2993, %v3001
    %v3004 = vtanh.pop %v3003
    %3006 = vrot.lane.b32.xlu0 %v3004, 32
    %v3007 = vpop.permute.xlu0 %3006
    %v3009 = vmul.f32 %v2991, %v3007
    %v3010 = vld [vmem:[%s529] sm:$0xff]
    %3012 = vrot.lane.b32.xlu0 %v3009, 64
    %v3013 = vpop.permute.xlu0 %3012
    %v3015 = vadd.f32 %v3010, %v3013
    %3016 = vst.msk [vmem:[%s529] sm:$0xff] %vm141, %v3015
    %v3017 = vld [vmem:[%s531] sm:$0xff]
    %v3018 = vpack.c.bf16 %v3009, %v3009
    %3020 = vrot.lane.b32.xlu0 %v3018, 64
    %v3021 = vpop.permute.xlu0 %3020
    %v3023 = vsel %vm141, %v3021, 0
    %3025 = vmatpush.bf16.msra.mxu0 0
    %3026 = vmatpush.bf16.msra.mxu0 0
    %3027 = vmatpush.bf16.msra.mxu0 0
    %3028 = vmatpush.bf16.msra.mxu0 0
    %3029 = vmatpush.bf16.msra.mxu0 0
    %3030 = vmatpush.bf16.msra.mxu0 0
    %3031 = vmatpush.bf16.msra.mxu0 %v2623
    %3032 = vmatpush.bf16.msra.mxu0 %v2622
    %3033 = vmatmul.bf16.gmra.mxu0 %v3023
    %v3034 = vpop.f32.mrf.mxu0
    %v3035 = vadd.f32 0.0, %v3034
    %v3036 = vpop.f32.mrf.mxu0
    %3037 = vdwg.mxu0
    %v3038 = vadd.f32 %v3017, %v3035
    %v3039 = vxor.u32 %v3038, 2147483648
    %v3040 = vmul.f32 %v3039, 1.442695
    %v3041 = vpow.pop %v3040
    %v3042 = vadd.f32 %v3041, 1.0
    %v3043 = vrcp.pop %v3042
    %v3044 = vmul.f32 %v3042, %v3043
    %v3045 = vsub.f32 1.0, %v3044
    %v3046 = vmul.f32 %v3043, %v3045
    %v3047 = vadd.f32 %v3043, %v3046
    %vm3048 = vweird.f32 %v3042
    %vm3049 = vweird.f32 %v3043
    %vm3050 = vmor %vm3048, %vm3049
    %v3051 = vsel %vm3050, %v3043, %v3047
    %v3052 = vand.u32 2147483647, %v3042
    %vm3053 = vcmp.eq.f32.partialorder %v3052, 8.507059e+37
    %v3054 = vand.u32 %v3042, 2147483648
    %v3055 = vor.u32 1.1754944e-38, %v3054
    %v3056 = vsel %vm3053, %v3055, %v3051
    %v3057 = vmul.f32 1.0, %v3056
    %v3058 = vtanh.pop %v3038
    %v3059 = vmul.f32 %v3057, %v3003
    %3061 = vrot.lane.b32.xlu0 %v3058, 32
    %v3062 = vpop.permute.xlu0 %3061
    %v3064 = vmul.f32 %v3057, %v3062
    %3066 = vrot.lane.b32.xlu0 %v3064, 32
    %v3067 = vpop.permute.xlu0 %3066
    %v3069 = vadd.f32 %v3059, %v3067
    %v3070 = vtanh.pop %v3069
    %3072 = vrot.lane.b32.xlu0 %v3070, 32
    %v3073 = vpop.permute.xlu0 %3072
    %v3075 = vmul.f32 %v3057, %v3073
    %v3076 = vld [vmem:[%s595] sm:$0xff]
    %3078 = vrot.lane.b32.xlu0 %v3075, 64
    %v3079 = vpop.permute.xlu0 %3078
    %v3081 = vadd.f32 %v3076, %v3079
    %3082 = vst.msk [vmem:[%s595] sm:$0xff] %vm141, %v3081
    %v3083 = vld [vmem:[%s597] sm:$0xff]
    %v3084 = vpack.c.bf16 %v3075, %v3075
    %3086 = vrot.lane.b32.xlu0 %v3084, 64
    %v3087 = vpop.permute.xlu0 %3086
    %v3089 = vsel %vm141, %v3087, 0
    %3091 = vmatpush.bf16.msra.mxu0 0
    %3092 = vmatpush.bf16.msra.mxu0 0
    %3093 = vmatpush.bf16.msra.mxu0 0
    %3094 = vmatpush.bf16.msra.mxu0 0
    %3095 = vmatpush.bf16.msra.mxu0 0
    %3096 = vmatpush.bf16.msra.mxu0 0
    %3097 = vmatpush.bf16.msra.mxu0 %v2623
    %3098 = vmatpush.bf16.msra.mxu0 %v2622
    %3099 = vmatmul.bf16.gmra.mxu0 %v3089
    %v3100 = vpop.f32.mrf.mxu0
    %v3101 = vadd.f32 0.0, %v3100
    %v3102 = vpop.f32.mrf.mxu0
    %3103 = vdwg.mxu0
    %v3104 = vadd.f32 %v3083, %v3101
    %v3105 = vxor.u32 %v3104, 2147483648
    %v3106 = vmul.f32 %v3105, 1.442695
    %v3107 = vpow.pop %v3106
    %v3108 = vadd.f32 %v3107, 1.0
    %v3109 = vrcp.pop %v3108
    %v3110 = vmul.f32 %v3108, %v3109
    %v3111 = vsub.f32 1.0, %v3110
    %v3112 = vmul.f32 %v3109, %v3111
    %v3113 = vadd.f32 %v3109, %v3112
    %vm3114 = vweird.f32 %v3108
    %vm3115 = vweird.f32 %v3109
    %vm3116 = vmor %vm3114, %vm3115
    %v3117 = vsel %vm3116, %v3109, %v3113
    %v3118 = vand.u32 2147483647, %v3108
    %vm3119 = vcmp.eq.f32.partialorder %v3118, 8.507059e+37
    %v3120 = vand.u32 %v3108, 2147483648
    %v3121 = vor.u32 1.1754944e-38, %v3120
    %v3122 = vsel %vm3119, %v3121, %v3117
    %v3123 = vmul.f32 1.0, %v3122
    %v3124 = vtanh.pop %v3104
    %v3125 = vmul.f32 %v3123, %v3069
    %3127 = vrot.lane.b32.xlu0 %v3124, 32
    %v3128 = vpop.permute.xlu0 %3127
    %v3130 = vmul.f32 %v3123, %v3128
    %3132 = vrot.lane.b32.xlu0 %v3130, 32
    %v3133 = vpop.permute.xlu0 %3132
    %v3135 = vadd.f32 %v3125, %v3133
    %v3136 = vtanh.pop %v3135
    %3138 = vrot.lane.b32.xlu0 %v3136, 32
    %v3139 = vpop.permute.xlu0 %3138
    %v3141 = vmul.f32 %v3123, %v3139
    %v3142 = vld [vmem:[%s661] sm:$0xff]
    %3144 = vrot.lane.b32.xlu0 %v3141, 64
    %v3145 = vpop.permute.xlu0 %3144
    %v3147 = vadd.f32 %v3142, %v3145
    %3148 = vst.msk [vmem:[%s661] sm:$0xff] %vm141, %v3147
    %s3149 = scalar_lea.vmem [#allocation5], 64
    %v3150 = vld [vmem:[%s3149] sm:$0xf]
    %v3151 = vld [vmem:[%s3149 + $0x4] sm:$0xf]
    %v3152 = vld [vmem:[%s3149 + $0x8] sm:$0xf]
    %v3153 = vld [vmem:[%s3149 + $0xc] sm:$0xf]
    %s3154 = scalar_lea.vmem [#allocation7], 80
    %v3155 = vld [vmem:[%s3154] sm:$0xf]
    %v3156 = vld [vmem:[%s3154 + $0x4] sm:$0xf]
    %v3157 = vld [vmem:[%s3154 + $0x8] sm:$0xf]
    %v3158 = vld [vmem:[%s3154 + $0xc] sm:$0xf]
    %s3159 = scalar_lea.vmem %s4, 5
    %v3160 = vld [vmem:[%s3159] sm:$0x1]
    %v3161 = vld [vmem:[#allocation2] sm:$0xff]
    %v3162 = vld [vmem:[#allocation2 + $0x8] sm:$0xff]
    %v3163 = vld [vmem:[#allocation2 + $0x10] sm:$0xff]
    %v3164 = vld [vmem:[#allocation2 + $0x18] sm:$0xff]
    %v3165 = vld [vmem:[#allocation2 + $0x20] sm:$0xff]
    %v3166 = vld [vmem:[#allocation2 + $0x28] sm:$0xff]
    %v3167 = vld [vmem:[#allocation2 + $0x30] sm:$0xff]
    %v3168 = vld [vmem:[#allocation2 + $0x38] sm:$0xff]
    %v3169 = vpack.c.bf16 %v3162, %v3161
    %v3170 = vpack.c.bf16 %v3164, %v3163
    %v3171 = vpack.c.bf16 %v3166, %v3165
    %v3172 = vpack.c.bf16 %v3168, %v3167
    %v3174 = vperm.slane %v3160, 0
    %v3180 = vunpack.c.l.b16 %v3150
    %v3181 = vunpack.c.l.b16 %v3151
    %v3182 = vunpack.c.l.b16 %v3152
    %v3183 = vunpack.c.l.b16 %v3153
    %v3184 = vpack.c.b16 %v3181, %v3180
    %v3185 = vpack.c.b16 %v3183, %v3182
    %v3189 = vsel %vm141, %v3169, 0
    %v3192 = vsel %vm141, %v3170, 0
    %v3195 = vsel %vm141, %v3171, 0
    %v3198 = vsel %vm141, %v3172, 0
    %3200 = vmatpush.bf16.msra.mxu0 0
    %3201 = vmatpush.bf16.msra.mxu0 0
    %3202 = vmatpush.bf16.msra.mxu0 0
    %3203 = vmatpush.bf16.msra.mxu0 0
    %3204 = vmatpush.bf16.msra.mxu0 0
    %3205 = vmatpush.bf16.msra.mxu0 0
    %3206 = vmatpush.bf16.msra.mxu0 %v3185
    %3207 = vmatpush.bf16.msra.mxu0 %v3184
    %3208 = vmatmul.bf16.gmra.mxu0 %v3189
    %v3209 = vpop.f32.mrf.mxu0
    %v3210 = vadd.f32 %v3174, %v3209
    %v3211 = vpop.f32.mrf.mxu0
    %v3212 = vadd.f32 %v3174, %v3211
    %3213 = vmatmul.bf16.gmra.mxu0 %v3192
    %v3214 = vpop.f32.mrf.mxu0
    %v3215 = vadd.f32 %v3174, %v3214
    %v3216 = vpop.f32.mrf.mxu0
    %v3217 = vadd.f32 %v3174, %v3216
    %3218 = vmatmul.bf16.gmra.mxu0 %v3195
    %v3219 = vpop.f32.mrf.mxu0
    %v3220 = vadd.f32 %v3174, %v3219
    %v3221 = vpop.f32.mrf.mxu0
    %v3222 = vadd.f32 %v3174, %v3221
    %3223 = vmatmul.bf16.gmra.mxu0 %v3198
    %v3224 = vpop.f32.mrf.mxu0
    %v3225 = vadd.f32 %v3174, %v3224
    %v3226 = vpop.f32.mrf.mxu0
    %v3227 = vadd.f32 %v3174, %v3226
    %3228 = vdwg.mxu0
    %3229 = vst [vmem:[#allocation4] sm:$0xff] %v3210
    %3230 = vst [vmem:[#allocation4 + $0x8] sm:$0xff] %v3212
    %3231 = vst [vmem:[#allocation4 + $0x10] sm:$0xff] %v3215
    %3232 = vst [vmem:[#allocation4 + $0x18] sm:$0xff] %v3217
    %3233 = vst [vmem:[#allocation4 + $0x20] sm:$0xff] %v3220
    %3234 = vst [vmem:[#allocation4 + $0x28] sm:$0xff] %v3222
    %3235 = vst [vmem:[#allocation4 + $0x30] sm:$0xff] %v3225
    %3236 = vst [vmem:[#allocation4 + $0x38] sm:$0xff] %v3227
    %v3237 = vld [vmem:[#allocation4] sm:$0xff]
    %v3238 = vpack.c.bf16 %v3141, %v3141
    %3240 = vrot.lane.b32.xlu0 %v3238, 64
    %v3241 = vpop.permute.xlu0 %3240
    %v3246 = vunpack.c.l.b16 %v3155
    %v3247 = vunpack.c.l.b16 %v3156
    %v3248 = vunpack.c.l.b16 %v3157
    %v3249 = vunpack.c.l.b16 %v3158
    %v3250 = vpack.c.b16 %v3247, %v3246
    %v3251 = vpack.c.b16 %v3249, %v3248
    %v3255 = vsel %vm141, %v3241, 0
    %3257 = vmatpush.bf16.msra.mxu0 0
    %3258 = vmatpush.bf16.msra.mxu0 0
    %3259 = vmatpush.bf16.msra.mxu0 0
    %3260 = vmatpush.bf16.msra.mxu0 0
    %3261 = vmatpush.bf16.msra.mxu0 0
    %3262 = vmatpush.bf16.msra.mxu0 0
    %3263 = vmatpush.bf16.msra.mxu0 %v3251
    %3264 = vmatpush.bf16.msra.mxu0 %v3250
    %3265 = vmatmul.bf16.gmra.mxu0 %v3255
    %v3266 = vpop.f32.mrf.mxu0
    %v3267 = vadd.f32 0.0, %v3266
    %v3268 = vpop.f32.mrf.mxu0
    %3269 = vdwg.mxu0
    %v3270 = vadd.f32 %v3237, %v3267
    %v3271 = vxor.u32 %v3270, 2147483648
    %v3272 = vmul.f32 %v3271, 1.442695
    %v3273 = vpow.pop %v3272
    %v3274 = vadd.f32 %v3273, 1.0
    %v3275 = vrcp.pop %v3274
    %v3276 = vmul.f32 %v3274, %v3275
    %v3277 = vsub.f32 1.0, %v3276
    %v3278 = vmul.f32 %v3275, %v3277
    %v3279 = vadd.f32 %v3275, %v3278
    %vm3280 = vweird.f32 %v3274
    %vm3281 = vweird.f32 %v3275
    %vm3282 = vmor %vm3280, %vm3281
    %v3283 = vsel %vm3282, %v3275, %v3279
    %v3284 = vand.u32 2147483647, %v3274
    %vm3285 = vcmp.eq.f32.partialorder %v3284, 8.507059e+37
    %v3286 = vand.u32 %v3274, 2147483648
    %v3287 = vor.u32 1.1754944e-38, %v3286
    %v3288 = vsel %vm3285, %v3287, %v3283
    %v3289 = vmul.f32 1.0, %v3288
    %v3290 = vtanh.pop %v3270
    %v3291 = vmul.f32 %v3289, %v3135
    %3293 = vrot.lane.b32.xlu0 %v3290, 32
    %v3294 = vpop.permute.xlu0 %3293
    %v3296 = vmul.f32 %v3289, %v3294
    %3298 = vrot.lane.b32.xlu0 %v3296, 32
    %v3299 = vpop.permute.xlu0 %3298
    %v3301 = vadd.f32 %v3291, %v3299
    %v3302 = vtanh.pop %v3301
    %3304 = vrot.lane.b32.xlu0 %v3302, 32
    %v3305 = vpop.permute.xlu0 %3304
    %v3307 = vmul.f32 %v3289, %v3305
    %3309 = vrot.lane.b32.xlu0 %v3307, 64
    %v3310 = vpop.permute.xlu0 %3309
    %3312 = vst.msk [vmem:[#allocation3] sm:$0xff] %vm141, %v3310
    %v3313 = vld [vmem:[%s201] sm:$0xff]
    %v3314 = vpack.c.bf16 %v3307, %v3307
    %3316 = vrot.lane.b32.xlu0 %v3314, 64
    %v3317 = vpop.permute.xlu0 %3316
    %v3319 = vsel %vm141, %v3317, 0
    %3321 = vmatpush.bf16.msra.mxu0 0
    %3322 = vmatpush.bf16.msra.mxu0 0
    %3323 = vmatpush.bf16.msra.mxu0 0
    %3324 = vmatpush.bf16.msra.mxu0 0
    %3325 = vmatpush.bf16.msra.mxu0 0
    %3326 = vmatpush.bf16.msra.mxu0 0
    %3327 = vmatpush.bf16.msra.mxu0 %v3251
    %3328 = vmatpush.bf16.msra.mxu0 %v3250
    %3329 = vmatmul.bf16.gmra.mxu0 %v3319
    %v3330 = vpop.f32.mrf.mxu0
    %v3331 = vadd.f32 0.0, %v3330
    %v3332 = vpop.f32.mrf.mxu0
    %3333 = vdwg.mxu0
    %v3334 = vadd.f32 %v3313, %v3331
    %v3335 = vxor.u32 %v3334, 2147483648
    %v3336 = vmul.f32 %v3335, 1.442695
    %v3337 = vpow.pop %v3336
    %v3338 = vadd.f32 %v3337, 1.0
    %v3339 = vrcp.pop %v3338
    %v3340 = vmul.f32 %v3338, %v3339
    %v3341 = vsub.f32 1.0, %v3340
    %v3342 = vmul.f32 %v3339, %v3341
    %v3343 = vadd.f32 %v3339, %v3342
    %vm3344 = vweird.f32 %v3338
    %vm3345 = vweird.f32 %v3339
    %vm3346 = vmor %vm3344, %vm3345
    %v3347 = vsel %vm3346, %v3339, %v3343
    %v3348 = vand.u32 2147483647, %v3338
    %vm3349 = vcmp.eq.f32.partialorder %v3348, 8.507059e+37
    %v3350 = vand.u32 %v3338, 2147483648
    %v3351 = vor.u32 1.1754944e-38, %v3350
    %v3352 = vsel %vm3349, %v3351, %v3347
    %v3353 = vmul.f32 1.0, %v3352
    %v3354 = vtanh.pop %v3334
    %v3355 = vmul.f32 %v3353, %v3301
    %3357 = vrot.lane.b32.xlu0 %v3354, 32
    %v3358 = vpop.permute.xlu0 %3357
    %v3360 = vmul.f32 %v3353, %v3358
    %3362 = vrot.lane.b32.xlu0 %v3360, 32
    %v3363 = vpop.permute.xlu0 %3362
    %v3365 = vadd.f32 %v3355, %v3363
    %v3366 = vtanh.pop %v3365
    %3368 = vrot.lane.b32.xlu0 %v3366, 32
    %v3369 = vpop.permute.xlu0 %3368
    %v3371 = vmul.f32 %v3353, %v3369
    %3373 = vrot.lane.b32.xlu0 %v3371, 64
    %v3374 = vpop.permute.xlu0 %3373
    %3376 = vst.msk [vmem:[%s889] sm:$0xff] %vm141, %v3374
    %v3377 = vld [vmem:[%s267] sm:$0xff]
    %v3378 = vpack.c.bf16 %v3371, %v3371
    %3380 = vrot.lane.b32.xlu0 %v3378, 64
    %v3381 = vpop.permute.xlu0 %3380
    %v3383 = vsel %vm141, %v3381, 0
    %3385 = vmatpush.bf16.msra.mxu0 0
    %3386 = vmatpush.bf16.msra.mxu0 0
    %3387 = vmatpush.bf16.msra.mxu0 0
    %3388 = vmatpush.bf16.msra.mxu0 0
    %3389 = vmatpush.bf16.msra.mxu0 0
    %3390 = vmatpush.bf16.msra.mxu0 0
    %3391 = vmatpush.bf16.msra.mxu0 %v3251
    %3392 = vmatpush.bf16.msra.mxu0 %v3250
    %3393 = vmatmul.bf16.gmra.mxu0 %v3383
    %v3394 = vpop.f32.mrf.mxu0
    %v3395 = vadd.f32 0.0, %v3394
    %v3396 = vpop.f32.mrf.mxu0
    %3397 = vdwg.mxu0
    %v3398 = vadd.f32 %v3377, %v3395
    %v3399 = vxor.u32 %v3398, 2147483648
    %v3400 = vmul.f32 %v3399, 1.442695
    %v3401 = vpow.pop %v3400
    %v3402 = vadd.f32 %v3401, 1.0
    %v3403 = vrcp.pop %v3402
    %v3404 = vmul.f32 %v3402, %v3403
    %v3405 = vsub.f32 1.0, %v3404
    %v3406 = vmul.f32 %v3403, %v3405
    %v3407 = vadd.f32 %v3403, %v3406
    %vm3408 = vweird.f32 %v3402
    %vm3409 = vweird.f32 %v3403
    %vm3410 = vmor %vm3408, %vm3409
    %v3411 = vsel %vm3410, %v3403, %v3407
    %v3412 = vand.u32 2147483647, %v3402
    %vm3413 = vcmp.eq.f32.partialorder %v3412, 8.507059e+37
    %v3414 = vand.u32 %v3402, 2147483648
    %v3415 = vor.u32 1.1754944e-38, %v3414
    %v3416 = vsel %vm3413, %v3415, %v3411
    %v3417 = vmul.f32 1.0, %v3416
    %v3418 = vtanh.pop %v3398
    %v3419 = vmul.f32 %v3417, %v3365
    %3421 = vrot.lane.b32.xlu0 %v3418, 32
    %v3422 = vpop.permute.xlu0 %3421
    %v3424 = vmul.f32 %v3417, %v3422
    %3426 = vrot.lane.b32.xlu0 %v3424, 32
    %v3427 = vpop.permute.xlu0 %3426
    %v3429 = vadd.f32 %v3419, %v3427
    %v3430 = vtanh.pop %v3429
    %3432 = vrot.lane.b32.xlu0 %v3430, 32
    %v3433 = vpop.permute.xlu0 %3432
    %v3435 = vmul.f32 %v3417, %v3433
    %3437 = vrot.lane.b32.xlu0 %v3435, 64
    %v3438 = vpop.permute.xlu0 %3437
    %3440 = vst.msk [vmem:[%s954] sm:$0xff] %vm141, %v3438
    %v3441 = vld [vmem:[%s333] sm:$0xff]
    %v3442 = vpack.c.bf16 %v3435, %v3435
    %3444 = vrot.lane.b32.xlu0 %v3442, 64
    %v3445 = vpop.permute.xlu0 %3444
    %v3447 = vsel %vm141, %v3445, 0
    %3449 = vmatpush.bf16.msra.mxu0 0
    %3450 = vmatpush.bf16.msra.mxu0 0
    %3451 = vmatpush.bf16.msra.mxu0 0
    %3452 = vmatpush.bf16.msra.mxu0 0
    %3453 = vmatpush.bf16.msra.mxu0 0
    %3454 = vmatpush.bf16.msra.mxu0 0
    %3455 = vmatpush.bf16.msra.mxu0 %v3251
    %3456 = vmatpush.bf16.msra.mxu0 %v3250
    %3457 = vmatmul.bf16.gmra.mxu0 %v3447
    %v3458 = vpop.f32.mrf.mxu0
    %v3459 = vadd.f32 0.0, %v3458
    %v3460 = vpop.f32.mrf.mxu0
    %3461 = vdwg.mxu0
    %v3462 = vadd.f32 %v3441, %v3459
    %v3463 = vxor.u32 %v3462, 2147483648
    %v3464 = vmul.f32 %v3463, 1.442695
    %v3465 = vpow.pop %v3464
    %v3466 = vadd.f32 %v3465, 1.0
    %v3467 = vrcp.pop %v3466
    %v3468 = vmul.f32 %v3466, %v3467
    %v3469 = vsub.f32 1.0, %v3468
    %v3470 = vmul.f32 %v3467, %v3469
    %v3471 = vadd.f32 %v3467, %v3470
    %vm3472 = vweird.f32 %v3466
    %vm3473 = vweird.f32 %v3467
    %vm3474 = vmor %vm3472, %vm3473
    %v3475 = vsel %vm3474, %v3467, %v3471
    %v3476 = vand.u32 2147483647, %v3466
    %vm3477 = vcmp.eq.f32.partialorder %v3476, 8.507059e+37
    %v3478 = vand.u32 %v3466, 2147483648
    %v3479 = vor.u32 1.1754944e-38, %v3478
    %v3480 = vsel %vm3477, %v3479, %v3475
    %v3481 = vmul.f32 1.0, %v3480
    %v3482 = vtanh.pop %v3462
    %v3483 = vmul.f32 %v3481, %v3429
    %3485 = vrot.lane.b32.xlu0 %v3482, 32
    %v3486 = vpop.permute.xlu0 %3485
    %v3488 = vmul.f32 %v3481, %v3486
    %3490 = vrot.lane.b32.xlu0 %v3488, 32
    %v3491 = vpop.permute.xlu0 %3490
    %v3493 = vadd.f32 %v3483, %v3491
    %v3494 = vtanh.pop %v3493
    %3496 = vrot.lane.b32.xlu0 %v3494, 32
    %v3497 = vpop.permute.xlu0 %3496
    %v3499 = vmul.f32 %v3481, %v3497
    %3501 = vrot.lane.b32.xlu0 %v3499, 64
    %v3502 = vpop.permute.xlu0 %3501
    %3504 = vst.msk [vmem:[%s1019] sm:$0xff] %vm141, %v3502
    %v3505 = vld [vmem:[%s399] sm:$0xff]
    %v3506 = vpack.c.bf16 %v3499, %v3499
    %3508 = vrot.lane.b32.xlu0 %v3506, 64
    %v3509 = vpop.permute.xlu0 %3508
    %v3511 = vsel %vm141, %v3509, 0
    %3513 = vmatpush.bf16.msra.mxu0 0
    %3514 = vmatpush.bf16.msra.mxu0 0
    %3515 = vmatpush.bf16.msra.mxu0 0
    %3516 = vmatpush.bf16.msra.mxu0 0
    %3517 = vmatpush.bf16.msra.mxu0 0
    %3518 = vmatpush.bf16.msra.mxu0 0
    %3519 = vmatpush.bf16.msra.mxu0 %v3251
    %3520 = vmatpush.bf16.msra.mxu0 %v3250
    %3521 = vmatmul.bf16.gmra.mxu0 %v3511
    %v3522 = vpop.f32.mrf.mxu0
    %v3523 = vadd.f32 0.0, %v3522
    %v3524 = vpop.f32.mrf.mxu0
    %3525 = vdwg.mxu0
    %v3526 = vadd.f32 %v3505, %v3523
    %v3527 = vxor.u32 %v3526, 2147483648
    %v3528 = vmul.f32 %v3527, 1.442695
    %v3529 = vpow.pop %v3528
    %v3530 = vadd.f32 %v3529, 1.0
    %v3531 = vrcp.pop %v3530
    %v3532 = vmul.f32 %v3530, %v3531
    %v3533 = vsub.f32 1.0, %v3532
    %v3534 = vmul.f32 %v3531, %v3533
    %v3535 = vadd.f32 %v3531, %v3534
    %vm3536 = vweird.f32 %v3530
    %vm3537 = vweird.f32 %v3531
    %vm3538 = vmor %vm3536, %vm3537
    %v3539 = vsel %vm3538, %v3531, %v3535
    %v3540 = vand.u32 2147483647, %v3530
    %vm3541 = vcmp.eq.f32.partialorder %v3540, 8.507059e+37
    %v3542 = vand.u32 %v3530, 2147483648
    %v3543 = vor.u32 1.1754944e-38, %v3542
    %v3544 = vsel %vm3541, %v3543, %v3539
    %v3545 = vmul.f32 1.0, %v3544
    %v3546 = vtanh.pop %v3526
    %v3547 = vmul.f32 %v3545, %v3493
    %3549 = vrot.lane.b32.xlu0 %v3546, 32
    %v3550 = vpop.permute.xlu0 %3549
    %v3552 = vmul.f32 %v3545, %v3550
    %3554 = vrot.lane.b32.xlu0 %v3552, 32
    %v3555 = vpop.permute.xlu0 %3554
    %v3557 = vadd.f32 %v3547, %v3555
    %v3558 = vtanh.pop %v3557
    %3560 = vrot.lane.b32.xlu0 %v3558, 32
    %v3561 = vpop.permute.xlu0 %3560
    %v3563 = vmul.f32 %v3545, %v3561
    %3565 = vrot.lane.b32.xlu0 %v3563, 64
    %v3566 = vpop.permute.xlu0 %3565
    %3568 = vst.msk [vmem:[%s1084] sm:$0xff] %vm141, %v3566
    %v3569 = vld [vmem:[%s465] sm:$0xff]
    %v3570 = vpack.c.bf16 %v3563, %v3563
    %3572 = vrot.lane.b32.xlu0 %v3570, 64
    %v3573 = vpop.permute.xlu0 %3572
    %v3575 = vsel %vm141, %v3573, 0
    %3577 = vmatpush.bf16.msra.mxu0 0
    %3578 = vmatpush.bf16.msra.mxu0 0
    %3579 = vmatpush.bf16.msra.mxu0 0
    %3580 = vmatpush.bf16.msra.mxu0 0
    %3581 = vmatpush.bf16.msra.mxu0 0
    %3582 = vmatpush.bf16.msra.mxu0 0
    %3583 = vmatpush.bf16.msra.mxu0 %v3251
    %3584 = vmatpush.bf16.msra.mxu0 %v3250
    %3585 = vmatmul.bf16.gmra.mxu0 %v3575
    %v3586 = vpop.f32.mrf.mxu0
    %v3587 = vadd.f32 0.0, %v3586
    %v3588 = vpop.f32.mrf.mxu0
    %3589 = vdwg.mxu0
    %v3590 = vadd.f32 %v3569, %v3587
    %v3591 = vxor.u32 %v3590, 2147483648
    %v3592 = vmul.f32 %v3591, 1.442695
    %v3593 = vpow.pop %v3592
    %v3594 = vadd.f32 %v3593, 1.0
    %v3595 = vrcp.pop %v3594
    %v3596 = vmul.f32 %v3594, %v3595
    %v3597 = vsub.f32 1.0, %v3596
    %v3598 = vmul.f32 %v3595, %v3597
    %v3599 = vadd.f32 %v3595, %v3598
    %vm3600 = vweird.f32 %v3594
    %vm3601 = vweird.f32 %v3595
    %vm3602 = vmor %vm3600, %vm3601
    %v3603 = vsel %vm3602, %v3595, %v3599
    %v3604 = vand.u32 2147483647, %v3594
    %vm3605 = vcmp.eq.f32.partialorder %v3604, 8.507059e+37
    %v3606 = vand.u32 %v3594, 2147483648
    %v3607 = vor.u32 1.1754944e-38, %v3606
    %v3608 = vsel %vm3605, %v3607, %v3603
    %v3609 = vmul.f32 1.0, %v3608
    %v3610 = vtanh.pop %v3590
    %v3611 = vmul.f32 %v3609, %v3557
    %3613 = vrot.lane.b32.xlu0 %v3610, 32
    %v3614 = vpop.permute.xlu0 %3613
    %v3616 = vmul.f32 %v3609, %v3614
    %3618 = vrot.lane.b32.xlu0 %v3616, 32
    %v3619 = vpop.permute.xlu0 %3618
    %v3621 = vadd.f32 %v3611, %v3619
    %v3622 = vtanh.pop %v3621
    %3624 = vrot.lane.b32.xlu0 %v3622, 32
    %v3625 = vpop.permute.xlu0 %3624
    %v3627 = vmul.f32 %v3609, %v3625
    %3629 = vrot.lane.b32.xlu0 %v3627, 64
    %v3630 = vpop.permute.xlu0 %3629
    %3632 = vst.msk [vmem:[%s1149] sm:$0xff] %vm141, %v3630
    %v3633 = vld [vmem:[%s531] sm:$0xff]
    %v3634 = vpack.c.bf16 %v3627, %v3627
    %3636 = vrot.lane.b32.xlu0 %v3634, 64
    %v3637 = vpop.permute.xlu0 %3636
    %v3639 = vsel %vm141, %v3637, 0
    %3641 = vmatpush.bf16.msra.mxu0 0
    %3642 = vmatpush.bf16.msra.mxu0 0
    %3643 = vmatpush.bf16.msra.mxu0 0
    %3644 = vmatpush.bf16.msra.mxu0 0
    %3645 = vmatpush.bf16.msra.mxu0 0
    %3646 = vmatpush.bf16.msra.mxu0 0
    %3647 = vmatpush.bf16.msra.mxu0 %v3251
    %3648 = vmatpush.bf16.msra.mxu0 %v3250
    %3649 = vmatmul.bf16.gmra.mxu0 %v3639
    %v3650 = vpop.f32.mrf.mxu0
    %v3651 = vadd.f32 0.0, %v3650
    %v3652 = vpop.f32.mrf.mxu0
    %3653 = vdwg.mxu0
    %v3654 = vadd.f32 %v3633, %v3651
    %v3655 = vxor.u32 %v3654, 2147483648
    %v3656 = vmul.f32 %v3655, 1.442695
    %v3657 = vpow.pop %v3656
    %v3658 = vadd.f32 %v3657, 1.0
    %v3659 = vrcp.pop %v3658
    %v3660 = vmul.f32 %v3658, %v3659
    %v3661 = vsub.f32 1.0, %v3660
    %v3662 = vmul.f32 %v3659, %v3661
    %v3663 = vadd.f32 %v3659, %v3662
    %vm3664 = vweird.f32 %v3658
    %vm3665 = vweird.f32 %v3659
    %vm3666 = vmor %vm3664, %vm3665
    %v3667 = vsel %vm3666, %v3659, %v3663
    %v3668 = vand.u32 2147483647, %v3658
    %vm3669 = vcmp.eq.f32.partialorder %v3668, 8.507059e+37
    %v3670 = vand.u32 %v3658, 2147483648
    %v3671 = vor.u32 1.1754944e-38, %v3670
    %v3672 = vsel %vm3669, %v3671, %v3667
    %v3673 = vmul.f32 1.0, %v3672
    %v3674 = vtanh.pop %v3654
    %v3675 = vmul.f32 %v3673, %v3621
    %3677 = vrot.lane.b32.xlu0 %v3674, 32
    %v3678 = vpop.permute.xlu0 %3677
    %v3680 = vmul.f32 %v3673, %v3678
    %3682 = vrot.lane.b32.xlu0 %v3680, 32
    %v3683 = vpop.permute.xlu0 %3682
    %v3685 = vadd.f32 %v3675, %v3683
    %v3686 = vtanh.pop %v3685
    %3688 = vrot.lane.b32.xlu0 %v3686, 32
    %v3689 = vpop.permute.xlu0 %3688
    %v3691 = vmul.f32 %v3673, %v3689
    %3693 = vrot.lane.b32.xlu0 %v3691, 64
    %v3694 = vpop.permute.xlu0 %3693
    %3696 = vst.msk [vmem:[%s1214] sm:$0xff] %vm141, %v3694
    %v3697 = vld [vmem:[%s597] sm:$0xff]
    %v3698 = vpack.c.bf16 %v3691, %v3691
    %3700 = vrot.lane.b32.xlu0 %v3698, 64
    %v3701 = vpop.permute.xlu0 %3700
    %v3703 = vsel %vm141, %v3701, 0
    %3705 = vmatpush.bf16.msra.mxu0 0
    %3706 = vmatpush.bf16.msra.mxu0 0
    %3707 = vmatpush.bf16.msra.mxu0 0
    %3708 = vmatpush.bf16.msra.mxu0 0
    %3709 = vmatpush.bf16.msra.mxu0 0
    %3710 = vmatpush.bf16.msra.mxu0 0
    %3711 = vmatpush.bf16.msra.mxu0 %v3251
    %3712 = vmatpush.bf16.msra.mxu0 %v3250
    %3713 = vmatmul.bf16.gmra.mxu0 %v3703
    %v3714 = vpop.f32.mrf.mxu0
    %v3715 = vadd.f32 0.0, %v3714
    %v3716 = vpop.f32.mrf.mxu0
    %3717 = vdwg.mxu0
    %v3718 = vadd.f32 %v3697, %v3715
    %v3719 = vxor.u32 %v3718, 2147483648
    %v3720 = vmul.f32 %v3719, 1.442695
    %v3721 = vpow.pop %v3720
    %v3722 = vadd.f32 %v3721, 1.0
    %v3723 = vrcp.pop %v3722
    %v3724 = vmul.f32 %v3722, %v3723
    %v3725 = vsub.f32 1.0, %v3724
    %v3726 = vmul.f32 %v3723, %v3725
    %v3727 = vadd.f32 %v3723, %v3726
    %vm3728 = vweird.f32 %v3722
    %vm3729 = vweird.f32 %v3723
    %vm3730 = vmor %vm3728, %vm3729
    %v3731 = vsel %vm3730, %v3723, %v3727
    %v3732 = vand.u32 2147483647, %v3722
    %vm3733 = vcmp.eq.f32.partialorder %v3732, 8.507059e+37
    %v3734 = vand.u32 %v3722, 2147483648
    %v3735 = vor.u32 1.1754944e-38, %v3734
    %v3736 = vsel %vm3733, %v3735, %v3731
    %v3737 = vmul.f32 1.0, %v3736
    %v3738 = vtanh.pop %v3718
    %v3739 = vmul.f32 %v3737, %v3685
    %3741 = vrot.lane.b32.xlu0 %v3738, 32
    %v3742 = vpop.permute.xlu0 %3741
    %v3744 = vmul.f32 %v3737, %v3742
    %3746 = vrot.lane.b32.xlu0 %v3744, 32
    %v3747 = vpop.permute.xlu0 %3746
    %v3749 = vadd.f32 %v3739, %v3747
    %v3750 = vtanh.pop %v3749
    %3752 = vrot.lane.b32.xlu0 %v3750, 32
    %v3753 = vpop.permute.xlu0 %3752
    %v3755 = vmul.f32 %v3737, %v3753
    %3757 = vrot.lane.b32.xlu0 %v3755, 64
    %v3758 = vpop.permute.xlu0 %3757
    %3760 = vst.msk [vmem:[%s1279] sm:$0xff] %vm141, %v3758
    %s3761 = scalar_lea.vmem [#allocation5], 80
    %v3762 = vld [vmem:[%s3761] sm:$0xf]
    %v3763 = vld [vmem:[%s3761 + $0x4] sm:$0xf]
    %v3764 = vld [vmem:[%s3761 + $0x8] sm:$0xf]
    %v3765 = vld [vmem:[%s3761 + $0xc] sm:$0xf]
    %s3766 = scalar_lea.vmem [#allocation7], 96
    %v3767 = vld [vmem:[%s3766] sm:$0xf]
    %v3768 = vld [vmem:[%s3766 + $0x4] sm:$0xf]
    %v3769 = vld [vmem:[%s3766 + $0x8] sm:$0xf]
    %v3770 = vld [vmem:[%s3766 + $0xc] sm:$0xf]
    %s3771 = scalar_lea.vmem %s4, 6
    %v3772 = vld [vmem:[%s3771] sm:$0x1]
    %v3773 = vld [vmem:[#allocation3] sm:$0xff]
    %v3774 = vld [vmem:[#allocation3 + $0x8] sm:$0xff]
    %v3775 = vld [vmem:[#allocation3 + $0x10] sm:$0xff]
    %v3776 = vld [vmem:[#allocation3 + $0x18] sm:$0xff]
    %v3777 = vld [vmem:[#allocation3 + $0x20] sm:$0xff]
    %v3778 = vld [vmem:[#allocation3 + $0x28] sm:$0xff]
    %v3779 = vld [vmem:[#allocation3 + $0x30] sm:$0xff]
    %v3780 = vld [vmem:[#allocation3 + $0x38] sm:$0xff]
    %v3781 = vpack.c.bf16 %v3774, %v3773
    %v3782 = vpack.c.bf16 %v3776, %v3775
    %v3783 = vpack.c.bf16 %v3778, %v3777
    %v3784 = vpack.c.bf16 %v3780, %v3779
    %v3786 = vperm.slane %v3772, 0
    %v3792 = vunpack.c.l.b16 %v3762
    %v3793 = vunpack.c.l.b16 %v3763
    %v3794 = vunpack.c.l.b16 %v3764
    %v3795 = vunpack.c.l.b16 %v3765
    %v3796 = vpack.c.b16 %v3793, %v3792
    %v3797 = vpack.c.b16 %v3795, %v3794
    %v3801 = vsel %vm141, %v3781, 0
    %v3804 = vsel %vm141, %v3782, 0
    %v3807 = vsel %vm141, %v3783, 0
    %v3810 = vsel %vm141, %v3784, 0
    %3812 = vmatpush.bf16.msra.mxu0 0
    %3813 = vmatpush.bf16.msra.mxu0 0
    %3814 = vmatpush.bf16.msra.mxu0 0
    %3815 = vmatpush.bf16.msra.mxu0 0
    %3816 = vmatpush.bf16.msra.mxu0 0
    %3817 = vmatpush.bf16.msra.mxu0 0
    %3818 = vmatpush.bf16.msra.mxu0 %v3797
    %3819 = vmatpush.bf16.msra.mxu0 %v3796
    %3820 = vmatmul.bf16.gmra.mxu0 %v3801
    %v3821 = vpop.f32.mrf.mxu0
    %v3822 = vadd.f32 %v3786, %v3821
    %v3823 = vpop.f32.mrf.mxu0
    %v3824 = vadd.f32 %v3786, %v3823
    %3825 = vmatmul.bf16.gmra.mxu0 %v3804
    %v3826 = vpop.f32.mrf.mxu0
    %v3827 = vadd.f32 %v3786, %v3826
    %v3828 = vpop.f32.mrf.mxu0
    %v3829 = vadd.f32 %v3786, %v3828
    %3830 = vmatmul.bf16.gmra.mxu0 %v3807
    %v3831 = vpop.f32.mrf.mxu0
    %v3832 = vadd.f32 %v3786, %v3831
    %v3833 = vpop.f32.mrf.mxu0
    %v3834 = vadd.f32 %v3786, %v3833
    %3835 = vmatmul.bf16.gmra.mxu0 %v3810
    %v3836 = vpop.f32.mrf.mxu0
    %v3837 = vadd.f32 %v3786, %v3836
    %v3838 = vpop.f32.mrf.mxu0
    %v3839 = vadd.f32 %v3786, %v3838
    %3840 = vdwg.mxu0
    %3841 = vst [vmem:[#allocation4] sm:$0xff] %v3822
    %3842 = vst [vmem:[#allocation4 + $0x8] sm:$0xff] %v3824
    %3843 = vst [vmem:[#allocation4 + $0x10] sm:$0xff] %v3827
    %3844 = vst [vmem:[#allocation4 + $0x18] sm:$0xff] %v3829
    %3845 = vst [vmem:[#allocation4 + $0x20] sm:$0xff] %v3832
    %3846 = vst [vmem:[#allocation4 + $0x28] sm:$0xff] %v3834
    %3847 = vst [vmem:[#allocation4 + $0x30] sm:$0xff] %v3837
    %3848 = vst [vmem:[#allocation4 + $0x38] sm:$0xff] %v3839
    %v3849 = vld [vmem:[#allocation4] sm:$0xff]
    %v3850 = vpack.c.bf16 %v3755, %v3755
    %3852 = vrot.lane.b32.xlu0 %v3850, 64
    %v3853 = vpop.permute.xlu0 %3852
    %v3858 = vunpack.c.l.b16 %v3767
    %v3859 = vunpack.c.l.b16 %v3768
    %v3860 = vunpack.c.l.b16 %v3769
    %v3861 = vunpack.c.l.b16 %v3770
    %v3862 = vpack.c.b16 %v3859, %v3858
    %v3863 = vpack.c.b16 %v3861, %v3860
    %v3867 = vsel %vm141, %v3853, 0
    %3869 = vmatpush.bf16.msra.mxu0 0
    %3870 = vmatpush.bf16.msra.mxu0 0
    %3871 = vmatpush.bf16.msra.mxu0 0
    %3872 = vmatpush.bf16.msra.mxu0 0
    %3873 = vmatpush.bf16.msra.mxu0 0
    %3874 = vmatpush.bf16.msra.mxu0 0
    %3875 = vmatpush.bf16.msra.mxu0 %v3863
    %3876 = vmatpush.bf16.msra.mxu0 %v3862
    %3877 = vmatmul.bf16.gmra.mxu0 %v3867
    %v3878 = vpop.f32.mrf.mxu0
    %v3879 = vadd.f32 0.0, %v3878
    %v3880 = vpop.f32.mrf.mxu0
    %3881 = vdwg.mxu0
    %v3882 = vadd.f32 %v3849, %v3879
    %v3883 = vxor.u32 %v3882, 2147483648
    %v3884 = vmul.f32 %v3883, 1.442695
    %v3885 = vpow.pop %v3884
    %v3886 = vadd.f32 %v3885, 1.0
    %v3887 = vrcp.pop %v3886
    %v3888 = vmul.f32 %v3886, %v3887
    %v3889 = vsub.f32 1.0, %v3888
    %v3890 = vmul.f32 %v3887, %v3889
    %v3891 = vadd.f32 %v3887, %v3890
    %vm3892 = vweird.f32 %v3886
    %vm3893 = vweird.f32 %v3887
    %vm3894 = vmor %vm3892, %vm3893
    %v3895 = vsel %vm3894, %v3887, %v3891
    %v3896 = vand.u32 2147483647, %v3886
    %vm3897 = vcmp.eq.f32.partialorder %v3896, 8.507059e+37
    %v3898 = vand.u32 %v3886, 2147483648
    %v3899 = vor.u32 1.1754944e-38, %v3898
    %v3900 = vsel %vm3897, %v3899, %v3895
    %v3901 = vmul.f32 1.0, %v3900
    %v3902 = vtanh.pop %v3882
    %v3903 = vmul.f32 %v3901, %v3749
    %3905 = vrot.lane.b32.xlu0 %v3902, 32
    %v3906 = vpop.permute.xlu0 %3905
    %v3908 = vmul.f32 %v3901, %v3906
    %3910 = vrot.lane.b32.xlu0 %v3908, 32
    %v3911 = vpop.permute.xlu0 %3910
    %v3913 = vadd.f32 %v3903, %v3911
    %v3914 = vtanh.pop %v3913
    %3916 = vrot.lane.b32.xlu0 %v3914, 32
    %v3917 = vpop.permute.xlu0 %3916
    %v3919 = vmul.f32 %v3901, %v3917
    %v3920 = vld [vmem:[#allocation2] sm:$0xff]
    %3922 = vrot.lane.b32.xlu0 %v3919, 64
    %v3923 = vpop.permute.xlu0 %3922
    %v3925 = vadd.f32 %v3920, %v3923
    %3926 = vst.msk [vmem:[#allocation2] sm:$0xff] %vm141, %v3925
    %v3927 = vld [vmem:[%s201] sm:$0xff]
    %v3928 = vpack.c.bf16 %v3919, %v3919
    %3930 = vrot.lane.b32.xlu0 %v3928, 64
    %v3931 = vpop.permute.xlu0 %3930
    %v3933 = vsel %vm141, %v3931, 0
    %3935 = vmatpush.bf16.msra.mxu0 0
    %3936 = vmatpush.bf16.msra.mxu0 0
    %3937 = vmatpush.bf16.msra.mxu0 0
    %3938 = vmatpush.bf16.msra.mxu0 0
    %3939 = vmatpush.bf16.msra.mxu0 0
    %3940 = vmatpush.bf16.msra.mxu0 0
    %3941 = vmatpush.bf16.msra.mxu0 %v3863
    %3942 = vmatpush.bf16.msra.mxu0 %v3862
    %3943 = vmatmul.bf16.gmra.mxu0 %v3933
    %v3944 = vpop.f32.mrf.mxu0
    %v3945 = vadd.f32 0.0, %v3944
    %v3946 = vpop.f32.mrf.mxu0
    %3947 = vdwg.mxu0
    %v3948 = vadd.f32 %v3927, %v3945
    %v3949 = vxor.u32 %v3948, 2147483648
    %v3950 = vmul.f32 %v3949, 1.442695
    %v3951 = vpow.pop %v3950
    %v3952 = vadd.f32 %v3951, 1.0
    %v3953 = vrcp.pop %v3952
    %v3954 = vmul.f32 %v3952, %v3953
    %v3955 = vsub.f32 1.0, %v3954
    %v3956 = vmul.f32 %v3953, %v3955
    %v3957 = vadd.f32 %v3953, %v3956
    %vm3958 = vweird.f32 %v3952
    %vm3959 = vweird.f32 %v3953
    %vm3960 = vmor %vm3958, %vm3959
    %v3961 = vsel %vm3960, %v3953, %v3957
    %v3962 = vand.u32 2147483647, %v3952
    %vm3963 = vcmp.eq.f32.partialorder %v3962, 8.507059e+37
    %v3964 = vand.u32 %v3952, 2147483648
    %v3965 = vor.u32 1.1754944e-38, %v3964
    %v3966 = vsel %vm3963, %v3965, %v3961
    %v3967 = vmul.f32 1.0, %v3966
    %v3968 = vtanh.pop %v3948
    %v3969 = vmul.f32 %v3967, %v3913
    %3971 = vrot.lane.b32.xlu0 %v3968, 32
    %v3972 = vpop.permute.xlu0 %3971
    %v3974 = vmul.f32 %v3967, %v3972
    %3976 = vrot.lane.b32.xlu0 %v3974, 32
    %v3977 = vpop.permute.xlu0 %3976
    %v3979 = vadd.f32 %v3969, %v3977
    %v3980 = vtanh.pop %v3979
    %3982 = vrot.lane.b32.xlu0 %v3980, 32
    %v3983 = vpop.permute.xlu0 %3982
    %v3985 = vmul.f32 %v3967, %v3983
    %v3986 = vld [vmem:[%s265] sm:$0xff]
    %3988 = vrot.lane.b32.xlu0 %v3985, 64
    %v3989 = vpop.permute.xlu0 %3988
    %v3991 = vadd.f32 %v3986, %v3989
    %3992 = vst.msk [vmem:[%s265] sm:$0xff] %vm141, %v3991
    %v3993 = vld [vmem:[%s267] sm:$0xff]
    %v3994 = vpack.c.bf16 %v3985, %v3985
    %3996 = vrot.lane.b32.xlu0 %v3994, 64
    %v3997 = vpop.permute.xlu0 %3996
    %v3999 = vsel %vm141, %v3997, 0
    %4001 = vmatpush.bf16.msra.mxu0 0
    %4002 = vmatpush.bf16.msra.mxu0 0
    %4003 = vmatpush.bf16.msra.mxu0 0
    %4004 = vmatpush.bf16.msra.mxu0 0
    %4005 = vmatpush.bf16.msra.mxu0 0
    %4006 = vmatpush.bf16.msra.mxu0 0
    %4007 = vmatpush.bf16.msra.mxu0 %v3863
    %4008 = vmatpush.bf16.msra.mxu0 %v3862
    %4009 = vmatmul.bf16.gmra.mxu0 %v3999
    %v4010 = vpop.f32.mrf.mxu0
    %v4011 = vadd.f32 0.0, %v4010
    %v4012 = vpop.f32.mrf.mxu0
    %4013 = vdwg.mxu0
    %v4014 = vadd.f32 %v3993, %v4011
    %v4015 = vxor.u32 %v4014, 2147483648
    %v4016 = vmul.f32 %v4015, 1.442695
    %v4017 = vpow.pop %v4016
    %v4018 = vadd.f32 %v4017, 1.0
    %v4019 = vrcp.pop %v4018
    %v4020 = vmul.f32 %v4018, %v4019
    %v4021 = vsub.f32 1.0, %v4020
    %v4022 = vmul.f32 %v4019, %v4021
    %v4023 = vadd.f32 %v4019, %v4022
    %vm4024 = vweird.f32 %v4018
    %vm4025 = vweird.f32 %v4019
    %vm4026 = vmor %vm4024, %vm4025
    %v4027 = vsel %vm4026, %v4019, %v4023
    %v4028 = vand.u32 2147483647, %v4018
    %vm4029 = vcmp.eq.f32.partialorder %v4028, 8.507059e+37
    %v4030 = vand.u32 %v4018, 2147483648
    %v4031 = vor.u32 1.1754944e-38, %v4030
    %v4032 = vsel %vm4029, %v4031, %v4027
    %v4033 = vmul.f32 1.0, %v4032
    %v4034 = vtanh.pop %v4014
    %v4035 = vmul.f32 %v4033, %v3979
    %4037 = vrot.lane.b32.xlu0 %v4034, 32
    %v4038 = vpop.permute.xlu0 %4037
    %v4040 = vmul.f32 %v4033, %v4038
    %4042 = vrot.lane.b32.xlu0 %v4040, 32
    %v4043 = vpop.permute.xlu0 %4042
    %v4045 = vadd.f32 %v4035, %v4043
    %v4046 = vtanh.pop %v4045
    %4048 = vrot.lane.b32.xlu0 %v4046, 32
    %v4049 = vpop.permute.xlu0 %4048
    %v4051 = vmul.f32 %v4033, %v4049
    %v4052 = vld [vmem:[%s331] sm:$0xff]
    %4054 = vrot.lane.b32.xlu0 %v4051, 64
    %v4055 = vpop.permute.xlu0 %4054
    %v4057 = vadd.f32 %v4052, %v4055
    %4058 = vst.msk [vmem:[%s331] sm:$0xff] %vm141, %v4057
    %v4059 = vld [vmem:[%s333] sm:$0xff]
    %v4060 = vpack.c.bf16 %v4051, %v4051
    %4062 = vrot.lane.b32.xlu0 %v4060, 64
    %v4063 = vpop.permute.xlu0 %4062
    %v4065 = vsel %vm141, %v4063, 0
    %4067 = vmatpush.bf16.msra.mxu0 0
    %4068 = vmatpush.bf16.msra.mxu0 0
    %4069 = vmatpush.bf16.msra.mxu0 0
    %4070 = vmatpush.bf16.msra.mxu0 0
    %4071 = vmatpush.bf16.msra.mxu0 0
    %4072 = vmatpush.bf16.msra.mxu0 0
    %4073 = vmatpush.bf16.msra.mxu0 %v3863
    %4074 = vmatpush.bf16.msra.mxu0 %v3862
    %4075 = vmatmul.bf16.gmra.mxu0 %v4065
    %v4076 = vpop.f32.mrf.mxu0
    %v4077 = vadd.f32 0.0, %v4076
    %v4078 = vpop.f32.mrf.mxu0
    %4079 = vdwg.mxu0
    %v4080 = vadd.f32 %v4059, %v4077
    %v4081 = vxor.u32 %v4080, 2147483648
    %v4082 = vmul.f32 %v4081, 1.442695
    %v4083 = vpow.pop %v4082
    %v4084 = vadd.f32 %v4083, 1.0
    %v4085 = vrcp.pop %v4084
    %v4086 = vmul.f32 %v4084, %v4085
    %v4087 = vsub.f32 1.0, %v4086
    %v4088 = vmul.f32 %v4085, %v4087
    %v4089 = vadd.f32 %v4085, %v4088
    %vm4090 = vweird.f32 %v4084
    %vm4091 = vweird.f32 %v4085
    %vm4092 = vmor %vm4090, %vm4091
    %v4093 = vsel %vm4092, %v4085, %v4089
    %v4094 = vand.u32 2147483647, %v4084
    %vm4095 = vcmp.eq.f32.partialorder %v4094, 8.507059e+37
    %v4096 = vand.u32 %v4084, 2147483648
    %v4097 = vor.u32 1.1754944e-38, %v4096
    %v4098 = vsel %vm4095, %v4097, %v4093
    %v4099 = vmul.f32 1.0, %v4098
    %v4100 = vtanh.pop %v4080
    %v4101 = vmul.f32 %v4099, %v4045
    %4103 = vrot.lane.b32.xlu0 %v4100, 32
    %v4104 = vpop.permute.xlu0 %4103
    %v4106 = vmul.f32 %v4099, %v4104
    %4108 = vrot.lane.b32.xlu0 %v4106, 32
    %v4109 = vpop.permute.xlu0 %4108
    %v4111 = vadd.f32 %v4101, %v4109
    %v4112 = vtanh.pop %v4111
    %4114 = vrot.lane.b32.xlu0 %v4112, 32
    %v4115 = vpop.permute.xlu0 %4114
    %v4117 = vmul.f32 %v4099, %v4115
    %v4118 = vld [vmem:[%s397] sm:$0xff]
    %4120 = vrot.lane.b32.xlu0 %v4117, 64
    %v4121 = vpop.permute.xlu0 %4120
    %v4123 = vadd.f32 %v4118, %v4121
    %4124 = vst.msk [vmem:[%s397] sm:$0xff] %vm141, %v4123
    %v4125 = vld [vmem:[%s399] sm:$0xff]
    %v4126 = vpack.c.bf16 %v4117, %v4117
    %4128 = vrot.lane.b32.xlu0 %v4126, 64
    %v4129 = vpop.permute.xlu0 %4128
    %v4131 = vsel %vm141, %v4129, 0
    %4133 = vmatpush.bf16.msra.mxu0 0
    %4134 = vmatpush.bf16.msra.mxu0 0
    %4135 = vmatpush.bf16.msra.mxu0 0
    %4136 = vmatpush.bf16.msra.mxu0 0
    %4137 = vmatpush.bf16.msra.mxu0 0
    %4138 = vmatpush.bf16.msra.mxu0 0
    %4139 = vmatpush.bf16.msra.mxu0 %v3863
    %4140 = vmatpush.bf16.msra.mxu0 %v3862
    %4141 = vmatmul.bf16.gmra.mxu0 %v4131
    %v4142 = vpop.f32.mrf.mxu0
    %v4143 = vadd.f32 0.0, %v4142
    %v4144 = vpop.f32.mrf.mxu0
    %4145 = vdwg.mxu0
    %v4146 = vadd.f32 %v4125, %v4143
    %v4147 = vxor.u32 %v4146, 2147483648
    %v4148 = vmul.f32 %v4147, 1.442695
    %v4149 = vpow.pop %v4148
    %v4150 = vadd.f32 %v4149, 1.0
    %v4151 = vrcp.pop %v4150
    %v4152 = vmul.f32 %v4150, %v4151
    %v4153 = vsub.f32 1.0, %v4152
    %v4154 = vmul.f32 %v4151, %v4153
    %v4155 = vadd.f32 %v4151, %v4154
    %vm4156 = vweird.f32 %v4150
    %vm4157 = vweird.f32 %v4151
    %vm4158 = vmor %vm4156, %vm4157
    %v4159 = vsel %vm4158, %v4151, %v4155
    %v4160 = vand.u32 2147483647, %v4150
    %vm4161 = vcmp.eq.f32.partialorder %v4160, 8.507059e+37
    %v4162 = vand.u32 %v4150, 2147483648
    %v4163 = vor.u32 1.1754944e-38, %v4162
    %v4164 = vsel %vm4161, %v4163, %v4159
    %v4165 = vmul.f32 1.0, %v4164
    %v4166 = vtanh.pop %v4146
    %v4167 = vmul.f32 %v4165, %v4111
    %4169 = vrot.lane.b32.xlu0 %v4166, 32
    %v4170 = vpop.permute.xlu0 %4169
    %v4172 = vmul.f32 %v4165, %v4170
    %4174 = vrot.lane.b32.xlu0 %v4172, 32
    %v4175 = vpop.permute.xlu0 %4174
    %v4177 = vadd.f32 %v4167, %v4175
    %v4178 = vtanh.pop %v4177
    %4180 = vrot.lane.b32.xlu0 %v4178, 32
    %v4181 = vpop.permute.xlu0 %4180
    %v4183 = vmul.f32 %v4165, %v4181
    %v4184 = vld [vmem:[%s463] sm:$0xff]
    %4186 = vrot.lane.b32.xlu0 %v4183, 64
    %v4187 = vpop.permute.xlu0 %4186
    %v4189 = vadd.f32 %v4184, %v4187
    %4190 = vst.msk [vmem:[%s463] sm:$0xff] %vm141, %v4189
    %v4191 = vld [vmem:[%s465] sm:$0xff]
    %v4192 = vpack.c.bf16 %v4183, %v4183
    %4194 = vrot.lane.b32.xlu0 %v4192, 64
    %v4195 = vpop.permute.xlu0 %4194
    %v4197 = vsel %vm141, %v4195, 0
    %4199 = vmatpush.bf16.msra.mxu0 0
    %4200 = vmatpush.bf16.msra.mxu0 0
    %4201 = vmatpush.bf16.msra.mxu0 0
    %4202 = vmatpush.bf16.msra.mxu0 0
    %4203 = vmatpush.bf16.msra.mxu0 0
    %4204 = vmatpush.bf16.msra.mxu0 0
    %4205 = vmatpush.bf16.msra.mxu0 %v3863
    %4206 = vmatpush.bf16.msra.mxu0 %v3862
    %4207 = vmatmul.bf16.gmra.mxu0 %v4197
    %v4208 = vpop.f32.mrf.mxu0
    %v4209 = vadd.f32 0.0, %v4208
    %v4210 = vpop.f32.mrf.mxu0
    %4211 = vdwg.mxu0
    %v4212 = vadd.f32 %v4191, %v4209
    %v4213 = vxor.u32 %v4212, 2147483648
    %v4214 = vmul.f32 %v4213, 1.442695
    %v4215 = vpow.pop %v4214
    %v4216 = vadd.f32 %v4215, 1.0
    %v4217 = vrcp.pop %v4216
    %v4218 = vmul.f32 %v4216, %v4217
    %v4219 = vsub.f32 1.0, %v4218
    %v4220 = vmul.f32 %v4217, %v4219
    %v4221 = vadd.f32 %v4217, %v4220
    %vm4222 = vweird.f32 %v4216
    %vm4223 = vweird.f32 %v4217
    %vm4224 = vmor %vm4222, %vm4223
    %v4225 = vsel %vm4224, %v4217, %v4221
    %v4226 = vand.u32 2147483647, %v4216
    %vm4227 = vcmp.eq.f32.partialorder %v4226, 8.507059e+37
    %v4228 = vand.u32 %v4216, 2147483648
    %v4229 = vor.u32 1.1754944e-38, %v4228
    %v4230 = vsel %vm4227, %v4229, %v4225
    %v4231 = vmul.f32 1.0, %v4230
    %v4232 = vtanh.pop %v4212
    %v4233 = vmul.f32 %v4231, %v4177
    %4235 = vrot.lane.b32.xlu0 %v4232, 32
    %v4236 = vpop.permute.xlu0 %4235
    %v4238 = vmul.f32 %v4231, %v4236
    %4240 = vrot.lane.b32.xlu0 %v4238, 32
    %v4241 = vpop.permute.xlu0 %4240
    %v4243 = vadd.f32 %v4233, %v4241
    %v4244 = vtanh.pop %v4243
    %4246 = vrot.lane.b32.xlu0 %v4244, 32
    %v4247 = vpop.permute.xlu0 %4246
    %v4249 = vmul.f32 %v4231, %v4247
    %v4250 = vld [vmem:[%s529] sm:$0xff]
    %4252 = vrot.lane.b32.xlu0 %v4249, 64
    %v4253 = vpop.permute.xlu0 %4252
    %v4255 = vadd.f32 %v4250, %v4253
    %4256 = vst.msk [vmem:[%s529] sm:$0xff] %vm141, %v4255
    %v4257 = vld [vmem:[%s531] sm:$0xff]
    %v4258 = vpack.c.bf16 %v4249, %v4249
    %4260 = vrot.lane.b32.xlu0 %v4258, 64
    %v4261 = vpop.permute.xlu0 %4260
    %v4263 = vsel %vm141, %v4261, 0
    %4265 = vmatpush.bf16.msra.mxu0 0
    %4266 = vmatpush.bf16.msra.mxu0 0
    %4267 = vmatpush.bf16.msra.mxu0 0
    %4268 = vmatpush.bf16.msra.mxu0 0
    %4269 = vmatpush.bf16.msra.mxu0 0
    %4270 = vmatpush.bf16.msra.mxu0 0
    %4271 = vmatpush.bf16.msra.mxu0 %v3863
    %4272 = vmatpush.bf16.msra.mxu0 %v3862
    %4273 = vmatmul.bf16.gmra.mxu0 %v4263
    %v4274 = vpop.f32.mrf.mxu0
    %v4275 = vadd.f32 0.0, %v4274
    %v4276 = vpop.f32.mrf.mxu0
    %4277 = vdwg.mxu0
    %v4278 = vadd.f32 %v4257, %v4275
    %v4279 = vxor.u32 %v4278, 2147483648
    %v4280 = vmul.f32 %v4279, 1.442695
    %v4281 = vpow.pop %v4280
    %v4282 = vadd.f32 %v4281, 1.0
    %v4283 = vrcp.pop %v4282
    %v4284 = vmul.f32 %v4282, %v4283
    %v4285 = vsub.f32 1.0, %v4284
    %v4286 = vmul.f32 %v4283, %v4285
    %v4287 = vadd.f32 %v4283, %v4286
    %vm4288 = vweird.f32 %v4282
    %vm4289 = vweird.f32 %v4283
    %vm4290 = vmor %vm4288, %vm4289
    %v4291 = vsel %vm4290, %v4283, %v4287
    %v4292 = vand.u32 2147483647, %v4282
    %vm4293 = vcmp.eq.f32.partialorder %v4292, 8.507059e+37
    %v4294 = vand.u32 %v4282, 2147483648
    %v4295 = vor.u32 1.1754944e-38, %v4294
    %v4296 = vsel %vm4293, %v4295, %v4291
    %v4297 = vmul.f32 1.0, %v4296
    %v4298 = vtanh.pop %v4278
    %v4299 = vmul.f32 %v4297, %v4243
    %4301 = vrot.lane.b32.xlu0 %v4298, 32
    %v4302 = vpop.permute.xlu0 %4301
    %v4304 = vmul.f32 %v4297, %v4302
    %4306 = vrot.lane.b32.xlu0 %v4304, 32
    %v4307 = vpop.permute.xlu0 %4306
    %v4309 = vadd.f32 %v4299, %v4307
    %v4310 = vtanh.pop %v4309
    %4312 = vrot.lane.b32.xlu0 %v4310, 32
    %v4313 = vpop.permute.xlu0 %4312
    %v4315 = vmul.f32 %v4297, %v4313
    %v4316 = vld [vmem:[%s595] sm:$0xff]
    %4318 = vrot.lane.b32.xlu0 %v4315, 64
    %v4319 = vpop.permute.xlu0 %4318
    %v4321 = vadd.f32 %v4316, %v4319
    %4322 = vst.msk [vmem:[%s595] sm:$0xff] %vm141, %v4321
    %v4323 = vld [vmem:[%s597] sm:$0xff]
    %v4324 = vpack.c.bf16 %v4315, %v4315
    %4326 = vrot.lane.b32.xlu0 %v4324, 64
    %v4327 = vpop.permute.xlu0 %4326
    %v4329 = vsel %vm141, %v4327, 0
    %4331 = vmatpush.bf16.msra.mxu0 0
    %4332 = vmatpush.bf16.msra.mxu0 0
    %4333 = vmatpush.bf16.msra.mxu0 0
    %4334 = vmatpush.bf16.msra.mxu0 0
    %4335 = vmatpush.bf16.msra.mxu0 0
    %4336 = vmatpush.bf16.msra.mxu0 0
    %4337 = vmatpush.bf16.msra.mxu0 %v3863
    %4338 = vmatpush.bf16.msra.mxu0 %v3862
    %4339 = vmatmul.bf16.gmra.mxu0 %v4329
    %v4340 = vpop.f32.mrf.mxu0
    %v4341 = vadd.f32 0.0, %v4340
    %v4342 = vpop.f32.mrf.mxu0
    %4343 = vdwg.mxu0
    %v4344 = vadd.f32 %v4323, %v4341
    %v4345 = vxor.u32 %v4344, 2147483648
    %v4346 = vmul.f32 %v4345, 1.442695
    %v4347 = vpow.pop %v4346
    %v4348 = vadd.f32 %v4347, 1.0
    %v4349 = vrcp.pop %v4348
    %v4350 = vmul.f32 %v4348, %v4349
    %v4351 = vsub.f32 1.0, %v4350
    %v4352 = vmul.f32 %v4349, %v4351
    %v4353 = vadd.f32 %v4349, %v4352
    %vm4354 = vweird.f32 %v4348
    %vm4355 = vweird.f32 %v4349
    %vm4356 = vmor %vm4354, %vm4355
    %v4357 = vsel %vm4356, %v4349, %v4353
    %v4358 = vand.u32 2147483647, %v4348
    %vm4359 = vcmp.eq.f32.partialorder %v4358, 8.507059e+37
    %v4360 = vand.u32 %v4348, 2147483648
    %v4361 = vor.u32 1.1754944e-38, %v4360
    %v4362 = vsel %vm4359, %v4361, %v4357
    %v4363 = vmul.f32 1.0, %v4362
    %v4364 = vtanh.pop %v4344
    %v4365 = vmul.f32 %v4363, %v4309
    %4367 = vrot.lane.b32.xlu0 %v4364, 32
    %v4368 = vpop.permute.xlu0 %4367
    %v4370 = vmul.f32 %v4363, %v4368
    %4372 = vrot.lane.b32.xlu0 %v4370, 32
    %v4373 = vpop.permute.xlu0 %4372
    %v4375 = vadd.f32 %v4365, %v4373
    %v4376 = vtanh.pop %v4375
    %4378 = vrot.lane.b32.xlu0 %v4376, 32
    %v4379 = vpop.permute.xlu0 %4378
    %v4381 = vmul.f32 %v4363, %v4379
    %v4382 = vld [vmem:[%s661] sm:$0xff]
    %4384 = vrot.lane.b32.xlu0 %v4381, 64
    %v4385 = vpop.permute.xlu0 %4384
    %v4387 = vadd.f32 %v4382, %v4385
    %4388 = vst.msk [vmem:[%s661] sm:$0xff] %vm141, %v4387
    %s4389 = scalar_lea.vmem [#allocation5], 96
    %v4390 = vld [vmem:[%s4389] sm:$0xf]
    %v4391 = vld [vmem:[%s4389 + $0x4] sm:$0xf]
    %v4392 = vld [vmem:[%s4389 + $0x8] sm:$0xf]
    %v4393 = vld [vmem:[%s4389 + $0xc] sm:$0xf]
    %s4394 = scalar_lea.vmem [#allocation7], 112
    %v4395 = vld [vmem:[%s4394] sm:$0xf]
    %v4396 = vld [vmem:[%s4394 + $0x4] sm:$0xf]
    %v4397 = vld [vmem:[%s4394 + $0x8] sm:$0xf]
    %v4398 = vld [vmem:[%s4394 + $0xc] sm:$0xf]
    %s4399 = scalar_lea.vmem %s4, 7
    %v4400 = vld [vmem:[%s4399] sm:$0x1]
    %v4401 = vld [vmem:[#allocation2] sm:$0xff]
    %v4402 = vld [vmem:[#allocation2 + $0x8] sm:$0xff]
    %v4403 = vld [vmem:[#allocation2 + $0x10] sm:$0xff]
    %v4404 = vld [vmem:[#allocation2 + $0x18] sm:$0xff]
    %v4405 = vld [vmem:[#allocation2 + $0x20] sm:$0xff]
    %v4406 = vld [vmem:[#allocation2 + $0x28] sm:$0xff]
    %v4407 = vld [vmem:[#allocation2 + $0x30] sm:$0xff]
    %v4408 = vld [vmem:[#allocation2 + $0x38] sm:$0xff]
    %v4409 = vpack.c.bf16 %v4402, %v4401
    %v4410 = vpack.c.bf16 %v4404, %v4403
    %v4411 = vpack.c.bf16 %v4406, %v4405
    %v4412 = vpack.c.bf16 %v4408, %v4407
    %v4414 = vperm.slane %v4400, 0
    %v4420 = vunpack.c.l.b16 %v4390
    %v4421 = vunpack.c.l.b16 %v4391
    %v4422 = vunpack.c.l.b16 %v4392
    %v4423 = vunpack.c.l.b16 %v4393
    %v4424 = vpack.c.b16 %v4421, %v4420
    %v4425 = vpack.c.b16 %v4423, %v4422
    %v4429 = vsel %vm141, %v4409, 0
    %v4432 = vsel %vm141, %v4410, 0
    %v4435 = vsel %vm141, %v4411, 0
    %v4438 = vsel %vm141, %v4412, 0
    %4440 = vmatpush.bf16.msra.mxu0 0
    %4441 = vmatpush.bf16.msra.mxu0 0
    %4442 = vmatpush.bf16.msra.mxu0 0
    %4443 = vmatpush.bf16.msra.mxu0 0
    %4444 = vmatpush.bf16.msra.mxu0 0
    %4445 = vmatpush.bf16.msra.mxu0 0
    %4446 = vmatpush.bf16.msra.mxu0 %v4425
    %4447 = vmatpush.bf16.msra.mxu0 %v4424
    %4448 = vmatmul.bf16.gmra.mxu0 %v4429
    %v4449 = vpop.f32.mrf.mxu0
    %v4450 = vadd.f32 %v4414, %v4449
    %v4451 = vpop.f32.mrf.mxu0
    %v4452 = vadd.f32 %v4414, %v4451
    %4453 = vmatmul.bf16.gmra.mxu0 %v4432
    %v4454 = vpop.f32.mrf.mxu0
    %v4455 = vadd.f32 %v4414, %v4454
    %v4456 = vpop.f32.mrf.mxu0
    %v4457 = vadd.f32 %v4414, %v4456
    %4458 = vmatmul.bf16.gmra.mxu0 %v4435
    %v4459 = vpop.f32.mrf.mxu0
    %v4460 = vadd.f32 %v4414, %v4459
    %v4461 = vpop.f32.mrf.mxu0
    %v4462 = vadd.f32 %v4414, %v4461
    %4463 = vmatmul.bf16.gmra.mxu0 %v4438
    %v4464 = vpop.f32.mrf.mxu0
    %v4465 = vadd.f32 %v4414, %v4464
    %v4466 = vpop.f32.mrf.mxu0
    %v4467 = vadd.f32 %v4414, %v4466
    %4468 = vdwg.mxu0
    %4469 = vst [vmem:[#allocation4] sm:$0xff] %v4450
    %4470 = vst [vmem:[#allocation4 + $0x8] sm:$0xff] %v4452
    %4471 = vst [vmem:[#allocation4 + $0x10] sm:$0xff] %v4455
    %4472 = vst [vmem:[#allocation4 + $0x18] sm:$0xff] %v4457
    %4473 = vst [vmem:[#allocation4 + $0x20] sm:$0xff] %v4460
    %4474 = vst [vmem:[#allocation4 + $0x28] sm:$0xff] %v4462
    %4475 = vst [vmem:[#allocation4 + $0x30] sm:$0xff] %v4465
    %4476 = vst [vmem:[#allocation4 + $0x38] sm:$0xff] %v4467
    %v4477 = vld [vmem:[#allocation4] sm:$0xff]
    %v4478 = vpack.c.bf16 %v4381, %v4381
    %4480 = vrot.lane.b32.xlu0 %v4478, 64
    %v4481 = vpop.permute.xlu0 %4480
    %v4486 = vunpack.c.l.b16 %v4395
    %v4487 = vunpack.c.l.b16 %v4396
    %v4488 = vunpack.c.l.b16 %v4397
    %v4489 = vunpack.c.l.b16 %v4398
    %v4490 = vpack.c.b16 %v4487, %v4486
    %v4491 = vpack.c.b16 %v4489, %v4488
    %v4495 = vsel %vm141, %v4481, 0
    %4497 = vmatpush.bf16.msra.mxu0 0
    %4498 = vmatpush.bf16.msra.mxu0 0
    %4499 = vmatpush.bf16.msra.mxu0 0
    %4500 = vmatpush.bf16.msra.mxu0 0
    %4501 = vmatpush.bf16.msra.mxu0 0
    %4502 = vmatpush.bf16.msra.mxu0 0
    %4503 = vmatpush.bf16.msra.mxu0 %v4491
    %4504 = vmatpush.bf16.msra.mxu0 %v4490
    %4505 = vmatmul.bf16.gmra.mxu0 %v4495
    %v4506 = vpop.f32.mrf.mxu0
    %v4507 = vadd.f32 0.0, %v4506
    %v4508 = vpop.f32.mrf.mxu0
    %4509 = vdwg.mxu0
    %v4510 = vadd.f32 %v4477, %v4507
    %v4511 = vxor.u32 %v4510, 2147483648
    %v4512 = vmul.f32 %v4511, 1.442695
    %v4513 = vpow.pop %v4512
    %v4514 = vadd.f32 %v4513, 1.0
    %v4515 = vrcp.pop %v4514
    %v4516 = vmul.f32 %v4514, %v4515
    %v4517 = vsub.f32 1.0, %v4516
    %v4518 = vmul.f32 %v4515, %v4517
    %v4519 = vadd.f32 %v4515, %v4518
    %vm4520 = vweird.f32 %v4514
    %vm4521 = vweird.f32 %v4515
    %vm4522 = vmor %vm4520, %vm4521
    %v4523 = vsel %vm4522, %v4515, %v4519
    %v4524 = vand.u32 2147483647, %v4514
    %vm4525 = vcmp.eq.f32.partialorder %v4524, 8.507059e+37
    %v4526 = vand.u32 %v4514, 2147483648
    %v4527 = vor.u32 1.1754944e-38, %v4526
    %v4528 = vsel %vm4525, %v4527, %v4523
    %v4529 = vmul.f32 1.0, %v4528
    %v4530 = vtanh.pop %v4510
    %v4531 = vmul.f32 %v4529, %v4375
    %4533 = vrot.lane.b32.xlu0 %v4530, 32
    %v4534 = vpop.permute.xlu0 %4533
    %v4536 = vmul.f32 %v4529, %v4534
    %4538 = vrot.lane.b32.xlu0 %v4536, 32
    %v4539 = vpop.permute.xlu0 %4538
    %v4541 = vadd.f32 %v4531, %v4539
    %v4542 = vtanh.pop %v4541
    %4544 = vrot.lane.b32.xlu0 %v4542, 32
    %v4545 = vpop.permute.xlu0 %4544
    %v4547 = vmul.f32 %v4529, %v4545
    %v4548 = vld [vmem:[%s201] sm:$0xff]
    %v4549 = vpack.c.bf16 %v4547, %v4547
    %4551 = vrot.lane.b32.xlu0 %v4549, 64
    %v4552 = vpop.permute.xlu0 %4551
    %v4554 = vsel %vm141, %v4552, 0
    %4556 = vmatpush.bf16.msra.mxu0 0
    %4557 = vmatpush.bf16.msra.mxu0 0
    %4558 = vmatpush.bf16.msra.mxu0 0
    %4559 = vmatpush.bf16.msra.mxu0 0
    %4560 = vmatpush.bf16.msra.mxu0 0
    %4561 = vmatpush.bf16.msra.mxu0 0
    %4562 = vmatpush.bf16.msra.mxu0 %v4491
    %4563 = vmatpush.bf16.msra.mxu0 %v4490
    %4564 = vmatmul.bf16.gmra.mxu0 %v4554
    %v4565 = vpop.f32.mrf.mxu0
    %v4566 = vadd.f32 0.0, %v4565
    %v4567 = vpop.f32.mrf.mxu0
    %4568 = vdwg.mxu0
    %v4569 = vadd.f32 %v4548, %v4566
    %v4570 = vxor.u32 %v4569, 2147483648
    %v4571 = vmul.f32 %v4570, 1.442695
    %v4572 = vpow.pop %v4571
    %v4573 = vadd.f32 %v4572, 1.0
    %v4574 = vrcp.pop %v4573
    %v4575 = vmul.f32 %v4573, %v4574
    %v4576 = vsub.f32 1.0, %v4575
    %v4577 = vmul.f32 %v4574, %v4576
    %v4578 = vadd.f32 %v4574, %v4577
    %vm4579 = vweird.f32 %v4573
    %vm4580 = vweird.f32 %v4574
    %vm4581 = vmor %vm4579, %vm4580
    %v4582 = vsel %vm4581, %v4574, %v4578
    %v4583 = vand.u32 2147483647, %v4573
    %vm4584 = vcmp.eq.f32.partialorder %v4583, 8.507059e+37
    %v4585 = vand.u32 %v4573, 2147483648
    %v4586 = vor.u32 1.1754944e-38, %v4585
    %v4587 = vsel %vm4584, %v4586, %v4582
    %v4588 = vmul.f32 1.0, %v4587
    %v4589 = vtanh.pop %v4569
    %v4590 = vmul.f32 %v4588, %v4541
    %4592 = vrot.lane.b32.xlu0 %v4589, 32
    %v4593 = vpop.permute.xlu0 %4592
    %v4595 = vmul.f32 %v4588, %v4593
    %4597 = vrot.lane.b32.xlu0 %v4595, 32
    %v4598 = vpop.permute.xlu0 %4597
    %v4600 = vadd.f32 %v4590, %v4598
    %v4601 = vtanh.pop %v4600
    %4603 = vrot.lane.b32.xlu0 %v4601, 32
    %v4604 = vpop.permute.xlu0 %4603
    %v4606 = vmul.f32 %v4588, %v4604
    %v4607 = vld [vmem:[%s267] sm:$0xff]
    %v4608 = vpack.c.bf16 %v4606, %v4606
    %4610 = vrot.lane.b32.xlu0 %v4608, 64
    %v4611 = vpop.permute.xlu0 %4610
    %v4613 = vsel %vm141, %v4611, 0
    %4615 = vmatpush.bf16.msra.mxu0 0
    %4616 = vmatpush.bf16.msra.mxu0 0
    %4617 = vmatpush.bf16.msra.mxu0 0
    %4618 = vmatpush.bf16.msra.mxu0 0
    %4619 = vmatpush.bf16.msra.mxu0 0
    %4620 = vmatpush.bf16.msra.mxu0 0
    %4621 = vmatpush.bf16.msra.mxu0 %v4491
    %4622 = vmatpush.bf16.msra.mxu0 %v4490
    %4623 = vmatmul.bf16.gmra.mxu0 %v4613
    %v4624 = vpop.f32.mrf.mxu0
    %v4625 = vadd.f32 0.0, %v4624
    %v4626 = vpop.f32.mrf.mxu0
    %4627 = vdwg.mxu0
    %v4628 = vadd.f32 %v4607, %v4625
    %v4629 = vxor.u32 %v4628, 2147483648
    %v4630 = vmul.f32 %v4629, 1.442695
    %v4631 = vpow.pop %v4630
    %v4632 = vadd.f32 %v4631, 1.0
    %v4633 = vrcp.pop %v4632
    %v4634 = vmul.f32 %v4632, %v4633
    %v4635 = vsub.f32 1.0, %v4634
    %v4636 = vmul.f32 %v4633, %v4635
    %v4637 = vadd.f32 %v4633, %v4636
    %vm4638 = vweird.f32 %v4632
    %vm4639 = vweird.f32 %v4633
    %vm4640 = vmor %vm4638, %vm4639
    %v4641 = vsel %vm4640, %v4633, %v4637
    %v4642 = vand.u32 2147483647, %v4632
    %vm4643 = vcmp.eq.f32.partialorder %v4642, 8.507059e+37
    %v4644 = vand.u32 %v4632, 2147483648
    %v4645 = vor.u32 1.1754944e-38, %v4644
    %v4646 = vsel %vm4643, %v4645, %v4641
    %v4647 = vmul.f32 1.0, %v4646
    %v4648 = vtanh.pop %v4628
    %v4649 = vmul.f32 %v4647, %v4600
    %4651 = vrot.lane.b32.xlu0 %v4648, 32
    %v4652 = vpop.permute.xlu0 %4651
    %v4654 = vmul.f32 %v4647, %v4652
    %4656 = vrot.lane.b32.xlu0 %v4654, 32
    %v4657 = vpop.permute.xlu0 %4656
    %v4659 = vadd.f32 %v4649, %v4657
    %v4660 = vtanh.pop %v4659
    %4662 = vrot.lane.b32.xlu0 %v4660, 32
    %v4663 = vpop.permute.xlu0 %4662
    %v4665 = vmul.f32 %v4647, %v4663
    %v4666 = vld [vmem:[%s333] sm:$0xff]
    %v4667 = vpack.c.bf16 %v4665, %v4665
    %4669 = vrot.lane.b32.xlu0 %v4667, 64
    %v4670 = vpop.permute.xlu0 %4669
    %v4672 = vsel %vm141, %v4670, 0
    %4674 = vmatpush.bf16.msra.mxu0 0
    %4675 = vmatpush.bf16.msra.mxu0 0
    %4676 = vmatpush.bf16.msra.mxu0 0
    %4677 = vmatpush.bf16.msra.mxu0 0
    %4678 = vmatpush.bf16.msra.mxu0 0
    %4679 = vmatpush.bf16.msra.mxu0 0
    %4680 = vmatpush.bf16.msra.mxu0 %v4491
    %4681 = vmatpush.bf16.msra.mxu0 %v4490
    %4682 = vmatmul.bf16.gmra.mxu0 %v4672
    %v4683 = vpop.f32.mrf.mxu0
    %v4684 = vadd.f32 0.0, %v4683
    %v4685 = vpop.f32.mrf.mxu0
    %4686 = vdwg.mxu0
    %v4687 = vadd.f32 %v4666, %v4684
    %v4688 = vxor.u32 %v4687, 2147483648
    %v4689 = vmul.f32 %v4688, 1.442695
    %v4690 = vpow.pop %v4689
    %v4691 = vadd.f32 %v4690, 1.0
    %v4692 = vrcp.pop %v4691
    %v4693 = vmul.f32 %v4691, %v4692
    %v4694 = vsub.f32 1.0, %v4693
    %v4695 = vmul.f32 %v4692, %v4694
    %v4696 = vadd.f32 %v4692, %v4695
    %vm4697 = vweird.f32 %v4691
    %vm4698 = vweird.f32 %v4692
    %vm4699 = vmor %vm4697, %vm4698
    %v4700 = vsel %vm4699, %v4692, %v4696
    %v4701 = vand.u32 2147483647, %v4691
    %vm4702 = vcmp.eq.f32.partialorder %v4701, 8.507059e+37
    %v4703 = vand.u32 %v4691, 2147483648
    %v4704 = vor.u32 1.1754944e-38, %v4703
    %v4705 = vsel %vm4702, %v4704, %v4700
    %v4706 = vmul.f32 1.0, %v4705
    %v4707 = vtanh.pop %v4687
    %v4708 = vmul.f32 %v4706, %v4659
    %4710 = vrot.lane.b32.xlu0 %v4707, 32
    %v4711 = vpop.permute.xlu0 %4710
    %v4713 = vmul.f32 %v4706, %v4711
    %4715 = vrot.lane.b32.xlu0 %v4713, 32
    %v4716 = vpop.permute.xlu0 %4715
    %v4718 = vadd.f32 %v4708, %v4716
    %v4719 = vtanh.pop %v4718
    %4721 = vrot.lane.b32.xlu0 %v4719, 32
    %v4722 = vpop.permute.xlu0 %4721
    %v4724 = vmul.f32 %v4706, %v4722
    %v4725 = vld [vmem:[%s399] sm:$0xff]
    %v4726 = vpack.c.bf16 %v4724, %v4724
    %4728 = vrot.lane.b32.xlu0 %v4726, 64
    %v4729 = vpop.permute.xlu0 %4728
    %v4731 = vsel %vm141, %v4729, 0
    %4733 = vmatpush.bf16.msra.mxu0 0
    %4734 = vmatpush.bf16.msra.mxu0 0
    %4735 = vmatpush.bf16.msra.mxu0 0
    %4736 = vmatpush.bf16.msra.mxu0 0
    %4737 = vmatpush.bf16.msra.mxu0 0
    %4738 = vmatpush.bf16.msra.mxu0 0
    %4739 = vmatpush.bf16.msra.mxu0 %v4491
    %4740 = vmatpush.bf16.msra.mxu0 %v4490
    %4741 = vmatmul.bf16.gmra.mxu0 %v4731
    %v4742 = vpop.f32.mrf.mxu0
    %v4743 = vadd.f32 0.0, %v4742
    %v4744 = vpop.f32.mrf.mxu0
    %4745 = vdwg.mxu0
    %v4746 = vadd.f32 %v4725, %v4743
    %v4747 = vxor.u32 %v4746, 2147483648
    %v4748 = vmul.f32 %v4747, 1.442695
    %v4749 = vpow.pop %v4748
    %v4750 = vadd.f32 %v4749, 1.0
    %v4751 = vrcp.pop %v4750
    %v4752 = vmul.f32 %v4750, %v4751
    %v4753 = vsub.f32 1.0, %v4752
    %v4754 = vmul.f32 %v4751, %v4753
    %v4755 = vadd.f32 %v4751, %v4754
    %vm4756 = vweird.f32 %v4750
    %vm4757 = vweird.f32 %v4751
    %vm4758 = vmor %vm4756, %vm4757
    %v4759 = vsel %vm4758, %v4751, %v4755
    %v4760 = vand.u32 2147483647, %v4750
    %vm4761 = vcmp.eq.f32.partialorder %v4760, 8.507059e+37
    %v4762 = vand.u32 %v4750, 2147483648
    %v4763 = vor.u32 1.1754944e-38, %v4762
    %v4764 = vsel %vm4761, %v4763, %v4759
    %v4765 = vmul.f32 1.0, %v4764
    %v4766 = vtanh.pop %v4746
    %v4767 = vmul.f32 %v4765, %v4718
    %4769 = vrot.lane.b32.xlu0 %v4766, 32
    %v4770 = vpop.permute.xlu0 %4769
    %v4772 = vmul.f32 %v4765, %v4770
    %4774 = vrot.lane.b32.xlu0 %v4772, 32
    %v4775 = vpop.permute.xlu0 %4774
    %v4777 = vadd.f32 %v4767, %v4775
    %v4778 = vtanh.pop %v4777
    %4780 = vrot.lane.b32.xlu0 %v4778, 32
    %v4781 = vpop.permute.xlu0 %4780
    %v4783 = vmul.f32 %v4765, %v4781
    %v4784 = vld [vmem:[%s465] sm:$0xff]
    %v4785 = vpack.c.bf16 %v4783, %v4783
    %4787 = vrot.lane.b32.xlu0 %v4785, 64
    %v4788 = vpop.permute.xlu0 %4787
    %v4790 = vsel %vm141, %v4788, 0
    %4792 = vmatpush.bf16.msra.mxu0 0
    %4793 = vmatpush.bf16.msra.mxu0 0
    %4794 = vmatpush.bf16.msra.mxu0 0
    %4795 = vmatpush.bf16.msra.mxu0 0
    %4796 = vmatpush.bf16.msra.mxu0 0
    %4797 = vmatpush.bf16.msra.mxu0 0
    %4798 = vmatpush.bf16.msra.mxu0 %v4491
    %4799 = vmatpush.bf16.msra.mxu0 %v4490
    %4800 = vmatmul.bf16.gmra.mxu0 %v4790
    %v4801 = vpop.f32.mrf.mxu0
    %v4802 = vadd.f32 0.0, %v4801
    %v4803 = vpop.f32.mrf.mxu0
    %4804 = vdwg.mxu0
    %v4805 = vadd.f32 %v4784, %v4802
    %v4806 = vxor.u32 %v4805, 2147483648
    %v4807 = vmul.f32 %v4806, 1.442695
    %v4808 = vpow.pop %v4807
    %v4809 = vadd.f32 %v4808, 1.0
    %v4810 = vrcp.pop %v4809
    %v4811 = vmul.f32 %v4809, %v4810
    %v4812 = vsub.f32 1.0, %v4811
    %v4813 = vmul.f32 %v4810, %v4812
    %v4814 = vadd.f32 %v4810, %v4813
    %vm4815 = vweird.f32 %v4809
    %vm4816 = vweird.f32 %v4810
    %vm4817 = vmor %vm4815, %vm4816
    %v4818 = vsel %vm4817, %v4810, %v4814
    %v4819 = vand.u32 2147483647, %v4809
    %vm4820 = vcmp.eq.f32.partialorder %v4819, 8.507059e+37
    %v4821 = vand.u32 %v4809, 2147483648
    %v4822 = vor.u32 1.1754944e-38, %v4821
    %v4823 = vsel %vm4820, %v4822, %v4818
    %v4824 = vmul.f32 1.0, %v4823
    %v4825 = vtanh.pop %v4805
    %v4826 = vmul.f32 %v4824, %v4777
    %4828 = vrot.lane.b32.xlu0 %v4825, 32
    %v4829 = vpop.permute.xlu0 %4828
    %v4831 = vmul.f32 %v4824, %v4829
    %4833 = vrot.lane.b32.xlu0 %v4831, 32
    %v4834 = vpop.permute.xlu0 %4833
    %v4836 = vadd.f32 %v4826, %v4834
    %v4837 = vtanh.pop %v4836
    %4839 = vrot.lane.b32.xlu0 %v4837, 32
    %v4840 = vpop.permute.xlu0 %4839
    %v4842 = vmul.f32 %v4824, %v4840
    %v4843 = vld [vmem:[%s531] sm:$0xff]
    %v4844 = vpack.c.bf16 %v4842, %v4842
    %4846 = vrot.lane.b32.xlu0 %v4844, 64
    %v4847 = vpop.permute.xlu0 %4846
    %v4849 = vsel %vm141, %v4847, 0
    %4851 = vmatpush.bf16.msra.mxu0 0
    %4852 = vmatpush.bf16.msra.mxu0 0
    %4853 = vmatpush.bf16.msra.mxu0 0
    %4854 = vmatpush.bf16.msra.mxu0 0
    %4855 = vmatpush.bf16.msra.mxu0 0
    %4856 = vmatpush.bf16.msra.mxu0 0
    %4857 = vmatpush.bf16.msra.mxu0 %v4491
    %4858 = vmatpush.bf16.msra.mxu0 %v4490
    %4859 = vmatmul.bf16.gmra.mxu0 %v4849
    %v4860 = vpop.f32.mrf.mxu0
    %v4861 = vadd.f32 0.0, %v4860
    %v4862 = vpop.f32.mrf.mxu0
    %4863 = vdwg.mxu0
    %v4864 = vadd.f32 %v4843, %v4861
    %v4865 = vxor.u32 %v4864, 2147483648
    %v4866 = vmul.f32 %v4865, 1.442695
    %v4867 = vpow.pop %v4866
    %v4868 = vadd.f32 %v4867, 1.0
    %v4869 = vrcp.pop %v4868
    %v4870 = vmul.f32 %v4868, %v4869
    %v4871 = vsub.f32 1.0, %v4870
    %v4872 = vmul.f32 %v4869, %v4871
    %v4873 = vadd.f32 %v4869, %v4872
    %vm4874 = vweird.f32 %v4868
    %vm4875 = vweird.f32 %v4869
    %vm4876 = vmor %vm4874, %vm4875
    %v4877 = vsel %vm4876, %v4869, %v4873
    %v4878 = vand.u32 2147483647, %v4868
    %vm4879 = vcmp.eq.f32.partialorder %v4878, 8.507059e+37
    %v4880 = vand.u32 %v4868, 2147483648
    %v4881 = vor.u32 1.1754944e-38, %v4880
    %v4882 = vsel %vm4879, %v4881, %v4877
    %v4883 = vmul.f32 1.0, %v4882
    %v4884 = vtanh.pop %v4864
    %v4885 = vmul.f32 %v4883, %v4836
    %4887 = vrot.lane.b32.xlu0 %v4884, 32
    %v4888 = vpop.permute.xlu0 %4887
    %v4890 = vmul.f32 %v4883, %v4888
    %4892 = vrot.lane.b32.xlu0 %v4890, 32
    %v4893 = vpop.permute.xlu0 %4892
    %v4895 = vadd.f32 %v4885, %v4893
    %v4896 = vtanh.pop %v4895
    %4898 = vrot.lane.b32.xlu0 %v4896, 32
    %v4899 = vpop.permute.xlu0 %4898
    %v4901 = vmul.f32 %v4883, %v4899
    %v4902 = vld [vmem:[%s597] sm:$0xff]
    %v4903 = vpack.c.bf16 %v4901, %v4901
    %4905 = vrot.lane.b32.xlu0 %v4903, 64
    %v4906 = vpop.permute.xlu0 %4905
    %v4908 = vsel %vm141, %v4906, 0
    %4910 = vmatpush.bf16.msra.mxu0 0
    %4911 = vmatpush.bf16.msra.mxu0 0
    %4912 = vmatpush.bf16.msra.mxu0 0
    %4913 = vmatpush.bf16.msra.mxu0 0
    %4914 = vmatpush.bf16.msra.mxu0 0
    %4915 = vmatpush.bf16.msra.mxu0 0
    %4916 = vmatpush.bf16.msra.mxu0 %v4491
    %4917 = vmatpush.bf16.msra.mxu0 %v4490
    %4918 = vmatmul.bf16.gmra.mxu0 %v4908
    %v4919 = vpop.f32.mrf.mxu0
    %v4920 = vadd.f32 0.0, %v4919
    %v4921 = vpop.f32.mrf.mxu0
    %4922 = vdwg.mxu0
    %v4923 = vadd.f32 %v4902, %v4920
    %v4924 = vxor.u32 %v4923, 2147483648
    %v4925 = vmul.f32 %v4924, 1.442695
    %v4926 = vpow.pop %v4925
    %v4927 = vadd.f32 %v4926, 1.0
    %v4928 = vrcp.pop %v4927
    %v4929 = vmul.f32 %v4927, %v4928
    %v4930 = vsub.f32 1.0, %v4929
    %v4931 = vmul.f32 %v4928, %v4930
    %v4932 = vadd.f32 %v4928, %v4931
    %vm4933 = vweird.f32 %v4927
    %vm4934 = vweird.f32 %v4928
    %vm4935 = vmor %vm4933, %vm4934
    %v4936 = vsel %vm4935, %v4928, %v4932
    %v4937 = vand.u32 2147483647, %v4927
    %vm4938 = vcmp.eq.f32.partialorder %v4937, 8.507059e+37
    %v4939 = vand.u32 %v4927, 2147483648
    %v4940 = vor.u32 1.1754944e-38, %v4939
    %v4941 = vsel %vm4938, %v4940, %v4936
    %v4942 = vmul.f32 1.0, %v4941
    %v4943 = vtanh.pop %v4923
    %v4944 = vmul.f32 %v4942, %v4895
    %4946 = vrot.lane.b32.xlu0 %v4943, 32
    %v4947 = vpop.permute.xlu0 %4946
    %v4949 = vmul.f32 %v4942, %v4947
    %4951 = vrot.lane.b32.xlu0 %v4949, 32
    %v4952 = vpop.permute.xlu0 %4951
    %v4954 = vadd.f32 %v4944, %v4952
    %v4955 = vtanh.pop %v4954
    %4957 = vrot.lane.b32.xlu0 %v4955, 32
    %v4958 = vpop.permute.xlu0 %4957
    %v4960 = vmul.f32 %v4942, %v4958
    %4962 = vrot.lane.b32.xlu0 %v4960, 64
    %v4963 = vpop.permute.xlu0 %4962
    %4965 = vst.msk [vmem:[%s5] sm:$0xff] %vm141, %v4963
    // Predicated region
    $region30: #{res_lstm_forward.1} parent=1 // pred_check
      _
    $region31: #{res_lstm_forward.1} parent=1 // pred_check_branch
      %4967 = sbr.rel (0) target = $region33
    $region32: #{res_lstm_forward.1} parent=1 // pred_region
      _
    $region33: #{res_lstm_forward.1} parent=1 // pred_fallthru
      _
    // Predicated region
    $region34: #{res_lstm_forward.1} parent=1 // pred_check
      _
    $region35: #{res_lstm_forward.1} parent=1 // pred_check_branch
      %4969 = sbr.rel (0) target = $region37
    $region36: #{res_lstm_forward.1} parent=1 // pred_region
      _
    $region37: #{res_lstm_forward.1} parent=1 // pred_fallthru
      _
    %4970 = vsyncpa [#allocation6], 1
    %4971 = vsyncpa [#allocation8], 1

</llo_original>
